<compile_context>
chip_gen: v6e
topology: v6e:2x2x1
jax: 0.10.0
libtpu: 0.0.40
codegen_flags: <defaults>
</compile_context>

<pallas_src>
import jax
import jax.numpy as jnp
from jax.experimental import pallas as pl
from jax.experimental.pallas import tpu as pltpu


def _conv_out(n, k, s):
    return (n - k) // s + 1


# ---------------------------------------------------------------------------
# Fused kernel (all shape parameters are static, captured via closure).
# ---------------------------------------------------------------------------
def _build_kernel(cfg):
    f32, bf16 = jnp.float32, jnp.bfloat16
    bblk = cfg["bblk"]

    def conv(act, oh, ow, kh, kw, st, w_ref, b_ref):
        # act: (ih, iw, bblk, cin) bf16 -- batch on sublanes, channels on lanes.
        ih, iw, _, cin = act.shape
        cout = w_ref.shape[-1]
        if st > 1:
            # Pre-split leading spatial dims by the stride so each tap becomes
            # a unit-stride slice on untiled dims (no strided tiled-dim slicing).
            if ih % st or iw % st:  # never hit for the shapes used here
                act = jnp.pad(act, ((0, (-ih) % st), (0, (-iw) % st),
                                    (0, 0), (0, 0)))
                ih, iw = act.shape[0], act.shape[1]
            act = act.reshape(ih // st, st, iw // st, st, bblk, cin)
        acc = jnp.zeros((oh * ow * bblk, cout), f32)
        for i in range(kh):                      # static unroll (<= 16 taps)
            for j in range(kw):
                t = i * kw + j
                if st > 1:
                    ib, ir = divmod(i, st)
                    jb, jr = divmod(j, st)
                    rows = act[ib:ib + oh, ir, jb:jb + ow, jr]
                else:
                    rows = act[i:i + oh, j:j + ow]
                rows = rows.reshape(oh * ow * bblk, cin)   # M = oh*ow*bblk
                acc = acc + jnp.dot(rows, w_ref[t],
                                    preferred_element_type=f32)
        y = jnp.maximum(acc + b_ref[...], 0.0)             # f32 epilogue
        return y.astype(bf16).reshape(oh, ow, bblk, cout)

    def kernel(x_ref,
               w1_ref, b1_ref, w2_ref, b2_ref, w3_ref, b3_ref,
               wf1_ref, bf1_ref, wf2_ref, bf2_ref,
               o_ref):
        # conv1 (8x8/s4) was re-expressed as a 2x2/s1 conv over space-to-depth
        # input (done in the wrapper), so the kernel only sees dense matmuls.
        a1 = conv(x_ref[...], cfg["oh1"], cfg["ow1"], cfg["kb"], cfg["kb"], 1,
                  w1_ref, b1_ref)
        a2 = conv(a1, cfg["oh2"], cfg["ow2"], cfg["k2"], cfg["k2"], cfg["s2"],
                  w2_ref, b2_ref)
        a3 = conv(a2, cfg["oh3"], cfg["ow3"], cfg["k3"], cfg["k3"], cfg["s3"],
                  w3_ref, b3_ref)

        # fc1: NCHW flatten folded into wf1 (n_pos, C3, 512); one matmul per
        # spatial position with M = bblk (no M=1 GEMVs).
        nf1 = wf1_ref.shape[-1]
        h = jnp.zeros((bblk, nf1), f32)
        for p in range(cfg["oh3"] * cfg["ow3"]):
            pi, pj = divmod(p, cfg["ow3"])
            h = h + jnp.dot(a3[pi, pj], wf1_ref[p], preferred_element_type=f32)
        h = jnp.maximum(h + bf1_ref[...], 0.0).astype(bf16)

        # fc2: lane-dense (128-padded) output block, dense store.
        q = jnp.dot(h, wf2_ref[...], preferred_element_type=f32) + bf2_ref[...]
        o_ref[...] = q.astype(o_ref.dtype)

    return kernel


# ---------------------------------------------------------------------------
# One-time (off-critical-path) preparation of all constant operands.
# ---------------------------------------------------------------------------
def prepare_fused_params(params, input_shape):
    C, H, W = input_shape
    bf16, f32 = jnp.bfloat16, jnp.float32

    # conv1: k=8, s=4 -> space-to-depth by the stride; kernel becomes kb x kb
    # (kb = 2) over C*s*s channels.  Requires k1 % s1 == 0 (true for 8/4).
    o1, _, k1, _ = params["w1"].shape
    s1 = 4
    assert k1 % s1 == 0
    kb = k1 // s1
    oh1, ow1 = _conv_out(H, k1, s1), _conv_out(W, k1, s1)
    hs, ws = oh1 - 1 + kb, ow1 - 1 + kb
    w1 = params["w1"].reshape(o1, C, kb, s1, kb, s1)        # o,c,bi,dh,bj,dw
    w1m = jnp.transpose(w1, (2, 4, 1, 3, 5, 0)).reshape(kb * kb, C * s1 * s1, o1)

    # conv2: k=4, s=2
    o2, _, k2, _ = params["w2"].shape
    s2 = 2
    oh2, ow2 = _conv_out(oh1, k2, s2), _conv_out(ow1, k2, s2)
    w2m = jnp.transpose(params["w2"], (2, 3, 1, 0)).reshape(k2 * k2, o1, o2)

    # conv3: k=3, s=1
    o3, _, k3, _ = params["w3"].shape
    s3 = 1
    oh3, ow3 = _conv_out(oh2, k3, s3), _conv_out(ow2, k3, s3)
    w3m = jnp.transpose(params["w3"], (2, 3, 1, 0)).reshape(k3 * k3, o2, o3)

    # fc1: fold PyTorch's NCHW flatten (index = c * n_pos + p) into the weight.
    n_pos = oh3 * ow3
    nf1 = params["fc1_w"].shape[0]
    wf1 = jnp.transpose(params["fc1_w"].reshape(nf1, o3, n_pos), (2, 1, 0))

    # fc2: pre-transpose + zero-pad actions to a lane-dense multiple of 128.
    n_act = params["fc2_w"].shape[0]
    n_pad = ((n_act + 127) // 128) * 128
    wf2 = jnp.zeros((nf1, n_pad), f32).at[:, :n_act].set(params["fc2_w"].T)
    bf2 = jnp.zeros((1, n_pad), f32).at[0, :n_act].set(params["fc2_b"])

    return {
        "stride1": s1, "k1": k1, "kb": kb, "hs_ws": (hs, ws),
        "oh1": oh1, "ow1": ow1,
        "k2": k2, "s2": s2, "oh2": oh2, "ow2": ow2,
        "k3": k3, "s3": s3, "oh3": oh3, "ow3": ow3,
        "num_actions": n_act, "n_pad": n_pad,
        "w1m": w1m.astype(bf16), "b1": params["b1"].reshape(1, -1).astype(f32),
        "w2m": w2m.astype(bf16), "b2": params["b2"].reshape(1, -1).astype(f32),
        "w3m": w3m.astype(bf16), "b3": params["b3"].reshape(1, -1).astype(f32),
        "wf1": wf1.astype(bf16),
        "bf1": params["fc1_b"].reshape(1, -1).astype(f32),
        "wf2": wf2.astype(bf16), "bf2": bf2,
    }


def _const_spec(arr):
    zero = (0,) * arr.ndim
    return pl.BlockSpec(arr.shape, lambda b, _z=zero: _z)   # resident in VMEM


def _choose_batch_block(batch):
    """Batch block: multiple of 8, <=128, and >=2 grid steps when possible
    (so v7x's two TensorCores both get work on realistic batches)."""
    bp8 = ((batch + 7) // 8) * 8
    bblk = min(128, bp8)
    if bp8 > 8 and (bp8 + bblk - 1) // bblk < 2:
        bblk = max(8, (((bp8 + 1) // 2 + 7) // 8) * 8)
    b_pad = ((bp8 + bblk - 1) // bblk) * bblk
    return bblk, b_pad


# ---------------------------------------------------------------------------
# Forward wrapper.
# ---------------------------------------------------------------------------
def cnn_dqn_forward(x_nchw, fp):
    """x_nchw: (B, C, H, W) float32 -> (B, num_actions) float32."""
    B, C, H, W = x_nchw.shape
    s = fp["stride1"]
    hs, ws = fp["hs_ws"]
    hu, wu = hs * s, ws * s            # extent actually read by a VALID conv1

    # Space-to-depth (pure rearrangement) + spatial-major layout:
    # (hs, ws, B, C*s*s); batch lands on sublanes, channels on lanes.
    x = x_nchw[:, :, :hu, :wu].reshape(B, C, hs, s, ws, s)
    x = jnp.transpose(x, (2, 4, 0, 1, 3, 5)).reshape(hs, ws, B, C * s * s)
    x = x.astype(jnp.bfloat16)

    bblk, b_pad = _choose_batch_block(B)
    if b_pad != B:
        x = jnp.pad(x, ((0, 0), (0, 0), (0, b_pad - B), (0, 0)))

    consts = (fp["w1m"], fp["b1"], fp["w2m"], fp["b2"], fp["w3m"], fp["b3"],
              fp["wf1"], fp["bf1"], fp["wf2"], fp["bf2"])

    cfg = {"bblk": bblk, "kb": fp["kb"], "oh1": fp["oh1"], "ow1": fp["ow1"],
           "k2": fp["k2"], "s2": fp["s2"], "oh2": fp["oh2"], "ow2": fp["ow2"],
           "k3": fp["k3"], "s3": fp["s3"], "oh3": fp["oh3"], "ow3": fp["ow3"]}
    kernel = _build_kernel(cfg)

    csz = C * s * s
    out = pl.pallas_call(
        kernel,
        out_shape=jax.ShapeDtypeStruct((b_pad, fp["n_pad"]), jnp.float32),
        grid=(b_pad // bblk,),
        in_specs=[pl.BlockSpec((hs, ws, bblk, csz), lambda b: (0, 0, b, 0))]
                 + [_const_spec(c) for c in consts],
        out_specs=pl.BlockSpec((bblk, fp["n_pad"]), lambda b: (b, 0)),
        compiler_params=pltpu.CompilerParams(
            dimension_semantics=("parallel",),
            vmem_limit_bytes=32 * 1024 * 1024),
    )(x, *consts)

    return out[:B, :fp["num_actions"]]


# ---------------------------------------------------------------------------
# Pure-JAX f32 reference (lax.conv, NCHW / OIHW) for the correctness check.
# ---------------------------------------------------------------------------
def cnn_dqn_reference(x_nchw, params):
    def conv(x, w, b, s):
        y = jax.lax.conv_general_dilated(
            x, w, window_strides=(s, s), padding="VALID",
            dimension_numbers=("NCHW", "OIHW", "NCHW"))
        return jnp.maximum(y + b[None, :, None, None], 0.0)

    h = conv(x_nchw, params["w1"], params["b1"], 4)
    h = conv(h, params["w2"], params["b2"], 2)
    h = conv(h, params["w3"], params["b3"], 1)
    h = h.reshape(h.shape[0], -1)
    h = jnp.maximum(h @ params["fc1_w"].T + params["fc1_b"], 0.0)
    return h @ params["fc2_w"].T + params["fc2_b"]


def init_params(key, in_ch, feat_size, num_actions):
    ks = jax.random.split(key, 10)
    s = 0.05
    return {
        "w1": s * jax.random.normal(ks[0], (32, in_ch, 8, 8), jnp.float32),
        "b1": s * jax.random.normal(ks[1], (32,), jnp.float32),
        "w2": s * jax.random.normal(ks[2], (64, 32, 4, 4), jnp.float32),
        "b2": s * jax.random.normal(ks[3], (64,), jnp.float32),
        "w3": s * jax.random.normal(ks[4], (64, 64, 3, 3), jnp.float32),
        "b3": s * jax.random.normal(ks[5], (64,), jnp.float32),
        "fc1_w": s * jax.random.normal(ks[6], (512, feat_size), jnp.float32),
        "fc1_b": s * jax.random.normal(ks[7], (512,), jnp.float32),
        "fc2_w": s * jax.random.normal(ks[8], (num_actions, 512), jnp.float32),
        "fc2_b": s * jax.random.normal(ks[9], (num_actions,), jnp.float32),
    }


if __name__ == "__main__":
    # Small shapes consistent with the module: B=2, C=4, 44x44 spatial.
    # conv chain: 44 ->(k8,s4) 10 ->(k4,s2) 4 ->(k3,s1) 2  => feat = 64*2*2
    B, C, H, W = 2, 4, 44, 44
    num_actions = 6
    feat_size = 64 * 2 * 2

    key = jax.random.PRNGKey(0)
    kx, kp = jax.random.split(key)
    x = jax.random.normal(kx, (B, C, H, W), jnp.float32)
    params = init_params(kp, C, feat_size, num_actions)

    fused = prepare_fused_params(params, (C, H, W))   # once, off critical path
    fwd = jax.jit(lambda inp: cnn_dqn_forward(inp, fused))

    q = jax.block_until_ready(fwd(x))
    q_ref = cnn_dqn_reference(x, params)

    assert q.shape == (B, num_actions)
    # bf16 MXU operands with f32 accumulation/epilogues -> loosened tolerance.
    assert jnp.allclose(q, q_ref, rtol=5e-2, atol=5e-2), "mismatch vs reference"
    print("KERNEL_OK")
</pallas_src>

<mosaic_0001>
module attributes {stable_mosaic.version = 11 : i64} {
  func.func @kernel(%arg0: i32, %arg1: memref<11x11x8x64xbf16, #tpu.memory_space<vmem>>, %arg2: memref<4x64x32xbf16, #tpu.memory_space<vmem>>, %arg3: memref<1x32xf32, #tpu.memory_space<vmem>>, %arg4: memref<16x32x64xbf16, #tpu.memory_space<vmem>>, %arg5: memref<1x64xf32, #tpu.memory_space<vmem>>, %arg6: memref<9x64x64xbf16, #tpu.memory_space<vmem>>, %arg7: memref<1x64xf32, #tpu.memory_space<vmem>>, %arg8: memref<4x64x512xbf16, #tpu.memory_space<vmem>>, %arg9: memref<1x512xf32, #tpu.memory_space<vmem>>, %arg10: memref<512x128xbf16, #tpu.memory_space<vmem>>, %arg11: memref<1x128xf32, #tpu.memory_space<vmem>>, %arg12: memref<8x128xf32, #tpu.memory_space<vmem>>) attributes {dimension_semantics = [#tpu.dimension_semantics<parallel>], iteration_bounds = array<i64: 1>, scalar_prefetch = 0 : i64, scratch_operands = 0 : i64, tpu.core_type = #tpu.core_type<tc>, window_params = [{transform_indices = @transform_0, window_bounds = array<i64: 11, 11, 8, 64>}, {pipeline_mode = #tpu.pipeline_mode<synchronous>, transform_indices = @transform_1, window_bounds = array<i64: 4, 64, 32>}, {pipeline_mode = #tpu.pipeline_mode<synchronous>, transform_indices = @transform_2, window_bounds = array<i64: 1, 32>}, {pipeline_mode = #tpu.pipeline_mode<synchronous>, transform_indices = @transform_3, window_bounds = array<i64: 16, 32, 64>}, {pipeline_mode = #tpu.pipeline_mode<synchronous>, transform_indices = @transform_4, window_bounds = array<i64: 1, 64>}, {pipeline_mode = #tpu.pipeline_mode<synchronous>, transform_indices = @transform_5, window_bounds = array<i64: 9, 64, 64>}, {pipeline_mode = #tpu.pipeline_mode<synchronous>, transform_indices = @transform_6, window_bounds = array<i64: 1, 64>}, {pipeline_mode = #tpu.pipeline_mode<synchronous>, transform_indices = @transform_7, window_bounds = array<i64: 4, 64, 512>}, {pipeline_mode = #tpu.pipeline_mode<synchronous>, transform_indices = @transform_8, window_bounds = array<i64: 1, 512>}, {pipeline_mode = #tpu.pipeline_mode<synchronous>, transform_indices = @transform_9, window_bounds = array<i64: 512, 128>}, {pipeline_mode = #tpu.pipeline_mode<synchronous>, transform_indices = @transform_10, window_bounds = array<i64: 1, 128>}, {transform_indices = @transform_11, window_bounds = array<i64: 8, 128>}]} {
    %c0 = arith.constant 0 : index
    %c0_0 = arith.constant 0 : index
    %c0_1 = arith.constant 0 : index
    %c0_2 = arith.constant 0 : index
    %0 = vector.load %arg1[%c0, %c0_0, %c0_1, %c0_2] : memref<11x11x8x64xbf16, #tpu.memory_space<vmem>>, vector<11x11x8x64xbf16>
    %cst = arith.constant 0.000000e+00 : f32
    %1 = vector.broadcast %cst : f32 to vector<800x32xf32>
    %2 = vector.extract_strided_slice %0 {offsets = [0, 0, 0, 0], sizes = [10, 10, 8, 64], strides = [1, 1, 1, 1]} : vector<11x11x8x64xbf16> to vector<10x10x8x64xbf16>
    %3 = vector.shape_cast %2 : vector<10x10x8x64xbf16> to vector<800x64xbf16>
    %c0_3 = arith.constant 0 : index
    %c0_4 = arith.constant 0 : index
    %c0_5 = arith.constant 0 : index
    %4 = vector.load %arg2[%c0_3, %c0_4, %c0_5] : memref<4x64x32xbf16, #tpu.memory_space<vmem>>, vector<1x64x32xbf16>
    %5 = vector.shape_cast %4 : vector<1x64x32xbf16> to vector<64x32xbf16>
    %cst_6 = arith.constant dense<0.000000e+00> : vector<800x32xf32>
    %6 = tpu.matmul %3, %5, %cst_6 {dimension_numbers = #tpu.dot_dimension_numbers<[1], [0], [0], [1], [0, 0, 1, 1], [], []>} : vector<800x64xbf16>, vector<64x32xbf16>, vector<800x32xf32> -> vector<800x32xf32>
    %7 = arith.addf %1, %6 : vector<800x32xf32>
    %8 = vector.extract_strided_slice %0 {offsets = [0, 1, 0, 0], sizes = [10, 10, 8, 64], strides = [1, 1, 1, 1]} : vector<11x11x8x64xbf16> to vector<10x10x8x64xbf16>
    %9 = vector.shape_cast %8 : vector<10x10x8x64xbf16> to vector<800x64xbf16>
    %c1 = arith.constant 1 : index
    %c0_7 = arith.constant 0 : index
    %c0_8 = arith.constant 0 : index
    %10 = vector.load %arg2[%c1, %c0_7, %c0_8] : memref<4x64x32xbf16, #tpu.memory_space<vmem>>, vector<1x64x32xbf16>
    %11 = vector.shape_cast %10 : vector<1x64x32xbf16> to vector<64x32xbf16>
    %cst_9 = arith.constant dense<0.000000e+00> : vector<800x32xf32>
    %12 = tpu.matmul %9, %11, %cst_9 {dimension_numbers = #tpu.dot_dimension_numbers<[1], [0], [0], [1], [0, 0, 1, 1], [], []>} : vector<800x64xbf16>, vector<64x32xbf16>, vector<800x32xf32> -> vector<800x32xf32>
    %13 = arith.addf %7, %12 : vector<800x32xf32>
    %14 = vector.extract_strided_slice %0 {offsets = [1, 0, 0, 0], sizes = [10, 10, 8, 64], strides = [1, 1, 1, 1]} : vector<11x11x8x64xbf16> to vector<10x10x8x64xbf16>
    %15 = vector.shape_cast %14 : vector<10x10x8x64xbf16> to vector<800x64xbf16>
    %c2 = arith.constant 2 : index
    %c0_10 = arith.constant 0 : index
    %c0_11 = arith.constant 0 : index
    %16 = vector.load %arg2[%c2, %c0_10, %c0_11] : memref<4x64x32xbf16, #tpu.memory_space<vmem>>, vector<1x64x32xbf16>
    %17 = vector.shape_cast %16 : vector<1x64x32xbf16> to vector<64x32xbf16>
    %cst_12 = arith.constant dense<0.000000e+00> : vector<800x32xf32>
    %18 = tpu.matmul %15, %17, %cst_12 {dimension_numbers = #tpu.dot_dimension_numbers<[1], [0], [0], [1], [0, 0, 1, 1], [], []>} : vector<800x64xbf16>, vector<64x32xbf16>, vector<800x32xf32> -> vector<800x32xf32>
    %19 = arith.addf %13, %18 : vector<800x32xf32>
    %20 = vector.extract_strided_slice %0 {offsets = [1, 1, 0, 0], sizes = [10, 10, 8, 64], strides = [1, 1, 1, 1]} : vector<11x11x8x64xbf16> to vector<10x10x8x64xbf16>
    %21 = vector.shape_cast %20 : vector<10x10x8x64xbf16> to vector<800x64xbf16>
    %c3 = arith.constant 3 : index
    %c0_13 = arith.constant 0 : index
    %c0_14 = arith.constant 0 : index
    %22 = vector.load %arg2[%c3, %c0_13, %c0_14] : memref<4x64x32xbf16, #tpu.memory_space<vmem>>, vector<1x64x32xbf16>
    %23 = vector.shape_cast %22 : vector<1x64x32xbf16> to vector<64x32xbf16>
    %cst_15 = arith.constant dense<0.000000e+00> : vector<800x32xf32>
    %24 = tpu.matmul %21, %23, %cst_15 {dimension_numbers = #tpu.dot_dimension_numbers<[1], [0], [0], [1], [0, 0, 1, 1], [], []>} : vector<800x64xbf16>, vector<64x32xbf16>, vector<800x32xf32> -> vector<800x32xf32>
    %25 = arith.addf %19, %24 : vector<800x32xf32>
    %c0_16 = arith.constant 0 : index
    %c0_17 = arith.constant 0 : index
    %26 = vector.load %arg3[%c0_16, %c0_17] : memref<1x32xf32, #tpu.memory_space<vmem>>, vector<1x32xf32>
    %27 = vector.broadcast %26 : vector<1x32xf32> to vector<800x32xf32>
    %28 = arith.addf %25, %27 : vector<800x32xf32>
    %cst_18 = arith.constant 0.000000e+00 : f32
    %29 = vector.broadcast %cst_18 : f32 to vector<800x32xf32>
    %30 = arith.maximumf %28, %29 : vector<800x32xf32>
    %31 = arith.truncf %30 : vector<800x32xf32> to vector<800x32xbf16>
    %32 = vector.shape_cast %31 : vector<800x32xbf16> to vector<10x10x8x32xbf16>
    %33 = vector.shape_cast %32 : vector<10x10x8x32xbf16> to vector<5x2x5x2x8x32xbf16>
    %cst_19 = arith.constant 0.000000e+00 : f32
    %34 = vector.broadcast %cst_19 : f32 to vector<128x64xf32>
    %35 = vector.extract_strided_slice %33 {offsets = [0, 0, 0, 0, 0, 0], sizes = [4, 1, 4, 1, 8, 32], strides = [1, 1, 1, 1, 1, 1]} : vector<5x2x5x2x8x32xbf16> to vector<4x1x4x1x8x32xbf16>
    %36 = vector.shape_cast %35 : vector<4x1x4x1x8x32xbf16> to vector<4x4x8x32xbf16>
    %37 = vector.shape_cast %36 : vector<4x4x8x32xbf16> to vector<128x32xbf16>
    %c0_20 = arith.constant 0 : index
    %c0_21 = arith.constant 0 : index
    %c0_22 = arith.constant 0 : index
    %38 = vector.load %arg4[%c0_20, %c0_21, %c0_22] : memref<16x32x64xbf16, #tpu.memory_space<vmem>>, vector<1x32x64xbf16>
    %39 = vector.shape_cast %38 : vector<1x32x64xbf16> to vector<32x64xbf16>
    %cst_23 = arith.constant dense<0.000000e+00> : vector<128x64xf32>
    %40 = tpu.matmul %37, %39, %cst_23 {dimension_numbers = #tpu.dot_dimension_numbers<[1], [0], [0], [1], [0, 0, 1, 1], [], []>} : vector<128x32xbf16>, vector<32x64xbf16>, vector<128x64xf32> -> vector<128x64xf32>
    %41 = arith.addf %34, %40 : vector<128x64xf32>
    %42 = vector.extract_strided_slice %33 {offsets = [0, 0, 0, 1, 0, 0], sizes = [4, 1, 4, 1, 8, 32], strides = [1, 1, 1, 1, 1, 1]} : vector<5x2x5x2x8x32xbf16> to vector<4x1x4x1x8x32xbf16>
    %43 = vector.shape_cast %42 : vector<4x1x4x1x8x32xbf16> to vector<4x4x8x32xbf16>
    %44 = vector.shape_cast %43 : vector<4x4x8x32xbf16> to vector<128x32xbf16>
    %c1_24 = arith.constant 1 : index
    %c0_25 = arith.constant 0 : index
    %c0_26 = arith.constant 0 : index
    %45 = vector.load %arg4[%c1_24, %c0_25, %c0_26] : memref<16x32x64xbf16, #tpu.memory_space<vmem>>, vector<1x32x64xbf16>
    %46 = vector.shape_cast %45 : vector<1x32x64xbf16> to vector<32x64xbf16>
    %cst_27 = arith.constant dense<0.000000e+00> : vector<128x64xf32>
    %47 = tpu.matmul %44, %46, %cst_27 {dimension_numbers = #tpu.dot_dimension_numbers<[1], [0], [0], [1], [0, 0, 1, 1], [], []>} : vector<128x32xbf16>, vector<32x64xbf16>, vector<128x64xf32> -> vector<128x64xf32>
    %48 = arith.addf %41, %47 : vector<128x64xf32>
    %49 = vector.extract_strided_slice %33 {offsets = [0, 0, 1, 0, 0, 0], sizes = [4, 1, 4, 1, 8, 32], strides = [1, 1, 1, 1, 1, 1]} : vector<5x2x5x2x8x32xbf16> to vector<4x1x4x1x8x32xbf16>
    %50 = vector.shape_cast %49 : vector<4x1x4x1x8x32xbf16> to vector<4x4x8x32xbf16>
    %51 = vector.shape_cast %50 : vector<4x4x8x32xbf16> to vector<128x32xbf16>
    %c2_28 = arith.constant 2 : index
    %c0_29 = arith.constant 0 : index
    %c0_30 = arith.constant 0 : index
    %52 = vector.load %arg4[%c2_28, %c0_29, %c0_30] : memref<16x32x64xbf16, #tpu.memory_space<vmem>>, vector<1x32x64xbf16>
    %53 = vector.shape_cast %52 : vector<1x32x64xbf16> to vector<32x64xbf16>
    %cst_31 = arith.constant dense<0.000000e+00> : vector<128x64xf32>
    %54 = tpu.matmul %51, %53, %cst_31 {dimension_numbers = #tpu.dot_dimension_numbers<[1], [0], [0], [1], [0, 0, 1, 1], [], []>} : vector<128x32xbf16>, vector<32x64xbf16>, vector<128x64xf32> -> vector<128x64xf32>
    %55 = arith.addf %48, %54 : vector<128x64xf32>
    %56 = vector.extract_strided_slice %33 {offsets = [0, 0, 1, 1, 0, 0], sizes = [4, 1, 4, 1, 8, 32], strides = [1, 1, 1, 1, 1, 1]} : vector<5x2x5x2x8x32xbf16> to vector<4x1x4x1x8x32xbf16>
    %57 = vector.shape_cast %56 : vector<4x1x4x1x8x32xbf16> to vector<4x4x8x32xbf16>
    %58 = vector.shape_cast %57 : vector<4x4x8x32xbf16> to vector<128x32xbf16>
    %c3_32 = arith.constant 3 : index
    %c0_33 = arith.constant 0 : index
    %c0_34 = arith.constant 0 : index
    %59 = vector.load %arg4[%c3_32, %c0_33, %c0_34] : memref<16x32x64xbf16, #tpu.memory_space<vmem>>, vector<1x32x64xbf16>
    %60 = vector.shape_cast %59 : vector<1x32x64xbf16> to vector<32x64xbf16>
    %cst_35 = arith.constant dense<0.000000e+00> : vector<128x64xf32>
    %61 = tpu.matmul %58, %60, %cst_35 {dimension_numbers = #tpu.dot_dimension_numbers<[1], [0], [0], [1], [0, 0, 1, 1], [], []>} : vector<128x32xbf16>, vector<32x64xbf16>, vector<128x64xf32> -> vector<128x64xf32>
    %62 = arith.addf %55, %61 : vector<128x64xf32>
    %63 = vector.extract_strided_slice %33 {offsets = [0, 1, 0, 0, 0, 0], sizes = [4, 1, 4, 1, 8, 32], strides = [1, 1, 1, 1, 1, 1]} : vector<5x2x5x2x8x32xbf16> to vector<4x1x4x1x8x32xbf16>
    %64 = vector.shape_cast %63 : vector<4x1x4x1x8x32xbf16> to vector<4x4x8x32xbf16>
    %65 = vector.shape_cast %64 : vector<4x4x8x32xbf16> to vector<128x32xbf16>
    %c4 = arith.constant 4 : index
    %c0_36 = arith.constant 0 : index
    %c0_37 = arith.constant 0 : index
    %66 = vector.load %arg4[%c4, %c0_36, %c0_37] : memref<16x32x64xbf16, #tpu.memory_space<vmem>>, vector<1x32x64xbf16>
    %67 = vector.shape_cast %66 : vector<1x32x64xbf16> to vector<32x64xbf16>
    %cst_38 = arith.constant dense<0.000000e+00> : vector<128x64xf32>
    %68 = tpu.matmul %65, %67, %cst_38 {dimension_numbers = #tpu.dot_dimension_numbers<[1], [0], [0], [1], [0, 0, 1, 1], [], []>} : vector<128x32xbf16>, vector<32x64xbf16>, vector<128x64xf32> -> vector<128x64xf32>
    %69 = arith.addf %62, %68 : vector<128x64xf32>
    %70 = vector.extract_strided_slice %33 {offsets = [0, 1, 0, 1, 0, 0], sizes = [4, 1, 4, 1, 8, 32], strides = [1, 1, 1, 1, 1, 1]} : vector<5x2x5x2x8x32xbf16> to vector<4x1x4x1x8x32xbf16>
    %71 = vector.shape_cast %70 : vector<4x1x4x1x8x32xbf16> to vector<4x4x8x32xbf16>
    %72 = vector.shape_cast %71 : vector<4x4x8x32xbf16> to vector<128x32xbf16>
    %c5 = arith.constant 5 : index
    %c0_39 = arith.constant 0 : index
    %c0_40 = arith.constant 0 : index
    %73 = vector.load %arg4[%c5, %c0_39, %c0_40] : memref<16x32x64xbf16, #tpu.memory_space<vmem>>, vector<1x32x64xbf16>
    %74 = vector.shape_cast %73 : vector<1x32x64xbf16> to vector<32x64xbf16>
    %cst_41 = arith.constant dense<0.000000e+00> : vector<128x64xf32>
    %75 = tpu.matmul %72, %74, %cst_41 {dimension_numbers = #tpu.dot_dimension_numbers<[1], [0], [0], [1], [0, 0, 1, 1], [], []>} : vector<128x32xbf16>, vector<32x64xbf16>, vector<128x64xf32> -> vector<128x64xf32>
    %76 = arith.addf %69, %75 : vector<128x64xf32>
    %77 = vector.extract_strided_slice %33 {offsets = [0, 1, 1, 0, 0, 0], sizes = [4, 1, 4, 1, 8, 32], strides = [1, 1, 1, 1, 1, 1]} : vector<5x2x5x2x8x32xbf16> to vector<4x1x4x1x8x32xbf16>
    %78 = vector.shape_cast %77 : vector<4x1x4x1x8x32xbf16> to vector<4x4x8x32xbf16>
    %79 = vector.shape_cast %78 : vector<4x4x8x32xbf16> to vector<128x32xbf16>
    %c6 = arith.constant 6 : index
    %c0_42 = arith.constant 0 : index
    %c0_43 = arith.constant 0 : index
    %80 = vector.load %arg4[%c6, %c0_42, %c0_43] : memref<16x32x64xbf16, #tpu.memory_space<vmem>>, vector<1x32x64xbf16>
    %81 = vector.shape_cast %80 : vector<1x32x64xbf16> to vector<32x64xbf16>
    %cst_44 = arith.constant dense<0.000000e+00> : vector<128x64xf32>
    %82 = tpu.matmul %79, %81, %cst_44 {dimension_numbers = #tpu.dot_dimension_numbers<[1], [0], [0], [1], [0, 0, 1, 1], [], []>} : vector<128x32xbf16>, vector<32x64xbf16>, vector<128x64xf32> -> vector<128x64xf32>
    %83 = arith.addf %76, %82 : vector<128x64xf32>
    %84 = vector.extract_strided_slice %33 {offsets = [0, 1, 1, 1, 0, 0], sizes = [4, 1, 4, 1, 8, 32], strides = [1, 1, 1, 1, 1, 1]} : vector<5x2x5x2x8x32xbf16> to vector<4x1x4x1x8x32xbf16>
    %85 = vector.shape_cast %84 : vector<4x1x4x1x8x32xbf16> to vector<4x4x8x32xbf16>
    %86 = vector.shape_cast %85 : vector<4x4x8x32xbf16> to vector<128x32xbf16>
    %c7 = arith.constant 7 : index
    %c0_45 = arith.constant 0 : index
    %c0_46 = arith.constant 0 : index
    %87 = vector.load %arg4[%c7, %c0_45, %c0_46] : memref<16x32x64xbf16, #tpu.memory_space<vmem>>, vector<1x32x64xbf16>
    %88 = vector.shape_cast %87 : vector<1x32x64xbf16> to vector<32x64xbf16>
    %cst_47 = arith.constant dense<0.000000e+00> : vector<128x64xf32>
    %89 = tpu.matmul %86, %88, %cst_47 {dimension_numbers = #tpu.dot_dimension_numbers<[1], [0], [0], [1], [0, 0, 1, 1], [], []>} : vector<128x32xbf16>, vector<32x64xbf16>, vector<128x64xf32> -> vector<128x64xf32>
    %90 = arith.addf %83, %89 : vector<128x64xf32>
    %91 = vector.extract_strided_slice %33 {offsets = [1, 0, 0, 0, 0, 0], sizes = [4, 1, 4, 1, 8, 32], strides = [1, 1, 1, 1, 1, 1]} : vector<5x2x5x2x8x32xbf16> to vector<4x1x4x1x8x32xbf16>
    %92 = vector.shape_cast %91 : vector<4x1x4x1x8x32xbf16> to vector<4x4x8x32xbf16>
    %93 = vector.shape_cast %92 : vector<4x4x8x32xbf16> to vector<128x32xbf16>
    %c8 = arith.constant 8 : index
    %c0_48 = arith.constant 0 : index
    %c0_49 = arith.constant 0 : index
    %94 = vector.load %arg4[%c8, %c0_48, %c0_49] : memref<16x32x64xbf16, #tpu.memory_space<vmem>>, vector<1x32x64xbf16>
    %95 = vector.shape_cast %94 : vector<1x32x64xbf16> to vector<32x64xbf16>
    %cst_50 = arith.constant dense<0.000000e+00> : vector<128x64xf32>
    %96 = tpu.matmul %93, %95, %cst_50 {dimension_numbers = #tpu.dot_dimension_numbers<[1], [0], [0], [1], [0, 0, 1, 1], [], []>} : vector<128x32xbf16>, vector<32x64xbf16>, vector<128x64xf32> -> vector<128x64xf32>
    %97 = arith.addf %90, %96 : vector<128x64xf32>
    %98 = vector.extract_strided_slice %33 {offsets = [1, 0, 0, 1, 0, 0], sizes = [4, 1, 4, 1, 8, 32], strides = [1, 1, 1, 1, 1, 1]} : vector<5x2x5x2x8x32xbf16> to vector<4x1x4x1x8x32xbf16>
    %99 = vector.shape_cast %98 : vector<4x1x4x1x8x32xbf16> to vector<4x4x8x32xbf16>
    %100 = vector.shape_cast %99 : vector<4x4x8x32xbf16> to vector<128x32xbf16>
    %c9 = arith.constant 9 : index
    %c0_51 = arith.constant 0 : index
    %c0_52 = arith.constant 0 : index
    %101 = vector.load %arg4[%c9, %c0_51, %c0_52] : memref<16x32x64xbf16, #tpu.memory_space<vmem>>, vector<1x32x64xbf16>
    %102 = vector.shape_cast %101 : vector<1x32x64xbf16> to vector<32x64xbf16>
    %cst_53 = arith.constant dense<0.000000e+00> : vector<128x64xf32>
    %103 = tpu.matmul %100, %102, %cst_53 {dimension_numbers = #tpu.dot_dimension_numbers<[1], [0], [0], [1], [0, 0, 1, 1], [], []>} : vector<128x32xbf16>, vector<32x64xbf16>, vector<128x64xf32> -> vector<128x64xf32>
    %104 = arith.addf %97, %103 : vector<128x64xf32>
    %105 = vector.extract_strided_slice %33 {offsets = [1, 0, 1, 0, 0, 0], sizes = [4, 1, 4, 1, 8, 32], strides = [1, 1, 1, 1, 1, 1]} : vector<5x2x5x2x8x32xbf16> to vector<4x1x4x1x8x32xbf16>
    %106 = vector.shape_cast %105 : vector<4x1x4x1x8x32xbf16> to vector<4x4x8x32xbf16>
    %107 = vector.shape_cast %106 : vector<4x4x8x32xbf16> to vector<128x32xbf16>
    %c10 = arith.constant 10 : index
    %c0_54 = arith.constant 0 : index
    %c0_55 = arith.constant 0 : index
    %108 = vector.load %arg4[%c10, %c0_54, %c0_55] : memref<16x32x64xbf16, #tpu.memory_space<vmem>>, vector<1x32x64xbf16>
    %109 = vector.shape_cast %108 : vector<1x32x64xbf16> to vector<32x64xbf16>
    %cst_56 = arith.constant dense<0.000000e+00> : vector<128x64xf32>
    %110 = tpu.matmul %107, %109, %cst_56 {dimension_numbers = #tpu.dot_dimension_numbers<[1], [0], [0], [1], [0, 0, 1, 1], [], []>} : vector<128x32xbf16>, vector<32x64xbf16>, vector<128x64xf32> -> vector<128x64xf32>
    %111 = arith.addf %104, %110 : vector<128x64xf32>
    %112 = vector.extract_strided_slice %33 {offsets = [1, 0, 1, 1, 0, 0], sizes = [4, 1, 4, 1, 8, 32], strides = [1, 1, 1, 1, 1, 1]} : vector<5x2x5x2x8x32xbf16> to vector<4x1x4x1x8x32xbf16>
    %113 = vector.shape_cast %112 : vector<4x1x4x1x8x32xbf16> to vector<4x4x8x32xbf16>
    %114 = vector.shape_cast %113 : vector<4x4x8x32xbf16> to vector<128x32xbf16>
    %c11 = arith.constant 11 : index
    %c0_57 = arith.constant 0 : index
    %c0_58 = arith.constant 0 : index
    %115 = vector.load %arg4[%c11, %c0_57, %c0_58] : memref<16x32x64xbf16, #tpu.memory_space<vmem>>, vector<1x32x64xbf16>
    %116 = vector.shape_cast %115 : vector<1x32x64xbf16> to vector<32x64xbf16>
    %cst_59 = arith.constant dense<0.000000e+00> : vector<128x64xf32>
    %117 = tpu.matmul %114, %116, %cst_59 {dimension_numbers = #tpu.dot_dimension_numbers<[1], [0], [0], [1], [0, 0, 1, 1], [], []>} : vector<128x32xbf16>, vector<32x64xbf16>, vector<128x64xf32> -> vector<128x64xf32>
    %118 = arith.addf %111, %117 : vector<128x64xf32>
    %119 = vector.extract_strided_slice %33 {offsets = [1, 1, 0, 0, 0, 0], sizes = [4, 1, 4, 1, 8, 32], strides = [1, 1, 1, 1, 1, 1]} : vector<5x2x5x2x8x32xbf16> to vector<4x1x4x1x8x32xbf16>
    %120 = vector.shape_cast %119 : vector<4x1x4x1x8x32xbf16> to vector<4x4x8x32xbf16>
    %121 = vector.shape_cast %120 : vector<4x4x8x32xbf16> to vector<128x32xbf16>
    %c12 = arith.constant 12 : index
    %c0_60 = arith.constant 0 : index
    %c0_61 = arith.constant 0 : index
    %122 = vector.load %arg4[%c12, %c0_60, %c0_61] : memref<16x32x64xbf16, #tpu.memory_space<vmem>>, vector<1x32x64xbf16>
    %123 = vector.shape_cast %122 : vector<1x32x64xbf16> to vector<32x64xbf16>
    %cst_62 = arith.constant dense<0.000000e+00> : vector<128x64xf32>
    %124 = tpu.matmul %121, %123, %cst_62 {dimension_numbers = #tpu.dot_dimension_numbers<[1], [0], [0], [1], [0, 0, 1, 1], [], []>} : vector<128x32xbf16>, vector<32x64xbf16>, vector<128x64xf32> -> vector<128x64xf32>
    %125 = arith.addf %118, %124 : vector<128x64xf32>
    %126 = vector.extract_strided_slice %33 {offsets = [1, 1, 0, 1, 0, 0], sizes = [4, 1, 4, 1, 8, 32], strides = [1, 1, 1, 1, 1, 1]} : vector<5x2x5x2x8x32xbf16> to vector<4x1x4x1x8x32xbf16>
    %127 = vector.shape_cast %126 : vector<4x1x4x1x8x32xbf16> to vector<4x4x8x32xbf16>
    %128 = vector.shape_cast %127 : vector<4x4x8x32xbf16> to vector<128x32xbf16>
    %c13 = arith.constant 13 : index
    %c0_63 = arith.constant 0 : index
    %c0_64 = arith.constant 0 : index
    %129 = vector.load %arg4[%c13, %c0_63, %c0_64] : memref<16x32x64xbf16, #tpu.memory_space<vmem>>, vector<1x32x64xbf16>
    %130 = vector.shape_cast %129 : vector<1x32x64xbf16> to vector<32x64xbf16>
    %cst_65 = arith.constant dense<0.000000e+00> : vector<128x64xf32>
    %131 = tpu.matmul %128, %130, %cst_65 {dimension_numbers = #tpu.dot_dimension_numbers<[1], [0], [0], [1], [0, 0, 1, 1], [], []>} : vector<128x32xbf16>, vector<32x64xbf16>, vector<128x64xf32> -> vector<128x64xf32>
    %132 = arith.addf %125, %131 : vector<128x64xf32>
    %133 = vector.extract_strided_slice %33 {offsets = [1, 1, 1, 0, 0, 0], sizes = [4, 1, 4, 1, 8, 32], strides = [1, 1, 1, 1, 1, 1]} : vector<5x2x5x2x8x32xbf16> to vector<4x1x4x1x8x32xbf16>
    %134 = vector.shape_cast %133 : vector<4x1x4x1x8x32xbf16> to vector<4x4x8x32xbf16>
    %135 = vector.shape_cast %134 : vector<4x4x8x32xbf16> to vector<128x32xbf16>
    %c14 = arith.constant 14 : index
    %c0_66 = arith.constant 0 : index
    %c0_67 = arith.constant 0 : index
    %136 = vector.load %arg4[%c14, %c0_66, %c0_67] : memref<16x32x64xbf16, #tpu.memory_space<vmem>>, vector<1x32x64xbf16>
    %137 = vector.shape_cast %136 : vector<1x32x64xbf16> to vector<32x64xbf16>
    %cst_68 = arith.constant dense<0.000000e+00> : vector<128x64xf32>
    %138 = tpu.matmul %135, %137, %cst_68 {dimension_numbers = #tpu.dot_dimension_numbers<[1], [0], [0], [1], [0, 0, 1, 1], [], []>} : vector<128x32xbf16>, vector<32x64xbf16>, vector<128x64xf32> -> vector<128x64xf32>
    %139 = arith.addf %132, %138 : vector<128x64xf32>
    %140 = vector.extract_strided_slice %33 {offsets = [1, 1, 1, 1, 0, 0], sizes = [4, 1, 4, 1, 8, 32], strides = [1, 1, 1, 1, 1, 1]} : vector<5x2x5x2x8x32xbf16> to vector<4x1x4x1x8x32xbf16>
    %141 = vector.shape_cast %140 : vector<4x1x4x1x8x32xbf16> to vector<4x4x8x32xbf16>
    %142 = vector.shape_cast %141 : vector<4x4x8x32xbf16> to vector<128x32xbf16>
    %c15 = arith.constant 15 : index
    %c0_69 = arith.constant 0 : index
    %c0_70 = arith.constant 0 : index
    %143 = vector.load %arg4[%c15, %c0_69, %c0_70] : memref<16x32x64xbf16, #tpu.memory_space<vmem>>, vector<1x32x64xbf16>
    %144 = vector.shape_cast %143 : vector<1x32x64xbf16> to vector<32x64xbf16>
    %cst_71 = arith.constant dense<0.000000e+00> : vector<128x64xf32>
    %145 = tpu.matmul %142, %144, %cst_71 {dimension_numbers = #tpu.dot_dimension_numbers<[1], [0], [0], [1], [0, 0, 1, 1], [], []>} : vector<128x32xbf16>, vector<32x64xbf16>, vector<128x64xf32> -> vector<128x64xf32>
    %146 = arith.addf %139, %145 : vector<128x64xf32>
    %c0_72 = arith.constant 0 : index
    %c0_73 = arith.constant 0 : index
    %147 = vector.load %arg5[%c0_72, %c0_73] : memref<1x64xf32, #tpu.memory_space<vmem>>, vector<1x64xf32>
    %148 = vector.broadcast %147 : vector<1x64xf32> to vector<128x64xf32>
    %149 = arith.addf %146, %148 : vector<128x64xf32>
    %cst_74 = arith.constant 0.000000e+00 : f32
    %150 = vector.broadcast %cst_74 : f32 to vector<128x64xf32>
    %151 = arith.maximumf %149, %150 : vector<128x64xf32>
    %152 = arith.truncf %151 : vector<128x64xf32> to vector<128x64xbf16>
    %153 = vector.shape_cast %152 : vector<128x64xbf16> to vector<4x4x8x64xbf16>
    %cst_75 = arith.constant 0.000000e+00 : f32
    %154 = vector.broadcast %cst_75 : f32 to vector<32x64xf32>
    %155 = vector.extract_strided_slice %153 {offsets = [0, 0, 0, 0], sizes = [2, 2, 8, 64], strides = [1, 1, 1, 1]} : vector<4x4x8x64xbf16> to vector<2x2x8x64xbf16>
    %156 = vector.shape_cast %155 : vector<2x2x8x64xbf16> to vector<32x64xbf16>
    %c0_76 = arith.constant 0 : index
    %c0_77 = arith.constant 0 : index
    %c0_78 = arith.constant 0 : index
    %157 = vector.load %arg6[%c0_76, %c0_77, %c0_78] : memref<9x64x64xbf16, #tpu.memory_space<vmem>>, vector<1x64x64xbf16>
    %158 = vector.shape_cast %157 : vector<1x64x64xbf16> to vector<64x64xbf16>
    %cst_79 = arith.constant dense<0.000000e+00> : vector<32x64xf32>
    %159 = tpu.matmul %156, %158, %cst_79 {dimension_numbers = #tpu.dot_dimension_numbers<[1], [0], [0], [1], [0, 0, 1, 1], [], []>} : vector<32x64xbf16>, vector<64x64xbf16>, vector<32x64xf32> -> vector<32x64xf32>
    %160 = arith.addf %154, %159 : vector<32x64xf32>
    %161 = vector.extract_strided_slice %153 {offsets = [0, 1, 0, 0], sizes = [2, 2, 8, 64], strides = [1, 1, 1, 1]} : vector<4x4x8x64xbf16> to vector<2x2x8x64xbf16>
    %162 = vector.shape_cast %161 : vector<2x2x8x64xbf16> to vector<32x64xbf16>
    %c1_80 = arith.constant 1 : index
    %c0_81 = arith.constant 0 : index
    %c0_82 = arith.constant 0 : index
    %163 = vector.load %arg6[%c1_80, %c0_81, %c0_82] : memref<9x64x64xbf16, #tpu.memory_space<vmem>>, vector<1x64x64xbf16>
    %164 = vector.shape_cast %163 : vector<1x64x64xbf16> to vector<64x64xbf16>
    %cst_83 = arith.constant dense<0.000000e+00> : vector<32x64xf32>
    %165 = tpu.matmul %162, %164, %cst_83 {dimension_numbers = #tpu.dot_dimension_numbers<[1], [0], [0], [1], [0, 0, 1, 1], [], []>} : vector<32x64xbf16>, vector<64x64xbf16>, vector<32x64xf32> -> vector<32x64xf32>
    %166 = arith.addf %160, %165 : vector<32x64xf32>
    %167 = vector.extract_strided_slice %153 {offsets = [0, 2, 0, 0], sizes = [2, 2, 8, 64], strides = [1, 1, 1, 1]} : vector<4x4x8x64xbf16> to vector<2x2x8x64xbf16>
    %168 = vector.shape_cast %167 : vector<2x2x8x64xbf16> to vector<32x64xbf16>
    %c2_84 = arith.constant 2 : index
    %c0_85 = arith.constant 0 : index
    %c0_86 = arith.constant 0 : index
    %169 = vector.load %arg6[%c2_84, %c0_85, %c0_86] : memref<9x64x64xbf16, #tpu.memory_space<vmem>>, vector<1x64x64xbf16>
    %170 = vector.shape_cast %169 : vector<1x64x64xbf16> to vector<64x64xbf16>
    %cst_87 = arith.constant dense<0.000000e+00> : vector<32x64xf32>
    %171 = tpu.matmul %168, %170, %cst_87 {dimension_numbers = #tpu.dot_dimension_numbers<[1], [0], [0], [1], [0, 0, 1, 1], [], []>} : vector<32x64xbf16>, vector<64x64xbf16>, vector<32x64xf32> -> vector<32x64xf32>
    %172 = arith.addf %166, %171 : vector<32x64xf32>
    %173 = vector.extract_strided_slice %153 {offsets = [1, 0, 0, 0], sizes = [2, 2, 8, 64], strides = [1, 1, 1, 1]} : vector<4x4x8x64xbf16> to vector<2x2x8x64xbf16>
    %174 = vector.shape_cast %173 : vector<2x2x8x64xbf16> to vector<32x64xbf16>
    %c3_88 = arith.constant 3 : index
    %c0_89 = arith.constant 0 : index
    %c0_90 = arith.constant 0 : index
    %175 = vector.load %arg6[%c3_88, %c0_89, %c0_90] : memref<9x64x64xbf16, #tpu.memory_space<vmem>>, vector<1x64x64xbf16>
    %176 = vector.shape_cast %175 : vector<1x64x64xbf16> to vector<64x64xbf16>
    %cst_91 = arith.constant dense<0.000000e+00> : vector<32x64xf32>
    %177 = tpu.matmul %174, %176, %cst_91 {dimension_numbers = #tpu.dot_dimension_numbers<[1], [0], [0], [1], [0, 0, 1, 1], [], []>} : vector<32x64xbf16>, vector<64x64xbf16>, vector<32x64xf32> -> vector<32x64xf32>
    %178 = arith.addf %172, %177 : vector<32x64xf32>
    %179 = vector.extract_strided_slice %153 {offsets = [1, 1, 0, 0], sizes = [2, 2, 8, 64], strides = [1, 1, 1, 1]} : vector<4x4x8x64xbf16> to vector<2x2x8x64xbf16>
    %180 = vector.shape_cast %179 : vector<2x2x8x64xbf16> to vector<32x64xbf16>
    %c4_92 = arith.constant 4 : index
    %c0_93 = arith.constant 0 : index
    %c0_94 = arith.constant 0 : index
    %181 = vector.load %arg6[%c4_92, %c0_93, %c0_94] : memref<9x64x64xbf16, #tpu.memory_space<vmem>>, vector<1x64x64xbf16>
    %182 = vector.shape_cast %181 : vector<1x64x64xbf16> to vector<64x64xbf16>
    %cst_95 = arith.constant dense<0.000000e+00> : vector<32x64xf32>
    %183 = tpu.matmul %180, %182, %cst_95 {dimension_numbers = #tpu.dot_dimension_numbers<[1], [0], [0], [1], [0, 0, 1, 1], [], []>} : vector<32x64xbf16>, vector<64x64xbf16>, vector<32x64xf32> -> vector<32x64xf32>
    %184 = arith.addf %178, %183 : vector<32x64xf32>
    %185 = vector.extract_strided_slice %153 {offsets = [1, 2, 0, 0], sizes = [2, 2, 8, 64], strides = [1, 1, 1, 1]} : vector<4x4x8x64xbf16> to vector<2x2x8x64xbf16>
    %186 = vector.shape_cast %185 : vector<2x2x8x64xbf16> to vector<32x64xbf16>
    %c5_96 = arith.constant 5 : index
    %c0_97 = arith.constant 0 : index
    %c0_98 = arith.constant 0 : index
    %187 = vector.load %arg6[%c5_96, %c0_97, %c0_98] : memref<9x64x64xbf16, #tpu.memory_space<vmem>>, vector<1x64x64xbf16>
    %188 = vector.shape_cast %187 : vector<1x64x64xbf16> to vector<64x64xbf16>
    %cst_99 = arith.constant dense<0.000000e+00> : vector<32x64xf32>
    %189 = tpu.matmul %186, %188, %cst_99 {dimension_numbers = #tpu.dot_dimension_numbers<[1], [0], [0], [1], [0, 0, 1, 1], [], []>} : vector<32x64xbf16>, vector<64x64xbf16>, vector<32x64xf32> -> vector<32x64xf32>
    %190 = arith.addf %184, %189 : vector<32x64xf32>
    %191 = vector.extract_strided_slice %153 {offsets = [2, 0, 0, 0], sizes = [2, 2, 8, 64], strides = [1, 1, 1, 1]} : vector<4x4x8x64xbf16> to vector<2x2x8x64xbf16>
    %192 = vector.shape_cast %191 : vector<2x2x8x64xbf16> to vector<32x64xbf16>
    %c6_100 = arith.constant 6 : index
    %c0_101 = arith.constant 0 : index
    %c0_102 = arith.constant 0 : index
    %193 = vector.load %arg6[%c6_100, %c0_101, %c0_102] : memref<9x64x64xbf16, #tpu.memory_space<vmem>>, vector<1x64x64xbf16>
    %194 = vector.shape_cast %193 : vector<1x64x64xbf16> to vector<64x64xbf16>
    %cst_103 = arith.constant dense<0.000000e+00> : vector<32x64xf32>
    %195 = tpu.matmul %192, %194, %cst_103 {dimension_numbers = #tpu.dot_dimension_numbers<[1], [0], [0], [1], [0, 0, 1, 1], [], []>} : vector<32x64xbf16>, vector<64x64xbf16>, vector<32x64xf32> -> vector<32x64xf32>
    %196 = arith.addf %190, %195 : vector<32x64xf32>
    %197 = vector.extract_strided_slice %153 {offsets = [2, 1, 0, 0], sizes = [2, 2, 8, 64], strides = [1, 1, 1, 1]} : vector<4x4x8x64xbf16> to vector<2x2x8x64xbf16>
    %198 = vector.shape_cast %197 : vector<2x2x8x64xbf16> to vector<32x64xbf16>
    %c7_104 = arith.constant 7 : index
    %c0_105 = arith.constant 0 : index
    %c0_106 = arith.constant 0 : index
    %199 = vector.load %arg6[%c7_104, %c0_105, %c0_106] : memref<9x64x64xbf16, #tpu.memory_space<vmem>>, vector<1x64x64xbf16>
    %200 = vector.shape_cast %199 : vector<1x64x64xbf16> to vector<64x64xbf16>
    %cst_107 = arith.constant dense<0.000000e+00> : vector<32x64xf32>
    %201 = tpu.matmul %198, %200, %cst_107 {dimension_numbers = #tpu.dot_dimension_numbers<[1], [0], [0], [1], [0, 0, 1, 1], [], []>} : vector<32x64xbf16>, vector<64x64xbf16>, vector<32x64xf32> -> vector<32x64xf32>
    %202 = arith.addf %196, %201 : vector<32x64xf32>
    %203 = vector.extract_strided_slice %153 {offsets = [2, 2, 0, 0], sizes = [2, 2, 8, 64], strides = [1, 1, 1, 1]} : vector<4x4x8x64xbf16> to vector<2x2x8x64xbf16>
    %204 = vector.shape_cast %203 : vector<2x2x8x64xbf16> to vector<32x64xbf16>
    %c8_108 = arith.constant 8 : index
    %c0_109 = arith.constant 0 : index
    %c0_110 = arith.constant 0 : index
    %205 = vector.load %arg6[%c8_108, %c0_109, %c0_110] : memref<9x64x64xbf16, #tpu.memory_space<vmem>>, vector<1x64x64xbf16>
    %206 = vector.shape_cast %205 : vector<1x64x64xbf16> to vector<64x64xbf16>
    %cst_111 = arith.constant dense<0.000000e+00> : vector<32x64xf32>
    %207 = tpu.matmul %204, %206, %cst_111 {dimension_numbers = #tpu.dot_dimension_numbers<[1], [0], [0], [1], [0, 0, 1, 1], [], []>} : vector<32x64xbf16>, vector<64x64xbf16>, vector<32x64xf32> -> vector<32x64xf32>
    %208 = arith.addf %202, %207 : vector<32x64xf32>
    %c0_112 = arith.constant 0 : index
    %c0_113 = arith.constant 0 : index
    %209 = vector.load %arg7[%c0_112, %c0_113] : memref<1x64xf32, #tpu.memory_space<vmem>>, vector<1x64xf32>
    %210 = vector.broadcast %209 : vector<1x64xf32> to vector<32x64xf32>
    %211 = arith.addf %208, %210 : vector<32x64xf32>
    %cst_114 = arith.constant 0.000000e+00 : f32
    %212 = vector.broadcast %cst_114 : f32 to vector<32x64xf32>
    %213 = arith.maximumf %211, %212 : vector<32x64xf32>
    %214 = arith.truncf %213 : vector<32x64xf32> to vector<32x64xbf16>
    %215 = vector.shape_cast %214 : vector<32x64xbf16> to vector<2x2x8x64xbf16>
    %cst_115 = arith.constant 0.000000e+00 : f32
    %216 = vector.broadcast %cst_115 : f32 to vector<8x512xf32>
    %217 = vector.extract_strided_slice %215 {offsets = [0, 0, 0, 0], sizes = [1, 1, 8, 64], strides = [1, 1, 1, 1]} : vector<2x2x8x64xbf16> to vector<1x1x8x64xbf16>
    %218 = vector.shape_cast %217 : vector<1x1x8x64xbf16> to vector<8x64xbf16>
    %c0_116 = arith.constant 0 : index
    %c0_117 = arith.constant 0 : index
    %c0_118 = arith.constant 0 : index
    %219 = vector.load %arg8[%c0_116, %c0_117, %c0_118] : memref<4x64x512xbf16, #tpu.memory_space<vmem>>, vector<1x64x512xbf16>
    %220 = vector.shape_cast %219 : vector<1x64x512xbf16> to vector<64x512xbf16>
    %cst_119 = arith.constant dense<0.000000e+00> : vector<8x512xf32>
    %221 = tpu.matmul %218, %220, %cst_119 {dimension_numbers = #tpu.dot_dimension_numbers<[1], [0], [0], [1], [0, 0, 1, 1], [], []>} : vector<8x64xbf16>, vector<64x512xbf16>, vector<8x512xf32> -> vector<8x512xf32>
    %222 = arith.addf %216, %221 : vector<8x512xf32>
    %223 = vector.extract_strided_slice %215 {offsets = [0, 1, 0, 0], sizes = [1, 1, 8, 64], strides = [1, 1, 1, 1]} : vector<2x2x8x64xbf16> to vector<1x1x8x64xbf16>
    %224 = vector.shape_cast %223 : vector<1x1x8x64xbf16> to vector<8x64xbf16>
    %c1_120 = arith.constant 1 : index
    %c0_121 = arith.constant 0 : index
    %c0_122 = arith.constant 0 : index
    %225 = vector.load %arg8[%c1_120, %c0_121, %c0_122] : memref<4x64x512xbf16, #tpu.memory_space<vmem>>, vector<1x64x512xbf16>
    %226 = vector.shape_cast %225 : vector<1x64x512xbf16> to vector<64x512xbf16>
    %cst_123 = arith.constant dense<0.000000e+00> : vector<8x512xf32>
    %227 = tpu.matmul %224, %226, %cst_123 {dimension_numbers = #tpu.dot_dimension_numbers<[1], [0], [0], [1], [0, 0, 1, 1], [], []>} : vector<8x64xbf16>, vector<64x512xbf16>, vector<8x512xf32> -> vector<8x512xf32>
    %228 = arith.addf %222, %227 : vector<8x512xf32>
    %229 = vector.extract_strided_slice %215 {offsets = [1, 0, 0, 0], sizes = [1, 1, 8, 64], strides = [1, 1, 1, 1]} : vector<2x2x8x64xbf16> to vector<1x1x8x64xbf16>
    %230 = vector.shape_cast %229 : vector<1x1x8x64xbf16> to vector<8x64xbf16>
    %c2_124 = arith.constant 2 : index
    %c0_125 = arith.constant 0 : index
    %c0_126 = arith.constant 0 : index
    %231 = vector.load %arg8[%c2_124, %c0_125, %c0_126] : memref<4x64x512xbf16, #tpu.memory_space<vmem>>, vector<1x64x512xbf16>
    %232 = vector.shape_cast %231 : vector<1x64x512xbf16> to vector<64x512xbf16>
    %cst_127 = arith.constant dense<0.000000e+00> : vector<8x512xf32>
    %233 = tpu.matmul %230, %232, %cst_127 {dimension_numbers = #tpu.dot_dimension_numbers<[1], [0], [0], [1], [0, 0, 1, 1], [], []>} : vector<8x64xbf16>, vector<64x512xbf16>, vector<8x512xf32> -> vector<8x512xf32>
    %234 = arith.addf %228, %233 : vector<8x512xf32>
    %235 = vector.extract_strided_slice %215 {offsets = [1, 1, 0, 0], sizes = [1, 1, 8, 64], strides = [1, 1, 1, 1]} : vector<2x2x8x64xbf16> to vector<1x1x8x64xbf16>
    %236 = vector.shape_cast %235 : vector<1x1x8x64xbf16> to vector<8x64xbf16>
    %c3_128 = arith.constant 3 : index
    %c0_129 = arith.constant 0 : index
    %c0_130 = arith.constant 0 : index
    %237 = vector.load %arg8[%c3_128, %c0_129, %c0_130] : memref<4x64x512xbf16, #tpu.memory_space<vmem>>, vector<1x64x512xbf16>
    %238 = vector.shape_cast %237 : vector<1x64x512xbf16> to vector<64x512xbf16>
    %cst_131 = arith.constant dense<0.000000e+00> : vector<8x512xf32>
    %239 = tpu.matmul %236, %238, %cst_131 {dimension_numbers = #tpu.dot_dimension_numbers<[1], [0], [0], [1], [0, 0, 1, 1], [], []>} : vector<8x64xbf16>, vector<64x512xbf16>, vector<8x512xf32> -> vector<8x512xf32>
    %240 = arith.addf %234, %239 : vector<8x512xf32>
    %c0_132 = arith.constant 0 : index
    %c0_133 = arith.constant 0 : index
    %241 = vector.load %arg9[%c0_132, %c0_133] : memref<1x512xf32, #tpu.memory_space<vmem>>, vector<1x512xf32>
    %242 = vector.broadcast %241 : vector<1x512xf32> to vector<8x512xf32>
    %243 = arith.addf %240, %242 : vector<8x512xf32>
    %cst_134 = arith.constant 0.000000e+00 : f32
    %244 = vector.broadcast %cst_134 : f32 to vector<8x512xf32>
    %245 = arith.maximumf %243, %244 : vector<8x512xf32>
    %246 = arith.truncf %245 : vector<8x512xf32> to vector<8x512xbf16>
    %c0_135 = arith.constant 0 : index
    %c0_136 = arith.constant 0 : index
    %247 = vector.load %arg10[%c0_135, %c0_136] : memref<512x128xbf16, #tpu.memory_space<vmem>>, vector<512x128xbf16>
    %cst_137 = arith.constant dense<0.000000e+00> : vector<8x128xf32>
    %248 = tpu.matmul %246, %247, %cst_137 {dimension_numbers = #tpu.dot_dimension_numbers<[1], [0], [0], [1], [0, 0, 1, 1], [], []>} : vector<8x512xbf16>, vector<512x128xbf16>, vector<8x128xf32> -> vector<8x128xf32>
    %c0_138 = arith.constant 0 : index
    %c0_139 = arith.constant 0 : index
    %249 = vector.load %arg11[%c0_138, %c0_139] : memref<1x128xf32, #tpu.memory_space<vmem>>, vector<1x128xf32>
    %250 = vector.broadcast %249 : vector<1x128xf32> to vector<8x128xf32>
    %251 = arith.addf %248, %250 : vector<8x128xf32>
    %c0_140 = arith.constant 0 : index
    %c0_141 = arith.constant 0 : index
    %252 = vector.load %arg12[%c0_140, %c0_141] : memref<8x128xf32, #tpu.memory_space<vmem>>, vector<8x128xf32>
    tpu.vector_store %arg12[%c0_140, %c0_141], %251 {strides = array<i32>} : memref<8x128xf32, #tpu.memory_space<vmem>>, vector<8x128xf32>,
    return
  }
  func.func @transform_0(%arg0: i32) -> (i32, i32, i32, i32) {
    %c0_i32 = arith.constant 0 : i32
    %c0_i32_0 = arith.constant 0 : i32
    %c0_i32_1 = arith.constant 0 : i32
    %c0_i32_2 = arith.constant 0 : i32
    return %c0_i32, %c0_i32_0, %arg0, %c0_i32_1 : i32, i32, i32, i32
  }
  func.func @transform_1(%arg0: i32) -> (i32, i32, i32) {
    %c0_i32 = arith.constant 0 : i32
    %c0_i32_0 = arith.constant 0 : i32
    %c0_i32_1 = arith.constant 0 : i32
    %c0_i32_2 = arith.constant 0 : i32
    return %c0_i32, %c0_i32_0, %c0_i32_1 : i32, i32, i32
  }
  func.func @transform_2(%arg0: i32) -> (i32, i32) {
    %c0_i32 = arith.constant 0 : i32
    %c0_i32_0 = arith.constant 0 : i32
    %c0_i32_1 = arith.constant 0 : i32
    return %c0_i32, %c0_i32_0 : i32, i32
  }
  func.func @transform_3(%arg0: i32) -> (i32, i32, i32) {
    %c0_i32 = arith.constant 0 : i32
    %c0_i32_0 = arith.constant 0 : i32
    %c0_i32_1 = arith.constant 0 : i32
    %c0_i32_2 = arith.constant 0 : i32
    return %c0_i32, %c0_i32_0, %c0_i32_1 : i32, i32, i32
  }
  func.func @transform_4(%arg0: i32) -> (i32, i32) {
    %c0_i32 = arith.constant 0 : i32
    %c0_i32_0 = arith.constant 0 : i32
    %c0_i32_1 = arith.constant 0 : i32
    return %c0_i32, %c0_i32_0 : i32, i32
  }
  func.func @transform_5(%arg0: i32) -> (i32, i32, i32) {
    %c0_i32 = arith.constant 0 : i32
    %c0_i32_0 = arith.constant 0 : i32
    %c0_i32_1 = arith.constant 0 : i32
    %c0_i32_2 = arith.constant 0 : i32
    return %c0_i32, %c0_i32_0, %c0_i32_1 : i32, i32, i32
  }
  func.func @transform_6(%arg0: i32) -> (i32, i32) {
    %c0_i32 = arith.constant 0 : i32
    %c0_i32_0 = arith.constant 0 : i32
    %c0_i32_1 = arith.constant 0 : i32
    return %c0_i32, %c0_i32_0 : i32, i32
  }
  func.func @transform_7(%arg0: i32) -> (i32, i32, i32) {
    %c0_i32 = arith.constant 0 : i32
    %c0_i32_0 = arith.constant 0 : i32
    %c0_i32_1 = arith.constant 0 : i32
    %c0_i32_2 = arith.constant 0 : i32
    return %c0_i32, %c0_i32_0, %c0_i32_1 : i32, i32, i32
  }
  func.func @transform_8(%arg0: i32) -> (i32, i32) {
    %c0_i32 = arith.constant 0 : i32
    %c0_i32_0 = arith.constant 0 : i32
    %c0_i32_1 = arith.constant 0 : i32
    return %c0_i32, %c0_i32_0 : i32, i32
  }
  func.func @transform_9(%arg0: i32) -> (i32, i32) {
    %c0_i32 = arith.constant 0 : i32
    %c0_i32_0 = arith.constant 0 : i32
    %c0_i32_1 = arith.constant 0 : i32
    return %c0_i32, %c0_i32_0 : i32, i32
  }
  func.func @transform_10(%arg0: i32) -> (i32, i32) {
    %c0_i32 = arith.constant 0 : i32
    %c0_i32_0 = arith.constant 0 : i32
    %c0_i32_1 = arith.constant 0 : i32
    return %c0_i32, %c0_i32_0 : i32, i32
  }
  func.func @transform_11(%arg0: i32) -> (i32, i32) {
    %c0_i32 = arith.constant 0 : i32
    %c0_i32_0 = arith.constant 0 : i32
    return %arg0, %c0_i32 : i32, i32
  }
}

</mosaic_0001>

<llo_original>
// kernel: _lambda_.1
$region0: #{_lambda_.1}
  #allocation0 [shape = 'u32[]', space=smem, size = 0x4, offset = 0x4, fixed_abs, tag = 'smem constant byte address 0x4 - core index']
  #allocation1 [shape = 'u32[144,128]{1,0:T(1,128)}', space=vmem, size = 0x12000, scoped, tag = 'internal scratch']
  %s0 = inlined_call_operand.vmem [shape: bf16[11,11,8,64], index: 0, kind: input, shape index: {}]
  %s1 = inlined_call_operand.vmem [shape: bf16[4,64,32], index: 1, kind: input, shape index: {}]
  %s2 = inlined_call_operand.vmem [shape: f32[1,32], index: 2, kind: input, shape index: {}]
  %s3 = inlined_call_operand.vmem [shape: bf16[16,32,64], index: 3, kind: input, shape index: {}]
  %s4 = inlined_call_operand.vmem [shape: f32[1,64], index: 4, kind: input, shape index: {}]
  %s5 = inlined_call_operand.vmem [shape: bf16[9,64,64], index: 5, kind: input, shape index: {}]
  %s6 = inlined_call_operand.vmem [shape: f32[1,64], index: 6, kind: input, shape index: {}]
  %s7 = inlined_call_operand.vmem [shape: bf16[4,64,512], index: 7, kind: input, shape index: {}]
  %s8 = inlined_call_operand.vmem [shape: f32[1,512], index: 8, kind: input, shape index: {}]
  %s9 = inlined_call_operand.vmem [shape: bf16[512,128], index: 9, kind: input, shape index: {}]
  %s10 = inlined_call_operand.vmem [shape: f32[1,128], index: 10, kind: input, shape index: {}]
  %s11 = inlined_call_operand.vmem [shape: f32[8,128], index: 11, kind: output, shape index: {}]
  %s12 = sld [smem:[#allocation0]]
  $region54: #{_lambda_.1} parent=0
    _
  %s14 = ssub.s32 1, %s12
  %s15 = scalar_select 0, %s14, %s12
  // Predicated region
  $region2: #{_lambda_.1} parent=0 // pred_check
    _
  $region3: #{_lambda_.1} parent=0 // pred_check_branch
    %17 = sbr.rel (0) target = $region5
  $region4: #{_lambda_.1} parent=0 // pred_region
    _
  $region5: #{_lambda_.1} parent=0 // pred_fallthru
    _
  // Predicated region
  $region6: #{_lambda_.1} parent=0 // pred_check
    _
  $region7: #{_lambda_.1} parent=0 // pred_check_branch
    %19 = sbr.rel (0) target = $region9
  $region8: #{_lambda_.1} parent=0 // pred_region
    _
  $region9: #{_lambda_.1} parent=0 // pred_fallthru
    _
  // Predicated region
  $region10: #{_lambda_.1} parent=0 // pred_check
    _
  $region11: #{_lambda_.1} parent=0 // pred_check_branch
    %21 = sbr.rel (0) target = $region13
  $region12: #{_lambda_.1} parent=0 // pred_region
    _
  $region13: #{_lambda_.1} parent=0 // pred_fallthru
    _
  // Predicated region
  $region14: #{_lambda_.1} parent=0 // pred_check
    _
  $region15: #{_lambda_.1} parent=0 // pred_check_branch
    %23 = sbr.rel (0) target = $region17
  $region16: #{_lambda_.1} parent=0 // pred_region
    _
  $region17: #{_lambda_.1} parent=0 // pred_fallthru
    _
  // Predicated region
  $region18: #{_lambda_.1} parent=0 // pred_check
    _
  $region19: #{_lambda_.1} parent=0 // pred_check_branch
    %25 = sbr.rel (0) target = $region21
  $region20: #{_lambda_.1} parent=0 // pred_region
    _
  $region21: #{_lambda_.1} parent=0 // pred_fallthru
    _
  // Predicated region
  $region22: #{_lambda_.1} parent=0 // pred_check
    _
  $region23: #{_lambda_.1} parent=0 // pred_check_branch
    %27 = sbr.rel (0) target = $region25
  $region24: #{_lambda_.1} parent=0 // pred_region
    _
  $region25: #{_lambda_.1} parent=0 // pred_fallthru
    _
  // Predicated region
  $region26: #{_lambda_.1} parent=0 // pred_check
    _
  $region27: #{_lambda_.1} parent=0 // pred_check_branch
    %29 = sbr.rel (0) target = $region29
  $region28: #{_lambda_.1} parent=0 // pred_region
    _
  $region29: #{_lambda_.1} parent=0 // pred_fallthru
    _
  // Predicated region
  $region30: #{_lambda_.1} parent=0 // pred_check
    _
  $region31: #{_lambda_.1} parent=0 // pred_check_branch
    %31 = sbr.rel (0) target = $region33
  $region32: #{_lambda_.1} parent=0 // pred_region
    _
  $region33: #{_lambda_.1} parent=0 // pred_fallthru
    _
  // Predicated region
  $region34: #{_lambda_.1} parent=0 // pred_check
    _
  $region35: #{_lambda_.1} parent=0 // pred_check_branch
    %33 = sbr.rel (0) target = $region37
  $region36: #{_lambda_.1} parent=0 // pred_region
    _
  $region37: #{_lambda_.1} parent=0 // pred_fallthru
    _
  // Predicated region
  $region38: #{_lambda_.1} parent=0 // pred_check
    _
  $region39: #{_lambda_.1} parent=0 // pred_check_branch
    %35 = sbr.rel (0) target = $region41
  $region40: #{_lambda_.1} parent=0 // pred_region
    _
  $region41: #{_lambda_.1} parent=0 // pred_fallthru
    _
  // Predicated region
  $region42: #{_lambda_.1} parent=0 // pred_check
    _
  $region43: #{_lambda_.1} parent=0 // pred_check_branch
    %37 = sbr.rel (0) target = $region45
  $region44: #{_lambda_.1} parent=0 // pred_region
    _
  $region45: #{_lambda_.1} parent=0 // pred_fallthru
    _
  %v39 = vld [vmem:[%s0] sm:$0xf]
  %v40 = vld [vmem:[%s0 + $0x4] sm:$0xf]
  %v41 = vld [vmem:[%s0 + $0x8] sm:$0xf]
  %v42 = vld [vmem:[%s0 + $0xc] sm:$0xf]
  %v43 = vld [vmem:[%s0 + $0x10] sm:$0xf]
  %v44 = vld [vmem:[%s0 + $0x14] sm:$0xf]
  %v45 = vld [vmem:[%s0 + $0x18] sm:$0xf]
  %v46 = vld [vmem:[%s0 + $0x1c] sm:$0xf]
  %v47 = vld [vmem:[%s0 + $0x20] sm:$0xf]
  %v48 = vld [vmem:[%s0 + $0x24] sm:$0xf]
  %v49 = vld [vmem:[%s0 + $0x28] sm:$0xf]
  %v50 = vld [vmem:[%s0 + $0x2c] sm:$0xf]
  %v51 = vld [vmem:[%s0 + $0x30] sm:$0xf]
  %v52 = vld [vmem:[%s0 + $0x34] sm:$0xf]
  %v53 = vld [vmem:[%s0 + $0x38] sm:$0xf]
  %v54 = vld [vmem:[%s0 + $0x3c] sm:$0xf]
  %v55 = vld [vmem:[%s0 + $0x40] sm:$0xf]
  %v56 = vld [vmem:[%s0 + $0x44] sm:$0xf]
  %v57 = vld [vmem:[%s0 + $0x48] sm:$0xf]
  %v58 = vld [vmem:[%s0 + $0x4c] sm:$0xf]
  %v59 = vld [vmem:[%s0 + $0x50] sm:$0xf]
  %v60 = vld [vmem:[%s0 + $0x54] sm:$0xf]
  %v61 = vld [vmem:[%s0 + $0x58] sm:$0xf]
  %v62 = vld [vmem:[%s0 + $0x5c] sm:$0xf]
  %v63 = vld [vmem:[%s0 + $0x60] sm:$0xf]
  %v64 = vld [vmem:[%s0 + $0x64] sm:$0xf]
  %v65 = vld [vmem:[%s0 + $0x68] sm:$0xf]
  %v66 = vld [vmem:[%s0 + $0x6c] sm:$0xf]
  %v67 = vld [vmem:[%s0 + $0x70] sm:$0xf]
  %v68 = vld [vmem:[%s0 + $0x74] sm:$0xf]
  %v69 = vld [vmem:[%s0 + $0x78] sm:$0xf]
  %v70 = vld [vmem:[%s0 + $0x7c] sm:$0xf]
  %v71 = vld [vmem:[%s0 + $0x80] sm:$0xf]
  %v72 = vld [vmem:[%s0 + $0x84] sm:$0xf]
  %v73 = vld [vmem:[%s0 + $0x88] sm:$0xf]
  %v74 = vld [vmem:[%s0 + $0x8c] sm:$0xf]
  %v75 = vld [vmem:[%s0 + $0x90] sm:$0xf]
  %v76 = vld [vmem:[%s0 + $0x94] sm:$0xf]
  %v77 = vld [vmem:[%s0 + $0x98] sm:$0xf]
  %v78 = vld [vmem:[%s0 + $0x9c] sm:$0xf]
  %v79 = vld [vmem:[%s0 + $0xa0] sm:$0xf]
  %v80 = vld [vmem:[%s0 + $0xa4] sm:$0xf]
  %v81 = vld [vmem:[%s0 + $0xa8] sm:$0xf]
  %v82 = vld [vmem:[%s0 + $0xac] sm:$0xf]
  %v83 = vld [vmem:[%s0 + $0xb0] sm:$0xf]
  %v84 = vld [vmem:[%s0 + $0xb4] sm:$0xf]
  %v85 = vld [vmem:[%s0 + $0xb8] sm:$0xf]
  %v86 = vld [vmem:[%s0 + $0xbc] sm:$0xf]
  %v87 = vld [vmem:[%s0 + $0xc0] sm:$0xf]
  %v88 = vld [vmem:[%s0 + $0xc4] sm:$0xf]
  %v89 = vld [vmem:[%s0 + $0xc8] sm:$0xf]
  %v90 = vld [vmem:[%s0 + $0xcc] sm:$0xf]
  %v91 = vld [vmem:[%s0 + $0xd0] sm:$0xf]
  %v92 = vld [vmem:[%s0 + $0xd4] sm:$0xf]
  %v93 = vld [vmem:[%s0 + $0xd8] sm:$0xf]
  %v94 = vld [vmem:[%s0 + $0xdc] sm:$0xf]
  %v95 = vld [vmem:[%s0 + $0xe0] sm:$0xf]
  %v96 = vld [vmem:[%s0 + $0xe4] sm:$0xf]
  %v97 = vld [vmem:[%s0 + $0xe8] sm:$0xf]
  %v98 = vld [vmem:[%s0 + $0xec] sm:$0xf]
  %v99 = vld [vmem:[%s0 + $0xf0] sm:$0xf]
  %v100 = vld [vmem:[%s0 + $0xf4] sm:$0xf]
  %v101 = vld [vmem:[%s0 + $0xf8] sm:$0xf]
  %v102 = vld [vmem:[%s0 + $0xfc] sm:$0xf]
  %v103 = vld [vmem:[%s0 + $0x100] sm:$0xf]
  %v104 = vld [vmem:[%s0 + $0x104] sm:$0xf]
  %v105 = vld [vmem:[%s0 + $0x108] sm:$0xf]
  %v106 = vld [vmem:[%s0 + $0x10c] sm:$0xf]
  %v107 = vld [vmem:[%s0 + $0x110] sm:$0xf]
  %v108 = vld [vmem:[%s0 + $0x114] sm:$0xf]
  %v109 = vld [vmem:[%s0 + $0x118] sm:$0xf]
  %v110 = vld [vmem:[%s0 + $0x11c] sm:$0xf]
  %v111 = vld [vmem:[%s0 + $0x120] sm:$0xf]
  %v112 = vld [vmem:[%s0 + $0x124] sm:$0xf]
  %v113 = vld [vmem:[%s0 + $0x128] sm:$0xf]
  %v114 = vld [vmem:[%s0 + $0x12c] sm:$0xf]
  %v115 = vld [vmem:[%s0 + $0x130] sm:$0xf]
  %v116 = vld [vmem:[%s0 + $0x134] sm:$0xf]
  %v117 = vld [vmem:[%s0 + $0x138] sm:$0xf]
  %v118 = vld [vmem:[%s0 + $0x13c] sm:$0xf]
  %v119 = vld [vmem:[%s0 + $0x140] sm:$0xf]
  %v120 = vld [vmem:[%s0 + $0x144] sm:$0xf]
  %v121 = vld [vmem:[%s0 + $0x148] sm:$0xf]
  %v122 = vld [vmem:[%s0 + $0x14c] sm:$0xf]
  %v123 = vld [vmem:[%s0 + $0x150] sm:$0xf]
  %v124 = vld [vmem:[%s0 + $0x154] sm:$0xf]
  %v125 = vld [vmem:[%s0 + $0x158] sm:$0xf]
  %v126 = vld [vmem:[%s0 + $0x15c] sm:$0xf]
  %v127 = vld [vmem:[%s0 + $0x160] sm:$0xf]
  %v128 = vld [vmem:[%s0 + $0x164] sm:$0xf]
  %v129 = vld [vmem:[%s0 + $0x168] sm:$0xf]
  %v130 = vld [vmem:[%s0 + $0x16c] sm:$0xf]
  %v131 = vld [vmem:[%s0 + $0x170] sm:$0xf]
  %v132 = vld [vmem:[%s0 + $0x174] sm:$0xf]
  %v133 = vld [vmem:[%s0 + $0x178] sm:$0xf]
  %v134 = vld [vmem:[%s0 + $0x17c] sm:$0xf]
  %v135 = vld [vmem:[%s0 + $0x180] sm:$0xf]
  %v136 = vld [vmem:[%s0 + $0x184] sm:$0xf]
  %v137 = vld [vmem:[%s0 + $0x188] sm:$0xf]
  %v138 = vld [vmem:[%s0 + $0x18c] sm:$0xf]
  %v139 = vld [vmem:[%s0 + $0x190] sm:$0xf]
  %v140 = vld [vmem:[%s0 + $0x194] sm:$0xf]
  %v141 = vld [vmem:[%s0 + $0x198] sm:$0xf]
  %v142 = vld [vmem:[%s0 + $0x19c] sm:$0xf]
  %v143 = vld [vmem:[%s0 + $0x1a0] sm:$0xf]
  %v144 = vld [vmem:[%s0 + $0x1a4] sm:$0xf]
  %v145 = vld [vmem:[%s0 + $0x1a8] sm:$0xf]
  %v146 = vld [vmem:[%s0 + $0x1ac] sm:$0xf]
  %v147 = vld [vmem:[%s0 + $0x1b0] sm:$0xf]
  %v148 = vld [vmem:[%s0 + $0x1b4] sm:$0xf]
  %v149 = vld [vmem:[%s0 + $0x1b8] sm:$0xf]
  %v150 = vld [vmem:[%s0 + $0x1bc] sm:$0xf]
  %v151 = vld [vmem:[%s0 + $0x1c0] sm:$0xf]
  %v152 = vld [vmem:[%s0 + $0x1c4] sm:$0xf]
  %v153 = vld [vmem:[%s0 + $0x1c8] sm:$0xf]
  %v154 = vld [vmem:[%s0 + $0x1cc] sm:$0xf]
  %v155 = vld [vmem:[%s0 + $0x1d0] sm:$0xf]
  %v156 = vld [vmem:[%s0 + $0x1d4] sm:$0xf]
  %v157 = vld [vmem:[%s0 + $0x1d8] sm:$0xf]
  %v158 = vld [vmem:[%s0 + $0x1dc] sm:$0xf]
  %v159 = vld [vmem:[%s0 + $0x1e0] sm:$0xf]
  %v160 = vld [vmem:[%s1] sm:$0xf]
  %v161 = vld [vmem:[%s1 + $0x4] sm:$0xf]
  %v162 = vld [vmem:[%s1 + $0x8] sm:$0xf]
  %v163 = vld [vmem:[%s1 + $0xc] sm:$0xf]
  %v164 = vld [vmem:[%s1 + $0x10] sm:$0xf]
  %v165 = vld [vmem:[%s1 + $0x14] sm:$0xf]
  %v166 = vld [vmem:[%s1 + $0x18] sm:$0xf]
  %v167 = vld [vmem:[%s1 + $0x1c] sm:$0xf]
  %s168 = scalar_lea.vmem %s1, 32
  %v169 = vld [vmem:[%s168] sm:$0xf]
  %v170 = vld [vmem:[%s168 + $0x4] sm:$0xf]
  %v171 = vld [vmem:[%s168 + $0x8] sm:$0xf]
  %v172 = vld [vmem:[%s168 + $0xc] sm:$0xf]
  %v173 = vld [vmem:[%s168 + $0x10] sm:$0xf]
  %v174 = vld [vmem:[%s168 + $0x14] sm:$0xf]
  %v175 = vld [vmem:[%s168 + $0x18] sm:$0xf]
  %v176 = vld [vmem:[%s168 + $0x1c] sm:$0xf]
  %v277 = vunpack.c.l.b16 %v40
  %v278 = vunpack.c.l.b16 %v41
  %v279 = vunpack.c.l.b16 %v42
  %v280 = vunpack.c.l.b16 %v43
  %v281 = vunpack.c.l.b16 %v44
  %v282 = vunpack.c.l.b16 %v45
  %v283 = vunpack.c.l.b16 %v46
  %v284 = vunpack.c.l.b16 %v47
  %v285 = vunpack.c.l.b16 %v48
  %v286 = vunpack.c.l.b16 %v49
  %v287 = vunpack.c.l.b16 %v51
  %v288 = vunpack.c.l.b16 %v52
  %v289 = vunpack.c.l.b16 %v53
  %v290 = vunpack.c.l.b16 %v54
  %v291 = vunpack.c.l.b16 %v55
  %v292 = vunpack.c.l.b16 %v56
  %v293 = vunpack.c.l.b16 %v57
  %v294 = vunpack.c.l.b16 %v58
  %v295 = vunpack.c.l.b16 %v59
  %v296 = vunpack.c.l.b16 %v60
  %v297 = vunpack.c.l.b16 %v62
  %v298 = vunpack.c.l.b16 %v63
  %v299 = vunpack.c.l.b16 %v64
  %v300 = vunpack.c.l.b16 %v65
  %v301 = vunpack.c.l.b16 %v66
  %v302 = vunpack.c.l.b16 %v67
  %v303 = vunpack.c.l.b16 %v68
  %v304 = vunpack.c.l.b16 %v69
  %v305 = vunpack.c.l.b16 %v70
  %v306 = vunpack.c.l.b16 %v71
  %v307 = vunpack.c.l.b16 %v73
  %v308 = vunpack.c.l.b16 %v74
  %v309 = vunpack.c.l.b16 %v75
  %v310 = vunpack.c.l.b16 %v76
  %v311 = vunpack.c.l.b16 %v77
  %v312 = vunpack.c.l.b16 %v78
  %v313 = vunpack.c.l.b16 %v79
  %v314 = vunpack.c.l.b16 %v80
  %v315 = vunpack.c.l.b16 %v81
  %v316 = vunpack.c.l.b16 %v82
  %v317 = vunpack.c.l.b16 %v84
  %v318 = vunpack.c.l.b16 %v85
  %v319 = vunpack.c.l.b16 %v86
  %v320 = vunpack.c.l.b16 %v87
  %v321 = vunpack.c.l.b16 %v88
  %v322 = vunpack.c.l.b16 %v89
  %v323 = vunpack.c.l.b16 %v90
  %v324 = vunpack.c.l.b16 %v91
  %v325 = vunpack.c.l.b16 %v92
  %v326 = vunpack.c.l.b16 %v93
  %v327 = vunpack.c.l.b16 %v95
  %v328 = vunpack.c.l.b16 %v96
  %v329 = vunpack.c.l.b16 %v97
  %v330 = vunpack.c.l.b16 %v98
  %v331 = vunpack.c.l.b16 %v99
  %v332 = vunpack.c.l.b16 %v100
  %v333 = vunpack.c.l.b16 %v101
  %v334 = vunpack.c.l.b16 %v102
  %v335 = vunpack.c.l.b16 %v103
  %v336 = vunpack.c.l.b16 %v104
  %v337 = vunpack.c.l.b16 %v106
  %v338 = vunpack.c.l.b16 %v107
  %v339 = vunpack.c.l.b16 %v108
  %v340 = vunpack.c.l.b16 %v109
  %v341 = vunpack.c.l.b16 %v110
  %v342 = vunpack.c.l.b16 %v111
  %v343 = vunpack.c.l.b16 %v112
  %v344 = vunpack.c.l.b16 %v113
  %v345 = vunpack.c.l.b16 %v114
  %v346 = vunpack.c.l.b16 %v115
  %v347 = vunpack.c.l.b16 %v117
  %v348 = vunpack.c.l.b16 %v118
  %v349 = vunpack.c.l.b16 %v119
  %v350 = vunpack.c.l.b16 %v120
  %v351 = vunpack.c.l.b16 %v121
  %v352 = vunpack.c.l.b16 %v122
  %v353 = vunpack.c.l.b16 %v123
  %v354 = vunpack.c.l.b16 %v124
  %v355 = vunpack.c.l.b16 %v125
  %v356 = vunpack.c.l.b16 %v126
  %v357 = vunpack.c.l.b16 %v128
  %v358 = vunpack.c.l.b16 %v129
  %v359 = vunpack.c.l.b16 %v130
  %v360 = vunpack.c.l.b16 %v131
  %v361 = vunpack.c.l.b16 %v132
  %v362 = vunpack.c.l.b16 %v133
  %v363 = vunpack.c.l.b16 %v134
  %v364 = vunpack.c.l.b16 %v135
  %v365 = vunpack.c.l.b16 %v136
  %v366 = vunpack.c.l.b16 %v137
  %v367 = vunpack.c.l.b16 %v139
  %v368 = vunpack.c.l.b16 %v140
  %v369 = vunpack.c.l.b16 %v141
  %v370 = vunpack.c.l.b16 %v142
  %v371 = vunpack.c.l.b16 %v143
  %v372 = vunpack.c.l.b16 %v144
  %v373 = vunpack.c.l.b16 %v145
  %v374 = vunpack.c.l.b16 %v146
  %v375 = vunpack.c.l.b16 %v147
  %v376 = vunpack.c.l.b16 %v148
  %v377 = vpack.c.b16 %v278, %v277
  %v378 = vpack.c.b16 %v280, %v279
  %v379 = vpack.c.b16 %v282, %v281
  %v380 = vpack.c.b16 %v284, %v283
  %v381 = vpack.c.b16 %v286, %v285
  %v382 = vpack.c.b16 %v288, %v287
  %v383 = vpack.c.b16 %v290, %v289
  %v384 = vpack.c.b16 %v292, %v291
  %v385 = vpack.c.b16 %v294, %v293
  %v386 = vpack.c.b16 %v296, %v295
  %v387 = vpack.c.b16 %v298, %v297
  %v388 = vpack.c.b16 %v300, %v299
  %v389 = vpack.c.b16 %v302, %v301
  %v390 = vpack.c.b16 %v304, %v303
  %v391 = vpack.c.b16 %v306, %v305
  %v392 = vpack.c.b16 %v308, %v307
  %v393 = vpack.c.b16 %v310, %v309
  %v394 = vpack.c.b16 %v312, %v311
  %v395 = vpack.c.b16 %v314, %v313
  %v396 = vpack.c.b16 %v316, %v315
  %v397 = vpack.c.b16 %v318, %v317
  %v398 = vpack.c.b16 %v320, %v319
  %v399 = vpack.c.b16 %v322, %v321
  %v400 = vpack.c.b16 %v324, %v323
  %v401 = vpack.c.b16 %v326, %v325
  %v402 = vpack.c.b16 %v328, %v327
  %v403 = vpack.c.b16 %v330, %v329
  %v404 = vpack.c.b16 %v332, %v331
  %v405 = vpack.c.b16 %v334, %v333
  %v406 = vpack.c.b16 %v336, %v335
  %v407 = vpack.c.b16 %v338, %v337
  %v408 = vpack.c.b16 %v340, %v339
  %v409 = vpack.c.b16 %v342, %v341
  %v410 = vpack.c.b16 %v344, %v343
  %v411 = vpack.c.b16 %v346, %v345
  %v412 = vpack.c.b16 %v348, %v347
  %v413 = vpack.c.b16 %v350, %v349
  %v414 = vpack.c.b16 %v352, %v351
  %v415 = vpack.c.b16 %v354, %v353
  %v416 = vpack.c.b16 %v356, %v355
  %v417 = vpack.c.b16 %v358, %v357
  %v418 = vpack.c.b16 %v360, %v359
  %v419 = vpack.c.b16 %v362, %v361
  %v420 = vpack.c.b16 %v364, %v363
  %v421 = vpack.c.b16 %v366, %v365
  %v422 = vpack.c.b16 %v368, %v367
  %v423 = vpack.c.b16 %v370, %v369
  %v424 = vpack.c.b16 %v372, %v371
  %v425 = vpack.c.b16 %v374, %v373
  %v426 = vpack.c.b16 %v376, %v375
  %v435 = vunpack.c.l.b16 %v169
  %v436 = vunpack.c.l.b16 %v170
  %v437 = vunpack.c.l.b16 %v171
  %v438 = vunpack.c.l.b16 %v172
  %v439 = vunpack.c.l.b16 %v173
  %v440 = vunpack.c.l.b16 %v174
  %v441 = vunpack.c.l.b16 %v175
  %v442 = vunpack.c.l.b16 %v176
  %v443 = vpack.c.b16 %v436, %v435
  %v444 = vpack.c.b16 %v438, %v437
  %v445 = vpack.c.b16 %v440, %v439
  %v446 = vpack.c.b16 %v442, %v441
  %vm451 = vcmask 523264
  %v453 = vsel %vm451, %v377, 0
  %v456 = vsel %vm451, %v378, 0
  %v459 = vsel %vm451, %v379, 0
  %v462 = vsel %vm451, %v380, 0
  %v465 = vsel %vm451, %v381, 0
  %v468 = vsel %vm451, %v382, 0
  %v471 = vsel %vm451, %v383, 0
  %v474 = vsel %vm451, %v384, 0
  %v477 = vsel %vm451, %v385, 0
  %v480 = vsel %vm451, %v386, 0
  %v483 = vsel %vm451, %v387, 0
  %v486 = vsel %vm451, %v388, 0
  %v489 = vsel %vm451, %v389, 0
  %v492 = vsel %vm451, %v390, 0
  %v495 = vsel %vm451, %v391, 0
  %v498 = vsel %vm451, %v392, 0
  %v501 = vsel %vm451, %v393, 0
  %v504 = vsel %vm451, %v394, 0
  %v507 = vsel %vm451, %v395, 0
  %v510 = vsel %vm451, %v396, 0
  %v513 = vsel %vm451, %v397, 0
  %v516 = vsel %vm451, %v398, 0
  %v519 = vsel %vm451, %v399, 0
  %v522 = vsel %vm451, %v400, 0
  %v525 = vsel %vm451, %v401, 0
  %v528 = vsel %vm451, %v402, 0
  %v531 = vsel %vm451, %v403, 0
  %v534 = vsel %vm451, %v404, 0
  %v537 = vsel %vm451, %v405, 0
  %v540 = vsel %vm451, %v406, 0
  %v543 = vsel %vm451, %v407, 0
  %v546 = vsel %vm451, %v408, 0
  %v549 = vsel %vm451, %v409, 0
  %v552 = vsel %vm451, %v410, 0
  %v555 = vsel %vm451, %v411, 0
  %v558 = vsel %vm451, %v412, 0
  %v561 = vsel %vm451, %v413, 0
  %v564 = vsel %vm451, %v414, 0
  %v567 = vsel %vm451, %v415, 0
  %v570 = vsel %vm451, %v416, 0
  %v573 = vsel %vm451, %v417, 0
  %v576 = vsel %vm451, %v418, 0
  %v579 = vsel %vm451, %v419, 0
  %v582 = vsel %vm451, %v420, 0
  %v585 = vsel %vm451, %v421, 0
  %v588 = vsel %vm451, %v422, 0
  %v591 = vsel %vm451, %v423, 0
  %v594 = vsel %vm451, %v424, 0
  %v597 = vsel %vm451, %v425, 0
  %v600 = vsel %vm451, %v426, 0
  %602 = vmatprep.subr.bf16.mxu0 0
  %603 = vmatpush1.bf16.msra.mxu0 0
  %604 = vmatprep.subr.bf16.mxu0 0
  %605 = vmatpush1.bf16.msra.mxu0 0
  %606 = vmatprep.subr.bf16.mxu0 0
  %607 = vmatpush1.bf16.msra.mxu0 0
  %608 = vmatprep.subr.bf16.mxu0 0
  %609 = vmatpush1.bf16.msra.mxu0 0
  %610 = vmatprep.subr.bf16.mxu0 0
  %611 = vmatpush1.bf16.msra.mxu0 %v446
  %612 = vmatprep.subr.bf16.mxu0 0
  %613 = vmatpush1.bf16.msra.mxu0 %v445
  %614 = vmatprep.subr.bf16.mxu0 0
  %615 = vmatpush1.bf16.msra.mxu0 %v444
  %616 = vmatprep.subr.bf16.mxu0 0
  %617 = vmatpush1.bf16.msra.mxu0 %v443
  %618 = vmatprep.subr.bf16.mxu0 0
  %619 = vmatpush2.bf16.msra.mxu0 0
  %620 = vmatprep.subr.bf16.mxu0 0
  %621 = vmatpush2.bf16.msra.mxu0 0
  %622 = vmatprep.subr.bf16.mxu0 0
  %623 = vmatpush2.bf16.msra.mxu0 0
  %624 = vmatprep.subr.bf16.mxu0 0
  %625 = vmatpush2.bf16.msra.mxu0 0
  %626 = vmatprep.subr.bf16.mxu0 0
  %627 = vmatpush2.bf16.msra.mxu0 0
  %628 = vmatprep.subr.bf16.mxu0 0
  %629 = vmatpush2.bf16.msra.mxu0 0
  %630 = vmatprep.subr.bf16.mxu0 0
  %631 = vmatpush2.bf16.msra.mxu0 0
  %632 = vmatprep.subr.bf16.mxu0 0
  %633 = vmatpush2.bf16.msra.mxu0 0
  %634 = vmatprep.mubr.bf16.mxu0 0
  %635 = vmatmul.mubr.bf16.gmra.mxu0 %v453
  %v636 = vpop.f32.mrf.mxu0
  %v637 = vadd.f32 0.0, %v636
  %v638 = vpop.f32.mrf.mxu0
  %v639 = vpop.f32.mrf.mxu0
  %v640 = vadd.f32 0.0, %v639
  %v641 = vpop.f32.mrf.mxu0
  %642 = vmatprep.mubr.bf16.mxu0 0
  %643 = vmatmul.mubr.bf16.gmra.mxu0 %v456
  %v644 = vpop.f32.mrf.mxu0
  %v645 = vadd.f32 0.0, %v644
  %v646 = vpop.f32.mrf.mxu0
  %v647 = vpop.f32.mrf.mxu0
  %v648 = vadd.f32 0.0, %v647
  %v649 = vpop.f32.mrf.mxu0
  %650 = vmatprep.mubr.bf16.mxu0 0
  %651 = vmatmul.mubr.bf16.gmra.mxu0 %v459
  %v652 = vpop.f32.mrf.mxu0
  %v653 = vadd.f32 0.0, %v652
  %v654 = vpop.f32.mrf.mxu0
  %v655 = vpop.f32.mrf.mxu0
  %v656 = vadd.f32 0.0, %v655
  %v657 = vpop.f32.mrf.mxu0
  %658 = vmatprep.mubr.bf16.mxu0 0
  %659 = vmatmul.mubr.bf16.gmra.mxu0 %v462
  %v660 = vpop.f32.mrf.mxu0
  %v661 = vadd.f32 0.0, %v660
  %v662 = vpop.f32.mrf.mxu0
  %v663 = vpop.f32.mrf.mxu0
  %v664 = vadd.f32 0.0, %v663
  %v665 = vpop.f32.mrf.mxu0
  %666 = vmatprep.mubr.bf16.mxu0 0
  %667 = vmatmul.mubr.bf16.gmra.mxu0 %v465
  %v668 = vpop.f32.mrf.mxu0
  %v669 = vadd.f32 0.0, %v668
  %v670 = vpop.f32.mrf.mxu0
  %v671 = vpop.f32.mrf.mxu0
  %v672 = vadd.f32 0.0, %v671
  %v673 = vpop.f32.mrf.mxu0
  %674 = vmatprep.mubr.bf16.mxu0 0
  %675 = vmatmul.mubr.bf16.gmra.mxu0 %v468
  %v676 = vpop.f32.mrf.mxu0
  %v677 = vadd.f32 0.0, %v676
  %v678 = vpop.f32.mrf.mxu0
  %v679 = vpop.f32.mrf.mxu0
  %v680 = vadd.f32 0.0, %v679
  %v681 = vpop.f32.mrf.mxu0
  %682 = vmatprep.mubr.bf16.mxu0 0
  %683 = vmatmul.mubr.bf16.gmra.mxu0 %v471
  %v684 = vpop.f32.mrf.mxu0
  %v685 = vadd.f32 0.0, %v684
  %v686 = vpop.f32.mrf.mxu0
  %v687 = vpop.f32.mrf.mxu0
  %v688 = vadd.f32 0.0, %v687
  %v689 = vpop.f32.mrf.mxu0
  %690 = vmatprep.mubr.bf16.mxu0 0
  %691 = vmatmul.mubr.bf16.gmra.mxu0 %v474
  %v692 = vpop.f32.mrf.mxu0
  %v693 = vadd.f32 0.0, %v692
  %v694 = vpop.f32.mrf.mxu0
  %v695 = vpop.f32.mrf.mxu0
  %v696 = vadd.f32 0.0, %v695
  %v697 = vpop.f32.mrf.mxu0
  %698 = vmatprep.mubr.bf16.mxu0 0
  %699 = vmatmul.mubr.bf16.gmra.mxu0 %v477
  %v700 = vpop.f32.mrf.mxu0
  %v701 = vadd.f32 0.0, %v700
  %v702 = vpop.f32.mrf.mxu0
  %v703 = vpop.f32.mrf.mxu0
  %v704 = vadd.f32 0.0, %v703
  %v705 = vpop.f32.mrf.mxu0
  %706 = vmatprep.mubr.bf16.mxu0 0
  %707 = vmatmul.mubr.bf16.gmra.mxu0 %v480
  %v708 = vpop.f32.mrf.mxu0
  %v709 = vadd.f32 0.0, %v708
  %v710 = vpop.f32.mrf.mxu0
  %v711 = vpop.f32.mrf.mxu0
  %v712 = vadd.f32 0.0, %v711
  %v713 = vpop.f32.mrf.mxu0
  %714 = vmatprep.mubr.bf16.mxu0 0
  %715 = vmatmul.mubr.bf16.gmra.mxu0 %v483
  %v716 = vpop.f32.mrf.mxu0
  %v717 = vadd.f32 0.0, %v716
  %v718 = vpop.f32.mrf.mxu0
  %v719 = vpop.f32.mrf.mxu0
  %v720 = vadd.f32 0.0, %v719
  %v721 = vpop.f32.mrf.mxu0
  %722 = vmatprep.mubr.bf16.mxu0 0
  %723 = vmatmul.mubr.bf16.gmra.mxu0 %v486
  %v724 = vpop.f32.mrf.mxu0
  %v725 = vadd.f32 0.0, %v724
  %v726 = vpop.f32.mrf.mxu0
  %v727 = vpop.f32.mrf.mxu0
  %v728 = vadd.f32 0.0, %v727
  %v729 = vpop.f32.mrf.mxu0
  %730 = vmatprep.mubr.bf16.mxu0 0
  %731 = vmatmul.mubr.bf16.gmra.mxu0 %v489
  %v732 = vpop.f32.mrf.mxu0
  %v733 = vadd.f32 0.0, %v732
  %v734 = vpop.f32.mrf.mxu0
  %v735 = vpop.f32.mrf.mxu0
  %v736 = vadd.f32 0.0, %v735
  %v737 = vpop.f32.mrf.mxu0
  %738 = vmatprep.mubr.bf16.mxu0 0
  %739 = vmatmul.mubr.bf16.gmra.mxu0 %v492
  %v740 = vpop.f32.mrf.mxu0
  %v741 = vadd.f32 0.0, %v740
  %v742 = vpop.f32.mrf.mxu0
  %v743 = vpop.f32.mrf.mxu0
  %v744 = vadd.f32 0.0, %v743
  %v745 = vpop.f32.mrf.mxu0
  %746 = vmatprep.mubr.bf16.mxu0 0
  %747 = vmatmul.mubr.bf16.gmra.mxu0 %v495
  %v748 = vpop.f32.mrf.mxu0
  %v749 = vadd.f32 0.0, %v748
  %v750 = vpop.f32.mrf.mxu0
  %v751 = vpop.f32.mrf.mxu0
  %v752 = vadd.f32 0.0, %v751
  %v753 = vpop.f32.mrf.mxu0
  %754 = vmatprep.mubr.bf16.mxu0 0
  %755 = vmatmul.mubr.bf16.gmra.mxu0 %v498
  %v756 = vpop.f32.mrf.mxu0
  %v757 = vadd.f32 0.0, %v756
  %v758 = vpop.f32.mrf.mxu0
  %v759 = vpop.f32.mrf.mxu0
  %v760 = vadd.f32 0.0, %v759
  %v761 = vpop.f32.mrf.mxu0
  %762 = vmatprep.mubr.bf16.mxu0 0
  %763 = vmatmul.mubr.bf16.gmra.mxu0 %v501
  %v764 = vpop.f32.mrf.mxu0
  %v765 = vadd.f32 0.0, %v764
  %v766 = vpop.f32.mrf.mxu0
  %v767 = vpop.f32.mrf.mxu0
  %v768 = vadd.f32 0.0, %v767
  %v769 = vpop.f32.mrf.mxu0
  %770 = vmatprep.mubr.bf16.mxu0 0
  %771 = vmatmul.mubr.bf16.gmra.mxu0 %v504
  %v772 = vpop.f32.mrf.mxu0
  %v773 = vadd.f32 0.0, %v772
  %v774 = vpop.f32.mrf.mxu0
  %v775 = vpop.f32.mrf.mxu0
  %v776 = vadd.f32 0.0, %v775
  %v777 = vpop.f32.mrf.mxu0
  %778 = vmatprep.mubr.bf16.mxu0 0
  %779 = vmatmul.mubr.bf16.gmra.mxu0 %v507
  %v780 = vpop.f32.mrf.mxu0
  %v781 = vadd.f32 0.0, %v780
  %v782 = vpop.f32.mrf.mxu0
  %v783 = vpop.f32.mrf.mxu0
  %v784 = vadd.f32 0.0, %v783
  %v785 = vpop.f32.mrf.mxu0
  %786 = vmatprep.mubr.bf16.mxu0 0
  %787 = vmatmul.mubr.bf16.gmra.mxu0 %v510
  %v788 = vpop.f32.mrf.mxu0
  %v789 = vadd.f32 0.0, %v788
  %v790 = vpop.f32.mrf.mxu0
  %v791 = vpop.f32.mrf.mxu0
  %v792 = vadd.f32 0.0, %v791
  %v793 = vpop.f32.mrf.mxu0
  %794 = vmatprep.mubr.bf16.mxu0 0
  %795 = vmatmul.mubr.bf16.gmra.mxu0 %v513
  %v796 = vpop.f32.mrf.mxu0
  %v797 = vadd.f32 0.0, %v796
  %v798 = vpop.f32.mrf.mxu0
  %v799 = vpop.f32.mrf.mxu0
  %v800 = vadd.f32 0.0, %v799
  %v801 = vpop.f32.mrf.mxu0
  %802 = vmatprep.mubr.bf16.mxu0 0
  %803 = vmatmul.mubr.bf16.gmra.mxu0 %v516
  %v804 = vpop.f32.mrf.mxu0
  %v805 = vadd.f32 0.0, %v804
  %v806 = vpop.f32.mrf.mxu0
  %v807 = vpop.f32.mrf.mxu0
  %v808 = vadd.f32 0.0, %v807
  %v809 = vpop.f32.mrf.mxu0
  %810 = vmatprep.mubr.bf16.mxu0 0
  %811 = vmatmul.mubr.bf16.gmra.mxu0 %v519
  %v812 = vpop.f32.mrf.mxu0
  %v813 = vadd.f32 0.0, %v812
  %v814 = vpop.f32.mrf.mxu0
  %v815 = vpop.f32.mrf.mxu0
  %v816 = vadd.f32 0.0, %v815
  %v817 = vpop.f32.mrf.mxu0
  %818 = vmatprep.mubr.bf16.mxu0 0
  %819 = vmatmul.mubr.bf16.gmra.mxu0 %v522
  %v820 = vpop.f32.mrf.mxu0
  %v821 = vadd.f32 0.0, %v820
  %v822 = vpop.f32.mrf.mxu0
  %v823 = vpop.f32.mrf.mxu0
  %v824 = vadd.f32 0.0, %v823
  %v825 = vpop.f32.mrf.mxu0
  %826 = vmatprep.mubr.bf16.mxu0 0
  %827 = vmatmul.mubr.bf16.gmra.mxu0 %v525
  %v828 = vpop.f32.mrf.mxu0
  %v829 = vadd.f32 0.0, %v828
  %v830 = vpop.f32.mrf.mxu0
  %v831 = vpop.f32.mrf.mxu0
  %v832 = vadd.f32 0.0, %v831
  %v833 = vpop.f32.mrf.mxu0
  %834 = vmatprep.mubr.bf16.mxu0 0
  %835 = vmatmul.mubr.bf16.gmra.mxu0 %v528
  %v836 = vpop.f32.mrf.mxu0
  %v837 = vadd.f32 0.0, %v836
  %v838 = vpop.f32.mrf.mxu0
  %v839 = vpop.f32.mrf.mxu0
  %v840 = vadd.f32 0.0, %v839
  %v841 = vpop.f32.mrf.mxu0
  %842 = vmatprep.mubr.bf16.mxu0 0
  %843 = vmatmul.mubr.bf16.gmra.mxu0 %v531
  %v844 = vpop.f32.mrf.mxu0
  %v845 = vadd.f32 0.0, %v844
  %v846 = vpop.f32.mrf.mxu0
  %v847 = vpop.f32.mrf.mxu0
  %v848 = vadd.f32 0.0, %v847
  %v849 = vpop.f32.mrf.mxu0
  %850 = vmatprep.mubr.bf16.mxu0 0
  %851 = vmatmul.mubr.bf16.gmra.mxu0 %v534
  %v852 = vpop.f32.mrf.mxu0
  %v853 = vadd.f32 0.0, %v852
  %v854 = vpop.f32.mrf.mxu0
  %v855 = vpop.f32.mrf.mxu0
  %v856 = vadd.f32 0.0, %v855
  %v857 = vpop.f32.mrf.mxu0
  %858 = vmatprep.mubr.bf16.mxu0 0
  %859 = vmatmul.mubr.bf16.gmra.mxu0 %v537
  %v860 = vpop.f32.mrf.mxu0
  %v861 = vadd.f32 0.0, %v860
  %v862 = vpop.f32.mrf.mxu0
  %v863 = vpop.f32.mrf.mxu0
  %v864 = vadd.f32 0.0, %v863
  %v865 = vpop.f32.mrf.mxu0
  %866 = vmatprep.mubr.bf16.mxu0 0
  %867 = vmatmul.mubr.bf16.gmra.mxu0 %v540
  %v868 = vpop.f32.mrf.mxu0
  %v869 = vadd.f32 0.0, %v868
  %v870 = vpop.f32.mrf.mxu0
  %v871 = vpop.f32.mrf.mxu0
  %v872 = vadd.f32 0.0, %v871
  %v873 = vpop.f32.mrf.mxu0
  %874 = vmatprep.mubr.bf16.mxu0 0
  %875 = vmatmul.mubr.bf16.gmra.mxu0 %v543
  %v876 = vpop.f32.mrf.mxu0
  %v877 = vadd.f32 0.0, %v876
  %v878 = vpop.f32.mrf.mxu0
  %v879 = vpop.f32.mrf.mxu0
  %v880 = vadd.f32 0.0, %v879
  %v881 = vpop.f32.mrf.mxu0
  %882 = vmatprep.mubr.bf16.mxu0 0
  %883 = vmatmul.mubr.bf16.gmra.mxu0 %v546
  %v884 = vpop.f32.mrf.mxu0
  %v885 = vadd.f32 0.0, %v884
  %v886 = vpop.f32.mrf.mxu0
  %v887 = vpop.f32.mrf.mxu0
  %v888 = vadd.f32 0.0, %v887
  %v889 = vpop.f32.mrf.mxu0
  %890 = vmatprep.mubr.bf16.mxu0 0
  %891 = vmatmul.mubr.bf16.gmra.mxu0 %v549
  %v892 = vpop.f32.mrf.mxu0
  %v893 = vadd.f32 0.0, %v892
  %v894 = vpop.f32.mrf.mxu0
  %v895 = vpop.f32.mrf.mxu0
  %v896 = vadd.f32 0.0, %v895
  %v897 = vpop.f32.mrf.mxu0
  %898 = vmatprep.mubr.bf16.mxu0 0
  %899 = vmatmul.mubr.bf16.gmra.mxu0 %v552
  %v900 = vpop.f32.mrf.mxu0
  %v901 = vadd.f32 0.0, %v900
  %v902 = vpop.f32.mrf.mxu0
  %v903 = vpop.f32.mrf.mxu0
  %v904 = vadd.f32 0.0, %v903
  %v905 = vpop.f32.mrf.mxu0
  %906 = vmatprep.mubr.bf16.mxu0 0
  %907 = vmatmul.mubr.bf16.gmra.mxu0 %v555
  %v908 = vpop.f32.mrf.mxu0
  %v909 = vadd.f32 0.0, %v908
  %v910 = vpop.f32.mrf.mxu0
  %v911 = vpop.f32.mrf.mxu0
  %v912 = vadd.f32 0.0, %v911
  %v913 = vpop.f32.mrf.mxu0
  %914 = vmatprep.mubr.bf16.mxu0 0
  %915 = vmatmul.mubr.bf16.gmra.mxu0 %v558
  %v916 = vpop.f32.mrf.mxu0
  %v917 = vadd.f32 0.0, %v916
  %v918 = vpop.f32.mrf.mxu0
  %v919 = vpop.f32.mrf.mxu0
  %v920 = vadd.f32 0.0, %v919
  %v921 = vpop.f32.mrf.mxu0
  %922 = vmatprep.mubr.bf16.mxu0 0
  %923 = vmatmul.mubr.bf16.gmra.mxu0 %v561
  %v924 = vpop.f32.mrf.mxu0
  %v925 = vadd.f32 0.0, %v924
  %v926 = vpop.f32.mrf.mxu0
  %v927 = vpop.f32.mrf.mxu0
  %v928 = vadd.f32 0.0, %v927
  %v929 = vpop.f32.mrf.mxu0
  %930 = vmatprep.mubr.bf16.mxu0 0
  %931 = vmatmul.mubr.bf16.gmra.mxu0 %v564
  %v932 = vpop.f32.mrf.mxu0
  %v933 = vadd.f32 0.0, %v932
  %v934 = vpop.f32.mrf.mxu0
  %v935 = vpop.f32.mrf.mxu0
  %v936 = vadd.f32 0.0, %v935
  %v937 = vpop.f32.mrf.mxu0
  %938 = vmatprep.mubr.bf16.mxu0 0
  %939 = vmatmul.mubr.bf16.gmra.mxu0 %v567
  %v940 = vpop.f32.mrf.mxu0
  %v941 = vadd.f32 0.0, %v940
  %v942 = vpop.f32.mrf.mxu0
  %v943 = vpop.f32.mrf.mxu0
  %v944 = vadd.f32 0.0, %v943
  %v945 = vpop.f32.mrf.mxu0
  %946 = vmatprep.mubr.bf16.mxu0 0
  %947 = vmatmul.mubr.bf16.gmra.mxu0 %v570
  %v948 = vpop.f32.mrf.mxu0
  %v949 = vadd.f32 0.0, %v948
  %v950 = vpop.f32.mrf.mxu0
  %v951 = vpop.f32.mrf.mxu0
  %v952 = vadd.f32 0.0, %v951
  %v953 = vpop.f32.mrf.mxu0
  %954 = vmatprep.mubr.bf16.mxu0 0
  %955 = vmatmul.mubr.bf16.gmra.mxu0 %v573
  %v956 = vpop.f32.mrf.mxu0
  %v957 = vadd.f32 0.0, %v956
  %v958 = vpop.f32.mrf.mxu0
  %v959 = vpop.f32.mrf.mxu0
  %v960 = vadd.f32 0.0, %v959
  %v961 = vpop.f32.mrf.mxu0
  %962 = vmatprep.mubr.bf16.mxu0 0
  %963 = vmatmul.mubr.bf16.gmra.mxu0 %v576
  %v964 = vpop.f32.mrf.mxu0
  %v965 = vadd.f32 0.0, %v964
  %v966 = vpop.f32.mrf.mxu0
  %v967 = vpop.f32.mrf.mxu0
  %v968 = vadd.f32 0.0, %v967
  %v969 = vpop.f32.mrf.mxu0
  %970 = vmatprep.mubr.bf16.mxu0 0
  %971 = vmatmul.mubr.bf16.gmra.mxu0 %v579
  %v972 = vpop.f32.mrf.mxu0
  %v973 = vadd.f32 0.0, %v972
  %v974 = vpop.f32.mrf.mxu0
  %v975 = vpop.f32.mrf.mxu0
  %v976 = vadd.f32 0.0, %v975
  %v977 = vpop.f32.mrf.mxu0
  %978 = vmatprep.mubr.bf16.mxu0 0
  %979 = vmatmul.mubr.bf16.gmra.mxu0 %v582
  %v980 = vpop.f32.mrf.mxu0
  %v981 = vadd.f32 0.0, %v980
  %v982 = vpop.f32.mrf.mxu0
  %v983 = vpop.f32.mrf.mxu0
  %v984 = vadd.f32 0.0, %v983
  %v985 = vpop.f32.mrf.mxu0
  %986 = vmatprep.mubr.bf16.mxu0 0
  %987 = vmatmul.mubr.bf16.gmra.mxu0 %v585
  %v988 = vpop.f32.mrf.mxu0
  %v989 = vadd.f32 0.0, %v988
  %v990 = vpop.f32.mrf.mxu0
  %v991 = vpop.f32.mrf.mxu0
  %v992 = vadd.f32 0.0, %v991
  %v993 = vpop.f32.mrf.mxu0
  %994 = vmatprep.mubr.bf16.mxu0 0
  %995 = vmatmul.mubr.bf16.gmra.mxu0 %v588
  %v996 = vpop.f32.mrf.mxu0
  %v997 = vadd.f32 0.0, %v996
  %v998 = vpop.f32.mrf.mxu0
  %v999 = vpop.f32.mrf.mxu0
  %v1000 = vadd.f32 0.0, %v999
  %v1001 = vpop.f32.mrf.mxu0
  %1002 = vmatprep.mubr.bf16.mxu0 0
  %1003 = vmatmul.mubr.bf16.gmra.mxu0 %v591
  %v1004 = vpop.f32.mrf.mxu0
  %v1005 = vadd.f32 0.0, %v1004
  %v1006 = vpop.f32.mrf.mxu0
  %v1007 = vpop.f32.mrf.mxu0
  %v1008 = vadd.f32 0.0, %v1007
  %v1009 = vpop.f32.mrf.mxu0
  %1010 = vmatprep.mubr.bf16.mxu0 0
  %1011 = vmatmul.mubr.bf16.gmra.mxu0 %v594
  %v1012 = vpop.f32.mrf.mxu0
  %v1013 = vadd.f32 0.0, %v1012
  %v1014 = vpop.f32.mrf.mxu0
  %v1015 = vpop.f32.mrf.mxu0
  %v1016 = vadd.f32 0.0, %v1015
  %v1017 = vpop.f32.mrf.mxu0
  %1018 = vmatprep.mubr.bf16.mxu0 0
  %1019 = vmatmul.mubr.bf16.gmra.mxu0 %v597
  %v1020 = vpop.f32.mrf.mxu0
  %v1021 = vadd.f32 0.0, %v1020
  %v1022 = vpop.f32.mrf.mxu0
  %v1023 = vpop.f32.mrf.mxu0
  %v1024 = vadd.f32 0.0, %v1023
  %v1025 = vpop.f32.mrf.mxu0
  %1026 = vmatprep.mubr.bf16.mxu0 0
  %1027 = vmatmul.mubr.bf16.gmra.mxu0 %v600
  %v1028 = vpop.f32.mrf.mxu0
  %v1029 = vadd.f32 0.0, %v1028
  %v1030 = vpop.f32.mrf.mxu0
  %v1031 = vpop.f32.mrf.mxu0
  %v1032 = vadd.f32 0.0, %v1031
  %v1033 = vpop.f32.mrf.mxu0
  %1034 = vdwg.mxu0
  %v1045 = vunpack.c.l.b16 %v39
  %v1046 = vunpack.c.l.b16 %v50
  %v1047 = vunpack.c.l.b16 %v61
  %v1048 = vunpack.c.l.b16 %v72
  %v1049 = vunpack.c.l.b16 %v83
  %v1050 = vunpack.c.l.b16 %v94
  %v1051 = vunpack.c.l.b16 %v105
  %v1052 = vunpack.c.l.b16 %v116
  %v1053 = vunpack.c.l.b16 %v127
  %v1054 = vunpack.c.l.b16 %v138
  %v1055 = vpack.c.b16 %v277, %v1045
  %v1056 = vpack.c.b16 %v279, %v278
  %v1057 = vpack.c.b16 %v281, %v280
  %v1058 = vpack.c.b16 %v283, %v282
  %v1059 = vpack.c.b16 %v285, %v284
  %v1060 = vpack.c.b16 %v287, %v1046
  %v1061 = vpack.c.b16 %v289, %v288
  %v1062 = vpack.c.b16 %v291, %v290
  %v1063 = vpack.c.b16 %v293, %v292
  %v1064 = vpack.c.b16 %v295, %v294
  %v1065 = vpack.c.b16 %v297, %v1047
  %v1066 = vpack.c.b16 %v299, %v298
  %v1067 = vpack.c.b16 %v301, %v300
  %v1068 = vpack.c.b16 %v303, %v302
  %v1069 = vpack.c.b16 %v305, %v304
  %v1070 = vpack.c.b16 %v307, %v1048
  %v1071 = vpack.c.b16 %v309, %v308
  %v1072 = vpack.c.b16 %v311, %v310
  %v1073 = vpack.c.b16 %v313, %v312
  %v1074 = vpack.c.b16 %v315, %v314
  %v1075 = vpack.c.b16 %v317, %v1049
  %v1076 = vpack.c.b16 %v319, %v318
  %v1077 = vpack.c.b16 %v321, %v320
  %v1078 = vpack.c.b16 %v323, %v322
  %v1079 = vpack.c.b16 %v325, %v324
  %v1080 = vpack.c.b16 %v327, %v1050
  %v1081 = vpack.c.b16 %v329, %v328
  %v1082 = vpack.c.b16 %v331, %v330
  %v1083 = vpack.c.b16 %v333, %v332
  %v1084 = vpack.c.b16 %v335, %v334
  %v1085 = vpack.c.b16 %v337, %v1051
  %v1086 = vpack.c.b16 %v339, %v338
  %v1087 = vpack.c.b16 %v341, %v340
  %v1088 = vpack.c.b16 %v343, %v342
  %v1089 = vpack.c.b16 %v345, %v344
  %v1090 = vpack.c.b16 %v347, %v1052
  %v1091 = vpack.c.b16 %v349, %v348
  %v1092 = vpack.c.b16 %v351, %v350
  %v1093 = vpack.c.b16 %v353, %v352
  %v1094 = vpack.c.b16 %v355, %v354
  %v1095 = vpack.c.b16 %v357, %v1053
  %v1096 = vpack.c.b16 %v359, %v358
  %v1097 = vpack.c.b16 %v361, %v360
  %v1098 = vpack.c.b16 %v363, %v362
  %v1099 = vpack.c.b16 %v365, %v364
  %v1100 = vpack.c.b16 %v367, %v1054
  %v1101 = vpack.c.b16 %v369, %v368
  %v1102 = vpack.c.b16 %v371, %v370
  %v1103 = vpack.c.b16 %v373, %v372
  %v1104 = vpack.c.b16 %v375, %v374
  %v1113 = vunpack.c.l.b16 %v160
  %v1114 = vunpack.c.l.b16 %v161
  %v1115 = vunpack.c.l.b16 %v162
  %v1116 = vunpack.c.l.b16 %v163
  %v1117 = vunpack.c.l.b16 %v164
  %v1118 = vunpack.c.l.b16 %v165
  %v1119 = vunpack.c.l.b16 %v166
  %v1120 = vunpack.c.l.b16 %v167
  %v1121 = vpack.c.b16 %v1114, %v1113
  %v1122 = vpack.c.b16 %v1116, %v1115
  %v1123 = vpack.c.b16 %v1118, %v1117
  %v1124 = vpack.c.b16 %v1120, %v1119
  %v1130 = vsel %vm451, %v1055, 0
  %v1133 = vsel %vm451, %v1056, 0
  %v1136 = vsel %vm451, %v1057, 0
  %v1139 = vsel %vm451, %v1058, 0
  %v1142 = vsel %vm451, %v1059, 0
  %v1145 = vsel %vm451, %v1060, 0
  %v1148 = vsel %vm451, %v1061, 0
  %v1151 = vsel %vm451, %v1062, 0
  %v1154 = vsel %vm451, %v1063, 0
  %v1157 = vsel %vm451, %v1064, 0
  %v1160 = vsel %vm451, %v1065, 0
  %v1163 = vsel %vm451, %v1066, 0
  %v1166 = vsel %vm451, %v1067, 0
  %v1169 = vsel %vm451, %v1068, 0
  %v1172 = vsel %vm451, %v1069, 0
  %v1175 = vsel %vm451, %v1070, 0
  %v1178 = vsel %vm451, %v1071, 0
  %v1181 = vsel %vm451, %v1072, 0
  %v1184 = vsel %vm451, %v1073, 0
  %v1187 = vsel %vm451, %v1074, 0
  %v1190 = vsel %vm451, %v1075, 0
  %v1193 = vsel %vm451, %v1076, 0
  %v1196 = vsel %vm451, %v1077, 0
  %v1199 = vsel %vm451, %v1078, 0
  %v1202 = vsel %vm451, %v1079, 0
  %v1205 = vsel %vm451, %v1080, 0
  %v1208 = vsel %vm451, %v1081, 0
  %v1211 = vsel %vm451, %v1082, 0
  %v1214 = vsel %vm451, %v1083, 0
  %v1217 = vsel %vm451, %v1084, 0
  %v1220 = vsel %vm451, %v1085, 0
  %v1223 = vsel %vm451, %v1086, 0
  %v1226 = vsel %vm451, %v1087, 0
  %v1229 = vsel %vm451, %v1088, 0
  %v1232 = vsel %vm451, %v1089, 0
  %v1235 = vsel %vm451, %v1090, 0
  %v1238 = vsel %vm451, %v1091, 0
  %v1241 = vsel %vm451, %v1092, 0
  %v1244 = vsel %vm451, %v1093, 0
  %v1247 = vsel %vm451, %v1094, 0
  %v1250 = vsel %vm451, %v1095, 0
  %v1253 = vsel %vm451, %v1096, 0
  %v1256 = vsel %vm451, %v1097, 0
  %v1259 = vsel %vm451, %v1098, 0
  %v1262 = vsel %vm451, %v1099, 0
  %v1265 = vsel %vm451, %v1100, 0
  %v1268 = vsel %vm451, %v1101, 0
  %v1271 = vsel %vm451, %v1102, 0
  %v1274 = vsel %vm451, %v1103, 0
  %v1277 = vsel %vm451, %v1104, 0
  %1279 = vmatprep.subr.bf16.mxu0 0
  %1280 = vmatpush1.bf16.msra.mxu0 0
  %1281 = vmatprep.subr.bf16.mxu0 0
  %1282 = vmatpush1.bf16.msra.mxu0 0
  %1283 = vmatprep.subr.bf16.mxu0 0
  %1284 = vmatpush1.bf16.msra.mxu0 0
  %1285 = vmatprep.subr.bf16.mxu0 0
  %1286 = vmatpush1.bf16.msra.mxu0 0
  %1287 = vmatprep.subr.bf16.mxu0 0
  %1288 = vmatpush1.bf16.msra.mxu0 %v1124
  %1289 = vmatprep.subr.bf16.mxu0 0
  %1290 = vmatpush1.bf16.msra.mxu0 %v1123
  %1291 = vmatprep.subr.bf16.mxu0 0
  %1292 = vmatpush1.bf16.msra.mxu0 %v1122
  %1293 = vmatprep.subr.bf16.mxu0 0
  %1294 = vmatpush1.bf16.msra.mxu0 %v1121
  %1295 = vmatprep.subr.bf16.mxu0 0
  %1296 = vmatpush2.bf16.msra.mxu0 0
  %1297 = vmatprep.subr.bf16.mxu0 0
  %1298 = vmatpush2.bf16.msra.mxu0 0
  %1299 = vmatprep.subr.bf16.mxu0 0
  %1300 = vmatpush2.bf16.msra.mxu0 0
  %1301 = vmatprep.subr.bf16.mxu0 0
  %1302 = vmatpush2.bf16.msra.mxu0 0
  %1303 = vmatprep.subr.bf16.mxu0 0
  %1304 = vmatpush2.bf16.msra.mxu0 0
  %1305 = vmatprep.subr.bf16.mxu0 0
  %1306 = vmatpush2.bf16.msra.mxu0 0
  %1307 = vmatprep.subr.bf16.mxu0 0
  %1308 = vmatpush2.bf16.msra.mxu0 0
  %1309 = vmatprep.subr.bf16.mxu0 0
  %1310 = vmatpush2.bf16.msra.mxu0 0
  %1311 = vmatprep.mubr.bf16.mxu0 0
  %1312 = vmatmul.mubr.bf16.gmra.mxu0 %v1130
  %v1313 = vpop.f32.mrf.mxu0
  %v1314 = vadd.f32 %v637, %v1313
  %v1315 = vpop.f32.mrf.mxu0
  %v1316 = vpop.f32.mrf.mxu0
  %v1317 = vadd.f32 %v640, %v1316
  %v1318 = vpop.f32.mrf.mxu0
  %1319 = vmatprep.mubr.bf16.mxu0 0
  %1320 = vmatmul.mubr.bf16.gmra.mxu0 %v1133
  %v1321 = vpop.f32.mrf.mxu0
  %v1322 = vadd.f32 %v645, %v1321
  %v1323 = vpop.f32.mrf.mxu0
  %v1324 = vpop.f32.mrf.mxu0
  %v1325 = vadd.f32 %v648, %v1324
  %v1326 = vpop.f32.mrf.mxu0
  %1327 = vmatprep.mubr.bf16.mxu0 0
  %1328 = vmatmul.mubr.bf16.gmra.mxu0 %v1136
  %v1329 = vpop.f32.mrf.mxu0
  %v1330 = vadd.f32 %v653, %v1329
  %v1331 = vpop.f32.mrf.mxu0
  %v1332 = vpop.f32.mrf.mxu0
  %v1333 = vadd.f32 %v656, %v1332
  %v1334 = vpop.f32.mrf.mxu0
  %1335 = vmatprep.mubr.bf16.mxu0 0
  %1336 = vmatmul.mubr.bf16.gmra.mxu0 %v1139
  %v1337 = vpop.f32.mrf.mxu0
  %v1338 = vadd.f32 %v661, %v1337
  %v1339 = vpop.f32.mrf.mxu0
  %v1340 = vpop.f32.mrf.mxu0
  %v1341 = vadd.f32 %v664, %v1340
  %v1342 = vpop.f32.mrf.mxu0
  %1343 = vmatprep.mubr.bf16.mxu0 0
  %1344 = vmatmul.mubr.bf16.gmra.mxu0 %v1142
  %v1345 = vpop.f32.mrf.mxu0
  %v1346 = vadd.f32 %v669, %v1345
  %v1347 = vpop.f32.mrf.mxu0
  %v1348 = vpop.f32.mrf.mxu0
  %v1349 = vadd.f32 %v672, %v1348
  %v1350 = vpop.f32.mrf.mxu0
  %1351 = vmatprep.mubr.bf16.mxu0 0
  %1352 = vmatmul.mubr.bf16.gmra.mxu0 %v1145
  %v1353 = vpop.f32.mrf.mxu0
  %v1354 = vadd.f32 %v677, %v1353
  %v1355 = vpop.f32.mrf.mxu0
  %v1356 = vpop.f32.mrf.mxu0
  %v1357 = vadd.f32 %v680, %v1356
  %v1358 = vpop.f32.mrf.mxu0
  %1359 = vmatprep.mubr.bf16.mxu0 0
  %1360 = vmatmul.mubr.bf16.gmra.mxu0 %v1148
  %v1361 = vpop.f32.mrf.mxu0
  %v1362 = vadd.f32 %v685, %v1361
  %v1363 = vpop.f32.mrf.mxu0
  %v1364 = vpop.f32.mrf.mxu0
  %v1365 = vadd.f32 %v688, %v1364
  %v1366 = vpop.f32.mrf.mxu0
  %1367 = vmatprep.mubr.bf16.mxu0 0
  %1368 = vmatmul.mubr.bf16.gmra.mxu0 %v1151
  %v1369 = vpop.f32.mrf.mxu0
  %v1370 = vadd.f32 %v693, %v1369
  %v1371 = vpop.f32.mrf.mxu0
  %v1372 = vpop.f32.mrf.mxu0
  %v1373 = vadd.f32 %v696, %v1372
  %v1374 = vpop.f32.mrf.mxu0
  %1375 = vmatprep.mubr.bf16.mxu0 0
  %1376 = vmatmul.mubr.bf16.gmra.mxu0 %v1154
  %v1377 = vpop.f32.mrf.mxu0
  %v1378 = vadd.f32 %v701, %v1377
  %v1379 = vpop.f32.mrf.mxu0
  %v1380 = vpop.f32.mrf.mxu0
  %v1381 = vadd.f32 %v704, %v1380
  %v1382 = vpop.f32.mrf.mxu0
  %1383 = vmatprep.mubr.bf16.mxu0 0
  %1384 = vmatmul.mubr.bf16.gmra.mxu0 %v1157
  %v1385 = vpop.f32.mrf.mxu0
  %v1386 = vadd.f32 %v709, %v1385
  %v1387 = vpop.f32.mrf.mxu0
  %v1388 = vpop.f32.mrf.mxu0
  %v1389 = vadd.f32 %v712, %v1388
  %v1390 = vpop.f32.mrf.mxu0
  %1391 = vmatprep.mubr.bf16.mxu0 0
  %1392 = vmatmul.mubr.bf16.gmra.mxu0 %v1160
  %v1393 = vpop.f32.mrf.mxu0
  %v1394 = vadd.f32 %v717, %v1393
  %v1395 = vpop.f32.mrf.mxu0
  %v1396 = vpop.f32.mrf.mxu0
  %v1397 = vadd.f32 %v720, %v1396
  %v1398 = vpop.f32.mrf.mxu0
  %1399 = vmatprep.mubr.bf16.mxu0 0
  %1400 = vmatmul.mubr.bf16.gmra.mxu0 %v1163
  %v1401 = vpop.f32.mrf.mxu0
  %v1402 = vadd.f32 %v725, %v1401
  %v1403 = vpop.f32.mrf.mxu0
  %v1404 = vpop.f32.mrf.mxu0
  %v1405 = vadd.f32 %v728, %v1404
  %v1406 = vpop.f32.mrf.mxu0
  %1407 = vmatprep.mubr.bf16.mxu0 0
  %1408 = vmatmul.mubr.bf16.gmra.mxu0 %v1166
  %v1409 = vpop.f32.mrf.mxu0
  %v1410 = vadd.f32 %v733, %v1409
  %v1411 = vpop.f32.mrf.mxu0
  %v1412 = vpop.f32.mrf.mxu0
  %v1413 = vadd.f32 %v736, %v1412
  %v1414 = vpop.f32.mrf.mxu0
  %1415 = vmatprep.mubr.bf16.mxu0 0
  %1416 = vmatmul.mubr.bf16.gmra.mxu0 %v1169
  %v1417 = vpop.f32.mrf.mxu0
  %v1418 = vadd.f32 %v741, %v1417
  %v1419 = vpop.f32.mrf.mxu0
  %v1420 = vpop.f32.mrf.mxu0
  %v1421 = vadd.f32 %v744, %v1420
  %v1422 = vpop.f32.mrf.mxu0
  %1423 = vmatprep.mubr.bf16.mxu0 0
  %1424 = vmatmul.mubr.bf16.gmra.mxu0 %v1172
  %v1425 = vpop.f32.mrf.mxu0
  %v1426 = vadd.f32 %v749, %v1425
  %v1427 = vpop.f32.mrf.mxu0
  %v1428 = vpop.f32.mrf.mxu0
  %v1429 = vadd.f32 %v752, %v1428
  %v1430 = vpop.f32.mrf.mxu0
  %1431 = vmatprep.mubr.bf16.mxu0 0
  %1432 = vmatmul.mubr.bf16.gmra.mxu0 %v1175
  %v1433 = vpop.f32.mrf.mxu0
  %v1434 = vadd.f32 %v757, %v1433
  %v1435 = vpop.f32.mrf.mxu0
  %v1436 = vpop.f32.mrf.mxu0
  %v1437 = vadd.f32 %v760, %v1436
  %v1438 = vpop.f32.mrf.mxu0
  %1439 = vmatprep.mubr.bf16.mxu0 0
  %1440 = vmatmul.mubr.bf16.gmra.mxu0 %v1178
  %v1441 = vpop.f32.mrf.mxu0
  %v1442 = vadd.f32 %v765, %v1441
  %v1443 = vpop.f32.mrf.mxu0
  %v1444 = vpop.f32.mrf.mxu0
  %v1445 = vadd.f32 %v768, %v1444
  %v1446 = vpop.f32.mrf.mxu0
  %1447 = vmatprep.mubr.bf16.mxu0 0
  %1448 = vmatmul.mubr.bf16.gmra.mxu0 %v1181
  %v1449 = vpop.f32.mrf.mxu0
  %v1450 = vadd.f32 %v773, %v1449
  %v1451 = vpop.f32.mrf.mxu0
  %v1452 = vpop.f32.mrf.mxu0
  %v1453 = vadd.f32 %v776, %v1452
  %v1454 = vpop.f32.mrf.mxu0
  %1455 = vmatprep.mubr.bf16.mxu0 0
  %1456 = vmatmul.mubr.bf16.gmra.mxu0 %v1184
  %v1457 = vpop.f32.mrf.mxu0
  %v1458 = vadd.f32 %v781, %v1457
  %v1459 = vpop.f32.mrf.mxu0
  %v1460 = vpop.f32.mrf.mxu0
  %v1461 = vadd.f32 %v784, %v1460
  %v1462 = vpop.f32.mrf.mxu0
  %1463 = vmatprep.mubr.bf16.mxu0 0
  %1464 = vmatmul.mubr.bf16.gmra.mxu0 %v1187
  %v1465 = vpop.f32.mrf.mxu0
  %v1466 = vadd.f32 %v789, %v1465
  %v1467 = vpop.f32.mrf.mxu0
  %v1468 = vpop.f32.mrf.mxu0
  %v1469 = vadd.f32 %v792, %v1468
  %v1470 = vpop.f32.mrf.mxu0
  %1471 = vmatprep.mubr.bf16.mxu0 0
  %1472 = vmatmul.mubr.bf16.gmra.mxu0 %v1190
  %v1473 = vpop.f32.mrf.mxu0
  %v1474 = vadd.f32 %v797, %v1473
  %v1475 = vpop.f32.mrf.mxu0
  %v1476 = vpop.f32.mrf.mxu0
  %v1477 = vadd.f32 %v800, %v1476
  %v1478 = vpop.f32.mrf.mxu0
  %1479 = vmatprep.mubr.bf16.mxu0 0
  %1480 = vmatmul.mubr.bf16.gmra.mxu0 %v1193
  %v1481 = vpop.f32.mrf.mxu0
  %v1482 = vadd.f32 %v805, %v1481
  %v1483 = vpop.f32.mrf.mxu0
  %v1484 = vpop.f32.mrf.mxu0
  %v1485 = vadd.f32 %v808, %v1484
  %v1486 = vpop.f32.mrf.mxu0
  %1487 = vmatprep.mubr.bf16.mxu0 0
  %1488 = vmatmul.mubr.bf16.gmra.mxu0 %v1196
  %v1489 = vpop.f32.mrf.mxu0
  %v1490 = vadd.f32 %v813, %v1489
  %v1491 = vpop.f32.mrf.mxu0
  %v1492 = vpop.f32.mrf.mxu0
  %v1493 = vadd.f32 %v816, %v1492
  %v1494 = vpop.f32.mrf.mxu0
  %1495 = vmatprep.mubr.bf16.mxu0 0
  %1496 = vmatmul.mubr.bf16.gmra.mxu0 %v1199
  %v1497 = vpop.f32.mrf.mxu0
  %v1498 = vadd.f32 %v821, %v1497
  %v1499 = vpop.f32.mrf.mxu0
  %v1500 = vpop.f32.mrf.mxu0
  %v1501 = vadd.f32 %v824, %v1500
  %v1502 = vpop.f32.mrf.mxu0
  %1503 = vmatprep.mubr.bf16.mxu0 0
  %1504 = vmatmul.mubr.bf16.gmra.mxu0 %v1202
  %v1505 = vpop.f32.mrf.mxu0
  %v1506 = vadd.f32 %v829, %v1505
  %v1507 = vpop.f32.mrf.mxu0
  %v1508 = vpop.f32.mrf.mxu0
  %v1509 = vadd.f32 %v832, %v1508
  %v1510 = vpop.f32.mrf.mxu0
  %1511 = vmatprep.mubr.bf16.mxu0 0
  %1512 = vmatmul.mubr.bf16.gmra.mxu0 %v1205
  %v1513 = vpop.f32.mrf.mxu0
  %v1514 = vadd.f32 %v837, %v1513
  %v1515 = vpop.f32.mrf.mxu0
  %v1516 = vpop.f32.mrf.mxu0
  %v1517 = vadd.f32 %v840, %v1516
  %v1518 = vpop.f32.mrf.mxu0
  %1519 = vmatprep.mubr.bf16.mxu0 0
  %1520 = vmatmul.mubr.bf16.gmra.mxu0 %v1208
  %v1521 = vpop.f32.mrf.mxu0
  %v1522 = vadd.f32 %v845, %v1521
  %v1523 = vpop.f32.mrf.mxu0
  %v1524 = vpop.f32.mrf.mxu0
  %v1525 = vadd.f32 %v848, %v1524
  %v1526 = vpop.f32.mrf.mxu0
  %1527 = vmatprep.mubr.bf16.mxu0 0
  %1528 = vmatmul.mubr.bf16.gmra.mxu0 %v1211
  %v1529 = vpop.f32.mrf.mxu0
  %v1530 = vadd.f32 %v853, %v1529
  %v1531 = vpop.f32.mrf.mxu0
  %v1532 = vpop.f32.mrf.mxu0
  %v1533 = vadd.f32 %v856, %v1532
  %v1534 = vpop.f32.mrf.mxu0
  %1535 = vmatprep.mubr.bf16.mxu0 0
  %1536 = vmatmul.mubr.bf16.gmra.mxu0 %v1214
  %v1537 = vpop.f32.mrf.mxu0
  %v1538 = vadd.f32 %v861, %v1537
  %v1539 = vpop.f32.mrf.mxu0
  %v1540 = vpop.f32.mrf.mxu0
  %v1541 = vadd.f32 %v864, %v1540
  %v1542 = vpop.f32.mrf.mxu0
  %1543 = vmatprep.mubr.bf16.mxu0 0
  %1544 = vmatmul.mubr.bf16.gmra.mxu0 %v1217
  %v1545 = vpop.f32.mrf.mxu0
  %v1546 = vadd.f32 %v869, %v1545
  %v1547 = vpop.f32.mrf.mxu0
  %v1548 = vpop.f32.mrf.mxu0
  %v1549 = vadd.f32 %v872, %v1548
  %v1550 = vpop.f32.mrf.mxu0
  %1551 = vmatprep.mubr.bf16.mxu0 0
  %1552 = vmatmul.mubr.bf16.gmra.mxu0 %v1220
  %v1553 = vpop.f32.mrf.mxu0
  %v1554 = vadd.f32 %v877, %v1553
  %v1555 = vpop.f32.mrf.mxu0
  %v1556 = vpop.f32.mrf.mxu0
  %v1557 = vadd.f32 %v880, %v1556
  %v1558 = vpop.f32.mrf.mxu0
  %1559 = vmatprep.mubr.bf16.mxu0 0
  %1560 = vmatmul.mubr.bf16.gmra.mxu0 %v1223
  %v1561 = vpop.f32.mrf.mxu0
  %v1562 = vadd.f32 %v885, %v1561
  %v1563 = vpop.f32.mrf.mxu0
  %v1564 = vpop.f32.mrf.mxu0
  %v1565 = vadd.f32 %v888, %v1564
  %v1566 = vpop.f32.mrf.mxu0
  %1567 = vmatprep.mubr.bf16.mxu0 0
  %1568 = vmatmul.mubr.bf16.gmra.mxu0 %v1226
  %v1569 = vpop.f32.mrf.mxu0
  %v1570 = vadd.f32 %v893, %v1569
  %v1571 = vpop.f32.mrf.mxu0
  %v1572 = vpop.f32.mrf.mxu0
  %v1573 = vadd.f32 %v896, %v1572
  %v1574 = vpop.f32.mrf.mxu0
  %1575 = vmatprep.mubr.bf16.mxu0 0
  %1576 = vmatmul.mubr.bf16.gmra.mxu0 %v1229
  %v1577 = vpop.f32.mrf.mxu0
  %v1578 = vadd.f32 %v901, %v1577
  %v1579 = vpop.f32.mrf.mxu0
  %v1580 = vpop.f32.mrf.mxu0
  %v1581 = vadd.f32 %v904, %v1580
  %v1582 = vpop.f32.mrf.mxu0
  %1583 = vmatprep.mubr.bf16.mxu0 0
  %1584 = vmatmul.mubr.bf16.gmra.mxu0 %v1232
  %v1585 = vpop.f32.mrf.mxu0
  %v1586 = vadd.f32 %v909, %v1585
  %v1587 = vpop.f32.mrf.mxu0
  %v1588 = vpop.f32.mrf.mxu0
  %v1589 = vadd.f32 %v912, %v1588
  %v1590 = vpop.f32.mrf.mxu0
  %1591 = vmatprep.mubr.bf16.mxu0 0
  %1592 = vmatmul.mubr.bf16.gmra.mxu0 %v1235
  %v1593 = vpop.f32.mrf.mxu0
  %v1594 = vadd.f32 %v917, %v1593
  %v1595 = vpop.f32.mrf.mxu0
  %v1596 = vpop.f32.mrf.mxu0
  %v1597 = vadd.f32 %v920, %v1596
  %v1598 = vpop.f32.mrf.mxu0
  %1599 = vmatprep.mubr.bf16.mxu0 0
  %1600 = vmatmul.mubr.bf16.gmra.mxu0 %v1238
  %v1601 = vpop.f32.mrf.mxu0
  %v1602 = vadd.f32 %v925, %v1601
  %v1603 = vpop.f32.mrf.mxu0
  %v1604 = vpop.f32.mrf.mxu0
  %v1605 = vadd.f32 %v928, %v1604
  %v1606 = vpop.f32.mrf.mxu0
  %1607 = vmatprep.mubr.bf16.mxu0 0
  %1608 = vmatmul.mubr.bf16.gmra.mxu0 %v1241
  %v1609 = vpop.f32.mrf.mxu0
  %v1610 = vadd.f32 %v933, %v1609
  %v1611 = vpop.f32.mrf.mxu0
  %v1612 = vpop.f32.mrf.mxu0
  %v1613 = vadd.f32 %v936, %v1612
  %v1614 = vpop.f32.mrf.mxu0
  %1615 = vmatprep.mubr.bf16.mxu0 0
  %1616 = vmatmul.mubr.bf16.gmra.mxu0 %v1244
  %v1617 = vpop.f32.mrf.mxu0
  %v1618 = vadd.f32 %v941, %v1617
  %v1619 = vpop.f32.mrf.mxu0
  %v1620 = vpop.f32.mrf.mxu0
  %v1621 = vadd.f32 %v944, %v1620
  %v1622 = vpop.f32.mrf.mxu0
  %1623 = vmatprep.mubr.bf16.mxu0 0
  %1624 = vmatmul.mubr.bf16.gmra.mxu0 %v1247
  %v1625 = vpop.f32.mrf.mxu0
  %v1626 = vadd.f32 %v949, %v1625
  %v1627 = vpop.f32.mrf.mxu0
  %v1628 = vpop.f32.mrf.mxu0
  %v1629 = vadd.f32 %v952, %v1628
  %v1630 = vpop.f32.mrf.mxu0
  %1631 = vmatprep.mubr.bf16.mxu0 0
  %1632 = vmatmul.mubr.bf16.gmra.mxu0 %v1250
  %v1633 = vpop.f32.mrf.mxu0
  %v1634 = vadd.f32 %v957, %v1633
  %v1635 = vpop.f32.mrf.mxu0
  %v1636 = vpop.f32.mrf.mxu0
  %v1637 = vadd.f32 %v960, %v1636
  %v1638 = vpop.f32.mrf.mxu0
  %1639 = vmatprep.mubr.bf16.mxu0 0
  %1640 = vmatmul.mubr.bf16.gmra.mxu0 %v1253
  %v1641 = vpop.f32.mrf.mxu0
  %v1642 = vadd.f32 %v965, %v1641
  %v1643 = vpop.f32.mrf.mxu0
  %v1644 = vpop.f32.mrf.mxu0
  %v1645 = vadd.f32 %v968, %v1644
  %v1646 = vpop.f32.mrf.mxu0
  %1647 = vmatprep.mubr.bf16.mxu0 0
  %1648 = vmatmul.mubr.bf16.gmra.mxu0 %v1256
  %v1649 = vpop.f32.mrf.mxu0
  %v1650 = vadd.f32 %v973, %v1649
  %v1651 = vpop.f32.mrf.mxu0
  %v1652 = vpop.f32.mrf.mxu0
  %v1653 = vadd.f32 %v976, %v1652
  %v1654 = vpop.f32.mrf.mxu0
  %1655 = vmatprep.mubr.bf16.mxu0 0
  %1656 = vmatmul.mubr.bf16.gmra.mxu0 %v1259
  %v1657 = vpop.f32.mrf.mxu0
  %v1658 = vadd.f32 %v981, %v1657
  %v1659 = vpop.f32.mrf.mxu0
  %v1660 = vpop.f32.mrf.mxu0
  %v1661 = vadd.f32 %v984, %v1660
  %v1662 = vpop.f32.mrf.mxu0
  %1663 = vmatprep.mubr.bf16.mxu0 0
  %1664 = vmatmul.mubr.bf16.gmra.mxu0 %v1262
  %v1665 = vpop.f32.mrf.mxu0
  %v1666 = vadd.f32 %v989, %v1665
  %v1667 = vpop.f32.mrf.mxu0
  %v1668 = vpop.f32.mrf.mxu0
  %v1669 = vadd.f32 %v992, %v1668
  %v1670 = vpop.f32.mrf.mxu0
  %1671 = vmatprep.mubr.bf16.mxu0 0
  %1672 = vmatmul.mubr.bf16.gmra.mxu0 %v1265
  %v1673 = vpop.f32.mrf.mxu0
  %v1674 = vadd.f32 %v997, %v1673
  %v1675 = vpop.f32.mrf.mxu0
  %v1676 = vpop.f32.mrf.mxu0
  %v1677 = vadd.f32 %v1000, %v1676
  %v1678 = vpop.f32.mrf.mxu0
  %1679 = vmatprep.mubr.bf16.mxu0 0
  %1680 = vmatmul.mubr.bf16.gmra.mxu0 %v1268
  %v1681 = vpop.f32.mrf.mxu0
  %v1682 = vadd.f32 %v1005, %v1681
  %v1683 = vpop.f32.mrf.mxu0
  %v1684 = vpop.f32.mrf.mxu0
  %v1685 = vadd.f32 %v1008, %v1684
  %v1686 = vpop.f32.mrf.mxu0
  %1687 = vmatprep.mubr.bf16.mxu0 0
  %1688 = vmatmul.mubr.bf16.gmra.mxu0 %v1271
  %v1689 = vpop.f32.mrf.mxu0
  %v1690 = vadd.f32 %v1013, %v1689
  %v1691 = vpop.f32.mrf.mxu0
  %v1692 = vpop.f32.mrf.mxu0
  %v1693 = vadd.f32 %v1016, %v1692
  %v1694 = vpop.f32.mrf.mxu0
  %1695 = vmatprep.mubr.bf16.mxu0 0
  %1696 = vmatmul.mubr.bf16.gmra.mxu0 %v1274
  %v1697 = vpop.f32.mrf.mxu0
  %v1698 = vadd.f32 %v1021, %v1697
  %v1699 = vpop.f32.mrf.mxu0
  %v1700 = vpop.f32.mrf.mxu0
  %v1701 = vadd.f32 %v1024, %v1700
  %v1702 = vpop.f32.mrf.mxu0
  %1703 = vmatprep.mubr.bf16.mxu0 0
  %1704 = vmatmul.mubr.bf16.gmra.mxu0 %v1277
  %v1705 = vpop.f32.mrf.mxu0
  %v1706 = vadd.f32 %v1029, %v1705
  %v1707 = vpop.f32.mrf.mxu0
  %v1708 = vpop.f32.mrf.mxu0
  %v1709 = vadd.f32 %v1032, %v1708
  %v1710 = vpop.f32.mrf.mxu0
  %1711 = vdwg.mxu0
  %s1712 = scalar_lea.vmem %s1, 64
  %v1713 = vld [vmem:[%s1712] sm:$0xf]
  %v1714 = vld [vmem:[%s1712 + $0x4] sm:$0xf]
  %v1715 = vld [vmem:[%s1712 + $0x8] sm:$0xf]
  %v1716 = vld [vmem:[%s1712 + $0xc] sm:$0xf]
  %v1717 = vld [vmem:[%s1712 + $0x10] sm:$0xf]
  %v1718 = vld [vmem:[%s1712 + $0x14] sm:$0xf]
  %v1719 = vld [vmem:[%s1712 + $0x18] sm:$0xf]
  %v1720 = vld [vmem:[%s1712 + $0x1c] sm:$0xf]
  %v1731 = vunpack.c.l.b16 %v149
  %v1732 = vunpack.c.l.b16 %v150
  %v1733 = vunpack.c.l.b16 %v151
  %v1734 = vunpack.c.l.b16 %v152
  %v1735 = vunpack.c.l.b16 %v153
  %v1736 = vunpack.c.l.b16 %v154
  %v1737 = vunpack.c.l.b16 %v155
  %v1738 = vunpack.c.l.b16 %v156
  %v1739 = vunpack.c.l.b16 %v157
  %v1740 = vunpack.c.l.b16 %v158
  %v1741 = vpack.c.b16 %v1732, %v1731
  %v1742 = vpack.c.b16 %v1734, %v1733
  %v1743 = vpack.c.b16 %v1736, %v1735
  %v1744 = vpack.c.b16 %v1738, %v1737
  %v1745 = vpack.c.b16 %v1740, %v1739
  %v1754 = vunpack.c.l.b16 %v1713
  %v1755 = vunpack.c.l.b16 %v1714
  %v1756 = vunpack.c.l.b16 %v1715
  %v1757 = vunpack.c.l.b16 %v1716
  %v1758 = vunpack.c.l.b16 %v1717
  %v1759 = vunpack.c.l.b16 %v1718
  %v1760 = vunpack.c.l.b16 %v1719
  %v1761 = vunpack.c.l.b16 %v1720
  %v1762 = vpack.c.b16 %v1755, %v1754
  %v1763 = vpack.c.b16 %v1757, %v1756
  %v1764 = vpack.c.b16 %v1759, %v1758
  %v1765 = vpack.c.b16 %v1761, %v1760
  %v1771 = vsel %vm451, %v1741, 0
  %v1774 = vsel %vm451, %v1742, 0
  %v1777 = vsel %vm451, %v1743, 0
  %v1780 = vsel %vm451, %v1744, 0
  %v1783 = vsel %vm451, %v1745, 0
  %1785 = vmatprep.subr.bf16.mxu0 0
  %1786 = vmatpush1.bf16.msra.mxu0 0
  %1787 = vmatprep.subr.bf16.mxu0 0
  %1788 = vmatpush1.bf16.msra.mxu0 0
  %1789 = vmatprep.subr.bf16.mxu0 0
  %1790 = vmatpush1.bf16.msra.mxu0 0
  %1791 = vmatprep.subr.bf16.mxu0 0
  %1792 = vmatpush1.bf16.msra.mxu0 0
  %1793 = vmatprep.subr.bf16.mxu0 0
  %1794 = vmatpush1.bf16.msra.mxu0 %v1765
  %1795 = vmatprep.subr.bf16.mxu0 0
  %1796 = vmatpush1.bf16.msra.mxu0 %v1764
  %1797 = vmatprep.subr.bf16.mxu0 0
  %1798 = vmatpush1.bf16.msra.mxu0 %v1763
  %1799 = vmatprep.subr.bf16.mxu0 0
  %1800 = vmatpush1.bf16.msra.mxu0 %v1762
  %1801 = vmatprep.subr.bf16.mxu0 0
  %1802 = vmatpush2.bf16.msra.mxu0 0
  %1803 = vmatprep.subr.bf16.mxu0 0
  %1804 = vmatpush2.bf16.msra.mxu0 0
  %1805 = vmatprep.subr.bf16.mxu0 0
  %1806 = vmatpush2.bf16.msra.mxu0 0
  %1807 = vmatprep.subr.bf16.mxu0 0
  %1808 = vmatpush2.bf16.msra.mxu0 0
  %1809 = vmatprep.subr.bf16.mxu0 0
  %1810 = vmatpush2.bf16.msra.mxu0 0
  %1811 = vmatprep.subr.bf16.mxu0 0
  %1812 = vmatpush2.bf16.msra.mxu0 0
  %1813 = vmatprep.subr.bf16.mxu0 0
  %1814 = vmatpush2.bf16.msra.mxu0 0
  %1815 = vmatprep.subr.bf16.mxu0 0
  %1816 = vmatpush2.bf16.msra.mxu0 0
  %1817 = vmatprep.mubr.bf16.mxu0 0
  %1818 = vmatmul.mubr.bf16.gmra.mxu0 %v1145
  %v1819 = vpop.f32.mrf.mxu0
  %v1820 = vadd.f32 0.0, %v1819
  %v1821 = vpop.f32.mrf.mxu0
  %v1822 = vpop.f32.mrf.mxu0
  %v1823 = vadd.f32 0.0, %v1822
  %v1824 = vpop.f32.mrf.mxu0
  %1825 = vmatprep.mubr.bf16.mxu0 0
  %1826 = vmatmul.mubr.bf16.gmra.mxu0 %v1148
  %v1827 = vpop.f32.mrf.mxu0
  %v1828 = vadd.f32 0.0, %v1827
  %v1829 = vpop.f32.mrf.mxu0
  %v1830 = vpop.f32.mrf.mxu0
  %v1831 = vadd.f32 0.0, %v1830
  %v1832 = vpop.f32.mrf.mxu0
  %1833 = vmatprep.mubr.bf16.mxu0 0
  %1834 = vmatmul.mubr.bf16.gmra.mxu0 %v1151
  %v1835 = vpop.f32.mrf.mxu0
  %v1836 = vadd.f32 0.0, %v1835
  %v1837 = vpop.f32.mrf.mxu0
  %v1838 = vpop.f32.mrf.mxu0
  %v1839 = vadd.f32 0.0, %v1838
  %v1840 = vpop.f32.mrf.mxu0
  %1841 = vmatprep.mubr.bf16.mxu0 0
  %1842 = vmatmul.mubr.bf16.gmra.mxu0 %v1154
  %v1843 = vpop.f32.mrf.mxu0
  %v1844 = vadd.f32 0.0, %v1843
  %v1845 = vpop.f32.mrf.mxu0
  %v1846 = vpop.f32.mrf.mxu0
  %v1847 = vadd.f32 0.0, %v1846
  %v1848 = vpop.f32.mrf.mxu0
  %1849 = vmatprep.mubr.bf16.mxu0 0
  %1850 = vmatmul.mubr.bf16.gmra.mxu0 %v1157
  %v1851 = vpop.f32.mrf.mxu0
  %v1852 = vadd.f32 0.0, %v1851
  %v1853 = vpop.f32.mrf.mxu0
  %v1854 = vpop.f32.mrf.mxu0
  %v1855 = vadd.f32 0.0, %v1854
  %v1856 = vpop.f32.mrf.mxu0
  %1857 = vmatprep.mubr.bf16.mxu0 0
  %1858 = vmatmul.mubr.bf16.gmra.mxu0 %v1160
  %v1859 = vpop.f32.mrf.mxu0
  %v1860 = vadd.f32 0.0, %v1859
  %v1861 = vpop.f32.mrf.mxu0
  %v1862 = vpop.f32.mrf.mxu0
  %v1863 = vadd.f32 0.0, %v1862
  %v1864 = vpop.f32.mrf.mxu0
  %1865 = vmatprep.mubr.bf16.mxu0 0
  %1866 = vmatmul.mubr.bf16.gmra.mxu0 %v1163
  %v1867 = vpop.f32.mrf.mxu0
  %v1868 = vadd.f32 0.0, %v1867
  %v1869 = vpop.f32.mrf.mxu0
  %v1870 = vpop.f32.mrf.mxu0
  %v1871 = vadd.f32 0.0, %v1870
  %v1872 = vpop.f32.mrf.mxu0
  %1873 = vmatprep.mubr.bf16.mxu0 0
  %1874 = vmatmul.mubr.bf16.gmra.mxu0 %v1166
  %v1875 = vpop.f32.mrf.mxu0
  %v1876 = vadd.f32 0.0, %v1875
  %v1877 = vpop.f32.mrf.mxu0
  %v1878 = vpop.f32.mrf.mxu0
  %v1879 = vadd.f32 0.0, %v1878
  %v1880 = vpop.f32.mrf.mxu0
  %1881 = vmatprep.mubr.bf16.mxu0 0
  %1882 = vmatmul.mubr.bf16.gmra.mxu0 %v1169
  %v1883 = vpop.f32.mrf.mxu0
  %v1884 = vadd.f32 0.0, %v1883
  %v1885 = vpop.f32.mrf.mxu0
  %v1886 = vpop.f32.mrf.mxu0
  %v1887 = vadd.f32 0.0, %v1886
  %v1888 = vpop.f32.mrf.mxu0
  %1889 = vmatprep.mubr.bf16.mxu0 0
  %1890 = vmatmul.mubr.bf16.gmra.mxu0 %v1172
  %v1891 = vpop.f32.mrf.mxu0
  %v1892 = vadd.f32 0.0, %v1891
  %v1893 = vpop.f32.mrf.mxu0
  %v1894 = vpop.f32.mrf.mxu0
  %v1895 = vadd.f32 0.0, %v1894
  %v1896 = vpop.f32.mrf.mxu0
  %1897 = vmatprep.mubr.bf16.mxu0 0
  %1898 = vmatmul.mubr.bf16.gmra.mxu0 %v1175
  %v1899 = vpop.f32.mrf.mxu0
  %v1900 = vadd.f32 0.0, %v1899
  %v1901 = vpop.f32.mrf.mxu0
  %v1902 = vpop.f32.mrf.mxu0
  %v1903 = vadd.f32 0.0, %v1902
  %v1904 = vpop.f32.mrf.mxu0
  %1905 = vmatprep.mubr.bf16.mxu0 0
  %1906 = vmatmul.mubr.bf16.gmra.mxu0 %v1178
  %v1907 = vpop.f32.mrf.mxu0
  %v1908 = vadd.f32 0.0, %v1907
  %v1909 = vpop.f32.mrf.mxu0
  %v1910 = vpop.f32.mrf.mxu0
  %v1911 = vadd.f32 0.0, %v1910
  %v1912 = vpop.f32.mrf.mxu0
  %1913 = vmatprep.mubr.bf16.mxu0 0
  %1914 = vmatmul.mubr.bf16.gmra.mxu0 %v1181
  %v1915 = vpop.f32.mrf.mxu0
  %v1916 = vadd.f32 0.0, %v1915
  %v1917 = vpop.f32.mrf.mxu0
  %v1918 = vpop.f32.mrf.mxu0
  %v1919 = vadd.f32 0.0, %v1918
  %v1920 = vpop.f32.mrf.mxu0
  %1921 = vmatprep.mubr.bf16.mxu0 0
  %1922 = vmatmul.mubr.bf16.gmra.mxu0 %v1184
  %v1923 = vpop.f32.mrf.mxu0
  %v1924 = vadd.f32 0.0, %v1923
  %v1925 = vpop.f32.mrf.mxu0
  %v1926 = vpop.f32.mrf.mxu0
  %v1927 = vadd.f32 0.0, %v1926
  %v1928 = vpop.f32.mrf.mxu0
  %1929 = vmatprep.mubr.bf16.mxu0 0
  %1930 = vmatmul.mubr.bf16.gmra.mxu0 %v1187
  %v1931 = vpop.f32.mrf.mxu0
  %v1932 = vadd.f32 0.0, %v1931
  %v1933 = vpop.f32.mrf.mxu0
  %v1934 = vpop.f32.mrf.mxu0
  %v1935 = vadd.f32 0.0, %v1934
  %v1936 = vpop.f32.mrf.mxu0
  %1937 = vmatprep.mubr.bf16.mxu0 0
  %1938 = vmatmul.mubr.bf16.gmra.mxu0 %v1190
  %v1939 = vpop.f32.mrf.mxu0
  %v1940 = vadd.f32 0.0, %v1939
  %v1941 = vpop.f32.mrf.mxu0
  %v1942 = vpop.f32.mrf.mxu0
  %v1943 = vadd.f32 0.0, %v1942
  %v1944 = vpop.f32.mrf.mxu0
  %1945 = vmatprep.mubr.bf16.mxu0 0
  %1946 = vmatmul.mubr.bf16.gmra.mxu0 %v1193
  %v1947 = vpop.f32.mrf.mxu0
  %v1948 = vadd.f32 0.0, %v1947
  %v1949 = vpop.f32.mrf.mxu0
  %v1950 = vpop.f32.mrf.mxu0
  %v1951 = vadd.f32 0.0, %v1950
  %v1952 = vpop.f32.mrf.mxu0
  %1953 = vmatprep.mubr.bf16.mxu0 0
  %1954 = vmatmul.mubr.bf16.gmra.mxu0 %v1196
  %v1955 = vpop.f32.mrf.mxu0
  %v1956 = vadd.f32 0.0, %v1955
  %v1957 = vpop.f32.mrf.mxu0
  %v1958 = vpop.f32.mrf.mxu0
  %v1959 = vadd.f32 0.0, %v1958
  %v1960 = vpop.f32.mrf.mxu0
  %1961 = vmatprep.mubr.bf16.mxu0 0
  %1962 = vmatmul.mubr.bf16.gmra.mxu0 %v1199
  %v1963 = vpop.f32.mrf.mxu0
  %v1964 = vadd.f32 0.0, %v1963
  %v1965 = vpop.f32.mrf.mxu0
  %v1966 = vpop.f32.mrf.mxu0
  %v1967 = vadd.f32 0.0, %v1966
  %v1968 = vpop.f32.mrf.mxu0
  %1969 = vmatprep.mubr.bf16.mxu0 0
  %1970 = vmatmul.mubr.bf16.gmra.mxu0 %v1202
  %v1971 = vpop.f32.mrf.mxu0
  %v1972 = vadd.f32 0.0, %v1971
  %v1973 = vpop.f32.mrf.mxu0
  %v1974 = vpop.f32.mrf.mxu0
  %v1975 = vadd.f32 0.0, %v1974
  %v1976 = vpop.f32.mrf.mxu0
  %1977 = vmatprep.mubr.bf16.mxu0 0
  %1978 = vmatmul.mubr.bf16.gmra.mxu0 %v1205
  %v1979 = vpop.f32.mrf.mxu0
  %v1980 = vadd.f32 0.0, %v1979
  %v1981 = vpop.f32.mrf.mxu0
  %v1982 = vpop.f32.mrf.mxu0
  %v1983 = vadd.f32 0.0, %v1982
  %v1984 = vpop.f32.mrf.mxu0
  %1985 = vmatprep.mubr.bf16.mxu0 0
  %1986 = vmatmul.mubr.bf16.gmra.mxu0 %v1208
  %v1987 = vpop.f32.mrf.mxu0
  %v1988 = vadd.f32 0.0, %v1987
  %v1989 = vpop.f32.mrf.mxu0
  %v1990 = vpop.f32.mrf.mxu0
  %v1991 = vadd.f32 0.0, %v1990
  %v1992 = vpop.f32.mrf.mxu0
  %1993 = vmatprep.mubr.bf16.mxu0 0
  %1994 = vmatmul.mubr.bf16.gmra.mxu0 %v1211
  %v1995 = vpop.f32.mrf.mxu0
  %v1996 = vadd.f32 0.0, %v1995
  %v1997 = vpop.f32.mrf.mxu0
  %v1998 = vpop.f32.mrf.mxu0
  %v1999 = vadd.f32 0.0, %v1998
  %v2000 = vpop.f32.mrf.mxu0
  %2001 = vmatprep.mubr.bf16.mxu0 0
  %2002 = vmatmul.mubr.bf16.gmra.mxu0 %v1214
  %v2003 = vpop.f32.mrf.mxu0
  %v2004 = vadd.f32 0.0, %v2003
  %v2005 = vpop.f32.mrf.mxu0
  %v2006 = vpop.f32.mrf.mxu0
  %v2007 = vadd.f32 0.0, %v2006
  %v2008 = vpop.f32.mrf.mxu0
  %2009 = vmatprep.mubr.bf16.mxu0 0
  %2010 = vmatmul.mubr.bf16.gmra.mxu0 %v1217
  %v2011 = vpop.f32.mrf.mxu0
  %v2012 = vadd.f32 0.0, %v2011
  %v2013 = vpop.f32.mrf.mxu0
  %v2014 = vpop.f32.mrf.mxu0
  %v2015 = vadd.f32 0.0, %v2014
  %v2016 = vpop.f32.mrf.mxu0
  %2017 = vmatprep.mubr.bf16.mxu0 0
  %2018 = vmatmul.mubr.bf16.gmra.mxu0 %v1220
  %v2019 = vpop.f32.mrf.mxu0
  %v2020 = vadd.f32 0.0, %v2019
  %v2021 = vpop.f32.mrf.mxu0
  %v2022 = vpop.f32.mrf.mxu0
  %v2023 = vadd.f32 0.0, %v2022
  %v2024 = vpop.f32.mrf.mxu0
  %2025 = vmatprep.mubr.bf16.mxu0 0
  %2026 = vmatmul.mubr.bf16.gmra.mxu0 %v1223
  %v2027 = vpop.f32.mrf.mxu0
  %v2028 = vadd.f32 0.0, %v2027
  %v2029 = vpop.f32.mrf.mxu0
  %v2030 = vpop.f32.mrf.mxu0
  %v2031 = vadd.f32 0.0, %v2030
  %v2032 = vpop.f32.mrf.mxu0
  %2033 = vmatprep.mubr.bf16.mxu0 0
  %2034 = vmatmul.mubr.bf16.gmra.mxu0 %v1226
  %v2035 = vpop.f32.mrf.mxu0
  %v2036 = vadd.f32 0.0, %v2035
  %v2037 = vpop.f32.mrf.mxu0
  %v2038 = vpop.f32.mrf.mxu0
  %v2039 = vadd.f32 0.0, %v2038
  %v2040 = vpop.f32.mrf.mxu0
  %2041 = vmatprep.mubr.bf16.mxu0 0
  %2042 = vmatmul.mubr.bf16.gmra.mxu0 %v1229
  %v2043 = vpop.f32.mrf.mxu0
  %v2044 = vadd.f32 0.0, %v2043
  %v2045 = vpop.f32.mrf.mxu0
  %v2046 = vpop.f32.mrf.mxu0
  %v2047 = vadd.f32 0.0, %v2046
  %v2048 = vpop.f32.mrf.mxu0
  %2049 = vmatprep.mubr.bf16.mxu0 0
  %2050 = vmatmul.mubr.bf16.gmra.mxu0 %v1232
  %v2051 = vpop.f32.mrf.mxu0
  %v2052 = vadd.f32 0.0, %v2051
  %v2053 = vpop.f32.mrf.mxu0
  %v2054 = vpop.f32.mrf.mxu0
  %v2055 = vadd.f32 0.0, %v2054
  %v2056 = vpop.f32.mrf.mxu0
  %2057 = vmatprep.mubr.bf16.mxu0 0
  %2058 = vmatmul.mubr.bf16.gmra.mxu0 %v1235
  %v2059 = vpop.f32.mrf.mxu0
  %v2060 = vadd.f32 0.0, %v2059
  %v2061 = vpop.f32.mrf.mxu0
  %v2062 = vpop.f32.mrf.mxu0
  %v2063 = vadd.f32 0.0, %v2062
  %v2064 = vpop.f32.mrf.mxu0
  %2065 = vmatprep.mubr.bf16.mxu0 0
  %2066 = vmatmul.mubr.bf16.gmra.mxu0 %v1238
  %v2067 = vpop.f32.mrf.mxu0
  %v2068 = vadd.f32 0.0, %v2067
  %v2069 = vpop.f32.mrf.mxu0
  %v2070 = vpop.f32.mrf.mxu0
  %v2071 = vadd.f32 0.0, %v2070
  %v2072 = vpop.f32.mrf.mxu0
  %2073 = vmatprep.mubr.bf16.mxu0 0
  %2074 = vmatmul.mubr.bf16.gmra.mxu0 %v1241
  %v2075 = vpop.f32.mrf.mxu0
  %v2076 = vadd.f32 0.0, %v2075
  %v2077 = vpop.f32.mrf.mxu0
  %v2078 = vpop.f32.mrf.mxu0
  %v2079 = vadd.f32 0.0, %v2078
  %v2080 = vpop.f32.mrf.mxu0
  %2081 = vmatprep.mubr.bf16.mxu0 0
  %2082 = vmatmul.mubr.bf16.gmra.mxu0 %v1244
  %v2083 = vpop.f32.mrf.mxu0
  %v2084 = vadd.f32 0.0, %v2083
  %v2085 = vpop.f32.mrf.mxu0
  %v2086 = vpop.f32.mrf.mxu0
  %v2087 = vadd.f32 0.0, %v2086
  %v2088 = vpop.f32.mrf.mxu0
  %2089 = vmatprep.mubr.bf16.mxu0 0
  %2090 = vmatmul.mubr.bf16.gmra.mxu0 %v1247
  %v2091 = vpop.f32.mrf.mxu0
  %v2092 = vadd.f32 0.0, %v2091
  %v2093 = vpop.f32.mrf.mxu0
  %v2094 = vpop.f32.mrf.mxu0
  %v2095 = vadd.f32 0.0, %v2094
  %v2096 = vpop.f32.mrf.mxu0
  %2097 = vmatprep.mubr.bf16.mxu0 0
  %2098 = vmatmul.mubr.bf16.gmra.mxu0 %v1250
  %v2099 = vpop.f32.mrf.mxu0
  %v2100 = vadd.f32 0.0, %v2099
  %v2101 = vpop.f32.mrf.mxu0
  %v2102 = vpop.f32.mrf.mxu0
  %v2103 = vadd.f32 0.0, %v2102
  %v2104 = vpop.f32.mrf.mxu0
  %2105 = vmatprep.mubr.bf16.mxu0 0
  %2106 = vmatmul.mubr.bf16.gmra.mxu0 %v1253
  %v2107 = vpop.f32.mrf.mxu0
  %v2108 = vadd.f32 0.0, %v2107
  %v2109 = vpop.f32.mrf.mxu0
  %v2110 = vpop.f32.mrf.mxu0
  %v2111 = vadd.f32 0.0, %v2110
  %v2112 = vpop.f32.mrf.mxu0
  %2113 = vmatprep.mubr.bf16.mxu0 0
  %2114 = vmatmul.mubr.bf16.gmra.mxu0 %v1256
  %v2115 = vpop.f32.mrf.mxu0
  %v2116 = vadd.f32 0.0, %v2115
  %v2117 = vpop.f32.mrf.mxu0
  %v2118 = vpop.f32.mrf.mxu0
  %v2119 = vadd.f32 0.0, %v2118
  %v2120 = vpop.f32.mrf.mxu0
  %2121 = vmatprep.mubr.bf16.mxu0 0
  %2122 = vmatmul.mubr.bf16.gmra.mxu0 %v1259
  %v2123 = vpop.f32.mrf.mxu0
  %v2124 = vadd.f32 0.0, %v2123
  %v2125 = vpop.f32.mrf.mxu0
  %v2126 = vpop.f32.mrf.mxu0
  %v2127 = vadd.f32 0.0, %v2126
  %v2128 = vpop.f32.mrf.mxu0
  %2129 = vmatprep.mubr.bf16.mxu0 0
  %2130 = vmatmul.mubr.bf16.gmra.mxu0 %v1262
  %v2131 = vpop.f32.mrf.mxu0
  %v2132 = vadd.f32 0.0, %v2131
  %v2133 = vpop.f32.mrf.mxu0
  %v2134 = vpop.f32.mrf.mxu0
  %v2135 = vadd.f32 0.0, %v2134
  %v2136 = vpop.f32.mrf.mxu0
  %2137 = vmatprep.mubr.bf16.mxu0 0
  %2138 = vmatmul.mubr.bf16.gmra.mxu0 %v1265
  %v2139 = vpop.f32.mrf.mxu0
  %v2140 = vadd.f32 0.0, %v2139
  %v2141 = vpop.f32.mrf.mxu0
  %v2142 = vpop.f32.mrf.mxu0
  %v2143 = vadd.f32 0.0, %v2142
  %v2144 = vpop.f32.mrf.mxu0
  %2145 = vmatprep.mubr.bf16.mxu0 0
  %2146 = vmatmul.mubr.bf16.gmra.mxu0 %v1268
  %v2147 = vpop.f32.mrf.mxu0
  %v2148 = vadd.f32 0.0, %v2147
  %v2149 = vpop.f32.mrf.mxu0
  %v2150 = vpop.f32.mrf.mxu0
  %v2151 = vadd.f32 0.0, %v2150
  %v2152 = vpop.f32.mrf.mxu0
  %2153 = vmatprep.mubr.bf16.mxu0 0
  %2154 = vmatmul.mubr.bf16.gmra.mxu0 %v1271
  %v2155 = vpop.f32.mrf.mxu0
  %v2156 = vadd.f32 0.0, %v2155
  %v2157 = vpop.f32.mrf.mxu0
  %v2158 = vpop.f32.mrf.mxu0
  %v2159 = vadd.f32 0.0, %v2158
  %v2160 = vpop.f32.mrf.mxu0
  %2161 = vmatprep.mubr.bf16.mxu0 0
  %2162 = vmatmul.mubr.bf16.gmra.mxu0 %v1274
  %v2163 = vpop.f32.mrf.mxu0
  %v2164 = vadd.f32 0.0, %v2163
  %v2165 = vpop.f32.mrf.mxu0
  %v2166 = vpop.f32.mrf.mxu0
  %v2167 = vadd.f32 0.0, %v2166
  %v2168 = vpop.f32.mrf.mxu0
  %2169 = vmatprep.mubr.bf16.mxu0 0
  %2170 = vmatmul.mubr.bf16.gmra.mxu0 %v1277
  %v2171 = vpop.f32.mrf.mxu0
  %v2172 = vadd.f32 0.0, %v2171
  %v2173 = vpop.f32.mrf.mxu0
  %v2174 = vpop.f32.mrf.mxu0
  %v2175 = vadd.f32 0.0, %v2174
  %v2176 = vpop.f32.mrf.mxu0
  %2177 = vmatprep.mubr.bf16.mxu0 0
  %2178 = vmatmul.mubr.bf16.gmra.mxu0 %v1771
  %v2179 = vpop.f32.mrf.mxu0
  %v2180 = vadd.f32 0.0, %v2179
  %v2181 = vpop.f32.mrf.mxu0
  %v2182 = vpop.f32.mrf.mxu0
  %v2183 = vadd.f32 0.0, %v2182
  %v2184 = vpop.f32.mrf.mxu0
  %2185 = vmatprep.mubr.bf16.mxu0 0
  %2186 = vmatmul.mubr.bf16.gmra.mxu0 %v1774
  %v2187 = vpop.f32.mrf.mxu0
  %v2188 = vadd.f32 0.0, %v2187
  %v2189 = vpop.f32.mrf.mxu0
  %v2190 = vpop.f32.mrf.mxu0
  %v2191 = vadd.f32 0.0, %v2190
  %v2192 = vpop.f32.mrf.mxu0
  %2193 = vmatprep.mubr.bf16.mxu0 0
  %2194 = vmatmul.mubr.bf16.gmra.mxu0 %v1777
  %v2195 = vpop.f32.mrf.mxu0
  %v2196 = vadd.f32 0.0, %v2195
  %v2197 = vpop.f32.mrf.mxu0
  %v2198 = vpop.f32.mrf.mxu0
  %v2199 = vadd.f32 0.0, %v2198
  %v2200 = vpop.f32.mrf.mxu0
  %2201 = vmatprep.mubr.bf16.mxu0 0
  %2202 = vmatmul.mubr.bf16.gmra.mxu0 %v1780
  %v2203 = vpop.f32.mrf.mxu0
  %v2204 = vadd.f32 0.0, %v2203
  %v2205 = vpop.f32.mrf.mxu0
  %v2206 = vpop.f32.mrf.mxu0
  %v2207 = vadd.f32 0.0, %v2206
  %v2208 = vpop.f32.mrf.mxu0
  %2209 = vmatprep.mubr.bf16.mxu0 0
  %2210 = vmatmul.mubr.bf16.gmra.mxu0 %v1783
  %v2211 = vpop.f32.mrf.mxu0
  %v2212 = vadd.f32 0.0, %v2211
  %v2213 = vpop.f32.mrf.mxu0
  %v2214 = vpop.f32.mrf.mxu0
  %v2215 = vadd.f32 0.0, %v2214
  %v2216 = vpop.f32.mrf.mxu0
  %2217 = vdwg.mxu0
  %v2218 = vadd.f32 %v1314, %v1820
  %v2219 = vadd.f32 %v1317, %v1823
  %v2220 = vadd.f32 %v1322, %v1828
  %v2221 = vadd.f32 %v1325, %v1831
  %v2222 = vadd.f32 %v1330, %v1836
  %v2223 = vadd.f32 %v1333, %v1839
  %v2224 = vadd.f32 %v1338, %v1844
  %v2225 = vadd.f32 %v1341, %v1847
  %v2226 = vadd.f32 %v1346, %v1852
  %v2227 = vadd.f32 %v1349, %v1855
  %v2228 = vadd.f32 %v1354, %v1860
  %v2229 = vadd.f32 %v1357, %v1863
  %v2230 = vadd.f32 %v1362, %v1868
  %v2231 = vadd.f32 %v1365, %v1871
  %v2232 = vadd.f32 %v1370, %v1876
  %v2233 = vadd.f32 %v1373, %v1879
  %v2234 = vadd.f32 %v1378, %v1884
  %v2235 = vadd.f32 %v1381, %v1887
  %v2236 = vadd.f32 %v1386, %v1892
  %v2237 = vadd.f32 %v1389, %v1895
  %v2238 = vadd.f32 %v1394, %v1900
  %v2239 = vadd.f32 %v1397, %v1903
  %v2240 = vadd.f32 %v1402, %v1908
  %v2241 = vadd.f32 %v1405, %v1911
  %v2242 = vadd.f32 %v1410, %v1916
  %v2243 = vadd.f32 %v1413, %v1919
  %v2244 = vadd.f32 %v1418, %v1924
  %v2245 = vadd.f32 %v1421, %v1927
  %v2246 = vadd.f32 %v1426, %v1932
  %v2247 = vadd.f32 %v1429, %v1935
  %v2248 = vadd.f32 %v1434, %v1940
  %v2249 = vadd.f32 %v1437, %v1943
  %v2250 = vadd.f32 %v1442, %v1948
  %v2251 = vadd.f32 %v1445, %v1951
  %v2252 = vadd.f32 %v1450, %v1956
  %v2253 = vadd.f32 %v1453, %v1959
  %v2254 = vadd.f32 %v1458, %v1964
  %v2255 = vadd.f32 %v1461, %v1967
  %v2256 = vadd.f32 %v1466, %v1972
  %v2257 = vadd.f32 %v1469, %v1975
  %v2258 = vadd.f32 %v1474, %v1980
  %v2259 = vadd.f32 %v1477, %v1983
  %v2260 = vadd.f32 %v1482, %v1988
  %v2261 = vadd.f32 %v1485, %v1991
  %v2262 = vadd.f32 %v1490, %v1996
  %v2263 = vadd.f32 %v1493, %v1999
  %v2264 = vadd.f32 %v1498, %v2004
  %v2265 = vadd.f32 %v1501, %v2007
  %v2266 = vadd.f32 %v1506, %v2012
  %v2267 = vadd.f32 %v1509, %v2015
  %v2268 = vadd.f32 %v1514, %v2020
  %v2269 = vadd.f32 %v1517, %v2023
  %v2270 = vadd.f32 %v1522, %v2028
  %v2271 = vadd.f32 %v1525, %v2031
  %v2272 = vadd.f32 %v1530, %v2036
  %v2273 = vadd.f32 %v1533, %v2039
  %v2274 = vadd.f32 %v1538, %v2044
  %v2275 = vadd.f32 %v1541, %v2047
  %v2276 = vadd.f32 %v1546, %v2052
  %v2277 = vadd.f32 %v1549, %v2055
  %v2278 = vadd.f32 %v1554, %v2060
  %v2279 = vadd.f32 %v1557, %v2063
  %v2280 = vadd.f32 %v1562, %v2068
  %v2281 = vadd.f32 %v1565, %v2071
  %v2282 = vadd.f32 %v1570, %v2076
  %v2283 = vadd.f32 %v1573, %v2079
  %v2284 = vadd.f32 %v1578, %v2084
  %v2285 = vadd.f32 %v1581, %v2087
  %v2286 = vadd.f32 %v1586, %v2092
  %v2287 = vadd.f32 %v1589, %v2095
  %v2288 = vadd.f32 %v1594, %v2100
  %v2289 = vadd.f32 %v1597, %v2103
  %v2290 = vadd.f32 %v1602, %v2108
  %v2291 = vadd.f32 %v1605, %v2111
  %v2292 = vadd.f32 %v1610, %v2116
  %v2293 = vadd.f32 %v1613, %v2119
  %v2294 = vadd.f32 %v1618, %v2124
  %v2295 = vadd.f32 %v1621, %v2127
  %v2296 = vadd.f32 %v1626, %v2132
  %v2297 = vadd.f32 %v1629, %v2135
  %v2298 = vadd.f32 %v1634, %v2140
  %v2299 = vadd.f32 %v1637, %v2143
  %v2300 = vadd.f32 %v1642, %v2148
  %v2301 = vadd.f32 %v1645, %v2151
  %v2302 = vadd.f32 %v1650, %v2156
  %v2303 = vadd.f32 %v1653, %v2159
  %v2304 = vadd.f32 %v1658, %v2164
  %v2305 = vadd.f32 %v1661, %v2167
  %v2306 = vadd.f32 %v1666, %v2172
  %v2307 = vadd.f32 %v1669, %v2175
  %v2308 = vadd.f32 %v1674, %v2180
  %v2309 = vadd.f32 %v1677, %v2183
  %v2310 = vadd.f32 %v1682, %v2188
  %v2311 = vadd.f32 %v1685, %v2191
  %v2312 = vadd.f32 %v1690, %v2196
  %v2313 = vadd.f32 %v1693, %v2199
  %v2314 = vadd.f32 %v1698, %v2204
  %v2315 = vadd.f32 %v1701, %v2207
  %v2316 = vadd.f32 %v1706, %v2212
  %v2317 = vadd.f32 %v1709, %v2215
  %s2318 = scalar_lea.vmem %s1, 96
  %v2319 = vld [vmem:[%s2318] sm:$0xf]
  %v2320 = vld [vmem:[%s2318 + $0x4] sm:$0xf]
  %v2321 = vld [vmem:[%s2318 + $0x8] sm:$0xf]
  %v2322 = vld [vmem:[%s2318 + $0xc] sm:$0xf]
  %v2323 = vld [vmem:[%s2318 + $0x10] sm:$0xf]
  %v2324 = vld [vmem:[%s2318 + $0x14] sm:$0xf]
  %v2325 = vld [vmem:[%s2318 + $0x18] sm:$0xf]
  %v2326 = vld [vmem:[%s2318 + $0x1c] sm:$0xf]
  %v2328 = vunpack.c.l.b16 %v159
  %v2329 = vpack.c.b16 %v1733, %v1732
  %v2330 = vpack.c.b16 %v1735, %v1734
  %v2331 = vpack.c.b16 %v1737, %v1736
  %v2332 = vpack.c.b16 %v1739, %v1738
  %v2333 = vpack.c.b16 %v2328, %v1740
  %v2342 = vunpack.c.l.b16 %v2319
  %v2343 = vunpack.c.l.b16 %v2320
  %v2344 = vunpack.c.l.b16 %v2321
  %v2345 = vunpack.c.l.b16 %v2322
  %v2346 = vunpack.c.l.b16 %v2323
  %v2347 = vunpack.c.l.b16 %v2324
  %v2348 = vunpack.c.l.b16 %v2325
  %v2349 = vunpack.c.l.b16 %v2326
  %v2350 = vpack.c.b16 %v2343, %v2342
  %v2351 = vpack.c.b16 %v2345, %v2344
  %v2352 = vpack.c.b16 %v2347, %v2346
  %v2353 = vpack.c.b16 %v2349, %v2348
  %v2359 = vsel %vm451, %v2329, 0
  %v2362 = vsel %vm451, %v2330, 0
  %v2365 = vsel %vm451, %v2331, 0
  %v2368 = vsel %vm451, %v2332, 0
  %v2371 = vsel %vm451, %v2333, 0
  %2373 = vmatprep.subr.bf16.mxu0 0
  %2374 = vmatpush1.bf16.msra.mxu0 0
  %2375 = vmatprep.subr.bf16.mxu0 0
  %2376 = vmatpush1.bf16.msra.mxu0 0
  %2377 = vmatprep.subr.bf16.mxu0 0
  %2378 = vmatpush1.bf16.msra.mxu0 0
  %2379 = vmatprep.subr.bf16.mxu0 0
  %2380 = vmatpush1.bf16.msra.mxu0 0
  %2381 = vmatprep.subr.bf16.mxu0 0
  %2382 = vmatpush1.bf16.msra.mxu0 %v2353
  %2383 = vmatprep.subr.bf16.mxu0 0
  %2384 = vmatpush1.bf16.msra.mxu0 %v2352
  %2385 = vmatprep.subr.bf16.mxu0 0
  %2386 = vmatpush1.bf16.msra.mxu0 %v2351
  %2387 = vmatprep.subr.bf16.mxu0 0
  %2388 = vmatpush1.bf16.msra.mxu0 %v2350
  %2389 = vmatprep.subr.bf16.mxu0 0
  %2390 = vmatpush2.bf16.msra.mxu0 0
  %2391 = vmatprep.subr.bf16.mxu0 0
  %2392 = vmatpush2.bf16.msra.mxu0 0
  %2393 = vmatprep.subr.bf16.mxu0 0
  %2394 = vmatpush2.bf16.msra.mxu0 0
  %2395 = vmatprep.subr.bf16.mxu0 0
  %2396 = vmatpush2.bf16.msra.mxu0 0
  %2397 = vmatprep.subr.bf16.mxu0 0
  %2398 = vmatpush2.bf16.msra.mxu0 0
  %2399 = vmatprep.subr.bf16.mxu0 0
  %2400 = vmatpush2.bf16.msra.mxu0 0
  %2401 = vmatprep.subr.bf16.mxu0 0
  %2402 = vmatpush2.bf16.msra.mxu0 0
  %2403 = vmatprep.subr.bf16.mxu0 0
  %2404 = vmatpush2.bf16.msra.mxu0 0
  %2405 = vmatprep.mubr.bf16.mxu0 0
  %2406 = vmatmul.mubr.bf16.gmra.mxu0 %v468
  %v2407 = vpop.f32.mrf.mxu0
  %v2408 = vadd.f32 0.0, %v2407
  %v2409 = vpop.f32.mrf.mxu0
  %v2410 = vpop.f32.mrf.mxu0
  %v2411 = vadd.f32 0.0, %v2410
  %v2412 = vpop.f32.mrf.mxu0
  %2413 = vmatprep.mubr.bf16.mxu0 0
  %2414 = vmatmul.mubr.bf16.gmra.mxu0 %v471
  %v2415 = vpop.f32.mrf.mxu0
  %v2416 = vadd.f32 0.0, %v2415
  %v2417 = vpop.f32.mrf.mxu0
  %v2418 = vpop.f32.mrf.mxu0
  %v2419 = vadd.f32 0.0, %v2418
  %v2420 = vpop.f32.mrf.mxu0
  %2421 = vmatprep.mubr.bf16.mxu0 0
  %2422 = vmatmul.mubr.bf16.gmra.mxu0 %v474
  %v2423 = vpop.f32.mrf.mxu0
  %v2424 = vadd.f32 0.0, %v2423
  %v2425 = vpop.f32.mrf.mxu0
  %v2426 = vpop.f32.mrf.mxu0
  %v2427 = vadd.f32 0.0, %v2426
  %v2428 = vpop.f32.mrf.mxu0
  %2429 = vmatprep.mubr.bf16.mxu0 0
  %2430 = vmatmul.mubr.bf16.gmra.mxu0 %v477
  %v2431 = vpop.f32.mrf.mxu0
  %v2432 = vadd.f32 0.0, %v2431
  %v2433 = vpop.f32.mrf.mxu0
  %v2434 = vpop.f32.mrf.mxu0
  %v2435 = vadd.f32 0.0, %v2434
  %v2436 = vpop.f32.mrf.mxu0
  %2437 = vmatprep.mubr.bf16.mxu0 0
  %2438 = vmatmul.mubr.bf16.gmra.mxu0 %v480
  %v2439 = vpop.f32.mrf.mxu0
  %v2440 = vadd.f32 0.0, %v2439
  %v2441 = vpop.f32.mrf.mxu0
  %v2442 = vpop.f32.mrf.mxu0
  %v2443 = vadd.f32 0.0, %v2442
  %v2444 = vpop.f32.mrf.mxu0
  %2445 = vmatprep.mubr.bf16.mxu0 0
  %2446 = vmatmul.mubr.bf16.gmra.mxu0 %v483
  %v2447 = vpop.f32.mrf.mxu0
  %v2448 = vadd.f32 0.0, %v2447
  %v2449 = vpop.f32.mrf.mxu0
  %v2450 = vpop.f32.mrf.mxu0
  %v2451 = vadd.f32 0.0, %v2450
  %v2452 = vpop.f32.mrf.mxu0
  %2453 = vmatprep.mubr.bf16.mxu0 0
  %2454 = vmatmul.mubr.bf16.gmra.mxu0 %v486
  %v2455 = vpop.f32.mrf.mxu0
  %v2456 = vadd.f32 0.0, %v2455
  %v2457 = vpop.f32.mrf.mxu0
  %v2458 = vpop.f32.mrf.mxu0
  %v2459 = vadd.f32 0.0, %v2458
  %v2460 = vpop.f32.mrf.mxu0
  %2461 = vmatprep.mubr.bf16.mxu0 0
  %2462 = vmatmul.mubr.bf16.gmra.mxu0 %v489
  %v2463 = vpop.f32.mrf.mxu0
  %v2464 = vadd.f32 0.0, %v2463
  %v2465 = vpop.f32.mrf.mxu0
  %v2466 = vpop.f32.mrf.mxu0
  %v2467 = vadd.f32 0.0, %v2466
  %v2468 = vpop.f32.mrf.mxu0
  %2469 = vmatprep.mubr.bf16.mxu0 0
  %2470 = vmatmul.mubr.bf16.gmra.mxu0 %v492
  %v2471 = vpop.f32.mrf.mxu0
  %v2472 = vadd.f32 0.0, %v2471
  %v2473 = vpop.f32.mrf.mxu0
  %v2474 = vpop.f32.mrf.mxu0
  %v2475 = vadd.f32 0.0, %v2474
  %v2476 = vpop.f32.mrf.mxu0
  %2477 = vmatprep.mubr.bf16.mxu0 0
  %2478 = vmatmul.mubr.bf16.gmra.mxu0 %v495
  %v2479 = vpop.f32.mrf.mxu0
  %v2480 = vadd.f32 0.0, %v2479
  %v2481 = vpop.f32.mrf.mxu0
  %v2482 = vpop.f32.mrf.mxu0
  %v2483 = vadd.f32 0.0, %v2482
  %v2484 = vpop.f32.mrf.mxu0
  %2485 = vmatprep.mubr.bf16.mxu0 0
  %2486 = vmatmul.mubr.bf16.gmra.mxu0 %v498
  %v2487 = vpop.f32.mrf.mxu0
  %v2488 = vadd.f32 0.0, %v2487
  %v2489 = vpop.f32.mrf.mxu0
  %v2490 = vpop.f32.mrf.mxu0
  %v2491 = vadd.f32 0.0, %v2490
  %v2492 = vpop.f32.mrf.mxu0
  %2493 = vmatprep.mubr.bf16.mxu0 0
  %2494 = vmatmul.mubr.bf16.gmra.mxu0 %v501
  %v2495 = vpop.f32.mrf.mxu0
  %v2496 = vadd.f32 0.0, %v2495
  %v2497 = vpop.f32.mrf.mxu0
  %v2498 = vpop.f32.mrf.mxu0
  %v2499 = vadd.f32 0.0, %v2498
  %v2500 = vpop.f32.mrf.mxu0
  %2501 = vmatprep.mubr.bf16.mxu0 0
  %2502 = vmatmul.mubr.bf16.gmra.mxu0 %v504
  %v2503 = vpop.f32.mrf.mxu0
  %v2504 = vadd.f32 0.0, %v2503
  %v2505 = vpop.f32.mrf.mxu0
  %v2506 = vpop.f32.mrf.mxu0
  %v2507 = vadd.f32 0.0, %v2506
  %v2508 = vpop.f32.mrf.mxu0
  %2509 = vmatprep.mubr.bf16.mxu0 0
  %2510 = vmatmul.mubr.bf16.gmra.mxu0 %v507
  %v2511 = vpop.f32.mrf.mxu0
  %v2512 = vadd.f32 0.0, %v2511
  %v2513 = vpop.f32.mrf.mxu0
  %v2514 = vpop.f32.mrf.mxu0
  %v2515 = vadd.f32 0.0, %v2514
  %v2516 = vpop.f32.mrf.mxu0
  %2517 = vmatprep.mubr.bf16.mxu0 0
  %2518 = vmatmul.mubr.bf16.gmra.mxu0 %v510
  %v2519 = vpop.f32.mrf.mxu0
  %v2520 = vadd.f32 0.0, %v2519
  %v2521 = vpop.f32.mrf.mxu0
  %v2522 = vpop.f32.mrf.mxu0
  %v2523 = vadd.f32 0.0, %v2522
  %v2524 = vpop.f32.mrf.mxu0
  %2525 = vmatprep.mubr.bf16.mxu0 0
  %2526 = vmatmul.mubr.bf16.gmra.mxu0 %v513
  %v2527 = vpop.f32.mrf.mxu0
  %v2528 = vadd.f32 0.0, %v2527
  %v2529 = vpop.f32.mrf.mxu0
  %v2530 = vpop.f32.mrf.mxu0
  %v2531 = vadd.f32 0.0, %v2530
  %v2532 = vpop.f32.mrf.mxu0
  %2533 = vmatprep.mubr.bf16.mxu0 0
  %2534 = vmatmul.mubr.bf16.gmra.mxu0 %v516
  %v2535 = vpop.f32.mrf.mxu0
  %v2536 = vadd.f32 0.0, %v2535
  %v2537 = vpop.f32.mrf.mxu0
  %v2538 = vpop.f32.mrf.mxu0
  %v2539 = vadd.f32 0.0, %v2538
  %v2540 = vpop.f32.mrf.mxu0
  %2541 = vmatprep.mubr.bf16.mxu0 0
  %2542 = vmatmul.mubr.bf16.gmra.mxu0 %v519
  %v2543 = vpop.f32.mrf.mxu0
  %v2544 = vadd.f32 0.0, %v2543
  %v2545 = vpop.f32.mrf.mxu0
  %v2546 = vpop.f32.mrf.mxu0
  %v2547 = vadd.f32 0.0, %v2546
  %v2548 = vpop.f32.mrf.mxu0
  %2549 = vmatprep.mubr.bf16.mxu0 0
  %2550 = vmatmul.mubr.bf16.gmra.mxu0 %v522
  %v2551 = vpop.f32.mrf.mxu0
  %v2552 = vadd.f32 0.0, %v2551
  %v2553 = vpop.f32.mrf.mxu0
  %v2554 = vpop.f32.mrf.mxu0
  %v2555 = vadd.f32 0.0, %v2554
  %v2556 = vpop.f32.mrf.mxu0
  %2557 = vmatprep.mubr.bf16.mxu0 0
  %2558 = vmatmul.mubr.bf16.gmra.mxu0 %v525
  %v2559 = vpop.f32.mrf.mxu0
  %v2560 = vadd.f32 0.0, %v2559
  %v2561 = vpop.f32.mrf.mxu0
  %v2562 = vpop.f32.mrf.mxu0
  %v2563 = vadd.f32 0.0, %v2562
  %v2564 = vpop.f32.mrf.mxu0
  %2565 = vmatprep.mubr.bf16.mxu0 0
  %2566 = vmatmul.mubr.bf16.gmra.mxu0 %v528
  %v2567 = vpop.f32.mrf.mxu0
  %v2568 = vadd.f32 0.0, %v2567
  %v2569 = vpop.f32.mrf.mxu0
  %v2570 = vpop.f32.mrf.mxu0
  %v2571 = vadd.f32 0.0, %v2570
  %v2572 = vpop.f32.mrf.mxu0
  %2573 = vmatprep.mubr.bf16.mxu0 0
  %2574 = vmatmul.mubr.bf16.gmra.mxu0 %v531
  %v2575 = vpop.f32.mrf.mxu0
  %v2576 = vadd.f32 0.0, %v2575
  %v2577 = vpop.f32.mrf.mxu0
  %v2578 = vpop.f32.mrf.mxu0
  %v2579 = vadd.f32 0.0, %v2578
  %v2580 = vpop.f32.mrf.mxu0
  %2581 = vmatprep.mubr.bf16.mxu0 0
  %2582 = vmatmul.mubr.bf16.gmra.mxu0 %v534
  %v2583 = vpop.f32.mrf.mxu0
  %v2584 = vadd.f32 0.0, %v2583
  %v2585 = vpop.f32.mrf.mxu0
  %v2586 = vpop.f32.mrf.mxu0
  %v2587 = vadd.f32 0.0, %v2586
  %v2588 = vpop.f32.mrf.mxu0
  %2589 = vmatprep.mubr.bf16.mxu0 0
  %2590 = vmatmul.mubr.bf16.gmra.mxu0 %v537
  %v2591 = vpop.f32.mrf.mxu0
  %v2592 = vadd.f32 0.0, %v2591
  %v2593 = vpop.f32.mrf.mxu0
  %v2594 = vpop.f32.mrf.mxu0
  %v2595 = vadd.f32 0.0, %v2594
  %v2596 = vpop.f32.mrf.mxu0
  %2597 = vmatprep.mubr.bf16.mxu0 0
  %2598 = vmatmul.mubr.bf16.gmra.mxu0 %v540
  %v2599 = vpop.f32.mrf.mxu0
  %v2600 = vadd.f32 0.0, %v2599
  %v2601 = vpop.f32.mrf.mxu0
  %v2602 = vpop.f32.mrf.mxu0
  %v2603 = vadd.f32 0.0, %v2602
  %v2604 = vpop.f32.mrf.mxu0
  %2605 = vmatprep.mubr.bf16.mxu0 0
  %2606 = vmatmul.mubr.bf16.gmra.mxu0 %v543
  %v2607 = vpop.f32.mrf.mxu0
  %v2608 = vadd.f32 0.0, %v2607
  %v2609 = vpop.f32.mrf.mxu0
  %v2610 = vpop.f32.mrf.mxu0
  %v2611 = vadd.f32 0.0, %v2610
  %v2612 = vpop.f32.mrf.mxu0
  %2613 = vmatprep.mubr.bf16.mxu0 0
  %2614 = vmatmul.mubr.bf16.gmra.mxu0 %v546
  %v2615 = vpop.f32.mrf.mxu0
  %v2616 = vadd.f32 0.0, %v2615
  %v2617 = vpop.f32.mrf.mxu0
  %v2618 = vpop.f32.mrf.mxu0
  %v2619 = vadd.f32 0.0, %v2618
  %v2620 = vpop.f32.mrf.mxu0
  %2621 = vmatprep.mubr.bf16.mxu0 0
  %2622 = vmatmul.mubr.bf16.gmra.mxu0 %v549
  %v2623 = vpop.f32.mrf.mxu0
  %v2624 = vadd.f32 0.0, %v2623
  %v2625 = vpop.f32.mrf.mxu0
  %v2626 = vpop.f32.mrf.mxu0
  %v2627 = vadd.f32 0.0, %v2626
  %v2628 = vpop.f32.mrf.mxu0
  %2629 = vmatprep.mubr.bf16.mxu0 0
  %2630 = vmatmul.mubr.bf16.gmra.mxu0 %v552
  %v2631 = vpop.f32.mrf.mxu0
  %v2632 = vadd.f32 0.0, %v2631
  %v2633 = vpop.f32.mrf.mxu0
  %v2634 = vpop.f32.mrf.mxu0
  %v2635 = vadd.f32 0.0, %v2634
  %v2636 = vpop.f32.mrf.mxu0
  %2637 = vmatprep.mubr.bf16.mxu0 0
  %2638 = vmatmul.mubr.bf16.gmra.mxu0 %v555
  %v2639 = vpop.f32.mrf.mxu0
  %v2640 = vadd.f32 0.0, %v2639
  %v2641 = vpop.f32.mrf.mxu0
  %v2642 = vpop.f32.mrf.mxu0
  %v2643 = vadd.f32 0.0, %v2642
  %v2644 = vpop.f32.mrf.mxu0
  %2645 = vmatprep.mubr.bf16.mxu0 0
  %2646 = vmatmul.mubr.bf16.gmra.mxu0 %v558
  %v2647 = vpop.f32.mrf.mxu0
  %v2648 = vadd.f32 0.0, %v2647
  %v2649 = vpop.f32.mrf.mxu0
  %v2650 = vpop.f32.mrf.mxu0
  %v2651 = vadd.f32 0.0, %v2650
  %v2652 = vpop.f32.mrf.mxu0
  %2653 = vmatprep.mubr.bf16.mxu0 0
  %2654 = vmatmul.mubr.bf16.gmra.mxu0 %v561
  %v2655 = vpop.f32.mrf.mxu0
  %v2656 = vadd.f32 0.0, %v2655
  %v2657 = vpop.f32.mrf.mxu0
  %v2658 = vpop.f32.mrf.mxu0
  %v2659 = vadd.f32 0.0, %v2658
  %v2660 = vpop.f32.mrf.mxu0
  %2661 = vmatprep.mubr.bf16.mxu0 0
  %2662 = vmatmul.mubr.bf16.gmra.mxu0 %v564
  %v2663 = vpop.f32.mrf.mxu0
  %v2664 = vadd.f32 0.0, %v2663
  %v2665 = vpop.f32.mrf.mxu0
  %v2666 = vpop.f32.mrf.mxu0
  %v2667 = vadd.f32 0.0, %v2666
  %v2668 = vpop.f32.mrf.mxu0
  %2669 = vmatprep.mubr.bf16.mxu0 0
  %2670 = vmatmul.mubr.bf16.gmra.mxu0 %v567
  %v2671 = vpop.f32.mrf.mxu0
  %v2672 = vadd.f32 0.0, %v2671
  %v2673 = vpop.f32.mrf.mxu0
  %v2674 = vpop.f32.mrf.mxu0
  %v2675 = vadd.f32 0.0, %v2674
  %v2676 = vpop.f32.mrf.mxu0
  %2677 = vmatprep.mubr.bf16.mxu0 0
  %2678 = vmatmul.mubr.bf16.gmra.mxu0 %v570
  %v2679 = vpop.f32.mrf.mxu0
  %v2680 = vadd.f32 0.0, %v2679
  %v2681 = vpop.f32.mrf.mxu0
  %v2682 = vpop.f32.mrf.mxu0
  %v2683 = vadd.f32 0.0, %v2682
  %v2684 = vpop.f32.mrf.mxu0
  %2685 = vmatprep.mubr.bf16.mxu0 0
  %2686 = vmatmul.mubr.bf16.gmra.mxu0 %v573
  %v2687 = vpop.f32.mrf.mxu0
  %v2688 = vadd.f32 0.0, %v2687
  %v2689 = vpop.f32.mrf.mxu0
  %v2690 = vpop.f32.mrf.mxu0
  %v2691 = vadd.f32 0.0, %v2690
  %v2692 = vpop.f32.mrf.mxu0
  %2693 = vmatprep.mubr.bf16.mxu0 0
  %2694 = vmatmul.mubr.bf16.gmra.mxu0 %v576
  %v2695 = vpop.f32.mrf.mxu0
  %v2696 = vadd.f32 0.0, %v2695
  %v2697 = vpop.f32.mrf.mxu0
  %v2698 = vpop.f32.mrf.mxu0
  %v2699 = vadd.f32 0.0, %v2698
  %v2700 = vpop.f32.mrf.mxu0
  %2701 = vmatprep.mubr.bf16.mxu0 0
  %2702 = vmatmul.mubr.bf16.gmra.mxu0 %v579
  %v2703 = vpop.f32.mrf.mxu0
  %v2704 = vadd.f32 0.0, %v2703
  %v2705 = vpop.f32.mrf.mxu0
  %v2706 = vpop.f32.mrf.mxu0
  %v2707 = vadd.f32 0.0, %v2706
  %v2708 = vpop.f32.mrf.mxu0
  %2709 = vmatprep.mubr.bf16.mxu0 0
  %2710 = vmatmul.mubr.bf16.gmra.mxu0 %v582
  %v2711 = vpop.f32.mrf.mxu0
  %v2712 = vadd.f32 0.0, %v2711
  %v2713 = vpop.f32.mrf.mxu0
  %v2714 = vpop.f32.mrf.mxu0
  %v2715 = vadd.f32 0.0, %v2714
  %v2716 = vpop.f32.mrf.mxu0
  %2717 = vmatprep.mubr.bf16.mxu0 0
  %2718 = vmatmul.mubr.bf16.gmra.mxu0 %v585
  %v2719 = vpop.f32.mrf.mxu0
  %v2720 = vadd.f32 0.0, %v2719
  %v2721 = vpop.f32.mrf.mxu0
  %v2722 = vpop.f32.mrf.mxu0
  %v2723 = vadd.f32 0.0, %v2722
  %v2724 = vpop.f32.mrf.mxu0
  %2725 = vmatprep.mubr.bf16.mxu0 0
  %2726 = vmatmul.mubr.bf16.gmra.mxu0 %v588
  %v2727 = vpop.f32.mrf.mxu0
  %v2728 = vadd.f32 0.0, %v2727
  %v2729 = vpop.f32.mrf.mxu0
  %v2730 = vpop.f32.mrf.mxu0
  %v2731 = vadd.f32 0.0, %v2730
  %v2732 = vpop.f32.mrf.mxu0
  %2733 = vmatprep.mubr.bf16.mxu0 0
  %2734 = vmatmul.mubr.bf16.gmra.mxu0 %v591
  %v2735 = vpop.f32.mrf.mxu0
  %v2736 = vadd.f32 0.0, %v2735
  %v2737 = vpop.f32.mrf.mxu0
  %v2738 = vpop.f32.mrf.mxu0
  %v2739 = vadd.f32 0.0, %v2738
  %v2740 = vpop.f32.mrf.mxu0
  %2741 = vmatprep.mubr.bf16.mxu0 0
  %2742 = vmatmul.mubr.bf16.gmra.mxu0 %v594
  %v2743 = vpop.f32.mrf.mxu0
  %v2744 = vadd.f32 0.0, %v2743
  %v2745 = vpop.f32.mrf.mxu0
  %v2746 = vpop.f32.mrf.mxu0
  %v2747 = vadd.f32 0.0, %v2746
  %v2748 = vpop.f32.mrf.mxu0
  %2749 = vmatprep.mubr.bf16.mxu0 0
  %2750 = vmatmul.mubr.bf16.gmra.mxu0 %v597
  %v2751 = vpop.f32.mrf.mxu0
  %v2752 = vadd.f32 0.0, %v2751
  %v2753 = vpop.f32.mrf.mxu0
  %v2754 = vpop.f32.mrf.mxu0
  %v2755 = vadd.f32 0.0, %v2754
  %v2756 = vpop.f32.mrf.mxu0
  %2757 = vmatprep.mubr.bf16.mxu0 0
  %2758 = vmatmul.mubr.bf16.gmra.mxu0 %v600
  %v2759 = vpop.f32.mrf.mxu0
  %v2760 = vadd.f32 0.0, %v2759
  %v2761 = vpop.f32.mrf.mxu0
  %v2762 = vpop.f32.mrf.mxu0
  %v2763 = vadd.f32 0.0, %v2762
  %v2764 = vpop.f32.mrf.mxu0
  %2765 = vmatprep.mubr.bf16.mxu0 0
  %2766 = vmatmul.mubr.bf16.gmra.mxu0 %v2359
  %v2767 = vpop.f32.mrf.mxu0
  %v2768 = vadd.f32 0.0, %v2767
  %v2769 = vpop.f32.mrf.mxu0
  %v2770 = vpop.f32.mrf.mxu0
  %v2771 = vadd.f32 0.0, %v2770
  %v2772 = vpop.f32.mrf.mxu0
  %2773 = vmatprep.mubr.bf16.mxu0 0
  %2774 = vmatmul.mubr.bf16.gmra.mxu0 %v2362
  %v2775 = vpop.f32.mrf.mxu0
  %v2776 = vadd.f32 0.0, %v2775
  %v2777 = vpop.f32.mrf.mxu0
  %v2778 = vpop.f32.mrf.mxu0
  %v2779 = vadd.f32 0.0, %v2778
  %v2780 = vpop.f32.mrf.mxu0
  %2781 = vmatprep.mubr.bf16.mxu0 0
  %2782 = vmatmul.mubr.bf16.gmra.mxu0 %v2365
  %v2783 = vpop.f32.mrf.mxu0
  %v2784 = vadd.f32 0.0, %v2783
  %v2785 = vpop.f32.mrf.mxu0
  %v2786 = vpop.f32.mrf.mxu0
  %v2787 = vadd.f32 0.0, %v2786
  %v2788 = vpop.f32.mrf.mxu0
  %2789 = vmatprep.mubr.bf16.mxu0 0
  %2790 = vmatmul.mubr.bf16.gmra.mxu0 %v2368
  %v2791 = vpop.f32.mrf.mxu0
  %v2792 = vadd.f32 0.0, %v2791
  %v2793 = vpop.f32.mrf.mxu0
  %v2794 = vpop.f32.mrf.mxu0
  %v2795 = vadd.f32 0.0, %v2794
  %v2796 = vpop.f32.mrf.mxu0
  %2797 = vmatprep.mubr.bf16.mxu0 0
  %2798 = vmatmul.mubr.bf16.gmra.mxu0 %v2371
  %v2799 = vpop.f32.mrf.mxu0
  %v2800 = vadd.f32 0.0, %v2799
  %v2801 = vpop.f32.mrf.mxu0
  %v2802 = vpop.f32.mrf.mxu0
  %v2803 = vadd.f32 0.0, %v2802
  %v2804 = vpop.f32.mrf.mxu0
  %2805 = vdwg.mxu0
  %v2806 = vadd.f32 %v2218, %v2408
  %v2807 = vadd.f32 %v2219, %v2411
  %v2808 = vadd.f32 %v2220, %v2416
  %v2809 = vadd.f32 %v2221, %v2419
  %v2810 = vadd.f32 %v2222, %v2424
  %v2811 = vadd.f32 %v2223, %v2427
  %v2812 = vadd.f32 %v2224, %v2432
  %v2813 = vadd.f32 %v2225, %v2435
  %v2814 = vadd.f32 %v2226, %v2440
  %v2815 = vadd.f32 %v2227, %v2443
  %v2816 = vadd.f32 %v2228, %v2448
  %v2817 = vadd.f32 %v2229, %v2451
  %v2818 = vadd.f32 %v2230, %v2456
  %v2819 = vadd.f32 %v2231, %v2459
  %v2820 = vadd.f32 %v2232, %v2464
  %v2821 = vadd.f32 %v2233, %v2467
  %v2822 = vadd.f32 %v2234, %v2472
  %v2823 = vadd.f32 %v2235, %v2475
  %v2824 = vadd.f32 %v2236, %v2480
  %v2825 = vadd.f32 %v2237, %v2483
  %v2826 = vadd.f32 %v2238, %v2488
  %v2827 = vadd.f32 %v2239, %v2491
  %v2828 = vadd.f32 %v2240, %v2496
  %v2829 = vadd.f32 %v2241, %v2499
  %v2830 = vadd.f32 %v2242, %v2504
  %v2831 = vadd.f32 %v2243, %v2507
  %v2832 = vadd.f32 %v2244, %v2512
  %v2833 = vadd.f32 %v2245, %v2515
  %v2834 = vadd.f32 %v2246, %v2520
  %v2835 = vadd.f32 %v2247, %v2523
  %v2836 = vadd.f32 %v2248, %v2528
  %v2837 = vadd.f32 %v2249, %v2531
  %v2838 = vadd.f32 %v2250, %v2536
  %v2839 = vadd.f32 %v2251, %v2539
  %v2840 = vadd.f32 %v2252, %v2544
  %v2841 = vadd.f32 %v2253, %v2547
  %v2842 = vadd.f32 %v2254, %v2552
  %v2843 = vadd.f32 %v2255, %v2555
  %v2844 = vadd.f32 %v2256, %v2560
  %v2845 = vadd.f32 %v2257, %v2563
  %v2846 = vadd.f32 %v2258, %v2568
  %v2847 = vadd.f32 %v2259, %v2571
  %v2848 = vadd.f32 %v2260, %v2576
  %v2849 = vadd.f32 %v2261, %v2579
  %v2850 = vadd.f32 %v2262, %v2584
  %v2851 = vadd.f32 %v2263, %v2587
  %v2852 = vadd.f32 %v2264, %v2592
  %v2853 = vadd.f32 %v2265, %v2595
  %v2854 = vadd.f32 %v2266, %v2600
  %v2855 = vadd.f32 %v2267, %v2603
  %v2856 = vadd.f32 %v2268, %v2608
  %v2857 = vadd.f32 %v2269, %v2611
  %v2858 = vadd.f32 %v2270, %v2616
  %v2859 = vadd.f32 %v2271, %v2619
  %v2860 = vadd.f32 %v2272, %v2624
  %v2861 = vadd.f32 %v2273, %v2627
  %v2862 = vadd.f32 %v2274, %v2632
  %v2863 = vadd.f32 %v2275, %v2635
  %v2864 = vadd.f32 %v2276, %v2640
  %v2865 = vadd.f32 %v2277, %v2643
  %v2866 = vadd.f32 %v2278, %v2648
  %v2867 = vadd.f32 %v2279, %v2651
  %v2868 = vadd.f32 %v2280, %v2656
  %v2869 = vadd.f32 %v2281, %v2659
  %v2870 = vadd.f32 %v2282, %v2664
  %v2871 = vadd.f32 %v2283, %v2667
  %v2872 = vadd.f32 %v2284, %v2672
  %v2873 = vadd.f32 %v2285, %v2675
  %v2874 = vadd.f32 %v2286, %v2680
  %v2875 = vadd.f32 %v2287, %v2683
  %v2876 = vadd.f32 %v2288, %v2688
  %v2877 = vadd.f32 %v2289, %v2691
  %v2878 = vadd.f32 %v2290, %v2696
  %v2879 = vadd.f32 %v2291, %v2699
  %v2880 = vadd.f32 %v2292, %v2704
  %v2881 = vadd.f32 %v2293, %v2707
  %v2882 = vadd.f32 %v2294, %v2712
  %v2883 = vadd.f32 %v2295, %v2715
  %v2884 = vadd.f32 %v2296, %v2720
  %v2885 = vadd.f32 %v2297, %v2723
  %v2886 = vadd.f32 %v2298, %v2728
  %v2887 = vadd.f32 %v2299, %v2731
  %v2888 = vadd.f32 %v2300, %v2736
  %v2889 = vadd.f32 %v2301, %v2739
  %v2890 = vadd.f32 %v2302, %v2744
  %v2891 = vadd.f32 %v2303, %v2747
  %v2892 = vadd.f32 %v2304, %v2752
  %v2893 = vadd.f32 %v2305, %v2755
  %v2894 = vadd.f32 %v2306, %v2760
  %v2895 = vadd.f32 %v2307, %v2763
  %v2896 = vadd.f32 %v2308, %v2768
  %v2897 = vadd.f32 %v2309, %v2771
  %v2898 = vadd.f32 %v2310, %v2776
  %v2899 = vadd.f32 %v2311, %v2779
  %v2900 = vadd.f32 %v2312, %v2784
  %v2901 = vadd.f32 %v2313, %v2787
  %v2902 = vadd.f32 %v2314, %v2792
  %v2903 = vadd.f32 %v2315, %v2795
  %v2904 = vadd.f32 %v2316, %v2800
  %v2905 = vadd.f32 %v2317, %v2803
  %v2906 = vld [vmem:[%s2] sm:$0x1]
  %v2908 = vlaneseq
  %v2909 = vshrl.u32 %v2908, 7
  %v2910 = vsub.s32 0, %v2909
  %v2911 = vrot.slane %v2906, %v2910
  %v2913 = vadd.f32 %v2806, %v2911
  %v2914 = vadd.f32 %v2807, %v2911
  %v2915 = vadd.f32 %v2808, %v2911
  %v2916 = vadd.f32 %v2809, %v2911
  %v2917 = vadd.f32 %v2810, %v2911
  %v2918 = vadd.f32 %v2811, %v2911
  %v2919 = vadd.f32 %v2812, %v2911
  %v2920 = vadd.f32 %v2813, %v2911
  %v2921 = vadd.f32 %v2814, %v2911
  %v2922 = vadd.f32 %v2815, %v2911
  %v2923 = vadd.f32 %v2816, %v2911
  %v2924 = vadd.f32 %v2817, %v2911
  %v2925 = vadd.f32 %v2818, %v2911
  %v2926 = vadd.f32 %v2819, %v2911
  %v2927 = vadd.f32 %v2820, %v2911
  %v2928 = vadd.f32 %v2821, %v2911
  %v2929 = vadd.f32 %v2822, %v2911
  %v2930 = vadd.f32 %v2823, %v2911
  %v2931 = vadd.f32 %v2824, %v2911
  %v2932 = vadd.f32 %v2825, %v2911
  %v2933 = vadd.f32 %v2826, %v2911
  %v2934 = vadd.f32 %v2827, %v2911
  %v2935 = vadd.f32 %v2828, %v2911
  %v2936 = vadd.f32 %v2829, %v2911
  %v2937 = vadd.f32 %v2830, %v2911
  %v2938 = vadd.f32 %v2831, %v2911
  %v2939 = vadd.f32 %v2832, %v2911
  %v2940 = vadd.f32 %v2833, %v2911
  %v2941 = vadd.f32 %v2834, %v2911
  %v2942 = vadd.f32 %v2835, %v2911
  %v2943 = vadd.f32 %v2836, %v2911
  %v2944 = vadd.f32 %v2837, %v2911
  %v2945 = vadd.f32 %v2838, %v2911
  %v2946 = vadd.f32 %v2839, %v2911
  %v2947 = vadd.f32 %v2840, %v2911
  %v2948 = vadd.f32 %v2841, %v2911
  %v2949 = vadd.f32 %v2842, %v2911
  %v2950 = vadd.f32 %v2843, %v2911
  %v2951 = vadd.f32 %v2844, %v2911
  %v2952 = vadd.f32 %v2845, %v2911
  %v2953 = vadd.f32 %v2846, %v2911
  %v2954 = vadd.f32 %v2847, %v2911
  %v2955 = vadd.f32 %v2848, %v2911
  %v2956 = vadd.f32 %v2849, %v2911
  %v2957 = vadd.f32 %v2850, %v2911
  %v2958 = vadd.f32 %v2851, %v2911
  %v2959 = vadd.f32 %v2852, %v2911
  %v2960 = vadd.f32 %v2853, %v2911
  %v2961 = vadd.f32 %v2854, %v2911
  %v2962 = vadd.f32 %v2855, %v2911
  %v2963 = vadd.f32 %v2856, %v2911
  %v2964 = vadd.f32 %v2857, %v2911
  %v2965 = vadd.f32 %v2858, %v2911
  %v2966 = vadd.f32 %v2859, %v2911
  %v2967 = vadd.f32 %v2860, %v2911
  %v2968 = vadd.f32 %v2861, %v2911
  %v2969 = vadd.f32 %v2862, %v2911
  %v2970 = vadd.f32 %v2863, %v2911
  %v2971 = vadd.f32 %v2864, %v2911
  %v2972 = vadd.f32 %v2865, %v2911
  %v2973 = vadd.f32 %v2866, %v2911
  %v2974 = vadd.f32 %v2867, %v2911
  %v2975 = vadd.f32 %v2868, %v2911
  %v2976 = vadd.f32 %v2869, %v2911
  %v2977 = vadd.f32 %v2870, %v2911
  %v2978 = vadd.f32 %v2871, %v2911
  %v2979 = vadd.f32 %v2872, %v2911
  %v2980 = vadd.f32 %v2873, %v2911
  %v2981 = vadd.f32 %v2874, %v2911
  %v2982 = vadd.f32 %v2875, %v2911
  %v2983 = vadd.f32 %v2876, %v2911
  %v2984 = vadd.f32 %v2877, %v2911
  %v2985 = vadd.f32 %v2878, %v2911
  %v2986 = vadd.f32 %v2879, %v2911
  %v2987 = vadd.f32 %v2880, %v2911
  %v2988 = vadd.f32 %v2881, %v2911
  %v2989 = vadd.f32 %v2882, %v2911
  %v2990 = vadd.f32 %v2883, %v2911
  %v2991 = vadd.f32 %v2884, %v2911
  %v2992 = vadd.f32 %v2885, %v2911
  %v2993 = vadd.f32 %v2886, %v2911
  %v2994 = vadd.f32 %v2887, %v2911
  %v2995 = vadd.f32 %v2888, %v2911
  %v2996 = vadd.f32 %v2889, %v2911
  %v2997 = vadd.f32 %v2890, %v2911
  %v2998 = vadd.f32 %v2891, %v2911
  %v2999 = vadd.f32 %v2892, %v2911
  %v3000 = vadd.f32 %v2893, %v2911
  %v3001 = vadd.f32 %v2894, %v2911
  %v3002 = vadd.f32 %v2895, %v2911
  %v3003 = vadd.f32 %v2896, %v2911
  %v3004 = vadd.f32 %v2897, %v2911
  %v3005 = vadd.f32 %v2898, %v2911
  %v3006 = vadd.f32 %v2899, %v2911
  %v3007 = vadd.f32 %v2900, %v2911
  %v3008 = vadd.f32 %v2901, %v2911
  %v3009 = vadd.f32 %v2902, %v2911
  %v3010 = vadd.f32 %v2903, %v2911
  %v3011 = vadd.f32 %v2904, %v2911
  %v3012 = vadd.f32 %v2905, %v2911
  %v3013 = vmax.f32 %v2913, 0.0
  %v3014 = vmax.f32 %v2914, 0.0
  %v3015 = vmax.f32 %v2915, 0.0
  %v3016 = vmax.f32 %v2916, 0.0
  %v3017 = vmax.f32 %v2917, 0.0
  %v3018 = vmax.f32 %v2918, 0.0
  %v3019 = vmax.f32 %v2919, 0.0
  %v3020 = vmax.f32 %v2920, 0.0
  %v3021 = vmax.f32 %v2921, 0.0
  %v3022 = vmax.f32 %v2922, 0.0
  %v3023 = vmax.f32 %v2923, 0.0
  %v3024 = vmax.f32 %v2924, 0.0
  %v3025 = vmax.f32 %v2925, 0.0
  %v3026 = vmax.f32 %v2926, 0.0
  %v3027 = vmax.f32 %v2927, 0.0
  %v3028 = vmax.f32 %v2928, 0.0
  %v3029 = vmax.f32 %v2929, 0.0
  %v3030 = vmax.f32 %v2930, 0.0
  %v3031 = vmax.f32 %v2931, 0.0
  %v3032 = vmax.f32 %v2932, 0.0
  %v3033 = vmax.f32 %v2933, 0.0
  %v3034 = vmax.f32 %v2934, 0.0
  %v3035 = vmax.f32 %v2935, 0.0
  %v3036 = vmax.f32 %v2936, 0.0
  %v3037 = vmax.f32 %v2937, 0.0
  %v3038 = vmax.f32 %v2938, 0.0
  %v3039 = vmax.f32 %v2939, 0.0
  %v3040 = vmax.f32 %v2940, 0.0
  %v3041 = vmax.f32 %v2941, 0.0
  %v3042 = vmax.f32 %v2942, 0.0
  %v3043 = vmax.f32 %v2943, 0.0
  %v3044 = vmax.f32 %v2944, 0.0
  %v3045 = vmax.f32 %v2945, 0.0
  %v3046 = vmax.f32 %v2946, 0.0
  %v3047 = vmax.f32 %v2947, 0.0
  %v3048 = vmax.f32 %v2948, 0.0
  %v3049 = vmax.f32 %v2949, 0.0
  %v3050 = vmax.f32 %v2950, 0.0
  %v3051 = vmax.f32 %v2951, 0.0
  %v3052 = vmax.f32 %v2952, 0.0
  %v3053 = vmax.f32 %v2953, 0.0
  %v3054 = vmax.f32 %v2954, 0.0
  %v3055 = vmax.f32 %v2955, 0.0
  %v3056 = vmax.f32 %v2956, 0.0
  %v3057 = vmax.f32 %v2957, 0.0
  %v3058 = vmax.f32 %v2958, 0.0
  %v3059 = vmax.f32 %v2959, 0.0
  %v3060 = vmax.f32 %v2960, 0.0
  %v3061 = vmax.f32 %v2961, 0.0
  %v3062 = vmax.f32 %v2962, 0.0
  %v3063 = vmax.f32 %v2963, 0.0
  %v3064 = vmax.f32 %v2964, 0.0
  %v3065 = vmax.f32 %v2965, 0.0
  %v3066 = vmax.f32 %v2966, 0.0
  %v3067 = vmax.f32 %v2967, 0.0
  %v3068 = vmax.f32 %v2968, 0.0
  %v3069 = vmax.f32 %v2969, 0.0
  %v3070 = vmax.f32 %v2970, 0.0
  %v3071 = vmax.f32 %v2971, 0.0
  %v3072 = vmax.f32 %v2972, 0.0
  %v3073 = vmax.f32 %v2973, 0.0
  %v3074 = vmax.f32 %v2974, 0.0
  %v3075 = vmax.f32 %v2975, 0.0
  %v3076 = vmax.f32 %v2976, 0.0
  %v3077 = vmax.f32 %v2977, 0.0
  %v3078 = vmax.f32 %v2978, 0.0
  %v3079 = vmax.f32 %v2979, 0.0
  %v3080 = vmax.f32 %v2980, 0.0
  %v3081 = vmax.f32 %v2981, 0.0
  %v3082 = vmax.f32 %v2982, 0.0
  %v3083 = vmax.f32 %v2983, 0.0
  %v3084 = vmax.f32 %v2984, 0.0
  %v3085 = vmax.f32 %v2985, 0.0
  %v3086 = vmax.f32 %v2986, 0.0
  %v3087 = vmax.f32 %v2987, 0.0
  %v3088 = vmax.f32 %v2988, 0.0
  %v3089 = vmax.f32 %v2989, 0.0
  %v3090 = vmax.f32 %v2990, 0.0
  %v3091 = vmax.f32 %v2991, 0.0
  %v3092 = vmax.f32 %v2992, 0.0
  %v3093 = vmax.f32 %v2993, 0.0
  %v3094 = vmax.f32 %v2994, 0.0
  %v3095 = vmax.f32 %v2995, 0.0
  %v3096 = vmax.f32 %v2996, 0.0
  %v3097 = vmax.f32 %v2997, 0.0
  %v3098 = vmax.f32 %v2998, 0.0
  %v3099 = vmax.f32 %v2999, 0.0
  %v3100 = vmax.f32 %v3000, 0.0
  %v3101 = vmax.f32 %v3001, 0.0
  %v3102 = vmax.f32 %v3002, 0.0
  %v3103 = vmax.f32 %v3003, 0.0
  %v3104 = vmax.f32 %v3004, 0.0
  %v3105 = vmax.f32 %v3005, 0.0
  %v3106 = vmax.f32 %v3006, 0.0
  %v3107 = vmax.f32 %v3007, 0.0
  %v3108 = vmax.f32 %v3008, 0.0
  %v3109 = vmax.f32 %v3009, 0.0
  %v3110 = vmax.f32 %v3010, 0.0
  %v3111 = vmax.f32 %v3011, 0.0
  %v3112 = vmax.f32 %v3012, 0.0
  %v3113 = vpack.c.bf16 %v3014, %v3013
  %v3114 = vpack.c.bf16 %v3016, %v3015
  %v3115 = vpack.c.bf16 %v3018, %v3017
  %v3116 = vpack.c.bf16 %v3020, %v3019
  %v3117 = vpack.c.bf16 %v3022, %v3021
  %v3118 = vpack.c.bf16 %v3024, %v3023
  %v3119 = vpack.c.bf16 %v3026, %v3025
  %v3120 = vpack.c.bf16 %v3028, %v3027
  %v3121 = vpack.c.bf16 %v3030, %v3029
  %v3122 = vpack.c.bf16 %v3032, %v3031
  %v3123 = vpack.c.bf16 %v3034, %v3033
  %v3124 = vpack.c.bf16 %v3036, %v3035
  %v3125 = vpack.c.bf16 %v3038, %v3037
  %v3126 = vpack.c.bf16 %v3040, %v3039
  %v3127 = vpack.c.bf16 %v3042, %v3041
  %v3128 = vpack.c.bf16 %v3044, %v3043
  %v3129 = vpack.c.bf16 %v3046, %v3045
  %v3130 = vpack.c.bf16 %v3048, %v3047
  %v3131 = vpack.c.bf16 %v3050, %v3049
  %v3132 = vpack.c.bf16 %v3052, %v3051
  %v3133 = vpack.c.bf16 %v3054, %v3053
  %v3134 = vpack.c.bf16 %v3056, %v3055
  %v3135 = vpack.c.bf16 %v3058, %v3057
  %v3136 = vpack.c.bf16 %v3060, %v3059
  %v3137 = vpack.c.bf16 %v3062, %v3061
  %v3138 = vpack.c.bf16 %v3064, %v3063
  %v3139 = vpack.c.bf16 %v3066, %v3065
  %v3140 = vpack.c.bf16 %v3068, %v3067
  %v3141 = vpack.c.bf16 %v3070, %v3069
  %v3142 = vpack.c.bf16 %v3072, %v3071
  %v3143 = vpack.c.bf16 %v3074, %v3073
  %v3144 = vpack.c.bf16 %v3076, %v3075
  %v3145 = vpack.c.bf16 %v3078, %v3077
  %v3146 = vpack.c.bf16 %v3080, %v3079
  %v3147 = vpack.c.bf16 %v3082, %v3081
  %v3148 = vpack.c.bf16 %v3084, %v3083
  %v3149 = vpack.c.bf16 %v3086, %v3085
  %v3150 = vpack.c.bf16 %v3088, %v3087
  %v3151 = vpack.c.bf16 %v3090, %v3089
  %v3152 = vpack.c.bf16 %v3092, %v3091
  %v3153 = vpack.c.bf16 %v3094, %v3093
  %v3154 = vpack.c.bf16 %v3096, %v3095
  %v3155 = vpack.c.bf16 %v3098, %v3097
  %v3156 = vpack.c.bf16 %v3100, %v3099
  %v3157 = vpack.c.bf16 %v3102, %v3101
  %v3158 = vpack.c.bf16 %v3104, %v3103
  %v3159 = vpack.c.bf16 %v3106, %v3105
  %v3160 = vpack.c.bf16 %v3108, %v3107
  %v3161 = vpack.c.bf16 %v3110, %v3109
  %v3162 = vpack.c.bf16 %v3112, %v3111
  %v3213 = vunpack.c.l.b16 %v3113
  %v3214 = vunpack.c.h.b16 %v3113
  %v3215 = vunpack.c.l.b16 %v3114
  %v3216 = vunpack.c.h.b16 %v3114
  %v3217 = vunpack.c.l.b16 %v3115
  %v3218 = vunpack.c.h.b16 %v3115
  %v3219 = vunpack.c.l.b16 %v3116
  %v3220 = vunpack.c.h.b16 %v3116
  %v3221 = vunpack.c.l.b16 %v3117
  %v3222 = vunpack.c.h.b16 %v3117
  %v3223 = vunpack.c.l.b16 %v3118
  %v3224 = vunpack.c.h.b16 %v3118
  %v3225 = vunpack.c.l.b16 %v3119
  %v3226 = vunpack.c.h.b16 %v3119
  %v3227 = vunpack.c.l.b16 %v3120
  %v3228 = vunpack.c.h.b16 %v3120
  %v3229 = vunpack.c.l.b16 %v3121
  %v3230 = vunpack.c.h.b16 %v3121
  %v3231 = vunpack.c.l.b16 %v3122
  %v3232 = vunpack.c.h.b16 %v3122
  %v3233 = vunpack.c.l.b16 %v3123
  %v3234 = vunpack.c.h.b16 %v3123
  %v3235 = vunpack.c.l.b16 %v3124
  %v3236 = vunpack.c.h.b16 %v3124
  %v3237 = vunpack.c.l.b16 %v3125
  %v3238 = vunpack.c.h.b16 %v3125
  %v3239 = vunpack.c.l.b16 %v3126
  %v3240 = vunpack.c.h.b16 %v3126
  %v3241 = vunpack.c.l.b16 %v3127
  %v3242 = vunpack.c.h.b16 %v3127
  %v3243 = vunpack.c.l.b16 %v3128
  %v3244 = vunpack.c.h.b16 %v3128
  %v3245 = vunpack.c.l.b16 %v3129
  %v3246 = vunpack.c.h.b16 %v3129
  %v3247 = vunpack.c.l.b16 %v3130
  %v3248 = vunpack.c.h.b16 %v3130
  %v3249 = vunpack.c.l.b16 %v3131
  %v3250 = vunpack.c.h.b16 %v3131
  %v3251 = vunpack.c.l.b16 %v3132
  %v3252 = vunpack.c.h.b16 %v3132
  %v3253 = vunpack.c.l.b16 %v3133
  %v3254 = vunpack.c.h.b16 %v3133
  %v3255 = vunpack.c.l.b16 %v3134
  %v3256 = vunpack.c.h.b16 %v3134
  %v3257 = vunpack.c.l.b16 %v3135
  %v3258 = vunpack.c.h.b16 %v3135
  %v3259 = vunpack.c.l.b16 %v3136
  %v3260 = vunpack.c.h.b16 %v3136
  %v3261 = vunpack.c.l.b16 %v3137
  %v3262 = vunpack.c.h.b16 %v3137
  %v3263 = vunpack.c.l.b16 %v3138
  %v3264 = vunpack.c.h.b16 %v3138
  %v3265 = vunpack.c.l.b16 %v3139
  %v3266 = vunpack.c.h.b16 %v3139
  %v3267 = vunpack.c.l.b16 %v3140
  %v3268 = vunpack.c.h.b16 %v3140
  %v3269 = vunpack.c.l.b16 %v3141
  %v3270 = vunpack.c.h.b16 %v3141
  %v3271 = vunpack.c.l.b16 %v3142
  %v3272 = vunpack.c.h.b16 %v3142
  %v3273 = vunpack.c.l.b16 %v3143
  %v3274 = vunpack.c.h.b16 %v3143
  %v3275 = vunpack.c.l.b16 %v3144
  %v3276 = vunpack.c.h.b16 %v3144
  %v3277 = vunpack.c.l.b16 %v3145
  %v3278 = vunpack.c.h.b16 %v3145
  %v3279 = vunpack.c.l.b16 %v3146
  %v3280 = vunpack.c.h.b16 %v3146
  %v3281 = vunpack.c.l.b16 %v3147
  %v3282 = vunpack.c.h.b16 %v3147
  %v3283 = vunpack.c.l.b16 %v3148
  %v3284 = vunpack.c.h.b16 %v3148
  %v3285 = vunpack.c.l.b16 %v3149
  %v3286 = vunpack.c.h.b16 %v3149
  %v3287 = vunpack.c.l.b16 %v3150
  %v3288 = vunpack.c.h.b16 %v3150
  %v3289 = vunpack.c.l.b16 %v3151
  %v3290 = vunpack.c.h.b16 %v3151
  %v3291 = vunpack.c.l.b16 %v3152
  %v3292 = vunpack.c.h.b16 %v3152
  %v3293 = vunpack.c.l.b16 %v3153
  %v3294 = vunpack.c.h.b16 %v3153
  %v3295 = vunpack.c.l.b16 %v3154
  %v3296 = vunpack.c.h.b16 %v3154
  %v3297 = vunpack.c.l.b16 %v3155
  %v3298 = vunpack.c.h.b16 %v3155
  %v3299 = vunpack.c.l.b16 %v3156
  %v3300 = vunpack.c.h.b16 %v3156
  %v3301 = vunpack.c.l.b16 %v3157
  %v3302 = vunpack.c.h.b16 %v3157
  %v3303 = vunpack.c.l.b16 %v3158
  %v3304 = vunpack.c.h.b16 %v3158
  %v3305 = vunpack.c.l.b16 %v3159
  %v3306 = vunpack.c.h.b16 %v3159
  %v3307 = vunpack.c.l.b16 %v3160
  %v3308 = vunpack.c.h.b16 %v3160
  %v3309 = vunpack.c.l.b16 %v3161
  %v3310 = vunpack.c.h.b16 %v3161
  %v3311 = vunpack.c.l.b16 %v3162
  %v3312 = vunpack.c.h.b16 %v3162
  %v3313 = vld [vmem:[%s3] sm:$0xf]
  %v3314 = vld [vmem:[%s3 + $0x4] sm:$0xf]
  %v3315 = vld [vmem:[%s3 + $0x8] sm:$0xf]
  %v3316 = vld [vmem:[%s3 + $0xc] sm:$0xf]
  %s3317 = scalar_lea.vmem %s3, 16
  %v3318 = vld [vmem:[%s3317] sm:$0xf]
  %v3319 = vld [vmem:[%s3317 + $0x4] sm:$0xf]
  %v3320 = vld [vmem:[%s3317 + $0x8] sm:$0xf]
  %v3321 = vld [vmem:[%s3317 + $0xc] sm:$0xf]
  %v3322 = vpack.c.b16 %v3216, %v3214
  %v3323 = vpack.c.b16 %v3220, %v3218
  %v3324 = vpack.c.b16 %v3236, %v3234
  %v3325 = vpack.c.b16 %v3240, %v3238
  %v3326 = vpack.c.b16 %v3256, %v3254
  %v3327 = vpack.c.b16 %v3260, %v3258
  %v3328 = vpack.c.b16 %v3276, %v3274
  %v3329 = vpack.c.b16 %v3280, %v3278
  %v3334 = vunpack.c.l.b16 %v3318
  %v3335 = vunpack.c.l.b16 %v3319
  %v3336 = vunpack.c.l.b16 %v3320
  %v3337 = vunpack.c.l.b16 %v3321
  %v3338 = vpack.c.b16 %v3335, %v3334
  %v3339 = vpack.c.b16 %v3337, %v3336
  %vm3342 = vcmask 261120
  %v3344 = vsel %vm3342, %v3322, 0
  %v3347 = vsel %vm3342, %v3323, 0
  %v3350 = vsel %vm3342, %v3324, 0
  %v3353 = vsel %vm3342, %v3325, 0
  %v3356 = vsel %vm3342, %v3326, 0
  %v3359 = vsel %vm3342, %v3327, 0
  %v3362 = vsel %vm3342, %v3328, 0
  %v3365 = vsel %vm3342, %v3329, 0
  %3367 = vmatprep.subr.bf16.mxu0 0
  %3368 = vmatpush1.bf16.msra.mxu0 0
  %3369 = vmatprep.subr.bf16.mxu0 0
  %3370 = vmatpush1.bf16.msra.mxu0 0
  %3371 = vmatprep.subr.bf16.mxu0 0
  %3372 = vmatpush1.bf16.msra.mxu0 0
  %3373 = vmatprep.subr.bf16.mxu0 0
  %3374 = vmatpush1.bf16.msra.mxu0 0
  %3375 = vmatprep.subr.bf16.mxu0 0
  %3376 = vmatpush1.bf16.msra.mxu0 0
  %3377 = vmatprep.subr.bf16.mxu0 0
  %3378 = vmatpush1.bf16.msra.mxu0 0
  %3379 = vmatprep.subr.bf16.mxu0 0
  %3380 = vmatpush1.bf16.msra.mxu0 %v3339
  %3381 = vmatprep.subr.bf16.mxu0 0
  %3382 = vmatpush1.bf16.msra.mxu0 %v3338
  %3383 = vmatprep.subr.bf16.mxu0 0
  %3384 = vmatpush2.bf16.msra.mxu0 0
  %3385 = vmatprep.subr.bf16.mxu0 0
  %3386 = vmatpush2.bf16.msra.mxu0 0
  %3387 = vmatprep.subr.bf16.mxu0 0
  %3388 = vmatpush2.bf16.msra.mxu0 0
  %3389 = vmatprep.subr.bf16.mxu0 0
  %3390 = vmatpush2.bf16.msra.mxu0 0
  %3391 = vmatprep.subr.bf16.mxu0 0
  %3392 = vmatpush2.bf16.msra.mxu0 0
  %3393 = vmatprep.subr.bf16.mxu0 0
  %3394 = vmatpush2.bf16.msra.mxu0 0
  %3395 = vmatprep.subr.bf16.mxu0 0
  %3396 = vmatpush2.bf16.msra.mxu0 0
  %3397 = vmatprep.subr.bf16.mxu0 0
  %3398 = vmatpush2.bf16.msra.mxu0 0
  %3399 = vmatprep.mubr.bf16.mxu0 0
  %3400 = vmatmul.mubr.bf16.gmra.mxu0 %v3344
  %v3401 = vpop.f32.mrf.mxu0
  %v3402 = vadd.f32 0.0, %v3401
  %v3403 = vpop.f32.mrf.mxu0
  %v3404 = vpop.f32.mrf.mxu0
  %v3405 = vadd.f32 0.0, %v3404
  %v3406 = vpop.f32.mrf.mxu0
  %3407 = vmatprep.mubr.bf16.mxu0 0
  %3408 = vmatmul.mubr.bf16.gmra.mxu0 %v3347
  %v3409 = vpop.f32.mrf.mxu0
  %v3410 = vadd.f32 0.0, %v3409
  %v3411 = vpop.f32.mrf.mxu0
  %v3412 = vpop.f32.mrf.mxu0
  %v3413 = vadd.f32 0.0, %v3412
  %v3414 = vpop.f32.mrf.mxu0
  %3415 = vmatprep.mubr.bf16.mxu0 0
  %3416 = vmatmul.mubr.bf16.gmra.mxu0 %v3350
  %v3417 = vpop.f32.mrf.mxu0
  %v3418 = vadd.f32 0.0, %v3417
  %v3419 = vpop.f32.mrf.mxu0
  %v3420 = vpop.f32.mrf.mxu0
  %v3421 = vadd.f32 0.0, %v3420
  %v3422 = vpop.f32.mrf.mxu0
  %3423 = vmatprep.mubr.bf16.mxu0 0
  %3424 = vmatmul.mubr.bf16.gmra.mxu0 %v3353
  %v3425 = vpop.f32.mrf.mxu0
  %v3426 = vadd.f32 0.0, %v3425
  %v3427 = vpop.f32.mrf.mxu0
  %v3428 = vpop.f32.mrf.mxu0
  %v3429 = vadd.f32 0.0, %v3428
  %v3430 = vpop.f32.mrf.mxu0
  %3431 = vmatprep.mubr.bf16.mxu0 0
  %3432 = vmatmul.mubr.bf16.gmra.mxu0 %v3356
  %v3433 = vpop.f32.mrf.mxu0
  %v3434 = vadd.f32 0.0, %v3433
  %v3435 = vpop.f32.mrf.mxu0
  %v3436 = vpop.f32.mrf.mxu0
  %v3437 = vadd.f32 0.0, %v3436
  %v3438 = vpop.f32.mrf.mxu0
  %3439 = vmatprep.mubr.bf16.mxu0 0
  %3440 = vmatmul.mubr.bf16.gmra.mxu0 %v3359
  %v3441 = vpop.f32.mrf.mxu0
  %v3442 = vadd.f32 0.0, %v3441
  %v3443 = vpop.f32.mrf.mxu0
  %v3444 = vpop.f32.mrf.mxu0
  %v3445 = vadd.f32 0.0, %v3444
  %v3446 = vpop.f32.mrf.mxu0
  %3447 = vmatprep.mubr.bf16.mxu0 0
  %3448 = vmatmul.mubr.bf16.gmra.mxu0 %v3362
  %v3449 = vpop.f32.mrf.mxu0
  %v3450 = vadd.f32 0.0, %v3449
  %v3451 = vpop.f32.mrf.mxu0
  %v3452 = vpop.f32.mrf.mxu0
  %v3453 = vadd.f32 0.0, %v3452
  %v3454 = vpop.f32.mrf.mxu0
  %3455 = vmatprep.mubr.bf16.mxu0 0
  %3456 = vmatmul.mubr.bf16.gmra.mxu0 %v3365
  %v3457 = vpop.f32.mrf.mxu0
  %v3458 = vadd.f32 0.0, %v3457
  %v3459 = vpop.f32.mrf.mxu0
  %v3460 = vpop.f32.mrf.mxu0
  %v3461 = vadd.f32 0.0, %v3460
  %v3462 = vpop.f32.mrf.mxu0
  %3463 = vdwg.mxu0
  %v3464 = vpack.c.b16 %v3215, %v3213
  %v3465 = vpack.c.b16 %v3219, %v3217
  %v3466 = vpack.c.b16 %v3235, %v3233
  %v3467 = vpack.c.b16 %v3239, %v3237
  %v3468 = vpack.c.b16 %v3255, %v3253
  %v3469 = vpack.c.b16 %v3259, %v3257
  %v3470 = vpack.c.b16 %v3275, %v3273
  %v3471 = vpack.c.b16 %v3279, %v3277
  %v3476 = vunpack.c.l.b16 %v3313
  %v3477 = vunpack.c.l.b16 %v3314
  %v3478 = vunpack.c.l.b16 %v3315
  %v3479 = vunpack.c.l.b16 %v3316
  %v3480 = vpack.c.b16 %v3477, %v3476
  %v3481 = vpack.c.b16 %v3479, %v3478
  %v3485 = vsel %vm3342, %v3464, 0
  %v3488 = vsel %vm3342, %v3465, 0
  %v3491 = vsel %vm3342, %v3466, 0
  %v3494 = vsel %vm3342, %v3467, 0
  %v3497 = vsel %vm3342, %v3468, 0
  %v3500 = vsel %vm3342, %v3469, 0
  %v3503 = vsel %vm3342, %v3470, 0
  %v3506 = vsel %vm3342, %v3471, 0
  %3508 = vmatprep.subr.bf16.mxu0 0
  %3509 = vmatpush1.bf16.msra.mxu0 0
  %3510 = vmatprep.subr.bf16.mxu0 0
  %3511 = vmatpush1.bf16.msra.mxu0 0
  %3512 = vmatprep.subr.bf16.mxu0 0
  %3513 = vmatpush1.bf16.msra.mxu0 0
  %3514 = vmatprep.subr.bf16.mxu0 0
  %3515 = vmatpush1.bf16.msra.mxu0 0
  %3516 = vmatprep.subr.bf16.mxu0 0
  %3517 = vmatpush1.bf16.msra.mxu0 0
  %3518 = vmatprep.subr.bf16.mxu0 0
  %3519 = vmatpush1.bf16.msra.mxu0 0
  %3520 = vmatprep.subr.bf16.mxu0 0
  %3521 = vmatpush1.bf16.msra.mxu0 %v3481
  %3522 = vmatprep.subr.bf16.mxu0 0
  %3523 = vmatpush1.bf16.msra.mxu0 %v3480
  %3524 = vmatprep.subr.bf16.mxu0 0
  %3525 = vmatpush2.bf16.msra.mxu0 0
  %3526 = vmatprep.subr.bf16.mxu0 0
  %3527 = vmatpush2.bf16.msra.mxu0 0
  %3528 = vmatprep.subr.bf16.mxu0 0
  %3529 = vmatpush2.bf16.msra.mxu0 0
  %3530 = vmatprep.subr.bf16.mxu0 0
  %3531 = vmatpush2.bf16.msra.mxu0 0
  %3532 = vmatprep.subr.bf16.mxu0 0
  %3533 = vmatpush2.bf16.msra.mxu0 0
  %3534 = vmatprep.subr.bf16.mxu0 0
  %3535 = vmatpush2.bf16.msra.mxu0 0
  %3536 = vmatprep.subr.bf16.mxu0 0
  %3537 = vmatpush2.bf16.msra.mxu0 0
  %3538 = vmatprep.subr.bf16.mxu0 0
  %3539 = vmatpush2.bf16.msra.mxu0 0
  %3540 = vmatprep.mubr.bf16.mxu0 0
  %3541 = vmatmul.mubr.bf16.gmra.mxu0 %v3485
  %v3542 = vpop.f32.mrf.mxu0
  %v3543 = vadd.f32 %v3402, %v3542
  %v3544 = vpop.f32.mrf.mxu0
  %v3545 = vpop.f32.mrf.mxu0
  %v3546 = vadd.f32 %v3405, %v3545
  %v3547 = vpop.f32.mrf.mxu0
  %3548 = vmatprep.mubr.bf16.mxu0 0
  %3549 = vmatmul.mubr.bf16.gmra.mxu0 %v3488
  %v3550 = vpop.f32.mrf.mxu0
  %v3551 = vadd.f32 %v3410, %v3550
  %v3552 = vpop.f32.mrf.mxu0
  %v3553 = vpop.f32.mrf.mxu0
  %v3554 = vadd.f32 %v3413, %v3553
  %v3555 = vpop.f32.mrf.mxu0
  %3556 = vmatprep.mubr.bf16.mxu0 0
  %3557 = vmatmul.mubr.bf16.gmra.mxu0 %v3491
  %v3558 = vpop.f32.mrf.mxu0
  %v3559 = vadd.f32 %v3418, %v3558
  %v3560 = vpop.f32.mrf.mxu0
  %v3561 = vpop.f32.mrf.mxu0
  %v3562 = vadd.f32 %v3421, %v3561
  %v3563 = vpop.f32.mrf.mxu0
  %3564 = vmatprep.mubr.bf16.mxu0 0
  %3565 = vmatmul.mubr.bf16.gmra.mxu0 %v3494
  %v3566 = vpop.f32.mrf.mxu0
  %v3567 = vadd.f32 %v3426, %v3566
  %v3568 = vpop.f32.mrf.mxu0
  %v3569 = vpop.f32.mrf.mxu0
  %v3570 = vadd.f32 %v3429, %v3569
  %v3571 = vpop.f32.mrf.mxu0
  %3572 = vmatprep.mubr.bf16.mxu0 0
  %3573 = vmatmul.mubr.bf16.gmra.mxu0 %v3497
  %v3574 = vpop.f32.mrf.mxu0
  %v3575 = vadd.f32 %v3434, %v3574
  %v3576 = vpop.f32.mrf.mxu0
  %v3577 = vpop.f32.mrf.mxu0
  %v3578 = vadd.f32 %v3437, %v3577
  %v3579 = vpop.f32.mrf.mxu0
  %3580 = vmatprep.mubr.bf16.mxu0 0
  %3581 = vmatmul.mubr.bf16.gmra.mxu0 %v3500
  %v3582 = vpop.f32.mrf.mxu0
  %v3583 = vadd.f32 %v3442, %v3582
  %v3584 = vpop.f32.mrf.mxu0
  %v3585 = vpop.f32.mrf.mxu0
  %v3586 = vadd.f32 %v3445, %v3585
  %v3587 = vpop.f32.mrf.mxu0
  %3588 = vmatprep.mubr.bf16.mxu0 0
  %3589 = vmatmul.mubr.bf16.gmra.mxu0 %v3503
  %v3590 = vpop.f32.mrf.mxu0
  %v3591 = vadd.f32 %v3450, %v3590
  %v3592 = vpop.f32.mrf.mxu0
  %v3593 = vpop.f32.mrf.mxu0
  %v3594 = vadd.f32 %v3453, %v3593
  %v3595 = vpop.f32.mrf.mxu0
  %3596 = vmatprep.mubr.bf16.mxu0 0
  %3597 = vmatmul.mubr.bf16.gmra.mxu0 %v3506
  %v3598 = vpop.f32.mrf.mxu0
  %v3599 = vadd.f32 %v3458, %v3598
  %v3600 = vpop.f32.mrf.mxu0
  %v3601 = vpop.f32.mrf.mxu0
  %v3602 = vadd.f32 %v3461, %v3601
  %v3603 = vpop.f32.mrf.mxu0
  %3604 = vdwg.mxu0
  %s3605 = scalar_lea.vmem %s3, 32
  %v3606 = vld [vmem:[%s3605] sm:$0xf]
  %v3607 = vld [vmem:[%s3605 + $0x4] sm:$0xf]
  %v3608 = vld [vmem:[%s3605 + $0x8] sm:$0xf]
  %v3609 = vld [vmem:[%s3605 + $0xc] sm:$0xf]
  %v3610 = vpack.c.b16 %v3217, %v3215
  %v3611 = vpack.c.b16 %v3221, %v3219
  %v3612 = vpack.c.b16 %v3237, %v3235
  %v3613 = vpack.c.b16 %v3241, %v3239
  %v3614 = vpack.c.b16 %v3257, %v3255
  %v3615 = vpack.c.b16 %v3261, %v3259
  %v3616 = vpack.c.b16 %v3277, %v3275
  %v3617 = vpack.c.b16 %v3281, %v3279
  %v3622 = vunpack.c.l.b16 %v3606
  %v3623 = vunpack.c.l.b16 %v3607
  %v3624 = vunpack.c.l.b16 %v3608
  %v3625 = vunpack.c.l.b16 %v3609
  %v3626 = vpack.c.b16 %v3623, %v3622
  %v3627 = vpack.c.b16 %v3625, %v3624
  %v3631 = vsel %vm3342, %v3610, 0
  %v3634 = vsel %vm3342, %v3611, 0
  %v3637 = vsel %vm3342, %v3612, 0
  %v3640 = vsel %vm3342, %v3613, 0
  %v3643 = vsel %vm3342, %v3614, 0
  %v3646 = vsel %vm3342, %v3615, 0
  %v3649 = vsel %vm3342, %v3616, 0
  %v3652 = vsel %vm3342, %v3617, 0
  %3654 = vmatprep.subr.bf16.mxu0 0
  %3655 = vmatpush1.bf16.msra.mxu0 0
  %3656 = vmatprep.subr.bf16.mxu0 0
  %3657 = vmatpush1.bf16.msra.mxu0 0
  %3658 = vmatprep.subr.bf16.mxu0 0
  %3659 = vmatpush1.bf16.msra.mxu0 0
  %3660 = vmatprep.subr.bf16.mxu0 0
  %3661 = vmatpush1.bf16.msra.mxu0 0
  %3662 = vmatprep.subr.bf16.mxu0 0
  %3663 = vmatpush1.bf16.msra.mxu0 0
  %3664 = vmatprep.subr.bf16.mxu0 0
  %3665 = vmatpush1.bf16.msra.mxu0 0
  %3666 = vmatprep.subr.bf16.mxu0 0
  %3667 = vmatpush1.bf16.msra.mxu0 %v3627
  %3668 = vmatprep.subr.bf16.mxu0 0
  %3669 = vmatpush1.bf16.msra.mxu0 %v3626
  %3670 = vmatprep.subr.bf16.mxu0 0
  %3671 = vmatpush2.bf16.msra.mxu0 0
  %3672 = vmatprep.subr.bf16.mxu0 0
  %3673 = vmatpush2.bf16.msra.mxu0 0
  %3674 = vmatprep.subr.bf16.mxu0 0
  %3675 = vmatpush2.bf16.msra.mxu0 0
  %3676 = vmatprep.subr.bf16.mxu0 0
  %3677 = vmatpush2.bf16.msra.mxu0 0
  %3678 = vmatprep.subr.bf16.mxu0 0
  %3679 = vmatpush2.bf16.msra.mxu0 0
  %3680 = vmatprep.subr.bf16.mxu0 0
  %3681 = vmatpush2.bf16.msra.mxu0 0
  %3682 = vmatprep.subr.bf16.mxu0 0
  %3683 = vmatpush2.bf16.msra.mxu0 0
  %3684 = vmatprep.subr.bf16.mxu0 0
  %3685 = vmatpush2.bf16.msra.mxu0 0
  %3686 = vmatprep.mubr.bf16.mxu0 0
  %3687 = vmatmul.mubr.bf16.gmra.mxu0 %v3631
  %v3688 = vpop.f32.mrf.mxu0
  %v3689 = vadd.f32 0.0, %v3688
  %v3690 = vpop.f32.mrf.mxu0
  %v3691 = vpop.f32.mrf.mxu0
  %v3692 = vadd.f32 0.0, %v3691
  %v3693 = vpop.f32.mrf.mxu0
  %3694 = vmatprep.mubr.bf16.mxu0 0
  %3695 = vmatmul.mubr.bf16.gmra.mxu0 %v3634
  %v3696 = vpop.f32.mrf.mxu0
  %v3697 = vadd.f32 0.0, %v3696
  %v3698 = vpop.f32.mrf.mxu0
  %v3699 = vpop.f32.mrf.mxu0
  %v3700 = vadd.f32 0.0, %v3699
  %v3701 = vpop.f32.mrf.mxu0
  %3702 = vmatprep.mubr.bf16.mxu0 0
  %3703 = vmatmul.mubr.bf16.gmra.mxu0 %v3637
  %v3704 = vpop.f32.mrf.mxu0
  %v3705 = vadd.f32 0.0, %v3704
  %v3706 = vpop.f32.mrf.mxu0
  %v3707 = vpop.f32.mrf.mxu0
  %v3708 = vadd.f32 0.0, %v3707
  %v3709 = vpop.f32.mrf.mxu0
  %3710 = vmatprep.mubr.bf16.mxu0 0
  %3711 = vmatmul.mubr.bf16.gmra.mxu0 %v3640
  %v3712 = vpop.f32.mrf.mxu0
  %v3713 = vadd.f32 0.0, %v3712
  %v3714 = vpop.f32.mrf.mxu0
  %v3715 = vpop.f32.mrf.mxu0
  %v3716 = vadd.f32 0.0, %v3715
  %v3717 = vpop.f32.mrf.mxu0
  %3718 = vmatprep.mubr.bf16.mxu0 0
  %3719 = vmatmul.mubr.bf16.gmra.mxu0 %v3643
  %v3720 = vpop.f32.mrf.mxu0
  %v3721 = vadd.f32 0.0, %v3720
  %v3722 = vpop.f32.mrf.mxu0
  %v3723 = vpop.f32.mrf.mxu0
  %v3724 = vadd.f32 0.0, %v3723
  %v3725 = vpop.f32.mrf.mxu0
  %3726 = vmatprep.mubr.bf16.mxu0 0
  %3727 = vmatmul.mubr.bf16.gmra.mxu0 %v3646
  %v3728 = vpop.f32.mrf.mxu0
  %v3729 = vadd.f32 0.0, %v3728
  %v3730 = vpop.f32.mrf.mxu0
  %v3731 = vpop.f32.mrf.mxu0
  %v3732 = vadd.f32 0.0, %v3731
  %v3733 = vpop.f32.mrf.mxu0
  %3734 = vmatprep.mubr.bf16.mxu0 0
  %3735 = vmatmul.mubr.bf16.gmra.mxu0 %v3649
  %v3736 = vpop.f32.mrf.mxu0
  %v3737 = vadd.f32 0.0, %v3736
  %v3738 = vpop.f32.mrf.mxu0
  %v3739 = vpop.f32.mrf.mxu0
  %v3740 = vadd.f32 0.0, %v3739
  %v3741 = vpop.f32.mrf.mxu0
  %3742 = vmatprep.mubr.bf16.mxu0 0
  %3743 = vmatmul.mubr.bf16.gmra.mxu0 %v3652
  %v3744 = vpop.f32.mrf.mxu0
  %v3745 = vadd.f32 0.0, %v3744
  %v3746 = vpop.f32.mrf.mxu0
  %v3747 = vpop.f32.mrf.mxu0
  %v3748 = vadd.f32 0.0, %v3747
  %v3749 = vpop.f32.mrf.mxu0
  %3750 = vdwg.mxu0
  %v3751 = vadd.f32 %v3543, %v3689
  %v3752 = vadd.f32 %v3546, %v3692
  %v3753 = vadd.f32 %v3551, %v3697
  %v3754 = vadd.f32 %v3554, %v3700
  %v3755 = vadd.f32 %v3559, %v3705
  %v3756 = vadd.f32 %v3562, %v3708
  %v3757 = vadd.f32 %v3567, %v3713
  %v3758 = vadd.f32 %v3570, %v3716
  %v3759 = vadd.f32 %v3575, %v3721
  %v3760 = vadd.f32 %v3578, %v3724
  %v3761 = vadd.f32 %v3583, %v3729
  %v3762 = vadd.f32 %v3586, %v3732
  %v3763 = vadd.f32 %v3591, %v3737
  %v3764 = vadd.f32 %v3594, %v3740
  %v3765 = vadd.f32 %v3599, %v3745
  %v3766 = vadd.f32 %v3602, %v3748
  %s3767 = scalar_lea.vmem %s3, 48
  %v3768 = vld [vmem:[%s3767] sm:$0xf]
  %v3769 = vld [vmem:[%s3767 + $0x4] sm:$0xf]
  %v3770 = vld [vmem:[%s3767 + $0x8] sm:$0xf]
  %v3771 = vld [vmem:[%s3767 + $0xc] sm:$0xf]
  %v3772 = vpack.c.b16 %v3218, %v3216
  %v3773 = vpack.c.b16 %v3222, %v3220
  %v3774 = vpack.c.b16 %v3238, %v3236
  %v3775 = vpack.c.b16 %v3242, %v3240
  %v3776 = vpack.c.b16 %v3258, %v3256
  %v3777 = vpack.c.b16 %v3262, %v3260
  %v3778 = vpack.c.b16 %v3278, %v3276
  %v3779 = vpack.c.b16 %v3282, %v3280
  %v3784 = vunpack.c.l.b16 %v3768
  %v3785 = vunpack.c.l.b16 %v3769
  %v3786 = vunpack.c.l.b16 %v3770
  %v3787 = vunpack.c.l.b16 %v3771
  %v3788 = vpack.c.b16 %v3785, %v3784
  %v3789 = vpack.c.b16 %v3787, %v3786
  %v3793 = vsel %vm3342, %v3772, 0
  %v3796 = vsel %vm3342, %v3773, 0
  %v3799 = vsel %vm3342, %v3774, 0
  %v3802 = vsel %vm3342, %v3775, 0
  %v3805 = vsel %vm3342, %v3776, 0
  %v3808 = vsel %vm3342, %v3777, 0
  %v3811 = vsel %vm3342, %v3778, 0
  %v3814 = vsel %vm3342, %v3779, 0
  %3816 = vmatprep.subr.bf16.mxu0 0
  %3817 = vmatpush1.bf16.msra.mxu0 0
  %3818 = vmatprep.subr.bf16.mxu0 0
  %3819 = vmatpush1.bf16.msra.mxu0 0
  %3820 = vmatprep.subr.bf16.mxu0 0
  %3821 = vmatpush1.bf16.msra.mxu0 0
  %3822 = vmatprep.subr.bf16.mxu0 0
  %3823 = vmatpush1.bf16.msra.mxu0 0
  %3824 = vmatprep.subr.bf16.mxu0 0
  %3825 = vmatpush1.bf16.msra.mxu0 0
  %3826 = vmatprep.subr.bf16.mxu0 0
  %3827 = vmatpush1.bf16.msra.mxu0 0
  %3828 = vmatprep.subr.bf16.mxu0 0
  %3829 = vmatpush1.bf16.msra.mxu0 %v3789
  %3830 = vmatprep.subr.bf16.mxu0 0
  %3831 = vmatpush1.bf16.msra.mxu0 %v3788
  %3832 = vmatprep.subr.bf16.mxu0 0
  %3833 = vmatpush2.bf16.msra.mxu0 0
  %3834 = vmatprep.subr.bf16.mxu0 0
  %3835 = vmatpush2.bf16.msra.mxu0 0
  %3836 = vmatprep.subr.bf16.mxu0 0
  %3837 = vmatpush2.bf16.msra.mxu0 0
  %3838 = vmatprep.subr.bf16.mxu0 0
  %3839 = vmatpush2.bf16.msra.mxu0 0
  %3840 = vmatprep.subr.bf16.mxu0 0
  %3841 = vmatpush2.bf16.msra.mxu0 0
  %3842 = vmatprep.subr.bf16.mxu0 0
  %3843 = vmatpush2.bf16.msra.mxu0 0
  %3844 = vmatprep.subr.bf16.mxu0 0
  %3845 = vmatpush2.bf16.msra.mxu0 0
  %3846 = vmatprep.subr.bf16.mxu0 0
  %3847 = vmatpush2.bf16.msra.mxu0 0
  %3848 = vmatprep.mubr.bf16.mxu0 0
  %3849 = vmatmul.mubr.bf16.gmra.mxu0 %v3793
  %v3850 = vpop.f32.mrf.mxu0
  %v3851 = vadd.f32 0.0, %v3850
  %v3852 = vpop.f32.mrf.mxu0
  %v3853 = vpop.f32.mrf.mxu0
  %v3854 = vadd.f32 0.0, %v3853
  %v3855 = vpop.f32.mrf.mxu0
  %3856 = vmatprep.mubr.bf16.mxu0 0
  %3857 = vmatmul.mubr.bf16.gmra.mxu0 %v3796
  %v3858 = vpop.f32.mrf.mxu0
  %v3859 = vadd.f32 0.0, %v3858
  %v3860 = vpop.f32.mrf.mxu0
  %v3861 = vpop.f32.mrf.mxu0
  %v3862 = vadd.f32 0.0, %v3861
  %v3863 = vpop.f32.mrf.mxu0
  %3864 = vmatprep.mubr.bf16.mxu0 0
  %3865 = vmatmul.mubr.bf16.gmra.mxu0 %v3799
  %v3866 = vpop.f32.mrf.mxu0
  %v3867 = vadd.f32 0.0, %v3866
  %v3868 = vpop.f32.mrf.mxu0
  %v3869 = vpop.f32.mrf.mxu0
  %v3870 = vadd.f32 0.0, %v3869
  %v3871 = vpop.f32.mrf.mxu0
  %3872 = vmatprep.mubr.bf16.mxu0 0
  %3873 = vmatmul.mubr.bf16.gmra.mxu0 %v3802
  %v3874 = vpop.f32.mrf.mxu0
  %v3875 = vadd.f32 0.0, %v3874
  %v3876 = vpop.f32.mrf.mxu0
  %v3877 = vpop.f32.mrf.mxu0
  %v3878 = vadd.f32 0.0, %v3877
  %v3879 = vpop.f32.mrf.mxu0
  %3880 = vmatprep.mubr.bf16.mxu0 0
  %3881 = vmatmul.mubr.bf16.gmra.mxu0 %v3805
  %v3882 = vpop.f32.mrf.mxu0
  %v3883 = vadd.f32 0.0, %v3882
  %v3884 = vpop.f32.mrf.mxu0
  %v3885 = vpop.f32.mrf.mxu0
  %v3886 = vadd.f32 0.0, %v3885
  %v3887 = vpop.f32.mrf.mxu0
  %3888 = vmatprep.mubr.bf16.mxu0 0
  %3889 = vmatmul.mubr.bf16.gmra.mxu0 %v3808
  %v3890 = vpop.f32.mrf.mxu0
  %v3891 = vadd.f32 0.0, %v3890
  %v3892 = vpop.f32.mrf.mxu0
  %v3893 = vpop.f32.mrf.mxu0
  %v3894 = vadd.f32 0.0, %v3893
  %v3895 = vpop.f32.mrf.mxu0
  %3896 = vmatprep.mubr.bf16.mxu0 0
  %3897 = vmatmul.mubr.bf16.gmra.mxu0 %v3811
  %v3898 = vpop.f32.mrf.mxu0
  %v3899 = vadd.f32 0.0, %v3898
  %v3900 = vpop.f32.mrf.mxu0
  %v3901 = vpop.f32.mrf.mxu0
  %v3902 = vadd.f32 0.0, %v3901
  %v3903 = vpop.f32.mrf.mxu0
  %3904 = vmatprep.mubr.bf16.mxu0 0
  %3905 = vmatmul.mubr.bf16.gmra.mxu0 %v3814
  %v3906 = vpop.f32.mrf.mxu0
  %v3907 = vadd.f32 0.0, %v3906
  %v3908 = vpop.f32.mrf.mxu0
  %v3909 = vpop.f32.mrf.mxu0
  %v3910 = vadd.f32 0.0, %v3909
  %v3911 = vpop.f32.mrf.mxu0
  %3912 = vdwg.mxu0
  %v3913 = vadd.f32 %v3751, %v3851
  %v3914 = vadd.f32 %v3752, %v3854
  %v3915 = vadd.f32 %v3753, %v3859
  %v3916 = vadd.f32 %v3754, %v3862
  %v3917 = vadd.f32 %v3755, %v3867
  %v3918 = vadd.f32 %v3756, %v3870
  %v3919 = vadd.f32 %v3757, %v3875
  %v3920 = vadd.f32 %v3758, %v3878
  %v3921 = vadd.f32 %v3759, %v3883
  %v3922 = vadd.f32 %v3760, %v3886
  %v3923 = vadd.f32 %v3761, %v3891
  %v3924 = vadd.f32 %v3762, %v3894
  %v3925 = vadd.f32 %v3763, %v3899
  %v3926 = vadd.f32 %v3764, %v3902
  %v3927 = vadd.f32 %v3765, %v3907
  %v3928 = vadd.f32 %v3766, %v3910
  %s3929 = scalar_lea.vmem %s3, 64
  %v3930 = vld [vmem:[%s3929] sm:$0xf]
  %v3931 = vld [vmem:[%s3929 + $0x4] sm:$0xf]
  %v3932 = vld [vmem:[%s3929 + $0x8] sm:$0xf]
  %v3933 = vld [vmem:[%s3929 + $0xc] sm:$0xf]
  %v3934 = vpack.c.b16 %v3225, %v3223
  %v3935 = vpack.c.b16 %v3229, %v3227
  %v3936 = vpack.c.b16 %v3245, %v3243
  %v3937 = vpack.c.b16 %v3249, %v3247
  %v3938 = vpack.c.b16 %v3265, %v3263
  %v3939 = vpack.c.b16 %v3269, %v3267
  %v3940 = vpack.c.b16 %v3285, %v3283
  %v3941 = vpack.c.b16 %v3289, %v3287
  %v3946 = vunpack.c.l.b16 %v3930
  %v3947 = vunpack.c.l.b16 %v3931
  %v3948 = vunpack.c.l.b16 %v3932
  %v3949 = vunpack.c.l.b16 %v3933
  %v3950 = vpack.c.b16 %v3947, %v3946
  %v3951 = vpack.c.b16 %v3949, %v3948
  %v3955 = vsel %vm3342, %v3934, 0
  %v3958 = vsel %vm3342, %v3935, 0
  %v3961 = vsel %vm3342, %v3936, 0
  %v3964 = vsel %vm3342, %v3937, 0
  %v3967 = vsel %vm3342, %v3938, 0
  %v3970 = vsel %vm3342, %v3939, 0
  %v3973 = vsel %vm3342, %v3940, 0
  %v3976 = vsel %vm3342, %v3941, 0
  %3978 = vmatprep.subr.bf16.mxu0 0
  %3979 = vmatpush1.bf16.msra.mxu0 0
  %3980 = vmatprep.subr.bf16.mxu0 0
  %3981 = vmatpush1.bf16.msra.mxu0 0
  %3982 = vmatprep.subr.bf16.mxu0 0
  %3983 = vmatpush1.bf16.msra.mxu0 0
  %3984 = vmatprep.subr.bf16.mxu0 0
  %3985 = vmatpush1.bf16.msra.mxu0 0
  %3986 = vmatprep.subr.bf16.mxu0 0
  %3987 = vmatpush1.bf16.msra.mxu0 0
  %3988 = vmatprep.subr.bf16.mxu0 0
  %3989 = vmatpush1.bf16.msra.mxu0 0
  %3990 = vmatprep.subr.bf16.mxu0 0
  %3991 = vmatpush1.bf16.msra.mxu0 %v3951
  %3992 = vmatprep.subr.bf16.mxu0 0
  %3993 = vmatpush1.bf16.msra.mxu0 %v3950
  %3994 = vmatprep.subr.bf16.mxu0 0
  %3995 = vmatpush2.bf16.msra.mxu0 0
  %3996 = vmatprep.subr.bf16.mxu0 0
  %3997 = vmatpush2.bf16.msra.mxu0 0
  %3998 = vmatprep.subr.bf16.mxu0 0
  %3999 = vmatpush2.bf16.msra.mxu0 0
  %4000 = vmatprep.subr.bf16.mxu0 0
  %4001 = vmatpush2.bf16.msra.mxu0 0
  %4002 = vmatprep.subr.bf16.mxu0 0
  %4003 = vmatpush2.bf16.msra.mxu0 0
  %4004 = vmatprep.subr.bf16.mxu0 0
  %4005 = vmatpush2.bf16.msra.mxu0 0
  %4006 = vmatprep.subr.bf16.mxu0 0
  %4007 = vmatpush2.bf16.msra.mxu0 0
  %4008 = vmatprep.subr.bf16.mxu0 0
  %4009 = vmatpush2.bf16.msra.mxu0 0
  %4010 = vmatprep.mubr.bf16.mxu0 0
  %4011 = vmatmul.mubr.bf16.gmra.mxu0 %v3955
  %v4012 = vpop.f32.mrf.mxu0
  %v4013 = vadd.f32 0.0, %v4012
  %v4014 = vpop.f32.mrf.mxu0
  %v4015 = vpop.f32.mrf.mxu0
  %v4016 = vadd.f32 0.0, %v4015
  %v4017 = vpop.f32.mrf.mxu0
  %4018 = vmatprep.mubr.bf16.mxu0 0
  %4019 = vmatmul.mubr.bf16.gmra.mxu0 %v3958
  %v4020 = vpop.f32.mrf.mxu0
  %v4021 = vadd.f32 0.0, %v4020
  %v4022 = vpop.f32.mrf.mxu0
  %v4023 = vpop.f32.mrf.mxu0
  %v4024 = vadd.f32 0.0, %v4023
  %v4025 = vpop.f32.mrf.mxu0
  %4026 = vmatprep.mubr.bf16.mxu0 0
  %4027 = vmatmul.mubr.bf16.gmra.mxu0 %v3961
  %v4028 = vpop.f32.mrf.mxu0
  %v4029 = vadd.f32 0.0, %v4028
  %v4030 = vpop.f32.mrf.mxu0
  %v4031 = vpop.f32.mrf.mxu0
  %v4032 = vadd.f32 0.0, %v4031
  %v4033 = vpop.f32.mrf.mxu0
  %4034 = vmatprep.mubr.bf16.mxu0 0
  %4035 = vmatmul.mubr.bf16.gmra.mxu0 %v3964
  %v4036 = vpop.f32.mrf.mxu0
  %v4037 = vadd.f32 0.0, %v4036
  %v4038 = vpop.f32.mrf.mxu0
  %v4039 = vpop.f32.mrf.mxu0
  %v4040 = vadd.f32 0.0, %v4039
  %v4041 = vpop.f32.mrf.mxu0
  %4042 = vmatprep.mubr.bf16.mxu0 0
  %4043 = vmatmul.mubr.bf16.gmra.mxu0 %v3967
  %v4044 = vpop.f32.mrf.mxu0
  %v4045 = vadd.f32 0.0, %v4044
  %v4046 = vpop.f32.mrf.mxu0
  %v4047 = vpop.f32.mrf.mxu0
  %v4048 = vadd.f32 0.0, %v4047
  %v4049 = vpop.f32.mrf.mxu0
  %4050 = vmatprep.mubr.bf16.mxu0 0
  %4051 = vmatmul.mubr.bf16.gmra.mxu0 %v3970
  %v4052 = vpop.f32.mrf.mxu0
  %v4053 = vadd.f32 0.0, %v4052
  %v4054 = vpop.f32.mrf.mxu0
  %v4055 = vpop.f32.mrf.mxu0
  %v4056 = vadd.f32 0.0, %v4055
  %v4057 = vpop.f32.mrf.mxu0
  %4058 = vmatprep.mubr.bf16.mxu0 0
  %4059 = vmatmul.mubr.bf16.gmra.mxu0 %v3973
  %v4060 = vpop.f32.mrf.mxu0
  %v4061 = vadd.f32 0.0, %v4060
  %v4062 = vpop.f32.mrf.mxu0
  %v4063 = vpop.f32.mrf.mxu0
  %v4064 = vadd.f32 0.0, %v4063
  %v4065 = vpop.f32.mrf.mxu0
  %4066 = vmatprep.mubr.bf16.mxu0 0
  %4067 = vmatmul.mubr.bf16.gmra.mxu0 %v3976
  %v4068 = vpop.f32.mrf.mxu0
  %v4069 = vadd.f32 0.0, %v4068
  %v4070 = vpop.f32.mrf.mxu0
  %v4071 = vpop.f32.mrf.mxu0
  %v4072 = vadd.f32 0.0, %v4071
  %v4073 = vpop.f32.mrf.mxu0
  %4074 = vdwg.mxu0
  %v4075 = vadd.f32 %v3913, %v4013
  %v4076 = vadd.f32 %v3914, %v4016
  %v4077 = vadd.f32 %v3915, %v4021
  %v4078 = vadd.f32 %v3916, %v4024
  %v4079 = vadd.f32 %v3917, %v4029
  %v4080 = vadd.f32 %v3918, %v4032
  %v4081 = vadd.f32 %v3919, %v4037
  %v4082 = vadd.f32 %v3920, %v4040
  %v4083 = vadd.f32 %v3921, %v4045
  %v4084 = vadd.f32 %v3922, %v4048
  %v4085 = vadd.f32 %v3923, %v4053
  %v4086 = vadd.f32 %v3924, %v4056
  %v4087 = vadd.f32 %v3925, %v4061
  %v4088 = vadd.f32 %v3926, %v4064
  %v4089 = vadd.f32 %v3927, %v4069
  %v4090 = vadd.f32 %v3928, %v4072
  %s4091 = scalar_lea.vmem %s3, 80
  %v4092 = vld [vmem:[%s4091] sm:$0xf]
  %v4093 = vld [vmem:[%s4091 + $0x4] sm:$0xf]
  %v4094 = vld [vmem:[%s4091 + $0x8] sm:$0xf]
  %v4095 = vld [vmem:[%s4091 + $0xc] sm:$0xf]
  %v4096 = vpack.c.b16 %v3226, %v3224
  %v4097 = vpack.c.b16 %v3230, %v3228
  %v4098 = vpack.c.b16 %v3246, %v3244
  %v4099 = vpack.c.b16 %v3250, %v3248
  %v4100 = vpack.c.b16 %v3266, %v3264
  %v4101 = vpack.c.b16 %v3270, %v3268
  %v4102 = vpack.c.b16 %v3286, %v3284
  %v4103 = vpack.c.b16 %v3290, %v3288
  %v4108 = vunpack.c.l.b16 %v4092
  %v4109 = vunpack.c.l.b16 %v4093
  %v4110 = vunpack.c.l.b16 %v4094
  %v4111 = vunpack.c.l.b16 %v4095
  %v4112 = vpack.c.b16 %v4109, %v4108
  %v4113 = vpack.c.b16 %v4111, %v4110
  %v4117 = vsel %vm3342, %v4096, 0
  %v4120 = vsel %vm3342, %v4097, 0
  %v4123 = vsel %vm3342, %v4098, 0
  %v4126 = vsel %vm3342, %v4099, 0
  %v4129 = vsel %vm3342, %v4100, 0
  %v4132 = vsel %vm3342, %v4101, 0
  %v4135 = vsel %vm3342, %v4102, 0
  %v4138 = vsel %vm3342, %v4103, 0
  %4140 = vmatprep.subr.bf16.mxu0 0
  %4141 = vmatpush1.bf16.msra.mxu0 0
  %4142 = vmatprep.subr.bf16.mxu0 0
  %4143 = vmatpush1.bf16.msra.mxu0 0
  %4144 = vmatprep.subr.bf16.mxu0 0
  %4145 = vmatpush1.bf16.msra.mxu0 0
  %4146 = vmatprep.subr.bf16.mxu0 0
  %4147 = vmatpush1.bf16.msra.mxu0 0
  %4148 = vmatprep.subr.bf16.mxu0 0
  %4149 = vmatpush1.bf16.msra.mxu0 0
  %4150 = vmatprep.subr.bf16.mxu0 0
  %4151 = vmatpush1.bf16.msra.mxu0 0
  %4152 = vmatprep.subr.bf16.mxu0 0
  %4153 = vmatpush1.bf16.msra.mxu0 %v4113
  %4154 = vmatprep.subr.bf16.mxu0 0
  %4155 = vmatpush1.bf16.msra.mxu0 %v4112
  %4156 = vmatprep.subr.bf16.mxu0 0
  %4157 = vmatpush2.bf16.msra.mxu0 0
  %4158 = vmatprep.subr.bf16.mxu0 0
  %4159 = vmatpush2.bf16.msra.mxu0 0
  %4160 = vmatprep.subr.bf16.mxu0 0
  %4161 = vmatpush2.bf16.msra.mxu0 0
  %4162 = vmatprep.subr.bf16.mxu0 0
  %4163 = vmatpush2.bf16.msra.mxu0 0
  %4164 = vmatprep.subr.bf16.mxu0 0
  %4165 = vmatpush2.bf16.msra.mxu0 0
  %4166 = vmatprep.subr.bf16.mxu0 0
  %4167 = vmatpush2.bf16.msra.mxu0 0
  %4168 = vmatprep.subr.bf16.mxu0 0
  %4169 = vmatpush2.bf16.msra.mxu0 0
  %4170 = vmatprep.subr.bf16.mxu0 0
  %4171 = vmatpush2.bf16.msra.mxu0 0
  %4172 = vmatprep.mubr.bf16.mxu0 0
  %4173 = vmatmul.mubr.bf16.gmra.mxu0 %v4117
  %v4174 = vpop.f32.mrf.mxu0
  %v4175 = vadd.f32 0.0, %v4174
  %v4176 = vpop.f32.mrf.mxu0
  %v4177 = vpop.f32.mrf.mxu0
  %v4178 = vadd.f32 0.0, %v4177
  %v4179 = vpop.f32.mrf.mxu0
  %4180 = vmatprep.mubr.bf16.mxu0 0
  %4181 = vmatmul.mubr.bf16.gmra.mxu0 %v4120
  %v4182 = vpop.f32.mrf.mxu0
  %v4183 = vadd.f32 0.0, %v4182
  %v4184 = vpop.f32.mrf.mxu0
  %v4185 = vpop.f32.mrf.mxu0
  %v4186 = vadd.f32 0.0, %v4185
  %v4187 = vpop.f32.mrf.mxu0
  %4188 = vmatprep.mubr.bf16.mxu0 0
  %4189 = vmatmul.mubr.bf16.gmra.mxu0 %v4123
  %v4190 = vpop.f32.mrf.mxu0
  %v4191 = vadd.f32 0.0, %v4190
  %v4192 = vpop.f32.mrf.mxu0
  %v4193 = vpop.f32.mrf.mxu0
  %v4194 = vadd.f32 0.0, %v4193
  %v4195 = vpop.f32.mrf.mxu0
  %4196 = vmatprep.mubr.bf16.mxu0 0
  %4197 = vmatmul.mubr.bf16.gmra.mxu0 %v4126
  %v4198 = vpop.f32.mrf.mxu0
  %v4199 = vadd.f32 0.0, %v4198
  %v4200 = vpop.f32.mrf.mxu0
  %v4201 = vpop.f32.mrf.mxu0
  %v4202 = vadd.f32 0.0, %v4201
  %v4203 = vpop.f32.mrf.mxu0
  %4204 = vmatprep.mubr.bf16.mxu0 0
  %4205 = vmatmul.mubr.bf16.gmra.mxu0 %v4129
  %v4206 = vpop.f32.mrf.mxu0
  %v4207 = vadd.f32 0.0, %v4206
  %v4208 = vpop.f32.mrf.mxu0
  %v4209 = vpop.f32.mrf.mxu0
  %v4210 = vadd.f32 0.0, %v4209
  %v4211 = vpop.f32.mrf.mxu0
  %4212 = vmatprep.mubr.bf16.mxu0 0
  %4213 = vmatmul.mubr.bf16.gmra.mxu0 %v4132
  %v4214 = vpop.f32.mrf.mxu0
  %v4215 = vadd.f32 0.0, %v4214
  %v4216 = vpop.f32.mrf.mxu0
  %v4217 = vpop.f32.mrf.mxu0
  %v4218 = vadd.f32 0.0, %v4217
  %v4219 = vpop.f32.mrf.mxu0
  %4220 = vmatprep.mubr.bf16.mxu0 0
  %4221 = vmatmul.mubr.bf16.gmra.mxu0 %v4135
  %v4222 = vpop.f32.mrf.mxu0
  %v4223 = vadd.f32 0.0, %v4222
  %v4224 = vpop.f32.mrf.mxu0
  %v4225 = vpop.f32.mrf.mxu0
  %v4226 = vadd.f32 0.0, %v4225
  %v4227 = vpop.f32.mrf.mxu0
  %4228 = vmatprep.mubr.bf16.mxu0 0
  %4229 = vmatmul.mubr.bf16.gmra.mxu0 %v4138
  %v4230 = vpop.f32.mrf.mxu0
  %v4231 = vadd.f32 0.0, %v4230
  %v4232 = vpop.f32.mrf.mxu0
  %v4233 = vpop.f32.mrf.mxu0
  %v4234 = vadd.f32 0.0, %v4233
  %v4235 = vpop.f32.mrf.mxu0
  %4236 = vdwg.mxu0
  %v4237 = vadd.f32 %v4075, %v4175
  %v4238 = vadd.f32 %v4076, %v4178
  %v4239 = vadd.f32 %v4077, %v4183
  %v4240 = vadd.f32 %v4078, %v4186
  %v4241 = vadd.f32 %v4079, %v4191
  %v4242 = vadd.f32 %v4080, %v4194
  %v4243 = vadd.f32 %v4081, %v4199
  %v4244 = vadd.f32 %v4082, %v4202
  %v4245 = vadd.f32 %v4083, %v4207
  %v4246 = vadd.f32 %v4084, %v4210
  %v4247 = vadd.f32 %v4085, %v4215
  %v4248 = vadd.f32 %v4086, %v4218
  %v4249 = vadd.f32 %v4087, %v4223
  %v4250 = vadd.f32 %v4088, %v4226
  %v4251 = vadd.f32 %v4089, %v4231
  %v4252 = vadd.f32 %v4090, %v4234
  %s4253 = scalar_lea.vmem %s3, 96
  %v4254 = vld [vmem:[%s4253] sm:$0xf]
  %v4255 = vld [vmem:[%s4253 + $0x4] sm:$0xf]
  %v4256 = vld [vmem:[%s4253 + $0x8] sm:$0xf]
  %v4257 = vld [vmem:[%s4253 + $0xc] sm:$0xf]
  %v4258 = vpack.c.b16 %v3227, %v3225
  %v4259 = vpack.c.b16 %v3231, %v3229
  %v4260 = vpack.c.b16 %v3247, %v3245
  %v4261 = vpack.c.b16 %v3251, %v3249
  %v4262 = vpack.c.b16 %v3267, %v3265
  %v4263 = vpack.c.b16 %v3271, %v3269
  %v4264 = vpack.c.b16 %v3287, %v3285
  %v4265 = vpack.c.b16 %v3291, %v3289
  %v4270 = vunpack.c.l.b16 %v4254
  %v4271 = vunpack.c.l.b16 %v4255
  %v4272 = vunpack.c.l.b16 %v4256
  %v4273 = vunpack.c.l.b16 %v4257
  %v4274 = vpack.c.b16 %v4271, %v4270
  %v4275 = vpack.c.b16 %v4273, %v4272
  %v4279 = vsel %vm3342, %v4258, 0
  %v4282 = vsel %vm3342, %v4259, 0
  %v4285 = vsel %vm3342, %v4260, 0
  %v4288 = vsel %vm3342, %v4261, 0
  %v4291 = vsel %vm3342, %v4262, 0
  %v4294 = vsel %vm3342, %v4263, 0
  %v4297 = vsel %vm3342, %v4264, 0
  %v4300 = vsel %vm3342, %v4265, 0
  %4302 = vmatprep.subr.bf16.mxu0 0
  %4303 = vmatpush1.bf16.msra.mxu0 0
  %4304 = vmatprep.subr.bf16.mxu0 0
  %4305 = vmatpush1.bf16.msra.mxu0 0
  %4306 = vmatprep.subr.bf16.mxu0 0
  %4307 = vmatpush1.bf16.msra.mxu0 0
  %4308 = vmatprep.subr.bf16.mxu0 0
  %4309 = vmatpush1.bf16.msra.mxu0 0
  %4310 = vmatprep.subr.bf16.mxu0 0
  %4311 = vmatpush1.bf16.msra.mxu0 0
  %4312 = vmatprep.subr.bf16.mxu0 0
  %4313 = vmatpush1.bf16.msra.mxu0 0
  %4314 = vmatprep.subr.bf16.mxu0 0
  %4315 = vmatpush1.bf16.msra.mxu0 %v4275
  %4316 = vmatprep.subr.bf16.mxu0 0
  %4317 = vmatpush1.bf16.msra.mxu0 %v4274
  %4318 = vmatprep.subr.bf16.mxu0 0
  %4319 = vmatpush2.bf16.msra.mxu0 0
  %4320 = vmatprep.subr.bf16.mxu0 0
  %4321 = vmatpush2.bf16.msra.mxu0 0
  %4322 = vmatprep.subr.bf16.mxu0 0
  %4323 = vmatpush2.bf16.msra.mxu0 0
  %4324 = vmatprep.subr.bf16.mxu0 0
  %4325 = vmatpush2.bf16.msra.mxu0 0
  %4326 = vmatprep.subr.bf16.mxu0 0
  %4327 = vmatpush2.bf16.msra.mxu0 0
  %4328 = vmatprep.subr.bf16.mxu0 0
  %4329 = vmatpush2.bf16.msra.mxu0 0
  %4330 = vmatprep.subr.bf16.mxu0 0
  %4331 = vmatpush2.bf16.msra.mxu0 0
  %4332 = vmatprep.subr.bf16.mxu0 0
  %4333 = vmatpush2.bf16.msra.mxu0 0
  %4334 = vmatprep.mubr.bf16.mxu0 0
  %4335 = vmatmul.mubr.bf16.gmra.mxu0 %v4279
  %v4336 = vpop.f32.mrf.mxu0
  %v4337 = vadd.f32 0.0, %v4336
  %v4338 = vpop.f32.mrf.mxu0
  %v4339 = vpop.f32.mrf.mxu0
  %v4340 = vadd.f32 0.0, %v4339
  %v4341 = vpop.f32.mrf.mxu0
  %4342 = vmatprep.mubr.bf16.mxu0 0
  %4343 = vmatmul.mubr.bf16.gmra.mxu0 %v4282
  %v4344 = vpop.f32.mrf.mxu0
  %v4345 = vadd.f32 0.0, %v4344
  %v4346 = vpop.f32.mrf.mxu0
  %v4347 = vpop.f32.mrf.mxu0
  %v4348 = vadd.f32 0.0, %v4347
  %v4349 = vpop.f32.mrf.mxu0
  %4350 = vmatprep.mubr.bf16.mxu0 0
  %4351 = vmatmul.mubr.bf16.gmra.mxu0 %v4285
  %v4352 = vpop.f32.mrf.mxu0
  %v4353 = vadd.f32 0.0, %v4352
  %v4354 = vpop.f32.mrf.mxu0
  %v4355 = vpop.f32.mrf.mxu0
  %v4356 = vadd.f32 0.0, %v4355
  %v4357 = vpop.f32.mrf.mxu0
  %4358 = vmatprep.mubr.bf16.mxu0 0
  %4359 = vmatmul.mubr.bf16.gmra.mxu0 %v4288
  %v4360 = vpop.f32.mrf.mxu0
  %v4361 = vadd.f32 0.0, %v4360
  %v4362 = vpop.f32.mrf.mxu0
  %v4363 = vpop.f32.mrf.mxu0
  %v4364 = vadd.f32 0.0, %v4363
  %v4365 = vpop.f32.mrf.mxu0
  %4366 = vmatprep.mubr.bf16.mxu0 0
  %4367 = vmatmul.mubr.bf16.gmra.mxu0 %v4291
  %v4368 = vpop.f32.mrf.mxu0
  %v4369 = vadd.f32 0.0, %v4368
  %v4370 = vpop.f32.mrf.mxu0
  %v4371 = vpop.f32.mrf.mxu0
  %v4372 = vadd.f32 0.0, %v4371
  %v4373 = vpop.f32.mrf.mxu0
  %4374 = vmatprep.mubr.bf16.mxu0 0
  %4375 = vmatmul.mubr.bf16.gmra.mxu0 %v4294
  %v4376 = vpop.f32.mrf.mxu0
  %v4377 = vadd.f32 0.0, %v4376
  %v4378 = vpop.f32.mrf.mxu0
  %v4379 = vpop.f32.mrf.mxu0
  %v4380 = vadd.f32 0.0, %v4379
  %v4381 = vpop.f32.mrf.mxu0
  %4382 = vmatprep.mubr.bf16.mxu0 0
  %4383 = vmatmul.mubr.bf16.gmra.mxu0 %v4297
  %v4384 = vpop.f32.mrf.mxu0
  %v4385 = vadd.f32 0.0, %v4384
  %v4386 = vpop.f32.mrf.mxu0
  %v4387 = vpop.f32.mrf.mxu0
  %v4388 = vadd.f32 0.0, %v4387
  %v4389 = vpop.f32.mrf.mxu0
  %4390 = vmatprep.mubr.bf16.mxu0 0
  %4391 = vmatmul.mubr.bf16.gmra.mxu0 %v4300
  %v4392 = vpop.f32.mrf.mxu0
  %v4393 = vadd.f32 0.0, %v4392
  %v4394 = vpop.f32.mrf.mxu0
  %v4395 = vpop.f32.mrf.mxu0
  %v4396 = vadd.f32 0.0, %v4395
  %v4397 = vpop.f32.mrf.mxu0
  %4398 = vdwg.mxu0
  %v4399 = vadd.f32 %v4237, %v4337
  %v4400 = vadd.f32 %v4238, %v4340
  %v4401 = vadd.f32 %v4239, %v4345
  %v4402 = vadd.f32 %v4240, %v4348
  %v4403 = vadd.f32 %v4241, %v4353
  %v4404 = vadd.f32 %v4242, %v4356
  %v4405 = vadd.f32 %v4243, %v4361
  %v4406 = vadd.f32 %v4244, %v4364
  %v4407 = vadd.f32 %v4245, %v4369
  %v4408 = vadd.f32 %v4246, %v4372
  %v4409 = vadd.f32 %v4247, %v4377
  %v4410 = vadd.f32 %v4248, %v4380
  %v4411 = vadd.f32 %v4249, %v4385
  %v4412 = vadd.f32 %v4250, %v4388
  %v4413 = vadd.f32 %v4251, %v4393
  %v4414 = vadd.f32 %v4252, %v4396
  %s4415 = scalar_lea.vmem %s3, 112
  %v4416 = vld [vmem:[%s4415] sm:$0xf]
  %v4417 = vld [vmem:[%s4415 + $0x4] sm:$0xf]
  %v4418 = vld [vmem:[%s4415 + $0x8] sm:$0xf]
  %v4419 = vld [vmem:[%s4415 + $0xc] sm:$0xf]
  %v4420 = vpack.c.b16 %v3228, %v3226
  %v4421 = vpack.c.b16 %v3232, %v3230
  %v4422 = vpack.c.b16 %v3248, %v3246
  %v4423 = vpack.c.b16 %v3252, %v3250
  %v4424 = vpack.c.b16 %v3268, %v3266
  %v4425 = vpack.c.b16 %v3272, %v3270
  %v4426 = vpack.c.b16 %v3288, %v3286
  %v4427 = vpack.c.b16 %v3292, %v3290
  %v4432 = vunpack.c.l.b16 %v4416
  %v4433 = vunpack.c.l.b16 %v4417
  %v4434 = vunpack.c.l.b16 %v4418
  %v4435 = vunpack.c.l.b16 %v4419
  %v4436 = vpack.c.b16 %v4433, %v4432
  %v4437 = vpack.c.b16 %v4435, %v4434
  %v4441 = vsel %vm3342, %v4420, 0
  %v4444 = vsel %vm3342, %v4421, 0
  %v4447 = vsel %vm3342, %v4422, 0
  %v4450 = vsel %vm3342, %v4423, 0
  %v4453 = vsel %vm3342, %v4424, 0
  %v4456 = vsel %vm3342, %v4425, 0
  %v4459 = vsel %vm3342, %v4426, 0
  %v4462 = vsel %vm3342, %v4427, 0
  %4464 = vmatprep.subr.bf16.mxu0 0
  %4465 = vmatpush1.bf16.msra.mxu0 0
  %4466 = vmatprep.subr.bf16.mxu0 0
  %4467 = vmatpush1.bf16.msra.mxu0 0
  %4468 = vmatprep.subr.bf16.mxu0 0
  %4469 = vmatpush1.bf16.msra.mxu0 0
  %4470 = vmatprep.subr.bf16.mxu0 0
  %4471 = vmatpush1.bf16.msra.mxu0 0
  %4472 = vmatprep.subr.bf16.mxu0 0
  %4473 = vmatpush1.bf16.msra.mxu0 0
  %4474 = vmatprep.subr.bf16.mxu0 0
  %4475 = vmatpush1.bf16.msra.mxu0 0
  %4476 = vmatprep.subr.bf16.mxu0 0
  %4477 = vmatpush1.bf16.msra.mxu0 %v4437
  %4478 = vmatprep.subr.bf16.mxu0 0
  %4479 = vmatpush1.bf16.msra.mxu0 %v4436
  %4480 = vmatprep.subr.bf16.mxu0 0
  %4481 = vmatpush2.bf16.msra.mxu0 0
  %4482 = vmatprep.subr.bf16.mxu0 0
  %4483 = vmatpush2.bf16.msra.mxu0 0
  %4484 = vmatprep.subr.bf16.mxu0 0
  %4485 = vmatpush2.bf16.msra.mxu0 0
  %4486 = vmatprep.subr.bf16.mxu0 0
  %4487 = vmatpush2.bf16.msra.mxu0 0
  %4488 = vmatprep.subr.bf16.mxu0 0
  %4489 = vmatpush2.bf16.msra.mxu0 0
  %4490 = vmatprep.subr.bf16.mxu0 0
  %4491 = vmatpush2.bf16.msra.mxu0 0
  %4492 = vmatprep.subr.bf16.mxu0 0
  %4493 = vmatpush2.bf16.msra.mxu0 0
  %4494 = vmatprep.subr.bf16.mxu0 0
  %4495 = vmatpush2.bf16.msra.mxu0 0
  %4496 = vmatprep.mubr.bf16.mxu0 0
  %4497 = vmatmul.mubr.bf16.gmra.mxu0 %v4441
  %v4498 = vpop.f32.mrf.mxu0
  %v4499 = vadd.f32 0.0, %v4498
  %v4500 = vpop.f32.mrf.mxu0
  %v4501 = vpop.f32.mrf.mxu0
  %v4502 = vadd.f32 0.0, %v4501
  %v4503 = vpop.f32.mrf.mxu0
  %4504 = vmatprep.mubr.bf16.mxu0 0
  %4505 = vmatmul.mubr.bf16.gmra.mxu0 %v4444
  %v4506 = vpop.f32.mrf.mxu0
  %v4507 = vadd.f32 0.0, %v4506
  %v4508 = vpop.f32.mrf.mxu0
  %v4509 = vpop.f32.mrf.mxu0
  %v4510 = vadd.f32 0.0, %v4509
  %v4511 = vpop.f32.mrf.mxu0
  %4512 = vmatprep.mubr.bf16.mxu0 0
  %4513 = vmatmul.mubr.bf16.gmra.mxu0 %v4447
  %v4514 = vpop.f32.mrf.mxu0
  %v4515 = vadd.f32 0.0, %v4514
  %v4516 = vpop.f32.mrf.mxu0
  %v4517 = vpop.f32.mrf.mxu0
  %v4518 = vadd.f32 0.0, %v4517
  %v4519 = vpop.f32.mrf.mxu0
  %4520 = vmatprep.mubr.bf16.mxu0 0
  %4521 = vmatmul.mubr.bf16.gmra.mxu0 %v4450
  %v4522 = vpop.f32.mrf.mxu0
  %v4523 = vadd.f32 0.0, %v4522
  %v4524 = vpop.f32.mrf.mxu0
  %v4525 = vpop.f32.mrf.mxu0
  %v4526 = vadd.f32 0.0, %v4525
  %v4527 = vpop.f32.mrf.mxu0
  %4528 = vmatprep.mubr.bf16.mxu0 0
  %4529 = vmatmul.mubr.bf16.gmra.mxu0 %v4453
  %v4530 = vpop.f32.mrf.mxu0
  %v4531 = vadd.f32 0.0, %v4530
  %v4532 = vpop.f32.mrf.mxu0
  %v4533 = vpop.f32.mrf.mxu0
  %v4534 = vadd.f32 0.0, %v4533
  %v4535 = vpop.f32.mrf.mxu0
  %4536 = vmatprep.mubr.bf16.mxu0 0
  %4537 = vmatmul.mubr.bf16.gmra.mxu0 %v4456
  %v4538 = vpop.f32.mrf.mxu0
  %v4539 = vadd.f32 0.0, %v4538
  %v4540 = vpop.f32.mrf.mxu0
  %v4541 = vpop.f32.mrf.mxu0
  %v4542 = vadd.f32 0.0, %v4541
  %v4543 = vpop.f32.mrf.mxu0
  %4544 = vmatprep.mubr.bf16.mxu0 0
  %4545 = vmatmul.mubr.bf16.gmra.mxu0 %v4459
  %v4546 = vpop.f32.mrf.mxu0
  %v4547 = vadd.f32 0.0, %v4546
  %v4548 = vpop.f32.mrf.mxu0
  %v4549 = vpop.f32.mrf.mxu0
  %v4550 = vadd.f32 0.0, %v4549
  %v4551 = vpop.f32.mrf.mxu0
  %4552 = vmatprep.mubr.bf16.mxu0 0
  %4553 = vmatmul.mubr.bf16.gmra.mxu0 %v4462
  %v4554 = vpop.f32.mrf.mxu0
  %v4555 = vadd.f32 0.0, %v4554
  %v4556 = vpop.f32.mrf.mxu0
  %v4557 = vpop.f32.mrf.mxu0
  %v4558 = vadd.f32 0.0, %v4557
  %v4559 = vpop.f32.mrf.mxu0
  %4560 = vdwg.mxu0
  %v4561 = vadd.f32 %v4399, %v4499
  %v4562 = vadd.f32 %v4400, %v4502
  %v4563 = vadd.f32 %v4401, %v4507
  %v4564 = vadd.f32 %v4402, %v4510
  %v4565 = vadd.f32 %v4403, %v4515
  %v4566 = vadd.f32 %v4404, %v4518
  %v4567 = vadd.f32 %v4405, %v4523
  %v4568 = vadd.f32 %v4406, %v4526
  %v4569 = vadd.f32 %v4407, %v4531
  %v4570 = vadd.f32 %v4408, %v4534
  %v4571 = vadd.f32 %v4409, %v4539
  %v4572 = vadd.f32 %v4410, %v4542
  %v4573 = vadd.f32 %v4411, %v4547
  %v4574 = vadd.f32 %v4412, %v4550
  %v4575 = vadd.f32 %v4413, %v4555
  %v4576 = vadd.f32 %v4414, %v4558
  %s4577 = scalar_lea.vmem %s3, 128
  %v4578 = vld [vmem:[%s4577] sm:$0xf]
  %v4579 = vld [vmem:[%s4577 + $0x4] sm:$0xf]
  %v4580 = vld [vmem:[%s4577 + $0x8] sm:$0xf]
  %v4581 = vld [vmem:[%s4577 + $0xc] sm:$0xf]
  %v4582 = vpack.c.b16 %v3295, %v3293
  %v4583 = vpack.c.b16 %v3299, %v3297
  %v4588 = vunpack.c.l.b16 %v4578
  %v4589 = vunpack.c.l.b16 %v4579
  %v4590 = vunpack.c.l.b16 %v4580
  %v4591 = vunpack.c.l.b16 %v4581
  %v4592 = vpack.c.b16 %v4589, %v4588
  %v4593 = vpack.c.b16 %v4591, %v4590
  %v4597 = vsel %vm3342, %v4582, 0
  %v4600 = vsel %vm3342, %v4583, 0
  %4602 = vmatprep.subr.bf16.mxu0 0
  %4603 = vmatpush1.bf16.msra.mxu0 0
  %4604 = vmatprep.subr.bf16.mxu0 0
  %4605 = vmatpush1.bf16.msra.mxu0 0
  %4606 = vmatprep.subr.bf16.mxu0 0
  %4607 = vmatpush1.bf16.msra.mxu0 0
  %4608 = vmatprep.subr.bf16.mxu0 0
  %4609 = vmatpush1.bf16.msra.mxu0 0
  %4610 = vmatprep.subr.bf16.mxu0 0
  %4611 = vmatpush1.bf16.msra.mxu0 0
  %4612 = vmatprep.subr.bf16.mxu0 0
  %4613 = vmatpush1.bf16.msra.mxu0 0
  %4614 = vmatprep.subr.bf16.mxu0 0
  %4615 = vmatpush1.bf16.msra.mxu0 %v4593
  %4616 = vmatprep.subr.bf16.mxu0 0
  %4617 = vmatpush1.bf16.msra.mxu0 %v4592
  %4618 = vmatprep.subr.bf16.mxu0 0
  %4619 = vmatpush2.bf16.msra.mxu0 0
  %4620 = vmatprep.subr.bf16.mxu0 0
  %4621 = vmatpush2.bf16.msra.mxu0 0
  %4622 = vmatprep.subr.bf16.mxu0 0
  %4623 = vmatpush2.bf16.msra.mxu0 0
  %4624 = vmatprep.subr.bf16.mxu0 0
  %4625 = vmatpush2.bf16.msra.mxu0 0
  %4626 = vmatprep.subr.bf16.mxu0 0
  %4627 = vmatpush2.bf16.msra.mxu0 0
  %4628 = vmatprep.subr.bf16.mxu0 0
  %4629 = vmatpush2.bf16.msra.mxu0 0
  %4630 = vmatprep.subr.bf16.mxu0 0
  %4631 = vmatpush2.bf16.msra.mxu0 0
  %4632 = vmatprep.subr.bf16.mxu0 0
  %4633 = vmatpush2.bf16.msra.mxu0 0
  %4634 = vmatprep.mubr.bf16.mxu0 0
  %4635 = vmatmul.mubr.bf16.gmra.mxu0 %v3491
  %v4636 = vpop.f32.mrf.mxu0
  %v4637 = vadd.f32 0.0, %v4636
  %v4638 = vpop.f32.mrf.mxu0
  %v4639 = vpop.f32.mrf.mxu0
  %v4640 = vadd.f32 0.0, %v4639
  %v4641 = vpop.f32.mrf.mxu0
  %4642 = vmatprep.mubr.bf16.mxu0 0
  %4643 = vmatmul.mubr.bf16.gmra.mxu0 %v3494
  %v4644 = vpop.f32.mrf.mxu0
  %v4645 = vadd.f32 0.0, %v4644
  %v4646 = vpop.f32.mrf.mxu0
  %v4647 = vpop.f32.mrf.mxu0
  %v4648 = vadd.f32 0.0, %v4647
  %v4649 = vpop.f32.mrf.mxu0
  %4650 = vmatprep.mubr.bf16.mxu0 0
  %4651 = vmatmul.mubr.bf16.gmra.mxu0 %v3497
  %v4652 = vpop.f32.mrf.mxu0
  %v4653 = vadd.f32 0.0, %v4652
  %v4654 = vpop.f32.mrf.mxu0
  %v4655 = vpop.f32.mrf.mxu0
  %v4656 = vadd.f32 0.0, %v4655
  %v4657 = vpop.f32.mrf.mxu0
  %4658 = vmatprep.mubr.bf16.mxu0 0
  %4659 = vmatmul.mubr.bf16.gmra.mxu0 %v3500
  %v4660 = vpop.f32.mrf.mxu0
  %v4661 = vadd.f32 0.0, %v4660
  %v4662 = vpop.f32.mrf.mxu0
  %v4663 = vpop.f32.mrf.mxu0
  %v4664 = vadd.f32 0.0, %v4663
  %v4665 = vpop.f32.mrf.mxu0
  %4666 = vmatprep.mubr.bf16.mxu0 0
  %4667 = vmatmul.mubr.bf16.gmra.mxu0 %v3503
  %v4668 = vpop.f32.mrf.mxu0
  %v4669 = vadd.f32 0.0, %v4668
  %v4670 = vpop.f32.mrf.mxu0
  %v4671 = vpop.f32.mrf.mxu0
  %v4672 = vadd.f32 0.0, %v4671
  %v4673 = vpop.f32.mrf.mxu0
  %4674 = vmatprep.mubr.bf16.mxu0 0
  %4675 = vmatmul.mubr.bf16.gmra.mxu0 %v3506
  %v4676 = vpop.f32.mrf.mxu0
  %v4677 = vadd.f32 0.0, %v4676
  %v4678 = vpop.f32.mrf.mxu0
  %v4679 = vpop.f32.mrf.mxu0
  %v4680 = vadd.f32 0.0, %v4679
  %v4681 = vpop.f32.mrf.mxu0
  %4682 = vmatprep.mubr.bf16.mxu0 0
  %4683 = vmatmul.mubr.bf16.gmra.mxu0 %v4597
  %v4684 = vpop.f32.mrf.mxu0
  %v4685 = vadd.f32 0.0, %v4684
  %v4686 = vpop.f32.mrf.mxu0
  %v4687 = vpop.f32.mrf.mxu0
  %v4688 = vadd.f32 0.0, %v4687
  %v4689 = vpop.f32.mrf.mxu0
  %4690 = vmatprep.mubr.bf16.mxu0 0
  %4691 = vmatmul.mubr.bf16.gmra.mxu0 %v4600
  %v4692 = vpop.f32.mrf.mxu0
  %v4693 = vadd.f32 0.0, %v4692
  %v4694 = vpop.f32.mrf.mxu0
  %v4695 = vpop.f32.mrf.mxu0
  %v4696 = vadd.f32 0.0, %v4695
  %v4697 = vpop.f32.mrf.mxu0
  %4698 = vdwg.mxu0
  %v4699 = vadd.f32 %v4561, %v4637
  %v4700 = vadd.f32 %v4562, %v4640
  %v4701 = vadd.f32 %v4563, %v4645
  %v4702 = vadd.f32 %v4564, %v4648
  %v4703 = vadd.f32 %v4565, %v4653
  %v4704 = vadd.f32 %v4566, %v4656
  %v4705 = vadd.f32 %v4567, %v4661
  %v4706 = vadd.f32 %v4568, %v4664
  %v4707 = vadd.f32 %v4569, %v4669
  %v4708 = vadd.f32 %v4570, %v4672
  %v4709 = vadd.f32 %v4571, %v4677
  %v4710 = vadd.f32 %v4572, %v4680
  %v4711 = vadd.f32 %v4573, %v4685
  %v4712 = vadd.f32 %v4574, %v4688
  %v4713 = vadd.f32 %v4575, %v4693
  %v4714 = vadd.f32 %v4576, %v4696
  %s4715 = scalar_lea.vmem %s3, 144
  %v4716 = vld [vmem:[%s4715] sm:$0xf]
  %v4717 = vld [vmem:[%s4715 + $0x4] sm:$0xf]
  %v4718 = vld [vmem:[%s4715 + $0x8] sm:$0xf]
  %v4719 = vld [vmem:[%s4715 + $0xc] sm:$0xf]
  %v4720 = vpack.c.b16 %v3296, %v3294
  %v4721 = vpack.c.b16 %v3300, %v3298
  %v4726 = vunpack.c.l.b16 %v4716
  %v4727 = vunpack.c.l.b16 %v4717
  %v4728 = vunpack.c.l.b16 %v4718
  %v4729 = vunpack.c.l.b16 %v4719
  %v4730 = vpack.c.b16 %v4727, %v4726
  %v4731 = vpack.c.b16 %v4729, %v4728
  %v4735 = vsel %vm3342, %v4720, 0
  %v4738 = vsel %vm3342, %v4721, 0
  %4740 = vmatprep.subr.bf16.mxu0 0
  %4741 = vmatpush1.bf16.msra.mxu0 0
  %4742 = vmatprep.subr.bf16.mxu0 0
  %4743 = vmatpush1.bf16.msra.mxu0 0
  %4744 = vmatprep.subr.bf16.mxu0 0
  %4745 = vmatpush1.bf16.msra.mxu0 0
  %4746 = vmatprep.subr.bf16.mxu0 0
  %4747 = vmatpush1.bf16.msra.mxu0 0
  %4748 = vmatprep.subr.bf16.mxu0 0
  %4749 = vmatpush1.bf16.msra.mxu0 0
  %4750 = vmatprep.subr.bf16.mxu0 0
  %4751 = vmatpush1.bf16.msra.mxu0 0
  %4752 = vmatprep.subr.bf16.mxu0 0
  %4753 = vmatpush1.bf16.msra.mxu0 %v4731
  %4754 = vmatprep.subr.bf16.mxu0 0
  %4755 = vmatpush1.bf16.msra.mxu0 %v4730
  %4756 = vmatprep.subr.bf16.mxu0 0
  %4757 = vmatpush2.bf16.msra.mxu0 0
  %4758 = vmatprep.subr.bf16.mxu0 0
  %4759 = vmatpush2.bf16.msra.mxu0 0
  %4760 = vmatprep.subr.bf16.mxu0 0
  %4761 = vmatpush2.bf16.msra.mxu0 0
  %4762 = vmatprep.subr.bf16.mxu0 0
  %4763 = vmatpush2.bf16.msra.mxu0 0
  %4764 = vmatprep.subr.bf16.mxu0 0
  %4765 = vmatpush2.bf16.msra.mxu0 0
  %4766 = vmatprep.subr.bf16.mxu0 0
  %4767 = vmatpush2.bf16.msra.mxu0 0
  %4768 = vmatprep.subr.bf16.mxu0 0
  %4769 = vmatpush2.bf16.msra.mxu0 0
  %4770 = vmatprep.subr.bf16.mxu0 0
  %4771 = vmatpush2.bf16.msra.mxu0 0
  %4772 = vmatprep.mubr.bf16.mxu0 0
  %4773 = vmatmul.mubr.bf16.gmra.mxu0 %v3350
  %v4774 = vpop.f32.mrf.mxu0
  %v4775 = vadd.f32 0.0, %v4774
  %v4776 = vpop.f32.mrf.mxu0
  %v4777 = vpop.f32.mrf.mxu0
  %v4778 = vadd.f32 0.0, %v4777
  %v4779 = vpop.f32.mrf.mxu0
  %4780 = vmatprep.mubr.bf16.mxu0 0
  %4781 = vmatmul.mubr.bf16.gmra.mxu0 %v3353
  %v4782 = vpop.f32.mrf.mxu0
  %v4783 = vadd.f32 0.0, %v4782
  %v4784 = vpop.f32.mrf.mxu0
  %v4785 = vpop.f32.mrf.mxu0
  %v4786 = vadd.f32 0.0, %v4785
  %v4787 = vpop.f32.mrf.mxu0
  %4788 = vmatprep.mubr.bf16.mxu0 0
  %4789 = vmatmul.mubr.bf16.gmra.mxu0 %v3356
  %v4790 = vpop.f32.mrf.mxu0
  %v4791 = vadd.f32 0.0, %v4790
  %v4792 = vpop.f32.mrf.mxu0
  %v4793 = vpop.f32.mrf.mxu0
  %v4794 = vadd.f32 0.0, %v4793
  %v4795 = vpop.f32.mrf.mxu0
  %4796 = vmatprep.mubr.bf16.mxu0 0
  %4797 = vmatmul.mubr.bf16.gmra.mxu0 %v3359
  %v4798 = vpop.f32.mrf.mxu0
  %v4799 = vadd.f32 0.0, %v4798
  %v4800 = vpop.f32.mrf.mxu0
  %v4801 = vpop.f32.mrf.mxu0
  %v4802 = vadd.f32 0.0, %v4801
  %v4803 = vpop.f32.mrf.mxu0
  %4804 = vmatprep.mubr.bf16.mxu0 0
  %4805 = vmatmul.mubr.bf16.gmra.mxu0 %v3362
  %v4806 = vpop.f32.mrf.mxu0
  %v4807 = vadd.f32 0.0, %v4806
  %v4808 = vpop.f32.mrf.mxu0
  %v4809 = vpop.f32.mrf.mxu0
  %v4810 = vadd.f32 0.0, %v4809
  %v4811 = vpop.f32.mrf.mxu0
  %4812 = vmatprep.mubr.bf16.mxu0 0
  %4813 = vmatmul.mubr.bf16.gmra.mxu0 %v3365
  %v4814 = vpop.f32.mrf.mxu0
  %v4815 = vadd.f32 0.0, %v4814
  %v4816 = vpop.f32.mrf.mxu0
  %v4817 = vpop.f32.mrf.mxu0
  %v4818 = vadd.f32 0.0, %v4817
  %v4819 = vpop.f32.mrf.mxu0
  %4820 = vmatprep.mubr.bf16.mxu0 0
  %4821 = vmatmul.mubr.bf16.gmra.mxu0 %v4735
  %v4822 = vpop.f32.mrf.mxu0
  %v4823 = vadd.f32 0.0, %v4822
  %v4824 = vpop.f32.mrf.mxu0
  %v4825 = vpop.f32.mrf.mxu0
  %v4826 = vadd.f32 0.0, %v4825
  %v4827 = vpop.f32.mrf.mxu0
  %4828 = vmatprep.mubr.bf16.mxu0 0
  %4829 = vmatmul.mubr.bf16.gmra.mxu0 %v4738
  %v4830 = vpop.f32.mrf.mxu0
  %v4831 = vadd.f32 0.0, %v4830
  %v4832 = vpop.f32.mrf.mxu0
  %v4833 = vpop.f32.mrf.mxu0
  %v4834 = vadd.f32 0.0, %v4833
  %v4835 = vpop.f32.mrf.mxu0
  %4836 = vdwg.mxu0
  %v4837 = vadd.f32 %v4699, %v4775
  %v4838 = vadd.f32 %v4700, %v4778
  %v4839 = vadd.f32 %v4701, %v4783
  %v4840 = vadd.f32 %v4702, %v4786
  %v4841 = vadd.f32 %v4703, %v4791
  %v4842 = vadd.f32 %v4704, %v4794
  %v4843 = vadd.f32 %v4705, %v4799
  %v4844 = vadd.f32 %v4706, %v4802
  %v4845 = vadd.f32 %v4707, %v4807
  %v4846 = vadd.f32 %v4708, %v4810
  %v4847 = vadd.f32 %v4709, %v4815
  %v4848 = vadd.f32 %v4710, %v4818
  %v4849 = vadd.f32 %v4711, %v4823
  %v4850 = vadd.f32 %v4712, %v4826
  %v4851 = vadd.f32 %v4713, %v4831
  %v4852 = vadd.f32 %v4714, %v4834
  %s4853 = scalar_lea.vmem %s3, 160
  %v4854 = vld [vmem:[%s4853] sm:$0xf]
  %v4855 = vld [vmem:[%s4853 + $0x4] sm:$0xf]
  %v4856 = vld [vmem:[%s4853 + $0x8] sm:$0xf]
  %v4857 = vld [vmem:[%s4853 + $0xc] sm:$0xf]
  %v4858 = vpack.c.b16 %v3297, %v3295
  %v4859 = vpack.c.b16 %v3301, %v3299
  %v4864 = vunpack.c.l.b16 %v4854
  %v4865 = vunpack.c.l.b16 %v4855
  %v4866 = vunpack.c.l.b16 %v4856
  %v4867 = vunpack.c.l.b16 %v4857
  %v4868 = vpack.c.b16 %v4865, %v4864
  %v4869 = vpack.c.b16 %v4867, %v4866
  %v4873 = vsel %vm3342, %v4858, 0
  %v4876 = vsel %vm3342, %v4859, 0
  %4878 = vmatprep.subr.bf16.mxu0 0
  %4879 = vmatpush1.bf16.msra.mxu0 0
  %4880 = vmatprep.subr.bf16.mxu0 0
  %4881 = vmatpush1.bf16.msra.mxu0 0
  %4882 = vmatprep.subr.bf16.mxu0 0
  %4883 = vmatpush1.bf16.msra.mxu0 0
  %4884 = vmatprep.subr.bf16.mxu0 0
  %4885 = vmatpush1.bf16.msra.mxu0 0
  %4886 = vmatprep.subr.bf16.mxu0 0
  %4887 = vmatpush1.bf16.msra.mxu0 0
  %4888 = vmatprep.subr.bf16.mxu0 0
  %4889 = vmatpush1.bf16.msra.mxu0 0
  %4890 = vmatprep.subr.bf16.mxu0 0
  %4891 = vmatpush1.bf16.msra.mxu0 %v4869
  %4892 = vmatprep.subr.bf16.mxu0 0
  %4893 = vmatpush1.bf16.msra.mxu0 %v4868
  %4894 = vmatprep.subr.bf16.mxu0 0
  %4895 = vmatpush2.bf16.msra.mxu0 0
  %4896 = vmatprep.subr.bf16.mxu0 0
  %4897 = vmatpush2.bf16.msra.mxu0 0
  %4898 = vmatprep.subr.bf16.mxu0 0
  %4899 = vmatpush2.bf16.msra.mxu0 0
  %4900 = vmatprep.subr.bf16.mxu0 0
  %4901 = vmatpush2.bf16.msra.mxu0 0
  %4902 = vmatprep.subr.bf16.mxu0 0
  %4903 = vmatpush2.bf16.msra.mxu0 0
  %4904 = vmatprep.subr.bf16.mxu0 0
  %4905 = vmatpush2.bf16.msra.mxu0 0
  %4906 = vmatprep.subr.bf16.mxu0 0
  %4907 = vmatpush2.bf16.msra.mxu0 0
  %4908 = vmatprep.subr.bf16.mxu0 0
  %4909 = vmatpush2.bf16.msra.mxu0 0
  %4910 = vmatprep.mubr.bf16.mxu0 0
  %4911 = vmatmul.mubr.bf16.gmra.mxu0 %v3637
  %v4912 = vpop.f32.mrf.mxu0
  %v4913 = vadd.f32 0.0, %v4912
  %v4914 = vpop.f32.mrf.mxu0
  %v4915 = vpop.f32.mrf.mxu0
  %v4916 = vadd.f32 0.0, %v4915
  %v4917 = vpop.f32.mrf.mxu0
  %4918 = vmatprep.mubr.bf16.mxu0 0
  %4919 = vmatmul.mubr.bf16.gmra.mxu0 %v3640
  %v4920 = vpop.f32.mrf.mxu0
  %v4921 = vadd.f32 0.0, %v4920
  %v4922 = vpop.f32.mrf.mxu0
  %v4923 = vpop.f32.mrf.mxu0
  %v4924 = vadd.f32 0.0, %v4923
  %v4925 = vpop.f32.mrf.mxu0
  %4926 = vmatprep.mubr.bf16.mxu0 0
  %4927 = vmatmul.mubr.bf16.gmra.mxu0 %v3643
  %v4928 = vpop.f32.mrf.mxu0
  %v4929 = vadd.f32 0.0, %v4928
  %v4930 = vpop.f32.mrf.mxu0
  %v4931 = vpop.f32.mrf.mxu0
  %v4932 = vadd.f32 0.0, %v4931
  %v4933 = vpop.f32.mrf.mxu0
  %4934 = vmatprep.mubr.bf16.mxu0 0
  %4935 = vmatmul.mubr.bf16.gmra.mxu0 %v3646
  %v4936 = vpop.f32.mrf.mxu0
  %v4937 = vadd.f32 0.0, %v4936
  %v4938 = vpop.f32.mrf.mxu0
  %v4939 = vpop.f32.mrf.mxu0
  %v4940 = vadd.f32 0.0, %v4939
  %v4941 = vpop.f32.mrf.mxu0
  %4942 = vmatprep.mubr.bf16.mxu0 0
  %4943 = vmatmul.mubr.bf16.gmra.mxu0 %v3649
  %v4944 = vpop.f32.mrf.mxu0
  %v4945 = vadd.f32 0.0, %v4944
  %v4946 = vpop.f32.mrf.mxu0
  %v4947 = vpop.f32.mrf.mxu0
  %v4948 = vadd.f32 0.0, %v4947
  %v4949 = vpop.f32.mrf.mxu0
  %4950 = vmatprep.mubr.bf16.mxu0 0
  %4951 = vmatmul.mubr.bf16.gmra.mxu0 %v3652
  %v4952 = vpop.f32.mrf.mxu0
  %v4953 = vadd.f32 0.0, %v4952
  %v4954 = vpop.f32.mrf.mxu0
  %v4955 = vpop.f32.mrf.mxu0
  %v4956 = vadd.f32 0.0, %v4955
  %v4957 = vpop.f32.mrf.mxu0
  %4958 = vmatprep.mubr.bf16.mxu0 0
  %4959 = vmatmul.mubr.bf16.gmra.mxu0 %v4873
  %v4960 = vpop.f32.mrf.mxu0
  %v4961 = vadd.f32 0.0, %v4960
  %v4962 = vpop.f32.mrf.mxu0
  %v4963 = vpop.f32.mrf.mxu0
  %v4964 = vadd.f32 0.0, %v4963
  %v4965 = vpop.f32.mrf.mxu0
  %4966 = vmatprep.mubr.bf16.mxu0 0
  %4967 = vmatmul.mubr.bf16.gmra.mxu0 %v4876
  %v4968 = vpop.f32.mrf.mxu0
  %v4969 = vadd.f32 0.0, %v4968
  %v4970 = vpop.f32.mrf.mxu0
  %v4971 = vpop.f32.mrf.mxu0
  %v4972 = vadd.f32 0.0, %v4971
  %v4973 = vpop.f32.mrf.mxu0
  %4974 = vdwg.mxu0
  %v4975 = vadd.f32 %v4837, %v4913
  %v4976 = vadd.f32 %v4838, %v4916
  %v4977 = vadd.f32 %v4839, %v4921
  %v4978 = vadd.f32 %v4840, %v4924
  %v4979 = vadd.f32 %v4841, %v4929
  %v4980 = vadd.f32 %v4842, %v4932
  %v4981 = vadd.f32 %v4843, %v4937
  %v4982 = vadd.f32 %v4844, %v4940
  %v4983 = vadd.f32 %v4845, %v4945
  %v4984 = vadd.f32 %v4846, %v4948
  %v4985 = vadd.f32 %v4847, %v4953
  %v4986 = vadd.f32 %v4848, %v4956
  %v4987 = vadd.f32 %v4849, %v4961
  %v4988 = vadd.f32 %v4850, %v4964
  %v4989 = vadd.f32 %v4851, %v4969
  %v4990 = vadd.f32 %v4852, %v4972
  %s4991 = scalar_lea.vmem %s3, 176
  %v4992 = vld [vmem:[%s4991] sm:$0xf]
  %v4993 = vld [vmem:[%s4991 + $0x4] sm:$0xf]
  %v4994 = vld [vmem:[%s4991 + $0x8] sm:$0xf]
  %v4995 = vld [vmem:[%s4991 + $0xc] sm:$0xf]
  %v4996 = vpack.c.b16 %v3298, %v3296
  %v4997 = vpack.c.b16 %v3302, %v3300
  %v5002 = vunpack.c.l.b16 %v4992
  %v5003 = vunpack.c.l.b16 %v4993
  %v5004 = vunpack.c.l.b16 %v4994
  %v5005 = vunpack.c.l.b16 %v4995
  %v5006 = vpack.c.b16 %v5003, %v5002
  %v5007 = vpack.c.b16 %v5005, %v5004
  %v5011 = vsel %vm3342, %v4996, 0
  %v5014 = vsel %vm3342, %v4997, 0
  %5016 = vmatprep.subr.bf16.mxu0 0
  %5017 = vmatpush1.bf16.msra.mxu0 0
  %5018 = vmatprep.subr.bf16.mxu0 0
  %5019 = vmatpush1.bf16.msra.mxu0 0
  %5020 = vmatprep.subr.bf16.mxu0 0
  %5021 = vmatpush1.bf16.msra.mxu0 0
  %5022 = vmatprep.subr.bf16.mxu0 0
  %5023 = vmatpush1.bf16.msra.mxu0 0
  %5024 = vmatprep.subr.bf16.mxu0 0
  %5025 = vmatpush1.bf16.msra.mxu0 0
  %5026 = vmatprep.subr.bf16.mxu0 0
  %5027 = vmatpush1.bf16.msra.mxu0 0
  %5028 = vmatprep.subr.bf16.mxu0 0
  %5029 = vmatpush1.bf16.msra.mxu0 %v5007
  %5030 = vmatprep.subr.bf16.mxu0 0
  %5031 = vmatpush1.bf16.msra.mxu0 %v5006
  %5032 = vmatprep.subr.bf16.mxu0 0
  %5033 = vmatpush2.bf16.msra.mxu0 0
  %5034 = vmatprep.subr.bf16.mxu0 0
  %5035 = vmatpush2.bf16.msra.mxu0 0
  %5036 = vmatprep.subr.bf16.mxu0 0
  %5037 = vmatpush2.bf16.msra.mxu0 0
  %5038 = vmatprep.subr.bf16.mxu0 0
  %5039 = vmatpush2.bf16.msra.mxu0 0
  %5040 = vmatprep.subr.bf16.mxu0 0
  %5041 = vmatpush2.bf16.msra.mxu0 0
  %5042 = vmatprep.subr.bf16.mxu0 0
  %5043 = vmatpush2.bf16.msra.mxu0 0
  %5044 = vmatprep.subr.bf16.mxu0 0
  %5045 = vmatpush2.bf16.msra.mxu0 0
  %5046 = vmatprep.subr.bf16.mxu0 0
  %5047 = vmatpush2.bf16.msra.mxu0 0
  %5048 = vmatprep.mubr.bf16.mxu0 0
  %5049 = vmatmul.mubr.bf16.gmra.mxu0 %v3799
  %v5050 = vpop.f32.mrf.mxu0
  %v5051 = vadd.f32 0.0, %v5050
  %v5052 = vpop.f32.mrf.mxu0
  %v5053 = vpop.f32.mrf.mxu0
  %v5054 = vadd.f32 0.0, %v5053
  %v5055 = vpop.f32.mrf.mxu0
  %5056 = vmatprep.mubr.bf16.mxu0 0
  %5057 = vmatmul.mubr.bf16.gmra.mxu0 %v3802
  %v5058 = vpop.f32.mrf.mxu0
  %v5059 = vadd.f32 0.0, %v5058
  %v5060 = vpop.f32.mrf.mxu0
  %v5061 = vpop.f32.mrf.mxu0
  %v5062 = vadd.f32 0.0, %v5061
  %v5063 = vpop.f32.mrf.mxu0
  %5064 = vmatprep.mubr.bf16.mxu0 0
  %5065 = vmatmul.mubr.bf16.gmra.mxu0 %v3805
  %v5066 = vpop.f32.mrf.mxu0
  %v5067 = vadd.f32 0.0, %v5066
  %v5068 = vpop.f32.mrf.mxu0
  %v5069 = vpop.f32.mrf.mxu0
  %v5070 = vadd.f32 0.0, %v5069
  %v5071 = vpop.f32.mrf.mxu0
  %5072 = vmatprep.mubr.bf16.mxu0 0
  %5073 = vmatmul.mubr.bf16.gmra.mxu0 %v3808
  %v5074 = vpop.f32.mrf.mxu0
  %v5075 = vadd.f32 0.0, %v5074
  %v5076 = vpop.f32.mrf.mxu0
  %v5077 = vpop.f32.mrf.mxu0
  %v5078 = vadd.f32 0.0, %v5077
  %v5079 = vpop.f32.mrf.mxu0
  %5080 = vmatprep.mubr.bf16.mxu0 0
  %5081 = vmatmul.mubr.bf16.gmra.mxu0 %v3811
  %v5082 = vpop.f32.mrf.mxu0
  %v5083 = vadd.f32 0.0, %v5082
  %v5084 = vpop.f32.mrf.mxu0
  %v5085 = vpop.f32.mrf.mxu0
  %v5086 = vadd.f32 0.0, %v5085
  %v5087 = vpop.f32.mrf.mxu0
  %5088 = vmatprep.mubr.bf16.mxu0 0
  %5089 = vmatmul.mubr.bf16.gmra.mxu0 %v3814
  %v5090 = vpop.f32.mrf.mxu0
  %v5091 = vadd.f32 0.0, %v5090
  %v5092 = vpop.f32.mrf.mxu0
  %v5093 = vpop.f32.mrf.mxu0
  %v5094 = vadd.f32 0.0, %v5093
  %v5095 = vpop.f32.mrf.mxu0
  %5096 = vmatprep.mubr.bf16.mxu0 0
  %5097 = vmatmul.mubr.bf16.gmra.mxu0 %v5011
  %v5098 = vpop.f32.mrf.mxu0
  %v5099 = vadd.f32 0.0, %v5098
  %v5100 = vpop.f32.mrf.mxu0
  %v5101 = vpop.f32.mrf.mxu0
  %v5102 = vadd.f32 0.0, %v5101
  %v5103 = vpop.f32.mrf.mxu0
  %5104 = vmatprep.mubr.bf16.mxu0 0
  %5105 = vmatmul.mubr.bf16.gmra.mxu0 %v5014
  %v5106 = vpop.f32.mrf.mxu0
  %v5107 = vadd.f32 0.0, %v5106
  %v5108 = vpop.f32.mrf.mxu0
  %v5109 = vpop.f32.mrf.mxu0
  %v5110 = vadd.f32 0.0, %v5109
  %v5111 = vpop.f32.mrf.mxu0
  %5112 = vdwg.mxu0
  %v5113 = vadd.f32 %v4975, %v5051
  %v5114 = vadd.f32 %v4976, %v5054
  %v5115 = vadd.f32 %v4977, %v5059
  %v5116 = vadd.f32 %v4978, %v5062
  %v5117 = vadd.f32 %v4979, %v5067
  %v5118 = vadd.f32 %v4980, %v5070
  %v5119 = vadd.f32 %v4981, %v5075
  %v5120 = vadd.f32 %v4982, %v5078
  %v5121 = vadd.f32 %v4983, %v5083
  %v5122 = vadd.f32 %v4984, %v5086
  %v5123 = vadd.f32 %v4985, %v5091
  %v5124 = vadd.f32 %v4986, %v5094
  %v5125 = vadd.f32 %v4987, %v5099
  %v5126 = vadd.f32 %v4988, %v5102
  %v5127 = vadd.f32 %v4989, %v5107
  %v5128 = vadd.f32 %v4990, %v5110
  %s5129 = scalar_lea.vmem %s3, 192
  %v5130 = vld [vmem:[%s5129] sm:$0xf]
  %v5131 = vld [vmem:[%s5129 + $0x4] sm:$0xf]
  %v5132 = vld [vmem:[%s5129 + $0x8] sm:$0xf]
  %v5133 = vld [vmem:[%s5129 + $0xc] sm:$0xf]
  %v5134 = vpack.c.b16 %v3305, %v3303
  %v5135 = vpack.c.b16 %v3309, %v3307
  %v5140 = vunpack.c.l.b16 %v5130
  %v5141 = vunpack.c.l.b16 %v5131
  %v5142 = vunpack.c.l.b16 %v5132
  %v5143 = vunpack.c.l.b16 %v5133
  %v5144 = vpack.c.b16 %v5141, %v5140
  %v5145 = vpack.c.b16 %v5143, %v5142
  %v5149 = vsel %vm3342, %v5134, 0
  %v5152 = vsel %vm3342, %v5135, 0
  %5154 = vmatprep.subr.bf16.mxu0 0
  %5155 = vmatpush1.bf16.msra.mxu0 0
  %5156 = vmatprep.subr.bf16.mxu0 0
  %5157 = vmatpush1.bf16.msra.mxu0 0
  %5158 = vmatprep.subr.bf16.mxu0 0
  %5159 = vmatpush1.bf16.msra.mxu0 0
  %5160 = vmatprep.subr.bf16.mxu0 0
  %5161 = vmatpush1.bf16.msra.mxu0 0
  %5162 = vmatprep.subr.bf16.mxu0 0
  %5163 = vmatpush1.bf16.msra.mxu0 0
  %5164 = vmatprep.subr.bf16.mxu0 0
  %5165 = vmatpush1.bf16.msra.mxu0 0
  %5166 = vmatprep.subr.bf16.mxu0 0
  %5167 = vmatpush1.bf16.msra.mxu0 %v5145
  %5168 = vmatprep.subr.bf16.mxu0 0
  %5169 = vmatpush1.bf16.msra.mxu0 %v5144
  %5170 = vmatprep.subr.bf16.mxu0 0
  %5171 = vmatpush2.bf16.msra.mxu0 0
  %5172 = vmatprep.subr.bf16.mxu0 0
  %5173 = vmatpush2.bf16.msra.mxu0 0
  %5174 = vmatprep.subr.bf16.mxu0 0
  %5175 = vmatpush2.bf16.msra.mxu0 0
  %5176 = vmatprep.subr.bf16.mxu0 0
  %5177 = vmatpush2.bf16.msra.mxu0 0
  %5178 = vmatprep.subr.bf16.mxu0 0
  %5179 = vmatpush2.bf16.msra.mxu0 0
  %5180 = vmatprep.subr.bf16.mxu0 0
  %5181 = vmatpush2.bf16.msra.mxu0 0
  %5182 = vmatprep.subr.bf16.mxu0 0
  %5183 = vmatpush2.bf16.msra.mxu0 0
  %5184 = vmatprep.subr.bf16.mxu0 0
  %5185 = vmatpush2.bf16.msra.mxu0 0
  %5186 = vmatprep.mubr.bf16.mxu0 0
  %5187 = vmatmul.mubr.bf16.gmra.mxu0 %v3961
  %v5188 = vpop.f32.mrf.mxu0
  %v5189 = vadd.f32 0.0, %v5188
  %v5190 = vpop.f32.mrf.mxu0
  %v5191 = vpop.f32.mrf.mxu0
  %v5192 = vadd.f32 0.0, %v5191
  %v5193 = vpop.f32.mrf.mxu0
  %5194 = vmatprep.mubr.bf16.mxu0 0
  %5195 = vmatmul.mubr.bf16.gmra.mxu0 %v3964
  %v5196 = vpop.f32.mrf.mxu0
  %v5197 = vadd.f32 0.0, %v5196
  %v5198 = vpop.f32.mrf.mxu0
  %v5199 = vpop.f32.mrf.mxu0
  %v5200 = vadd.f32 0.0, %v5199
  %v5201 = vpop.f32.mrf.mxu0
  %5202 = vmatprep.mubr.bf16.mxu0 0
  %5203 = vmatmul.mubr.bf16.gmra.mxu0 %v3967
  %v5204 = vpop.f32.mrf.mxu0
  %v5205 = vadd.f32 0.0, %v5204
  %v5206 = vpop.f32.mrf.mxu0
  %v5207 = vpop.f32.mrf.mxu0
  %v5208 = vadd.f32 0.0, %v5207
  %v5209 = vpop.f32.mrf.mxu0
  %5210 = vmatprep.mubr.bf16.mxu0 0
  %5211 = vmatmul.mubr.bf16.gmra.mxu0 %v3970
  %v5212 = vpop.f32.mrf.mxu0
  %v5213 = vadd.f32 0.0, %v5212
  %v5214 = vpop.f32.mrf.mxu0
  %v5215 = vpop.f32.mrf.mxu0
  %v5216 = vadd.f32 0.0, %v5215
  %v5217 = vpop.f32.mrf.mxu0
  %5218 = vmatprep.mubr.bf16.mxu0 0
  %5219 = vmatmul.mubr.bf16.gmra.mxu0 %v3973
  %v5220 = vpop.f32.mrf.mxu0
  %v5221 = vadd.f32 0.0, %v5220
  %v5222 = vpop.f32.mrf.mxu0
  %v5223 = vpop.f32.mrf.mxu0
  %v5224 = vadd.f32 0.0, %v5223
  %v5225 = vpop.f32.mrf.mxu0
  %5226 = vmatprep.mubr.bf16.mxu0 0
  %5227 = vmatmul.mubr.bf16.gmra.mxu0 %v3976
  %v5228 = vpop.f32.mrf.mxu0
  %v5229 = vadd.f32 0.0, %v5228
  %v5230 = vpop.f32.mrf.mxu0
  %v5231 = vpop.f32.mrf.mxu0
  %v5232 = vadd.f32 0.0, %v5231
  %v5233 = vpop.f32.mrf.mxu0
  %5234 = vmatprep.mubr.bf16.mxu0 0
  %5235 = vmatmul.mubr.bf16.gmra.mxu0 %v5149
  %v5236 = vpop.f32.mrf.mxu0
  %v5237 = vadd.f32 0.0, %v5236
  %v5238 = vpop.f32.mrf.mxu0
  %v5239 = vpop.f32.mrf.mxu0
  %v5240 = vadd.f32 0.0, %v5239
  %v5241 = vpop.f32.mrf.mxu0
  %5242 = vmatprep.mubr.bf16.mxu0 0
  %5243 = vmatmul.mubr.bf16.gmra.mxu0 %v5152
  %v5244 = vpop.f32.mrf.mxu0
  %v5245 = vadd.f32 0.0, %v5244
  %v5246 = vpop.f32.mrf.mxu0
  %v5247 = vpop.f32.mrf.mxu0
  %v5248 = vadd.f32 0.0, %v5247
  %v5249 = vpop.f32.mrf.mxu0
  %5250 = vdwg.mxu0
  %v5251 = vadd.f32 %v5113, %v5189
  %v5252 = vadd.f32 %v5114, %v5192
  %v5253 = vadd.f32 %v5115, %v5197
  %v5254 = vadd.f32 %v5116, %v5200
  %v5255 = vadd.f32 %v5117, %v5205
  %v5256 = vadd.f32 %v5118, %v5208
  %v5257 = vadd.f32 %v5119, %v5213
  %v5258 = vadd.f32 %v5120, %v5216
  %v5259 = vadd.f32 %v5121, %v5221
  %v5260 = vadd.f32 %v5122, %v5224
  %v5261 = vadd.f32 %v5123, %v5229
  %v5262 = vadd.f32 %v5124, %v5232
  %v5263 = vadd.f32 %v5125, %v5237
  %v5264 = vadd.f32 %v5126, %v5240
  %v5265 = vadd.f32 %v5127, %v5245
  %v5266 = vadd.f32 %v5128, %v5248
  %s5267 = scalar_lea.vmem %s3, 208
  %v5268 = vld [vmem:[%s5267] sm:$0xf]
  %v5269 = vld [vmem:[%s5267 + $0x4] sm:$0xf]
  %v5270 = vld [vmem:[%s5267 + $0x8] sm:$0xf]
  %v5271 = vld [vmem:[%s5267 + $0xc] sm:$0xf]
  %v5272 = vpack.c.b16 %v3306, %v3304
  %v5273 = vpack.c.b16 %v3310, %v3308
  %v5278 = vunpack.c.l.b16 %v5268
  %v5279 = vunpack.c.l.b16 %v5269
  %v5280 = vunpack.c.l.b16 %v5270
  %v5281 = vunpack.c.l.b16 %v5271
  %v5282 = vpack.c.b16 %v5279, %v5278
  %v5283 = vpack.c.b16 %v5281, %v5280
  %v5287 = vsel %vm3342, %v5272, 0
  %v5290 = vsel %vm3342, %v5273, 0
  %5292 = vmatprep.subr.bf16.mxu0 0
  %5293 = vmatpush1.bf16.msra.mxu0 0
  %5294 = vmatprep.subr.bf16.mxu0 0
  %5295 = vmatpush1.bf16.msra.mxu0 0
  %5296 = vmatprep.subr.bf16.mxu0 0
  %5297 = vmatpush1.bf16.msra.mxu0 0
  %5298 = vmatprep.subr.bf16.mxu0 0
  %5299 = vmatpush1.bf16.msra.mxu0 0
  %5300 = vmatprep.subr.bf16.mxu0 0
  %5301 = vmatpush1.bf16.msra.mxu0 0
  %5302 = vmatprep.subr.bf16.mxu0 0
  %5303 = vmatpush1.bf16.msra.mxu0 0
  %5304 = vmatprep.subr.bf16.mxu0 0
  %5305 = vmatpush1.bf16.msra.mxu0 %v5283
  %5306 = vmatprep.subr.bf16.mxu0 0
  %5307 = vmatpush1.bf16.msra.mxu0 %v5282
  %5308 = vmatprep.subr.bf16.mxu0 0
  %5309 = vmatpush2.bf16.msra.mxu0 0
  %5310 = vmatprep.subr.bf16.mxu0 0
  %5311 = vmatpush2.bf16.msra.mxu0 0
  %5312 = vmatprep.subr.bf16.mxu0 0
  %5313 = vmatpush2.bf16.msra.mxu0 0
  %5314 = vmatprep.subr.bf16.mxu0 0
  %5315 = vmatpush2.bf16.msra.mxu0 0
  %5316 = vmatprep.subr.bf16.mxu0 0
  %5317 = vmatpush2.bf16.msra.mxu0 0
  %5318 = vmatprep.subr.bf16.mxu0 0
  %5319 = vmatpush2.bf16.msra.mxu0 0
  %5320 = vmatprep.subr.bf16.mxu0 0
  %5321 = vmatpush2.bf16.msra.mxu0 0
  %5322 = vmatprep.subr.bf16.mxu0 0
  %5323 = vmatpush2.bf16.msra.mxu0 0
  %5324 = vmatprep.mubr.bf16.mxu0 0
  %5325 = vmatmul.mubr.bf16.gmra.mxu0 %v4123
  %v5326 = vpop.f32.mrf.mxu0
  %v5327 = vadd.f32 0.0, %v5326
  %v5328 = vpop.f32.mrf.mxu0
  %v5329 = vpop.f32.mrf.mxu0
  %v5330 = vadd.f32 0.0, %v5329
  %v5331 = vpop.f32.mrf.mxu0
  %5332 = vmatprep.mubr.bf16.mxu0 0
  %5333 = vmatmul.mubr.bf16.gmra.mxu0 %v4126
  %v5334 = vpop.f32.mrf.mxu0
  %v5335 = vadd.f32 0.0, %v5334
  %v5336 = vpop.f32.mrf.mxu0
  %v5337 = vpop.f32.mrf.mxu0
  %v5338 = vadd.f32 0.0, %v5337
  %v5339 = vpop.f32.mrf.mxu0
  %5340 = vmatprep.mubr.bf16.mxu0 0
  %5341 = vmatmul.mubr.bf16.gmra.mxu0 %v4129
  %v5342 = vpop.f32.mrf.mxu0
  %v5343 = vadd.f32 0.0, %v5342
  %v5344 = vpop.f32.mrf.mxu0
  %v5345 = vpop.f32.mrf.mxu0
  %v5346 = vadd.f32 0.0, %v5345
  %v5347 = vpop.f32.mrf.mxu0
  %5348 = vmatprep.mubr.bf16.mxu0 0
  %5349 = vmatmul.mubr.bf16.gmra.mxu0 %v4132
  %v5350 = vpop.f32.mrf.mxu0
  %v5351 = vadd.f32 0.0, %v5350
  %v5352 = vpop.f32.mrf.mxu0
  %v5353 = vpop.f32.mrf.mxu0
  %v5354 = vadd.f32 0.0, %v5353
  %v5355 = vpop.f32.mrf.mxu0
  %5356 = vmatprep.mubr.bf16.mxu0 0
  %5357 = vmatmul.mubr.bf16.gmra.mxu0 %v4135
  %v5358 = vpop.f32.mrf.mxu0
  %v5359 = vadd.f32 0.0, %v5358
  %v5360 = vpop.f32.mrf.mxu0
  %v5361 = vpop.f32.mrf.mxu0
  %v5362 = vadd.f32 0.0, %v5361
  %v5363 = vpop.f32.mrf.mxu0
  %5364 = vmatprep.mubr.bf16.mxu0 0
  %5365 = vmatmul.mubr.bf16.gmra.mxu0 %v4138
  %v5366 = vpop.f32.mrf.mxu0
  %v5367 = vadd.f32 0.0, %v5366
  %v5368 = vpop.f32.mrf.mxu0
  %v5369 = vpop.f32.mrf.mxu0
  %v5370 = vadd.f32 0.0, %v5369
  %v5371 = vpop.f32.mrf.mxu0
  %5372 = vmatprep.mubr.bf16.mxu0 0
  %5373 = vmatmul.mubr.bf16.gmra.mxu0 %v5287
  %v5374 = vpop.f32.mrf.mxu0
  %v5375 = vadd.f32 0.0, %v5374
  %v5376 = vpop.f32.mrf.mxu0
  %v5377 = vpop.f32.mrf.mxu0
  %v5378 = vadd.f32 0.0, %v5377
  %v5379 = vpop.f32.mrf.mxu0
  %5380 = vmatprep.mubr.bf16.mxu0 0
  %5381 = vmatmul.mubr.bf16.gmra.mxu0 %v5290
  %v5382 = vpop.f32.mrf.mxu0
  %v5383 = vadd.f32 0.0, %v5382
  %v5384 = vpop.f32.mrf.mxu0
  %v5385 = vpop.f32.mrf.mxu0
  %v5386 = vadd.f32 0.0, %v5385
  %v5387 = vpop.f32.mrf.mxu0
  %5388 = vdwg.mxu0
  %v5389 = vadd.f32 %v5251, %v5327
  %v5390 = vadd.f32 %v5252, %v5330
  %v5391 = vadd.f32 %v5253, %v5335
  %v5392 = vadd.f32 %v5254, %v5338
  %v5393 = vadd.f32 %v5255, %v5343
  %v5394 = vadd.f32 %v5256, %v5346
  %v5395 = vadd.f32 %v5257, %v5351
  %v5396 = vadd.f32 %v5258, %v5354
  %v5397 = vadd.f32 %v5259, %v5359
  %v5398 = vadd.f32 %v5260, %v5362
  %v5399 = vadd.f32 %v5261, %v5367
  %v5400 = vadd.f32 %v5262, %v5370
  %v5401 = vadd.f32 %v5263, %v5375
  %v5402 = vadd.f32 %v5264, %v5378
  %v5403 = vadd.f32 %v5265, %v5383
  %v5404 = vadd.f32 %v5266, %v5386
  %s5405 = scalar_lea.vmem %s3, 224
  %v5406 = vld [vmem:[%s5405] sm:$0xf]
  %v5407 = vld [vmem:[%s5405 + $0x4] sm:$0xf]
  %v5408 = vld [vmem:[%s5405 + $0x8] sm:$0xf]
  %v5409 = vld [vmem:[%s5405 + $0xc] sm:$0xf]
  %v5410 = vpack.c.b16 %v3307, %v3305
  %v5411 = vpack.c.b16 %v3311, %v3309
  %v5416 = vunpack.c.l.b16 %v5406
  %v5417 = vunpack.c.l.b16 %v5407
  %v5418 = vunpack.c.l.b16 %v5408
  %v5419 = vunpack.c.l.b16 %v5409
  %v5420 = vpack.c.b16 %v5417, %v5416
  %v5421 = vpack.c.b16 %v5419, %v5418
  %v5425 = vsel %vm3342, %v5410, 0
  %v5428 = vsel %vm3342, %v5411, 0
  %5430 = vmatprep.subr.bf16.mxu0 0
  %5431 = vmatpush1.bf16.msra.mxu0 0
  %5432 = vmatprep.subr.bf16.mxu0 0
  %5433 = vmatpush1.bf16.msra.mxu0 0
  %5434 = vmatprep.subr.bf16.mxu0 0
  %5435 = vmatpush1.bf16.msra.mxu0 0
  %5436 = vmatprep.subr.bf16.mxu0 0
  %5437 = vmatpush1.bf16.msra.mxu0 0
  %5438 = vmatprep.subr.bf16.mxu0 0
  %5439 = vmatpush1.bf16.msra.mxu0 0
  %5440 = vmatprep.subr.bf16.mxu0 0
  %5441 = vmatpush1.bf16.msra.mxu0 0
  %5442 = vmatprep.subr.bf16.mxu0 0
  %5443 = vmatpush1.bf16.msra.mxu0 %v5421
  %5444 = vmatprep.subr.bf16.mxu0 0
  %5445 = vmatpush1.bf16.msra.mxu0 %v5420
  %5446 = vmatprep.subr.bf16.mxu0 0
  %5447 = vmatpush2.bf16.msra.mxu0 0
  %5448 = vmatprep.subr.bf16.mxu0 0
  %5449 = vmatpush2.bf16.msra.mxu0 0
  %5450 = vmatprep.subr.bf16.mxu0 0
  %5451 = vmatpush2.bf16.msra.mxu0 0
  %5452 = vmatprep.subr.bf16.mxu0 0
  %5453 = vmatpush2.bf16.msra.mxu0 0
  %5454 = vmatprep.subr.bf16.mxu0 0
  %5455 = vmatpush2.bf16.msra.mxu0 0
  %5456 = vmatprep.subr.bf16.mxu0 0
  %5457 = vmatpush2.bf16.msra.mxu0 0
  %5458 = vmatprep.subr.bf16.mxu0 0
  %5459 = vmatpush2.bf16.msra.mxu0 0
  %5460 = vmatprep.subr.bf16.mxu0 0
  %5461 = vmatpush2.bf16.msra.mxu0 0
  %5462 = vmatprep.mubr.bf16.mxu0 0
  %5463 = vmatmul.mubr.bf16.gmra.mxu0 %v4285
  %v5464 = vpop.f32.mrf.mxu0
  %v5465 = vadd.f32 0.0, %v5464
  %v5466 = vpop.f32.mrf.mxu0
  %v5467 = vpop.f32.mrf.mxu0
  %v5468 = vadd.f32 0.0, %v5467
  %v5469 = vpop.f32.mrf.mxu0
  %5470 = vmatprep.mubr.bf16.mxu0 0
  %5471 = vmatmul.mubr.bf16.gmra.mxu0 %v4288
  %v5472 = vpop.f32.mrf.mxu0
  %v5473 = vadd.f32 0.0, %v5472
  %v5474 = vpop.f32.mrf.mxu0
  %v5475 = vpop.f32.mrf.mxu0
  %v5476 = vadd.f32 0.0, %v5475
  %v5477 = vpop.f32.mrf.mxu0
  %5478 = vmatprep.mubr.bf16.mxu0 0
  %5479 = vmatmul.mubr.bf16.gmra.mxu0 %v4291
  %v5480 = vpop.f32.mrf.mxu0
  %v5481 = vadd.f32 0.0, %v5480
  %v5482 = vpop.f32.mrf.mxu0
  %v5483 = vpop.f32.mrf.mxu0
  %v5484 = vadd.f32 0.0, %v5483
  %v5485 = vpop.f32.mrf.mxu0
  %5486 = vmatprep.mubr.bf16.mxu0 0
  %5487 = vmatmul.mubr.bf16.gmra.mxu0 %v4294
  %v5488 = vpop.f32.mrf.mxu0
  %v5489 = vadd.f32 0.0, %v5488
  %v5490 = vpop.f32.mrf.mxu0
  %v5491 = vpop.f32.mrf.mxu0
  %v5492 = vadd.f32 0.0, %v5491
  %v5493 = vpop.f32.mrf.mxu0
  %5494 = vmatprep.mubr.bf16.mxu0 0
  %5495 = vmatmul.mubr.bf16.gmra.mxu0 %v4297
  %v5496 = vpop.f32.mrf.mxu0
  %v5497 = vadd.f32 0.0, %v5496
  %v5498 = vpop.f32.mrf.mxu0
  %v5499 = vpop.f32.mrf.mxu0
  %v5500 = vadd.f32 0.0, %v5499
  %v5501 = vpop.f32.mrf.mxu0
  %5502 = vmatprep.mubr.bf16.mxu0 0
  %5503 = vmatmul.mubr.bf16.gmra.mxu0 %v4300
  %v5504 = vpop.f32.mrf.mxu0
  %v5505 = vadd.f32 0.0, %v5504
  %v5506 = vpop.f32.mrf.mxu0
  %v5507 = vpop.f32.mrf.mxu0
  %v5508 = vadd.f32 0.0, %v5507
  %v5509 = vpop.f32.mrf.mxu0
  %5510 = vmatprep.mubr.bf16.mxu0 0
  %5511 = vmatmul.mubr.bf16.gmra.mxu0 %v5425
  %v5512 = vpop.f32.mrf.mxu0
  %v5513 = vadd.f32 0.0, %v5512
  %v5514 = vpop.f32.mrf.mxu0
  %v5515 = vpop.f32.mrf.mxu0
  %v5516 = vadd.f32 0.0, %v5515
  %v5517 = vpop.f32.mrf.mxu0
  %5518 = vmatprep.mubr.bf16.mxu0 0
  %5519 = vmatmul.mubr.bf16.gmra.mxu0 %v5428
  %v5520 = vpop.f32.mrf.mxu0
  %v5521 = vadd.f32 0.0, %v5520
  %v5522 = vpop.f32.mrf.mxu0
  %v5523 = vpop.f32.mrf.mxu0
  %v5524 = vadd.f32 0.0, %v5523
  %v5525 = vpop.f32.mrf.mxu0
  %5526 = vdwg.mxu0
  %v5527 = vadd.f32 %v5389, %v5465
  %v5528 = vadd.f32 %v5390, %v5468
  %v5529 = vadd.f32 %v5391, %v5473
  %v5530 = vadd.f32 %v5392, %v5476
  %v5531 = vadd.f32 %v5393, %v5481
  %v5532 = vadd.f32 %v5394, %v5484
  %v5533 = vadd.f32 %v5395, %v5489
  %v5534 = vadd.f32 %v5396, %v5492
  %v5535 = vadd.f32 %v5397, %v5497
  %v5536 = vadd.f32 %v5398, %v5500
  %v5537 = vadd.f32 %v5399, %v5505
  %v5538 = vadd.f32 %v5400, %v5508
  %v5539 = vadd.f32 %v5401, %v5513
  %v5540 = vadd.f32 %v5402, %v5516
  %v5541 = vadd.f32 %v5403, %v5521
  %v5542 = vadd.f32 %v5404, %v5524
  %s5543 = scalar_lea.vmem %s3, 240
  %v5544 = vld [vmem:[%s5543] sm:$0xf]
  %v5545 = vld [vmem:[%s5543 + $0x4] sm:$0xf]
  %v5546 = vld [vmem:[%s5543 + $0x8] sm:$0xf]
  %v5547 = vld [vmem:[%s5543 + $0xc] sm:$0xf]
  %v5548 = vpack.c.b16 %v3308, %v3306
  %v5549 = vpack.c.b16 %v3312, %v3310
  %v5554 = vunpack.c.l.b16 %v5544
  %v5555 = vunpack.c.l.b16 %v5545
  %v5556 = vunpack.c.l.b16 %v5546
  %v5557 = vunpack.c.l.b16 %v5547
  %v5558 = vpack.c.b16 %v5555, %v5554
  %v5559 = vpack.c.b16 %v5557, %v5556
  %v5563 = vsel %vm3342, %v5548, 0
  %v5566 = vsel %vm3342, %v5549, 0
  %5568 = vmatprep.subr.bf16.mxu0 0
  %5569 = vmatpush1.bf16.msra.mxu0 0
  %5570 = vmatprep.subr.bf16.mxu0 0
  %5571 = vmatpush1.bf16.msra.mxu0 0
  %5572 = vmatprep.subr.bf16.mxu0 0
  %5573 = vmatpush1.bf16.msra.mxu0 0
  %5574 = vmatprep.subr.bf16.mxu0 0
  %5575 = vmatpush1.bf16.msra.mxu0 0
  %5576 = vmatprep.subr.bf16.mxu0 0
  %5577 = vmatpush1.bf16.msra.mxu0 0
  %5578 = vmatprep.subr.bf16.mxu0 0
  %5579 = vmatpush1.bf16.msra.mxu0 0
  %5580 = vmatprep.subr.bf16.mxu0 0
  %5581 = vmatpush1.bf16.msra.mxu0 %v5559
  %5582 = vmatprep.subr.bf16.mxu0 0
  %5583 = vmatpush1.bf16.msra.mxu0 %v5558
  %5584 = vmatprep.subr.bf16.mxu0 0
  %5585 = vmatpush2.bf16.msra.mxu0 0
  %5586 = vmatprep.subr.bf16.mxu0 0
  %5587 = vmatpush2.bf16.msra.mxu0 0
  %5588 = vmatprep.subr.bf16.mxu0 0
  %5589 = vmatpush2.bf16.msra.mxu0 0
  %5590 = vmatprep.subr.bf16.mxu0 0
  %5591 = vmatpush2.bf16.msra.mxu0 0
  %5592 = vmatprep.subr.bf16.mxu0 0
  %5593 = vmatpush2.bf16.msra.mxu0 0
  %5594 = vmatprep.subr.bf16.mxu0 0
  %5595 = vmatpush2.bf16.msra.mxu0 0
  %5596 = vmatprep.subr.bf16.mxu0 0
  %5597 = vmatpush2.bf16.msra.mxu0 0
  %5598 = vmatprep.subr.bf16.mxu0 0
  %5599 = vmatpush2.bf16.msra.mxu0 0
  %5600 = vmatprep.mubr.bf16.mxu0 0
  %5601 = vmatmul.mubr.bf16.gmra.mxu0 %v4447
  %v5602 = vpop.f32.mrf.mxu0
  %v5603 = vadd.f32 0.0, %v5602
  %v5604 = vpop.f32.mrf.mxu0
  %v5605 = vpop.f32.mrf.mxu0
  %v5606 = vadd.f32 0.0, %v5605
  %v5607 = vpop.f32.mrf.mxu0
  %5608 = vmatprep.mubr.bf16.mxu0 0
  %5609 = vmatmul.mubr.bf16.gmra.mxu0 %v4450
  %v5610 = vpop.f32.mrf.mxu0
  %v5611 = vadd.f32 0.0, %v5610
  %v5612 = vpop.f32.mrf.mxu0
  %v5613 = vpop.f32.mrf.mxu0
  %v5614 = vadd.f32 0.0, %v5613
  %v5615 = vpop.f32.mrf.mxu0
  %5616 = vmatprep.mubr.bf16.mxu0 0
  %5617 = vmatmul.mubr.bf16.gmra.mxu0 %v4453
  %v5618 = vpop.f32.mrf.mxu0
  %v5619 = vadd.f32 0.0, %v5618
  %v5620 = vpop.f32.mrf.mxu0
  %v5621 = vpop.f32.mrf.mxu0
  %v5622 = vadd.f32 0.0, %v5621
  %v5623 = vpop.f32.mrf.mxu0
  %5624 = vmatprep.mubr.bf16.mxu0 0
  %5625 = vmatmul.mubr.bf16.gmra.mxu0 %v4456
  %v5626 = vpop.f32.mrf.mxu0
  %v5627 = vadd.f32 0.0, %v5626
  %v5628 = vpop.f32.mrf.mxu0
  %v5629 = vpop.f32.mrf.mxu0
  %v5630 = vadd.f32 0.0, %v5629
  %v5631 = vpop.f32.mrf.mxu0
  %5632 = vmatprep.mubr.bf16.mxu0 0
  %5633 = vmatmul.mubr.bf16.gmra.mxu0 %v4459
  %v5634 = vpop.f32.mrf.mxu0
  %v5635 = vadd.f32 0.0, %v5634
  %v5636 = vpop.f32.mrf.mxu0
  %v5637 = vpop.f32.mrf.mxu0
  %v5638 = vadd.f32 0.0, %v5637
  %v5639 = vpop.f32.mrf.mxu0
  %5640 = vmatprep.mubr.bf16.mxu0 0
  %5641 = vmatmul.mubr.bf16.gmra.mxu0 %v4462
  %v5642 = vpop.f32.mrf.mxu0
  %v5643 = vadd.f32 0.0, %v5642
  %v5644 = vpop.f32.mrf.mxu0
  %v5645 = vpop.f32.mrf.mxu0
  %v5646 = vadd.f32 0.0, %v5645
  %v5647 = vpop.f32.mrf.mxu0
  %5648 = vmatprep.mubr.bf16.mxu0 0
  %5649 = vmatmul.mubr.bf16.gmra.mxu0 %v5563
  %v5650 = vpop.f32.mrf.mxu0
  %v5651 = vadd.f32 0.0, %v5650
  %v5652 = vpop.f32.mrf.mxu0
  %v5653 = vpop.f32.mrf.mxu0
  %v5654 = vadd.f32 0.0, %v5653
  %v5655 = vpop.f32.mrf.mxu0
  %5656 = vmatprep.mubr.bf16.mxu0 0
  %5657 = vmatmul.mubr.bf16.gmra.mxu0 %v5566
  %v5658 = vpop.f32.mrf.mxu0
  %v5659 = vadd.f32 0.0, %v5658
  %v5660 = vpop.f32.mrf.mxu0
  %v5661 = vpop.f32.mrf.mxu0
  %v5662 = vadd.f32 0.0, %v5661
  %v5663 = vpop.f32.mrf.mxu0
  %5664 = vdwg.mxu0
  %v5665 = vadd.f32 %v5527, %v5603
  %v5666 = vadd.f32 %v5528, %v5606
  %v5667 = vadd.f32 %v5529, %v5611
  %v5668 = vadd.f32 %v5530, %v5614
  %v5669 = vadd.f32 %v5531, %v5619
  %v5670 = vadd.f32 %v5532, %v5622
  %v5671 = vadd.f32 %v5533, %v5627
  %v5672 = vadd.f32 %v5534, %v5630
  %v5673 = vadd.f32 %v5535, %v5635
  %v5674 = vadd.f32 %v5536, %v5638
  %v5675 = vadd.f32 %v5537, %v5643
  %v5676 = vadd.f32 %v5538, %v5646
  %v5677 = vadd.f32 %v5539, %v5651
  %v5678 = vadd.f32 %v5540, %v5654
  %v5679 = vadd.f32 %v5541, %v5659
  %v5680 = vadd.f32 %v5542, %v5662
  %v5681 = vld [vmem:[%s4] sm:$0x1]
  %v5683 = vlaneseq
  %v5684 = vshrl.u32 %v5683, 7
  %v5685 = vsub.s32 0, %v5684
  %v5686 = vrot.slane %v5681, %v5685
  %v5688 = vadd.f32 %v5665, %v5686
  %v5689 = vadd.f32 %v5666, %v5686
  %v5690 = vadd.f32 %v5667, %v5686
  %v5691 = vadd.f32 %v5668, %v5686
  %v5692 = vadd.f32 %v5669, %v5686
  %v5693 = vadd.f32 %v5670, %v5686
  %v5694 = vadd.f32 %v5671, %v5686
  %v5695 = vadd.f32 %v5672, %v5686
  %v5696 = vadd.f32 %v5673, %v5686
  %v5697 = vadd.f32 %v5674, %v5686
  %v5698 = vadd.f32 %v5675, %v5686
  %v5699 = vadd.f32 %v5676, %v5686
  %v5700 = vadd.f32 %v5677, %v5686
  %v5701 = vadd.f32 %v5678, %v5686
  %v5702 = vadd.f32 %v5679, %v5686
  %v5703 = vadd.f32 %v5680, %v5686
  %v5704 = vmax.f32 %v5688, 0.0
  %v5705 = vmax.f32 %v5689, 0.0
  %v5706 = vmax.f32 %v5690, 0.0
  %v5707 = vmax.f32 %v5691, 0.0
  %v5708 = vmax.f32 %v5692, 0.0
  %v5709 = vmax.f32 %v5693, 0.0
  %v5710 = vmax.f32 %v5694, 0.0
  %v5711 = vmax.f32 %v5695, 0.0
  %v5712 = vmax.f32 %v5696, 0.0
  %v5713 = vmax.f32 %v5697, 0.0
  %v5714 = vmax.f32 %v5698, 0.0
  %v5715 = vmax.f32 %v5699, 0.0
  %v5716 = vmax.f32 %v5700, 0.0
  %v5717 = vmax.f32 %v5701, 0.0
  %v5718 = vmax.f32 %v5702, 0.0
  %v5719 = vmax.f32 %v5703, 0.0
  %v5720 = vpack.c.bf16 %v5705, %v5704
  %v5721 = vpack.c.bf16 %v5707, %v5706
  %v5722 = vpack.c.bf16 %v5709, %v5708
  %v5723 = vpack.c.bf16 %v5711, %v5710
  %v5724 = vpack.c.bf16 %v5713, %v5712
  %v5725 = vpack.c.bf16 %v5715, %v5714
  %v5726 = vpack.c.bf16 %v5717, %v5716
  %v5727 = vpack.c.bf16 %v5719, %v5718
  %v5736 = vunpack.c.l.b16 %v5720
  %v5737 = vunpack.c.h.b16 %v5720
  %v5738 = vunpack.c.l.b16 %v5721
  %v5739 = vunpack.c.h.b16 %v5721
  %v5740 = vunpack.c.l.b16 %v5722
  %v5741 = vunpack.c.h.b16 %v5722
  %v5742 = vunpack.c.l.b16 %v5723
  %v5743 = vunpack.c.h.b16 %v5723
  %v5744 = vunpack.c.l.b16 %v5724
  %v5745 = vunpack.c.h.b16 %v5724
  %v5746 = vunpack.c.l.b16 %v5725
  %v5747 = vunpack.c.h.b16 %v5725
  %v5748 = vunpack.c.l.b16 %v5726
  %v5749 = vunpack.c.h.b16 %v5726
  %v5750 = vunpack.c.l.b16 %v5727
  %v5751 = vunpack.c.h.b16 %v5727
  %v5752 = vld [vmem:[%s5] sm:$0xf]
  %v5753 = vld [vmem:[%s5 + $0x4] sm:$0xf]
  %v5754 = vld [vmem:[%s5 + $0x8] sm:$0xf]
  %v5755 = vld [vmem:[%s5 + $0xc] sm:$0xf]
  %v5756 = vld [vmem:[%s5 + $0x10] sm:$0xf]
  %v5757 = vld [vmem:[%s5 + $0x14] sm:$0xf]
  %v5758 = vld [vmem:[%s5 + $0x18] sm:$0xf]
  %v5759 = vld [vmem:[%s5 + $0x1c] sm:$0xf]
  %s5760 = scalar_lea.vmem %s5, 32
  %v5761 = vld [vmem:[%s5760] sm:$0xf]
  %v5762 = vld [vmem:[%s5760 + $0x4] sm:$0xf]
  %v5763 = vld [vmem:[%s5760 + $0x8] sm:$0xf]
  %v5764 = vld [vmem:[%s5760 + $0xc] sm:$0xf]
  %v5765 = vld [vmem:[%s5760 + $0x10] sm:$0xf]
  %v5766 = vld [vmem:[%s5760 + $0x14] sm:$0xf]
  %v5767 = vld [vmem:[%s5760 + $0x18] sm:$0xf]
  %v5768 = vld [vmem:[%s5760 + $0x1c] sm:$0xf]
  %v5769 = vpack.c.b16 %v5738, %v5737
  %v5770 = vpack.c.b16 %v5742, %v5741
  %v5779 = vunpack.c.l.b16 %v5761
  %v5780 = vunpack.c.l.b16 %v5762
  %v5781 = vunpack.c.l.b16 %v5763
  %v5782 = vunpack.c.l.b16 %v5764
  %v5783 = vunpack.c.l.b16 %v5765
  %v5784 = vunpack.c.l.b16 %v5766
  %v5785 = vunpack.c.l.b16 %v5767
  %v5786 = vunpack.c.l.b16 %v5768
  %v5787 = vpack.c.b16 %v5780, %v5779
  %v5788 = vpack.c.b16 %v5782, %v5781
  %v5789 = vpack.c.b16 %v5784, %v5783
  %v5790 = vpack.c.b16 %v5786, %v5785
  %v5796 = vsel %vm451, %v5769, 0
  %v5799 = vsel %vm451, %v5770, 0
  %5801 = vmatprep.subr.bf16.mxu0 0
  %5802 = vmatpush1.bf16.msra.mxu0 0
  %5803 = vmatprep.subr.bf16.mxu0 0
  %5804 = vmatpush1.bf16.msra.mxu0 0
  %5805 = vmatprep.subr.bf16.mxu0 0
  %5806 = vmatpush1.bf16.msra.mxu0 0
  %5807 = vmatprep.subr.bf16.mxu0 0
  %5808 = vmatpush1.bf16.msra.mxu0 0
  %5809 = vmatprep.subr.bf16.mxu0 0
  %5810 = vmatpush1.bf16.msra.mxu0 %v5790
  %5811 = vmatprep.subr.bf16.mxu0 0
  %5812 = vmatpush1.bf16.msra.mxu0 %v5789
  %5813 = vmatprep.subr.bf16.mxu0 0
  %5814 = vmatpush1.bf16.msra.mxu0 %v5788
  %5815 = vmatprep.subr.bf16.mxu0 0
  %5816 = vmatpush1.bf16.msra.mxu0 %v5787
  %5817 = vmatprep.subr.bf16.mxu0 0
  %5818 = vmatpush2.bf16.msra.mxu0 0
  %5819 = vmatprep.subr.bf16.mxu0 0
  %5820 = vmatpush2.bf16.msra.mxu0 0
  %5821 = vmatprep.subr.bf16.mxu0 0
  %5822 = vmatpush2.bf16.msra.mxu0 0
  %5823 = vmatprep.subr.bf16.mxu0 0
  %5824 = vmatpush2.bf16.msra.mxu0 0
  %5825 = vmatprep.subr.bf16.mxu0 0
  %5826 = vmatpush2.bf16.msra.mxu0 0
  %5827 = vmatprep.subr.bf16.mxu0 0
  %5828 = vmatpush2.bf16.msra.mxu0 0
  %5829 = vmatprep.subr.bf16.mxu0 0
  %5830 = vmatpush2.bf16.msra.mxu0 0
  %5831 = vmatprep.subr.bf16.mxu0 0
  %5832 = vmatpush2.bf16.msra.mxu0 0
  %5833 = vmatprep.mubr.bf16.mxu0 0
  %5834 = vmatmul.mubr.bf16.gmra.mxu0 %v5796
  %v5835 = vpop.f32.mrf.mxu0
  %v5836 = vadd.f32 0.0, %v5835
  %v5837 = vpop.f32.mrf.mxu0
  %v5838 = vpop.f32.mrf.mxu0
  %v5839 = vadd.f32 0.0, %v5838
  %v5840 = vpop.f32.mrf.mxu0
  %5841 = vmatprep.mubr.bf16.mxu0 0
  %5842 = vmatmul.mubr.bf16.gmra.mxu0 %v5799
  %v5843 = vpop.f32.mrf.mxu0
  %v5844 = vadd.f32 0.0, %v5843
  %v5845 = vpop.f32.mrf.mxu0
  %v5846 = vpop.f32.mrf.mxu0
  %v5847 = vadd.f32 0.0, %v5846
  %v5848 = vpop.f32.mrf.mxu0
  %5849 = vdwg.mxu0
  %v5850 = vpack.c.b16 %v5737, %v5736
  %v5851 = vpack.c.b16 %v5741, %v5740
  %v5860 = vunpack.c.l.b16 %v5752
  %v5861 = vunpack.c.l.b16 %v5753
  %v5862 = vunpack.c.l.b16 %v5754
  %v5863 = vunpack.c.l.b16 %v5755
  %v5864 = vunpack.c.l.b16 %v5756
  %v5865 = vunpack.c.l.b16 %v5757
  %v5866 = vunpack.c.l.b16 %v5758
  %v5867 = vunpack.c.l.b16 %v5759
  %v5868 = vpack.c.b16 %v5861, %v5860
  %v5869 = vpack.c.b16 %v5863, %v5862
  %v5870 = vpack.c.b16 %v5865, %v5864
  %v5871 = vpack.c.b16 %v5867, %v5866
  %v5877 = vsel %vm451, %v5850, 0
  %v5880 = vsel %vm451, %v5851, 0
  %5882 = vmatprep.subr.bf16.mxu0 0
  %5883 = vmatpush1.bf16.msra.mxu0 0
  %5884 = vmatprep.subr.bf16.mxu0 0
  %5885 = vmatpush1.bf16.msra.mxu0 0
  %5886 = vmatprep.subr.bf16.mxu0 0
  %5887 = vmatpush1.bf16.msra.mxu0 0
  %5888 = vmatprep.subr.bf16.mxu0 0
  %5889 = vmatpush1.bf16.msra.mxu0 0
  %5890 = vmatprep.subr.bf16.mxu0 0
  %5891 = vmatpush1.bf16.msra.mxu0 %v5871
  %5892 = vmatprep.subr.bf16.mxu0 0
  %5893 = vmatpush1.bf16.msra.mxu0 %v5870
  %5894 = vmatprep.subr.bf16.mxu0 0
  %5895 = vmatpush1.bf16.msra.mxu0 %v5869
  %5896 = vmatprep.subr.bf16.mxu0 0
  %5897 = vmatpush1.bf16.msra.mxu0 %v5868
  %5898 = vmatprep.subr.bf16.mxu0 0
  %5899 = vmatpush2.bf16.msra.mxu0 0
  %5900 = vmatprep.subr.bf16.mxu0 0
  %5901 = vmatpush2.bf16.msra.mxu0 0
  %5902 = vmatprep.subr.bf16.mxu0 0
  %5903 = vmatpush2.bf16.msra.mxu0 0
  %5904 = vmatprep.subr.bf16.mxu0 0
  %5905 = vmatpush2.bf16.msra.mxu0 0
  %5906 = vmatprep.subr.bf16.mxu0 0
  %5907 = vmatpush2.bf16.msra.mxu0 0
  %5908 = vmatprep.subr.bf16.mxu0 0
  %5909 = vmatpush2.bf16.msra.mxu0 0
  %5910 = vmatprep.subr.bf16.mxu0 0
  %5911 = vmatpush2.bf16.msra.mxu0 0
  %5912 = vmatprep.subr.bf16.mxu0 0
  %5913 = vmatpush2.bf16.msra.mxu0 0
  %5914 = vmatprep.mubr.bf16.mxu0 0
  %5915 = vmatmul.mubr.bf16.gmra.mxu0 %v5877
  %v5916 = vpop.f32.mrf.mxu0
  %v5917 = vadd.f32 %v5836, %v5916
  %v5918 = vpop.f32.mrf.mxu0
  %v5919 = vpop.f32.mrf.mxu0
  %v5920 = vadd.f32 %v5839, %v5919
  %v5921 = vpop.f32.mrf.mxu0
  %5922 = vmatprep.mubr.bf16.mxu0 0
  %5923 = vmatmul.mubr.bf16.gmra.mxu0 %v5880
  %v5924 = vpop.f32.mrf.mxu0
  %v5925 = vadd.f32 %v5844, %v5924
  %v5926 = vpop.f32.mrf.mxu0
  %v5927 = vpop.f32.mrf.mxu0
  %v5928 = vadd.f32 %v5847, %v5927
  %v5929 = vpop.f32.mrf.mxu0
  %5930 = vdwg.mxu0
  %s5931 = scalar_lea.vmem %s5, 64
  %v5932 = vld [vmem:[%s5931] sm:$0xf]
  %v5933 = vld [vmem:[%s5931 + $0x4] sm:$0xf]
  %v5934 = vld [vmem:[%s5931 + $0x8] sm:$0xf]
  %v5935 = vld [vmem:[%s5931 + $0xc] sm:$0xf]
  %v5936 = vld [vmem:[%s5931 + $0x10] sm:$0xf]
  %v5937 = vld [vmem:[%s5931 + $0x14] sm:$0xf]
  %v5938 = vld [vmem:[%s5931 + $0x18] sm:$0xf]
  %v5939 = vld [vmem:[%s5931 + $0x1c] sm:$0xf]
  %v5940 = vpack.c.b16 %v5739, %v5738
  %v5941 = vpack.c.b16 %v5743, %v5742
  %v5950 = vunpack.c.l.b16 %v5932
  %v5951 = vunpack.c.l.b16 %v5933
  %v5952 = vunpack.c.l.b16 %v5934
  %v5953 = vunpack.c.l.b16 %v5935
  %v5954 = vunpack.c.l.b16 %v5936
  %v5955 = vunpack.c.l.b16 %v5937
  %v5956 = vunpack.c.l.b16 %v5938
  %v5957 = vunpack.c.l.b16 %v5939
  %v5958 = vpack.c.b16 %v5951, %v5950
  %v5959 = vpack.c.b16 %v5953, %v5952
  %v5960 = vpack.c.b16 %v5955, %v5954
  %v5961 = vpack.c.b16 %v5957, %v5956
  %v5967 = vsel %vm451, %v5940, 0
  %v5970 = vsel %vm451, %v5941, 0
  %5972 = vmatprep.subr.bf16.mxu0 0
  %5973 = vmatpush1.bf16.msra.mxu0 0
  %5974 = vmatprep.subr.bf16.mxu0 0
  %5975 = vmatpush1.bf16.msra.mxu0 0
  %5976 = vmatprep.subr.bf16.mxu0 0
  %5977 = vmatpush1.bf16.msra.mxu0 0
  %5978 = vmatprep.subr.bf16.mxu0 0
  %5979 = vmatpush1.bf16.msra.mxu0 0
  %5980 = vmatprep.subr.bf16.mxu0 0
  %5981 = vmatpush1.bf16.msra.mxu0 %v5961
  %5982 = vmatprep.subr.bf16.mxu0 0
  %5983 = vmatpush1.bf16.msra.mxu0 %v5960
  %5984 = vmatprep.subr.bf16.mxu0 0
  %5985 = vmatpush1.bf16.msra.mxu0 %v5959
  %5986 = vmatprep.subr.bf16.mxu0 0
  %5987 = vmatpush1.bf16.msra.mxu0 %v5958
  %5988 = vmatprep.subr.bf16.mxu0 0
  %5989 = vmatpush2.bf16.msra.mxu0 0
  %5990 = vmatprep.subr.bf16.mxu0 0
  %5991 = vmatpush2.bf16.msra.mxu0 0
  %5992 = vmatprep.subr.bf16.mxu0 0
  %5993 = vmatpush2.bf16.msra.mxu0 0
  %5994 = vmatprep.subr.bf16.mxu0 0
  %5995 = vmatpush2.bf16.msra.mxu0 0
  %5996 = vmatprep.subr.bf16.mxu0 0
  %5997 = vmatpush2.bf16.msra.mxu0 0
  %5998 = vmatprep.subr.bf16.mxu0 0
  %5999 = vmatpush2.bf16.msra.mxu0 0
  %6000 = vmatprep.subr.bf16.mxu0 0
  %6001 = vmatpush2.bf16.msra.mxu0 0
  %6002 = vmatprep.subr.bf16.mxu0 0
  %6003 = vmatpush2.bf16.msra.mxu0 0
  %6004 = vmatprep.mubr.bf16.mxu0 0
  %6005 = vmatmul.mubr.bf16.gmra.mxu0 %v5967
  %v6006 = vpop.f32.mrf.mxu0
  %v6007 = vadd.f32 0.0, %v6006
  %v6008 = vpop.f32.mrf.mxu0
  %v6009 = vpop.f32.mrf.mxu0
  %v6010 = vadd.f32 0.0, %v6009
  %v6011 = vpop.f32.mrf.mxu0
  %6012 = vmatprep.mubr.bf16.mxu0 0
  %6013 = vmatmul.mubr.bf16.gmra.mxu0 %v5970
  %v6014 = vpop.f32.mrf.mxu0
  %v6015 = vadd.f32 0.0, %v6014
  %v6016 = vpop.f32.mrf.mxu0
  %v6017 = vpop.f32.mrf.mxu0
  %v6018 = vadd.f32 0.0, %v6017
  %v6019 = vpop.f32.mrf.mxu0
  %6020 = vdwg.mxu0
  %v6021 = vadd.f32 %v5917, %v6007
  %v6022 = vadd.f32 %v5920, %v6010
  %v6023 = vadd.f32 %v5925, %v6015
  %v6024 = vadd.f32 %v5928, %v6018
  %s6025 = scalar_lea.vmem %s5, 96
  %v6026 = vld [vmem:[%s6025] sm:$0xf]
  %v6027 = vld [vmem:[%s6025 + $0x4] sm:$0xf]
  %v6028 = vld [vmem:[%s6025 + $0x8] sm:$0xf]
  %v6029 = vld [vmem:[%s6025 + $0xc] sm:$0xf]
  %v6030 = vld [vmem:[%s6025 + $0x10] sm:$0xf]
  %v6031 = vld [vmem:[%s6025 + $0x14] sm:$0xf]
  %v6032 = vld [vmem:[%s6025 + $0x18] sm:$0xf]
  %v6033 = vld [vmem:[%s6025 + $0x1c] sm:$0xf]
  %v6034 = vpack.c.b16 %v5745, %v5744
  %v6043 = vunpack.c.l.b16 %v6026
  %v6044 = vunpack.c.l.b16 %v6027
  %v6045 = vunpack.c.l.b16 %v6028
  %v6046 = vunpack.c.l.b16 %v6029
  %v6047 = vunpack.c.l.b16 %v6030
  %v6048 = vunpack.c.l.b16 %v6031
  %v6049 = vunpack.c.l.b16 %v6032
  %v6050 = vunpack.c.l.b16 %v6033
  %v6051 = vpack.c.b16 %v6044, %v6043
  %v6052 = vpack.c.b16 %v6046, %v6045
  %v6053 = vpack.c.b16 %v6048, %v6047
  %v6054 = vpack.c.b16 %v6050, %v6049
  %v6060 = vsel %vm451, %v6034, 0
  %6062 = vmatprep.subr.bf16.mxu0 0
  %6063 = vmatpush1.bf16.msra.mxu0 0
  %6064 = vmatprep.subr.bf16.mxu0 0
  %6065 = vmatpush1.bf16.msra.mxu0 0
  %6066 = vmatprep.subr.bf16.mxu0 0
  %6067 = vmatpush1.bf16.msra.mxu0 0
  %6068 = vmatprep.subr.bf16.mxu0 0
  %6069 = vmatpush1.bf16.msra.mxu0 0
  %6070 = vmatprep.subr.bf16.mxu0 0
  %6071 = vmatpush1.bf16.msra.mxu0 %v6054
  %6072 = vmatprep.subr.bf16.mxu0 0
  %6073 = vmatpush1.bf16.msra.mxu0 %v6053
  %6074 = vmatprep.subr.bf16.mxu0 0
  %6075 = vmatpush1.bf16.msra.mxu0 %v6052
  %6076 = vmatprep.subr.bf16.mxu0 0
  %6077 = vmatpush1.bf16.msra.mxu0 %v6051
  %6078 = vmatprep.subr.bf16.mxu0 0
  %6079 = vmatpush2.bf16.msra.mxu0 0
  %6080 = vmatprep.subr.bf16.mxu0 0
  %6081 = vmatpush2.bf16.msra.mxu0 0
  %6082 = vmatprep.subr.bf16.mxu0 0
  %6083 = vmatpush2.bf16.msra.mxu0 0
  %6084 = vmatprep.subr.bf16.mxu0 0
  %6085 = vmatpush2.bf16.msra.mxu0 0
  %6086 = vmatprep.subr.bf16.mxu0 0
  %6087 = vmatpush2.bf16.msra.mxu0 0
  %6088 = vmatprep.subr.bf16.mxu0 0
  %6089 = vmatpush2.bf16.msra.mxu0 0
  %6090 = vmatprep.subr.bf16.mxu0 0
  %6091 = vmatpush2.bf16.msra.mxu0 0
  %6092 = vmatprep.subr.bf16.mxu0 0
  %6093 = vmatpush2.bf16.msra.mxu0 0
  %6094 = vmatprep.mubr.bf16.mxu0 0
  %6095 = vmatmul.mubr.bf16.gmra.mxu0 %v5880
  %v6096 = vpop.f32.mrf.mxu0
  %v6097 = vadd.f32 0.0, %v6096
  %v6098 = vpop.f32.mrf.mxu0
  %v6099 = vpop.f32.mrf.mxu0
  %v6100 = vadd.f32 0.0, %v6099
  %v6101 = vpop.f32.mrf.mxu0
  %6102 = vmatprep.mubr.bf16.mxu0 0
  %6103 = vmatmul.mubr.bf16.gmra.mxu0 %v6060
  %v6104 = vpop.f32.mrf.mxu0
  %v6105 = vadd.f32 0.0, %v6104
  %v6106 = vpop.f32.mrf.mxu0
  %v6107 = vpop.f32.mrf.mxu0
  %v6108 = vadd.f32 0.0, %v6107
  %v6109 = vpop.f32.mrf.mxu0
  %6110 = vdwg.mxu0
  %v6111 = vadd.f32 %v6021, %v6097
  %v6112 = vadd.f32 %v6022, %v6100
  %v6113 = vadd.f32 %v6023, %v6105
  %v6114 = vadd.f32 %v6024, %v6108
  %s6115 = scalar_lea.vmem %s5, 128
  %v6116 = vld [vmem:[%s6115] sm:$0xf]
  %v6117 = vld [vmem:[%s6115 + $0x4] sm:$0xf]
  %v6118 = vld [vmem:[%s6115 + $0x8] sm:$0xf]
  %v6119 = vld [vmem:[%s6115 + $0xc] sm:$0xf]
  %v6120 = vld [vmem:[%s6115 + $0x10] sm:$0xf]
  %v6121 = vld [vmem:[%s6115 + $0x14] sm:$0xf]
  %v6122 = vld [vmem:[%s6115 + $0x18] sm:$0xf]
  %v6123 = vld [vmem:[%s6115 + $0x1c] sm:$0xf]
  %v6124 = vpack.c.b16 %v5746, %v5745
  %v6133 = vunpack.c.l.b16 %v6116
  %v6134 = vunpack.c.l.b16 %v6117
  %v6135 = vunpack.c.l.b16 %v6118
  %v6136 = vunpack.c.l.b16 %v6119
  %v6137 = vunpack.c.l.b16 %v6120
  %v6138 = vunpack.c.l.b16 %v6121
  %v6139 = vunpack.c.l.b16 %v6122
  %v6140 = vunpack.c.l.b16 %v6123
  %v6141 = vpack.c.b16 %v6134, %v6133
  %v6142 = vpack.c.b16 %v6136, %v6135
  %v6143 = vpack.c.b16 %v6138, %v6137
  %v6144 = vpack.c.b16 %v6140, %v6139
  %v6150 = vsel %vm451, %v6124, 0
  %6152 = vmatprep.subr.bf16.mxu0 0
  %6153 = vmatpush1.bf16.msra.mxu0 0
  %6154 = vmatprep.subr.bf16.mxu0 0
  %6155 = vmatpush1.bf16.msra.mxu0 0
  %6156 = vmatprep.subr.bf16.mxu0 0
  %6157 = vmatpush1.bf16.msra.mxu0 0
  %6158 = vmatprep.subr.bf16.mxu0 0
  %6159 = vmatpush1.bf16.msra.mxu0 0
  %6160 = vmatprep.subr.bf16.mxu0 0
  %6161 = vmatpush1.bf16.msra.mxu0 %v6144
  %6162 = vmatprep.subr.bf16.mxu0 0
  %6163 = vmatpush1.bf16.msra.mxu0 %v6143
  %6164 = vmatprep.subr.bf16.mxu0 0
  %6165 = vmatpush1.bf16.msra.mxu0 %v6142
  %6166 = vmatprep.subr.bf16.mxu0 0
  %6167 = vmatpush1.bf16.msra.mxu0 %v6141
  %6168 = vmatprep.subr.bf16.mxu0 0
  %6169 = vmatpush2.bf16.msra.mxu0 0
  %6170 = vmatprep.subr.bf16.mxu0 0
  %6171 = vmatpush2.bf16.msra.mxu0 0
  %6172 = vmatprep.subr.bf16.mxu0 0
  %6173 = vmatpush2.bf16.msra.mxu0 0
  %6174 = vmatprep.subr.bf16.mxu0 0
  %6175 = vmatpush2.bf16.msra.mxu0 0
  %6176 = vmatprep.subr.bf16.mxu0 0
  %6177 = vmatpush2.bf16.msra.mxu0 0
  %6178 = vmatprep.subr.bf16.mxu0 0
  %6179 = vmatpush2.bf16.msra.mxu0 0
  %6180 = vmatprep.subr.bf16.mxu0 0
  %6181 = vmatpush2.bf16.msra.mxu0 0
  %6182 = vmatprep.subr.bf16.mxu0 0
  %6183 = vmatpush2.bf16.msra.mxu0 0
  %6184 = vmatprep.mubr.bf16.mxu0 0
  %6185 = vmatmul.mubr.bf16.gmra.mxu0 %v5799
  %v6186 = vpop.f32.mrf.mxu0
  %v6187 = vadd.f32 0.0, %v6186
  %v6188 = vpop.f32.mrf.mxu0
  %v6189 = vpop.f32.mrf.mxu0
  %v6190 = vadd.f32 0.0, %v6189
  %v6191 = vpop.f32.mrf.mxu0
  %6192 = vmatprep.mubr.bf16.mxu0 0
  %6193 = vmatmul.mubr.bf16.gmra.mxu0 %v6150
  %v6194 = vpop.f32.mrf.mxu0
  %v6195 = vadd.f32 0.0, %v6194
  %v6196 = vpop.f32.mrf.mxu0
  %v6197 = vpop.f32.mrf.mxu0
  %v6198 = vadd.f32 0.0, %v6197
  %v6199 = vpop.f32.mrf.mxu0
  %6200 = vdwg.mxu0
  %v6201 = vadd.f32 %v6111, %v6187
  %v6202 = vadd.f32 %v6112, %v6190
  %v6203 = vadd.f32 %v6113, %v6195
  %v6204 = vadd.f32 %v6114, %v6198
  %s6205 = scalar_lea.vmem %s5, 160
  %v6206 = vld [vmem:[%s6205] sm:$0xf]
  %v6207 = vld [vmem:[%s6205 + $0x4] sm:$0xf]
  %v6208 = vld [vmem:[%s6205 + $0x8] sm:$0xf]
  %v6209 = vld [vmem:[%s6205 + $0xc] sm:$0xf]
  %v6210 = vld [vmem:[%s6205 + $0x10] sm:$0xf]
  %v6211 = vld [vmem:[%s6205 + $0x14] sm:$0xf]
  %v6212 = vld [vmem:[%s6205 + $0x18] sm:$0xf]
  %v6213 = vld [vmem:[%s6205 + $0x1c] sm:$0xf]
  %v6214 = vpack.c.b16 %v5747, %v5746
  %v6223 = vunpack.c.l.b16 %v6206
  %v6224 = vunpack.c.l.b16 %v6207
  %v6225 = vunpack.c.l.b16 %v6208
  %v6226 = vunpack.c.l.b16 %v6209
  %v6227 = vunpack.c.l.b16 %v6210
  %v6228 = vunpack.c.l.b16 %v6211
  %v6229 = vunpack.c.l.b16 %v6212
  %v6230 = vunpack.c.l.b16 %v6213
  %v6231 = vpack.c.b16 %v6224, %v6223
  %v6232 = vpack.c.b16 %v6226, %v6225
  %v6233 = vpack.c.b16 %v6228, %v6227
  %v6234 = vpack.c.b16 %v6230, %v6229
  %v6240 = vsel %vm451, %v6214, 0
  %6242 = vmatprep.subr.bf16.mxu0 0
  %6243 = vmatpush1.bf16.msra.mxu0 0
  %6244 = vmatprep.subr.bf16.mxu0 0
  %6245 = vmatpush1.bf16.msra.mxu0 0
  %6246 = vmatprep.subr.bf16.mxu0 0
  %6247 = vmatpush1.bf16.msra.mxu0 0
  %6248 = vmatprep.subr.bf16.mxu0 0
  %6249 = vmatpush1.bf16.msra.mxu0 0
  %6250 = vmatprep.subr.bf16.mxu0 0
  %6251 = vmatpush1.bf16.msra.mxu0 %v6234
  %6252 = vmatprep.subr.bf16.mxu0 0
  %6253 = vmatpush1.bf16.msra.mxu0 %v6233
  %6254 = vmatprep.subr.bf16.mxu0 0
  %6255 = vmatpush1.bf16.msra.mxu0 %v6232
  %6256 = vmatprep.subr.bf16.mxu0 0
  %6257 = vmatpush1.bf16.msra.mxu0 %v6231
  %6258 = vmatprep.subr.bf16.mxu0 0
  %6259 = vmatpush2.bf16.msra.mxu0 0
  %6260 = vmatprep.subr.bf16.mxu0 0
  %6261 = vmatpush2.bf16.msra.mxu0 0
  %6262 = vmatprep.subr.bf16.mxu0 0
  %6263 = vmatpush2.bf16.msra.mxu0 0
  %6264 = vmatprep.subr.bf16.mxu0 0
  %6265 = vmatpush2.bf16.msra.mxu0 0
  %6266 = vmatprep.subr.bf16.mxu0 0
  %6267 = vmatpush2.bf16.msra.mxu0 0
  %6268 = vmatprep.subr.bf16.mxu0 0
  %6269 = vmatpush2.bf16.msra.mxu0 0
  %6270 = vmatprep.subr.bf16.mxu0 0
  %6271 = vmatpush2.bf16.msra.mxu0 0
  %6272 = vmatprep.subr.bf16.mxu0 0
  %6273 = vmatpush2.bf16.msra.mxu0 0
  %6274 = vmatprep.mubr.bf16.mxu0 0
  %6275 = vmatmul.mubr.bf16.gmra.mxu0 %v5970
  %v6276 = vpop.f32.mrf.mxu0
  %v6277 = vadd.f32 0.0, %v6276
  %v6278 = vpop.f32.mrf.mxu0
  %v6279 = vpop.f32.mrf.mxu0
  %v6280 = vadd.f32 0.0, %v6279
  %v6281 = vpop.f32.mrf.mxu0
  %6282 = vmatprep.mubr.bf16.mxu0 0
  %6283 = vmatmul.mubr.bf16.gmra.mxu0 %v6240
  %v6284 = vpop.f32.mrf.mxu0
  %v6285 = vadd.f32 0.0, %v6284
  %v6286 = vpop.f32.mrf.mxu0
  %v6287 = vpop.f32.mrf.mxu0
  %v6288 = vadd.f32 0.0, %v6287
  %v6289 = vpop.f32.mrf.mxu0
  %6290 = vdwg.mxu0
  %v6291 = vadd.f32 %v6201, %v6277
  %v6292 = vadd.f32 %v6202, %v6280
  %v6293 = vadd.f32 %v6203, %v6285
  %v6294 = vadd.f32 %v6204, %v6288
  %s6295 = scalar_lea.vmem %s5, 192
  %v6296 = vld [vmem:[%s6295] sm:$0xf]
  %v6297 = vld [vmem:[%s6295 + $0x4] sm:$0xf]
  %v6298 = vld [vmem:[%s6295 + $0x8] sm:$0xf]
  %v6299 = vld [vmem:[%s6295 + $0xc] sm:$0xf]
  %v6300 = vld [vmem:[%s6295 + $0x10] sm:$0xf]
  %v6301 = vld [vmem:[%s6295 + $0x14] sm:$0xf]
  %v6302 = vld [vmem:[%s6295 + $0x18] sm:$0xf]
  %v6303 = vld [vmem:[%s6295 + $0x1c] sm:$0xf]
  %v6304 = vpack.c.b16 %v5749, %v5748
  %v6313 = vunpack.c.l.b16 %v6296
  %v6314 = vunpack.c.l.b16 %v6297
  %v6315 = vunpack.c.l.b16 %v6298
  %v6316 = vunpack.c.l.b16 %v6299
  %v6317 = vunpack.c.l.b16 %v6300
  %v6318 = vunpack.c.l.b16 %v6301
  %v6319 = vunpack.c.l.b16 %v6302
  %v6320 = vunpack.c.l.b16 %v6303
  %v6321 = vpack.c.b16 %v6314, %v6313
  %v6322 = vpack.c.b16 %v6316, %v6315
  %v6323 = vpack.c.b16 %v6318, %v6317
  %v6324 = vpack.c.b16 %v6320, %v6319
  %v6330 = vsel %vm451, %v6304, 0
  %6332 = vmatprep.subr.bf16.mxu0 0
  %6333 = vmatpush1.bf16.msra.mxu0 0
  %6334 = vmatprep.subr.bf16.mxu0 0
  %6335 = vmatpush1.bf16.msra.mxu0 0
  %6336 = vmatprep.subr.bf16.mxu0 0
  %6337 = vmatpush1.bf16.msra.mxu0 0
  %6338 = vmatprep.subr.bf16.mxu0 0
  %6339 = vmatpush1.bf16.msra.mxu0 0
  %6340 = vmatprep.subr.bf16.mxu0 0
  %6341 = vmatpush1.bf16.msra.mxu0 %v6324
  %6342 = vmatprep.subr.bf16.mxu0 0
  %6343 = vmatpush1.bf16.msra.mxu0 %v6323
  %6344 = vmatprep.subr.bf16.mxu0 0
  %6345 = vmatpush1.bf16.msra.mxu0 %v6322
  %6346 = vmatprep.subr.bf16.mxu0 0
  %6347 = vmatpush1.bf16.msra.mxu0 %v6321
  %6348 = vmatprep.subr.bf16.mxu0 0
  %6349 = vmatpush2.bf16.msra.mxu0 0
  %6350 = vmatprep.subr.bf16.mxu0 0
  %6351 = vmatpush2.bf16.msra.mxu0 0
  %6352 = vmatprep.subr.bf16.mxu0 0
  %6353 = vmatpush2.bf16.msra.mxu0 0
  %6354 = vmatprep.subr.bf16.mxu0 0
  %6355 = vmatpush2.bf16.msra.mxu0 0
  %6356 = vmatprep.subr.bf16.mxu0 0
  %6357 = vmatpush2.bf16.msra.mxu0 0
  %6358 = vmatprep.subr.bf16.mxu0 0
  %6359 = vmatpush2.bf16.msra.mxu0 0
  %6360 = vmatprep.subr.bf16.mxu0 0
  %6361 = vmatpush2.bf16.msra.mxu0 0
  %6362 = vmatprep.subr.bf16.mxu0 0
  %6363 = vmatpush2.bf16.msra.mxu0 0
  %6364 = vmatprep.mubr.bf16.mxu0 0
  %6365 = vmatmul.mubr.bf16.gmra.mxu0 %v6060
  %v6366 = vpop.f32.mrf.mxu0
  %v6367 = vadd.f32 0.0, %v6366
  %v6368 = vpop.f32.mrf.mxu0
  %v6369 = vpop.f32.mrf.mxu0
  %v6370 = vadd.f32 0.0, %v6369
  %v6371 = vpop.f32.mrf.mxu0
  %6372 = vmatprep.mubr.bf16.mxu0 0
  %6373 = vmatmul.mubr.bf16.gmra.mxu0 %v6330
  %v6374 = vpop.f32.mrf.mxu0
  %v6375 = vadd.f32 0.0, %v6374
  %v6376 = vpop.f32.mrf.mxu0
  %v6377 = vpop.f32.mrf.mxu0
  %v6378 = vadd.f32 0.0, %v6377
  %v6379 = vpop.f32.mrf.mxu0
  %6380 = vdwg.mxu0
  %v6381 = vadd.f32 %v6291, %v6367
  %v6382 = vadd.f32 %v6292, %v6370
  %v6383 = vadd.f32 %v6293, %v6375
  %v6384 = vadd.f32 %v6294, %v6378
  %s6385 = scalar_lea.vmem %s5, 224
  %v6386 = vld [vmem:[%s6385] sm:$0xf]
  %v6387 = vld [vmem:[%s6385 + $0x4] sm:$0xf]
  %v6388 = vld [vmem:[%s6385 + $0x8] sm:$0xf]
  %v6389 = vld [vmem:[%s6385 + $0xc] sm:$0xf]
  %v6390 = vld [vmem:[%s6385 + $0x10] sm:$0xf]
  %v6391 = vld [vmem:[%s6385 + $0x14] sm:$0xf]
  %v6392 = vld [vmem:[%s6385 + $0x18] sm:$0xf]
  %v6393 = vld [vmem:[%s6385 + $0x1c] sm:$0xf]
  %v6394 = vpack.c.b16 %v5750, %v5749
  %v6403 = vunpack.c.l.b16 %v6386
  %v6404 = vunpack.c.l.b16 %v6387
  %v6405 = vunpack.c.l.b16 %v6388
  %v6406 = vunpack.c.l.b16 %v6389
  %v6407 = vunpack.c.l.b16 %v6390
  %v6408 = vunpack.c.l.b16 %v6391
  %v6409 = vunpack.c.l.b16 %v6392
  %v6410 = vunpack.c.l.b16 %v6393
  %v6411 = vpack.c.b16 %v6404, %v6403
  %v6412 = vpack.c.b16 %v6406, %v6405
  %v6413 = vpack.c.b16 %v6408, %v6407
  %v6414 = vpack.c.b16 %v6410, %v6409
  %v6420 = vsel %vm451, %v6394, 0
  %6422 = vmatprep.subr.bf16.mxu0 0
  %6423 = vmatpush1.bf16.msra.mxu0 0
  %6424 = vmatprep.subr.bf16.mxu0 0
  %6425 = vmatpush1.bf16.msra.mxu0 0
  %6426 = vmatprep.subr.bf16.mxu0 0
  %6427 = vmatpush1.bf16.msra.mxu0 0
  %6428 = vmatprep.subr.bf16.mxu0 0
  %6429 = vmatpush1.bf16.msra.mxu0 0
  %6430 = vmatprep.subr.bf16.mxu0 0
  %6431 = vmatpush1.bf16.msra.mxu0 %v6414
  %6432 = vmatprep.subr.bf16.mxu0 0
  %6433 = vmatpush1.bf16.msra.mxu0 %v6413
  %6434 = vmatprep.subr.bf16.mxu0 0
  %6435 = vmatpush1.bf16.msra.mxu0 %v6412
  %6436 = vmatprep.subr.bf16.mxu0 0
  %6437 = vmatpush1.bf16.msra.mxu0 %v6411
  %6438 = vmatprep.subr.bf16.mxu0 0
  %6439 = vmatpush2.bf16.msra.mxu0 0
  %6440 = vmatprep.subr.bf16.mxu0 0
  %6441 = vmatpush2.bf16.msra.mxu0 0
  %6442 = vmatprep.subr.bf16.mxu0 0
  %6443 = vmatpush2.bf16.msra.mxu0 0
  %6444 = vmatprep.subr.bf16.mxu0 0
  %6445 = vmatpush2.bf16.msra.mxu0 0
  %6446 = vmatprep.subr.bf16.mxu0 0
  %6447 = vmatpush2.bf16.msra.mxu0 0
  %6448 = vmatprep.subr.bf16.mxu0 0
  %6449 = vmatpush2.bf16.msra.mxu0 0
  %6450 = vmatprep.subr.bf16.mxu0 0
  %6451 = vmatpush2.bf16.msra.mxu0 0
  %6452 = vmatprep.subr.bf16.mxu0 0
  %6453 = vmatpush2.bf16.msra.mxu0 0
  %6454 = vmatprep.mubr.bf16.mxu0 0
  %6455 = vmatmul.mubr.bf16.gmra.mxu0 %v6150
  %v6456 = vpop.f32.mrf.mxu0
  %v6457 = vadd.f32 0.0, %v6456
  %v6458 = vpop.f32.mrf.mxu0
  %v6459 = vpop.f32.mrf.mxu0
  %v6460 = vadd.f32 0.0, %v6459
  %v6461 = vpop.f32.mrf.mxu0
  %6462 = vmatprep.mubr.bf16.mxu0 0
  %6463 = vmatmul.mubr.bf16.gmra.mxu0 %v6420
  %v6464 = vpop.f32.mrf.mxu0
  %v6465 = vadd.f32 0.0, %v6464
  %v6466 = vpop.f32.mrf.mxu0
  %v6467 = vpop.f32.mrf.mxu0
  %v6468 = vadd.f32 0.0, %v6467
  %v6469 = vpop.f32.mrf.mxu0
  %6470 = vdwg.mxu0
  %v6471 = vadd.f32 %v6381, %v6457
  %v6472 = vadd.f32 %v6382, %v6460
  %v6473 = vadd.f32 %v6383, %v6465
  %v6474 = vadd.f32 %v6384, %v6468
  %s6475 = scalar_lea.vmem %s5, 256
  %v6476 = vld [vmem:[%s6475] sm:$0xf]
  %v6477 = vld [vmem:[%s6475 + $0x4] sm:$0xf]
  %v6478 = vld [vmem:[%s6475 + $0x8] sm:$0xf]
  %v6479 = vld [vmem:[%s6475 + $0xc] sm:$0xf]
  %v6480 = vld [vmem:[%s6475 + $0x10] sm:$0xf]
  %v6481 = vld [vmem:[%s6475 + $0x14] sm:$0xf]
  %v6482 = vld [vmem:[%s6475 + $0x18] sm:$0xf]
  %v6483 = vld [vmem:[%s6475 + $0x1c] sm:$0xf]
  %v6484 = vpack.c.b16 %v5751, %v5750
  %v6493 = vunpack.c.l.b16 %v6476
  %v6494 = vunpack.c.l.b16 %v6477
  %v6495 = vunpack.c.l.b16 %v6478
  %v6496 = vunpack.c.l.b16 %v6479
  %v6497 = vunpack.c.l.b16 %v6480
  %v6498 = vunpack.c.l.b16 %v6481
  %v6499 = vunpack.c.l.b16 %v6482
  %v6500 = vunpack.c.l.b16 %v6483
  %v6501 = vpack.c.b16 %v6494, %v6493
  %v6502 = vpack.c.b16 %v6496, %v6495
  %v6503 = vpack.c.b16 %v6498, %v6497
  %v6504 = vpack.c.b16 %v6500, %v6499
  %v6510 = vsel %vm451, %v6484, 0
  %6512 = vmatprep.subr.bf16.mxu0 0
  %6513 = vmatpush1.bf16.msra.mxu0 0
  %6514 = vmatprep.subr.bf16.mxu0 0
  %6515 = vmatpush1.bf16.msra.mxu0 0
  %6516 = vmatprep.subr.bf16.mxu0 0
  %6517 = vmatpush1.bf16.msra.mxu0 0
  %6518 = vmatprep.subr.bf16.mxu0 0
  %6519 = vmatpush1.bf16.msra.mxu0 0
  %6520 = vmatprep.subr.bf16.mxu0 0
  %6521 = vmatpush1.bf16.msra.mxu0 %v6504
  %6522 = vmatprep.subr.bf16.mxu0 0
  %6523 = vmatpush1.bf16.msra.mxu0 %v6503
  %6524 = vmatprep.subr.bf16.mxu0 0
  %6525 = vmatpush1.bf16.msra.mxu0 %v6502
  %6526 = vmatprep.subr.bf16.mxu0 0
  %6527 = vmatpush1.bf16.msra.mxu0 %v6501
  %6528 = vmatprep.subr.bf16.mxu0 0
  %6529 = vmatpush2.bf16.msra.mxu0 0
  %6530 = vmatprep.subr.bf16.mxu0 0
  %6531 = vmatpush2.bf16.msra.mxu0 0
  %6532 = vmatprep.subr.bf16.mxu0 0
  %6533 = vmatpush2.bf16.msra.mxu0 0
  %6534 = vmatprep.subr.bf16.mxu0 0
  %6535 = vmatpush2.bf16.msra.mxu0 0
  %6536 = vmatprep.subr.bf16.mxu0 0
  %6537 = vmatpush2.bf16.msra.mxu0 0
  %6538 = vmatprep.subr.bf16.mxu0 0
  %6539 = vmatpush2.bf16.msra.mxu0 0
  %6540 = vmatprep.subr.bf16.mxu0 0
  %6541 = vmatpush2.bf16.msra.mxu0 0
  %6542 = vmatprep.subr.bf16.mxu0 0
  %6543 = vmatpush2.bf16.msra.mxu0 0
  %6544 = vmatprep.mubr.bf16.mxu0 0
  %6545 = vmatmul.mubr.bf16.gmra.mxu0 %v6240
  %v6546 = vpop.f32.mrf.mxu0
  %v6547 = vadd.f32 0.0, %v6546
  %v6548 = vpop.f32.mrf.mxu0
  %v6549 = vpop.f32.mrf.mxu0
  %v6550 = vadd.f32 0.0, %v6549
  %v6551 = vpop.f32.mrf.mxu0
  %6552 = vmatprep.mubr.bf16.mxu0 0
  %6553 = vmatmul.mubr.bf16.gmra.mxu0 %v6510
  %v6554 = vpop.f32.mrf.mxu0
  %v6555 = vadd.f32 0.0, %v6554
  %v6556 = vpop.f32.mrf.mxu0
  %v6557 = vpop.f32.mrf.mxu0
  %v6558 = vadd.f32 0.0, %v6557
  %v6559 = vpop.f32.mrf.mxu0
  %6560 = vdwg.mxu0
  %v6561 = vadd.f32 %v6471, %v6547
  %v6562 = vadd.f32 %v6472, %v6550
  %v6563 = vadd.f32 %v6473, %v6555
  %v6564 = vadd.f32 %v6474, %v6558
  %v6565 = vld [vmem:[%s6] sm:$0x1]
  %v6567 = vlaneseq
  %v6568 = vshrl.u32 %v6567, 7
  %v6569 = vsub.s32 0, %v6568
  %v6570 = vrot.slane %v6565, %v6569
  %v6572 = vadd.f32 %v6561, %v6570
  %v6573 = vadd.f32 %v6562, %v6570
  %v6574 = vadd.f32 %v6563, %v6570
  %v6575 = vadd.f32 %v6564, %v6570
  %v6576 = vmax.f32 %v6572, 0.0
  %v6577 = vmax.f32 %v6573, 0.0
  %v6578 = vmax.f32 %v6574, 0.0
  %v6579 = vmax.f32 %v6575, 0.0
  %v6580 = vpack.c.bf16 %v6577, %v6576
  %v6581 = vpack.c.bf16 %v6579, %v6578
  %v6584 = vunpack.c.l.b16 %v6580
  %v6585 = vunpack.c.h.b16 %v6580
  %v6586 = vunpack.c.l.b16 %v6581
  %v6587 = vunpack.c.h.b16 %v6581
  %v6588 = vpack.c.b16 %v6584, %v6584
  %v6589 = vpack.c.b16 %v6585, %v6585
  %v6590 = vpack.c.b16 %v6586, %v6586
  %v6591 = vpack.c.b16 %v6587, %v6587
  %v6592 = vld [vmem:[%s7] sm:$0xff]
  %v6593 = vld [vmem:[%s7 + $0x8] sm:$0xff]
  %v6594 = vld [vmem:[%s7 + $0x10] sm:$0xff]
  %v6595 = vld [vmem:[%s7 + $0x18] sm:$0xff]
  %v6596 = vld [vmem:[%s7 + $0x20] sm:$0xff]
  %v6597 = vld [vmem:[%s7 + $0x28] sm:$0xff]
  %v6598 = vld [vmem:[%s7 + $0x30] sm:$0xff]
  %v6599 = vld [vmem:[%s7 + $0x38] sm:$0xff]
  %v6600 = vld [vmem:[%s7 + $0x40] sm:$0xff]
  %v6601 = vld [vmem:[%s7 + $0x48] sm:$0xff]
  %v6602 = vld [vmem:[%s7 + $0x50] sm:$0xff]
  %v6603 = vld [vmem:[%s7 + $0x58] sm:$0xff]
  %v6604 = vld [vmem:[%s7 + $0x60] sm:$0xff]
  %v6605 = vld [vmem:[%s7 + $0x68] sm:$0xff]
  %v6606 = vld [vmem:[%s7 + $0x70] sm:$0xff]
  %v6607 = vld [vmem:[%s7 + $0x78] sm:$0xff]
  %s6608 = scalar_lea.vmem %s7, 128
  %v6609 = vld [vmem:[%s6608] sm:$0xff]
  %v6610 = vld [vmem:[%s6608 + $0x8] sm:$0xff]
  %v6611 = vld [vmem:[%s6608 + $0x10] sm:$0xff]
  %v6612 = vld [vmem:[%s6608 + $0x18] sm:$0xff]
  %v6613 = vld [vmem:[%s6608 + $0x20] sm:$0xff]
  %v6614 = vld [vmem:[%s6608 + $0x28] sm:$0xff]
  %v6615 = vld [vmem:[%s6608 + $0x30] sm:$0xff]
  %v6616 = vld [vmem:[%s6608 + $0x38] sm:$0xff]
  %v6617 = vld [vmem:[%s6608 + $0x40] sm:$0xff]
  %v6618 = vld [vmem:[%s6608 + $0x48] sm:$0xff]
  %v6619 = vld [vmem:[%s6608 + $0x50] sm:$0xff]
  %v6620 = vld [vmem:[%s6608 + $0x58] sm:$0xff]
  %v6621 = vld [vmem:[%s6608 + $0x60] sm:$0xff]
  %v6622 = vld [vmem:[%s6608 + $0x68] sm:$0xff]
  %v6623 = vld [vmem:[%s6608 + $0x70] sm:$0xff]
  %v6624 = vld [vmem:[%s6608 + $0x78] sm:$0xff]
  %v6641 = vunpack.c.l.b16 %v6609
  %v6642 = vunpack.c.h.b16 %v6609
  %v6643 = vunpack.c.l.b16 %v6610
  %v6644 = vunpack.c.h.b16 %v6610
  %v6645 = vunpack.c.l.b16 %v6611
  %v6646 = vunpack.c.h.b16 %v6611
  %v6647 = vunpack.c.l.b16 %v6612
  %v6648 = vunpack.c.h.b16 %v6612
  %v6649 = vunpack.c.l.b16 %v6613
  %v6650 = vunpack.c.h.b16 %v6613
  %v6651 = vunpack.c.l.b16 %v6614
  %v6652 = vunpack.c.h.b16 %v6614
  %v6653 = vunpack.c.l.b16 %v6615
  %v6654 = vunpack.c.h.b16 %v6615
  %v6655 = vunpack.c.l.b16 %v6616
  %v6656 = vunpack.c.h.b16 %v6616
  %v6657 = vunpack.c.l.b16 %v6617
  %v6658 = vunpack.c.h.b16 %v6617
  %v6659 = vunpack.c.l.b16 %v6618
  %v6660 = vunpack.c.h.b16 %v6618
  %v6661 = vunpack.c.l.b16 %v6619
  %v6662 = vunpack.c.h.b16 %v6619
  %v6663 = vunpack.c.l.b16 %v6620
  %v6664 = vunpack.c.h.b16 %v6620
  %v6665 = vunpack.c.l.b16 %v6621
  %v6666 = vunpack.c.h.b16 %v6621
  %v6667 = vunpack.c.l.b16 %v6622
  %v6668 = vunpack.c.h.b16 %v6622
  %v6669 = vunpack.c.l.b16 %v6623
  %v6670 = vunpack.c.h.b16 %v6623
  %v6671 = vunpack.c.l.b16 %v6624
  %v6672 = vunpack.c.h.b16 %v6624
  %v6673 = vpack.c.b16 %v6645, %v6641
  %v6674 = vpack.c.b16 %v6646, %v6642
  %v6675 = vpack.c.b16 %v6647, %v6643
  %v6676 = vpack.c.b16 %v6648, %v6644
  %v6677 = vpack.c.b16 %v6653, %v6649
  %v6678 = vpack.c.b16 %v6654, %v6650
  %v6679 = vpack.c.b16 %v6655, %v6651
  %v6680 = vpack.c.b16 %v6656, %v6652
  %v6681 = vpack.c.b16 %v6661, %v6657
  %v6682 = vpack.c.b16 %v6662, %v6658
  %v6683 = vpack.c.b16 %v6663, %v6659
  %v6684 = vpack.c.b16 %v6664, %v6660
  %v6685 = vpack.c.b16 %v6669, %v6665
  %v6686 = vpack.c.b16 %v6670, %v6666
  %v6687 = vpack.c.b16 %v6671, %v6667
  %v6688 = vpack.c.b16 %v6672, %v6668
  %v6706 = vsel %vm451, %v6589, 0
  %6708 = vmatprep.subr.bf16.mxu0 0
  %6709 = vmatpush1.bf16.msra.mxu0 0
  %6710 = vmatprep.subr.bf16.mxu0 0
  %6711 = vmatpush1.bf16.msra.mxu0 0
  %6712 = vmatprep.subr.bf16.mxu0 0
  %6713 = vmatpush1.bf16.msra.mxu0 0
  %6714 = vmatprep.subr.bf16.mxu0 0
  %6715 = vmatpush1.bf16.msra.mxu0 0
  %6716 = vmatprep.subr.bf16.mxu0 %v6686
  %6717 = vmatpush1.bf16.msra.mxu0 %v6685
  %6718 = vmatprep.subr.bf16.mxu0 %v6682
  %6719 = vmatpush1.bf16.msra.mxu0 %v6681
  %6720 = vmatprep.subr.bf16.mxu0 %v6678
  %6721 = vmatpush1.bf16.msra.mxu0 %v6677
  %6722 = vmatprep.subr.bf16.mxu0 %v6674
  %6723 = vmatpush1.bf16.msra.mxu0 %v6673
  %6724 = vmatprep.subr.bf16.mxu0 0
  %6725 = vmatpush2.bf16.msra.mxu0 0
  %6726 = vmatprep.subr.bf16.mxu0 0
  %6727 = vmatpush2.bf16.msra.mxu0 0
  %6728 = vmatprep.subr.bf16.mxu0 0
  %6729 = vmatpush2.bf16.msra.mxu0 0
  %6730 = vmatprep.subr.bf16.mxu0 0
  %6731 = vmatpush2.bf16.msra.mxu0 0
  %6732 = vmatprep.subr.bf16.mxu0 0
  %6733 = vmatpush2.bf16.msra.mxu0 0
  %6734 = vmatprep.subr.bf16.mxu0 0
  %6735 = vmatpush2.bf16.msra.mxu0 0
  %6736 = vmatprep.subr.bf16.mxu0 0
  %6737 = vmatpush2.bf16.msra.mxu0 0
  %6738 = vmatprep.subr.bf16.mxu0 0
  %6739 = vmatpush2.bf16.msra.mxu0 0
  %6740 = vmatprep.mubr.bf16.mxu0 0
  %6741 = vmatmul.mubr.bf16.gmra.mxu0 %v6706
  %v6742 = vpop.f32.mrf.mxu0
  %v6743 = vadd.f32 0.0, %v6742
  %v6744 = vpop.f32.mrf.mxu0
  %v6745 = vadd.f32 0.0, %v6744
  %v6746 = vpop.f32.mrf.mxu0
  %v6747 = vpop.f32.mrf.mxu0
  %6748 = vdwg.mxu0
  %6749 = vmatprep.subr.bf16.mxu0 0
  %6750 = vmatpush1.bf16.msra.mxu0 0
  %6751 = vmatprep.subr.bf16.mxu0 0
  %6752 = vmatpush1.bf16.msra.mxu0 0
  %6753 = vmatprep.subr.bf16.mxu0 0
  %6754 = vmatpush1.bf16.msra.mxu0 0
  %6755 = vmatprep.subr.bf16.mxu0 0
  %6756 = vmatpush1.bf16.msra.mxu0 0
  %6757 = vmatprep.subr.bf16.mxu0 %v6688
  %6758 = vmatpush1.bf16.msra.mxu0 %v6687
  %6759 = vmatprep.subr.bf16.mxu0 %v6684
  %6760 = vmatpush1.bf16.msra.mxu0 %v6683
  %6761 = vmatprep.subr.bf16.mxu0 %v6680
  %6762 = vmatpush1.bf16.msra.mxu0 %v6679
  %6763 = vmatprep.subr.bf16.mxu0 %v6676
  %6764 = vmatpush1.bf16.msra.mxu0 %v6675
  %6765 = vmatprep.subr.bf16.mxu0 0
  %6766 = vmatpush2.bf16.msra.mxu0 0
  %6767 = vmatprep.subr.bf16.mxu0 0
  %6768 = vmatpush2.bf16.msra.mxu0 0
  %6769 = vmatprep.subr.bf16.mxu0 0
  %6770 = vmatpush2.bf16.msra.mxu0 0
  %6771 = vmatprep.subr.bf16.mxu0 0
  %6772 = vmatpush2.bf16.msra.mxu0 0
  %6773 = vmatprep.subr.bf16.mxu0 0
  %6774 = vmatpush2.bf16.msra.mxu0 0
  %6775 = vmatprep.subr.bf16.mxu0 0
  %6776 = vmatpush2.bf16.msra.mxu0 0
  %6777 = vmatprep.subr.bf16.mxu0 0
  %6778 = vmatpush2.bf16.msra.mxu0 0
  %6779 = vmatprep.subr.bf16.mxu0 0
  %6780 = vmatpush2.bf16.msra.mxu0 0
  %6781 = vmatprep.mubr.bf16.mxu0 0
  %6782 = vmatmul.mubr.bf16.gmra.mxu0 %v6706
  %v6783 = vpop.f32.mrf.mxu0
  %v6784 = vadd.f32 0.0, %v6783
  %v6785 = vpop.f32.mrf.mxu0
  %v6786 = vadd.f32 0.0, %v6785
  %v6787 = vpop.f32.mrf.mxu0
  %v6788 = vpop.f32.mrf.mxu0
  %6789 = vdwg.mxu0
  %v6806 = vunpack.c.l.b16 %v6592
  %v6807 = vunpack.c.h.b16 %v6592
  %v6808 = vunpack.c.l.b16 %v6593
  %v6809 = vunpack.c.h.b16 %v6593
  %v6810 = vunpack.c.l.b16 %v6594
  %v6811 = vunpack.c.h.b16 %v6594
  %v6812 = vunpack.c.l.b16 %v6595
  %v6813 = vunpack.c.h.b16 %v6595
  %v6814 = vunpack.c.l.b16 %v6596
  %v6815 = vunpack.c.h.b16 %v6596
  %v6816 = vunpack.c.l.b16 %v6597
  %v6817 = vunpack.c.h.b16 %v6597
  %v6818 = vunpack.c.l.b16 %v6598
  %v6819 = vunpack.c.h.b16 %v6598
  %v6820 = vunpack.c.l.b16 %v6599
  %v6821 = vunpack.c.h.b16 %v6599
  %v6822 = vunpack.c.l.b16 %v6600
  %v6823 = vunpack.c.h.b16 %v6600
  %v6824 = vunpack.c.l.b16 %v6601
  %v6825 = vunpack.c.h.b16 %v6601
  %v6826 = vunpack.c.l.b16 %v6602
  %v6827 = vunpack.c.h.b16 %v6602
  %v6828 = vunpack.c.l.b16 %v6603
  %v6829 = vunpack.c.h.b16 %v6603
  %v6830 = vunpack.c.l.b16 %v6604
  %v6831 = vunpack.c.h.b16 %v6604
  %v6832 = vunpack.c.l.b16 %v6605
  %v6833 = vunpack.c.h.b16 %v6605
  %v6834 = vunpack.c.l.b16 %v6606
  %v6835 = vunpack.c.h.b16 %v6606
  %v6836 = vunpack.c.l.b16 %v6607
  %v6837 = vunpack.c.h.b16 %v6607
  %v6838 = vpack.c.b16 %v6810, %v6806
  %v6839 = vpack.c.b16 %v6811, %v6807
  %v6840 = vpack.c.b16 %v6812, %v6808
  %v6841 = vpack.c.b16 %v6813, %v6809
  %v6842 = vpack.c.b16 %v6818, %v6814
  %v6843 = vpack.c.b16 %v6819, %v6815
  %v6844 = vpack.c.b16 %v6820, %v6816
  %v6845 = vpack.c.b16 %v6821, %v6817
  %v6846 = vpack.c.b16 %v6826, %v6822
  %v6847 = vpack.c.b16 %v6827, %v6823
  %v6848 = vpack.c.b16 %v6828, %v6824
  %v6849 = vpack.c.b16 %v6829, %v6825
  %v6850 = vpack.c.b16 %v6834, %v6830
  %v6851 = vpack.c.b16 %v6835, %v6831
  %v6852 = vpack.c.b16 %v6836, %v6832
  %v6853 = vpack.c.b16 %v6837, %v6833
  %v6871 = vsel %vm451, %v6588, 0
  %6873 = vmatprep.subr.bf16.mxu0 0
  %6874 = vmatpush1.bf16.msra.mxu0 0
  %6875 = vmatprep.subr.bf16.mxu0 0
  %6876 = vmatpush1.bf16.msra.mxu0 0
  %6877 = vmatprep.subr.bf16.mxu0 0
  %6878 = vmatpush1.bf16.msra.mxu0 0
  %6879 = vmatprep.subr.bf16.mxu0 0
  %6880 = vmatpush1.bf16.msra.mxu0 0
  %6881 = vmatprep.subr.bf16.mxu0 %v6851
  %6882 = vmatpush1.bf16.msra.mxu0 %v6850
  %6883 = vmatprep.subr.bf16.mxu0 %v6847
  %6884 = vmatpush1.bf16.msra.mxu0 %v6846
  %6885 = vmatprep.subr.bf16.mxu0 %v6843
  %6886 = vmatpush1.bf16.msra.mxu0 %v6842
  %6887 = vmatprep.subr.bf16.mxu0 %v6839
  %6888 = vmatpush1.bf16.msra.mxu0 %v6838
  %6889 = vmatprep.subr.bf16.mxu0 0
  %6890 = vmatpush2.bf16.msra.mxu0 0
  %6891 = vmatprep.subr.bf16.mxu0 0
  %6892 = vmatpush2.bf16.msra.mxu0 0
  %6893 = vmatprep.subr.bf16.mxu0 0
  %6894 = vmatpush2.bf16.msra.mxu0 0
  %6895 = vmatprep.subr.bf16.mxu0 0
  %6896 = vmatpush2.bf16.msra.mxu0 0
  %6897 = vmatprep.subr.bf16.mxu0 0
  %6898 = vmatpush2.bf16.msra.mxu0 0
  %6899 = vmatprep.subr.bf16.mxu0 0
  %6900 = vmatpush2.bf16.msra.mxu0 0
  %6901 = vmatprep.subr.bf16.mxu0 0
  %6902 = vmatpush2.bf16.msra.mxu0 0
  %6903 = vmatprep.subr.bf16.mxu0 0
  %6904 = vmatpush2.bf16.msra.mxu0 0
  %6905 = vmatprep.mubr.bf16.mxu0 0
  %6906 = vmatmul.mubr.bf16.gmra.mxu0 %v6871
  %v6907 = vpop.f32.mrf.mxu0
  %v6908 = vadd.f32 %v6743, %v6907
  %v6909 = vpop.f32.mrf.mxu0
  %v6910 = vadd.f32 %v6745, %v6909
  %v6911 = vpop.f32.mrf.mxu0
  %v6912 = vpop.f32.mrf.mxu0
  %6913 = vdwg.mxu0
  %6914 = vmatprep.subr.bf16.mxu0 0
  %6915 = vmatpush1.bf16.msra.mxu0 0
  %6916 = vmatprep.subr.bf16.mxu0 0
  %6917 = vmatpush1.bf16.msra.mxu0 0
  %6918 = vmatprep.subr.bf16.mxu0 0
  %6919 = vmatpush1.bf16.msra.mxu0 0
  %6920 = vmatprep.subr.bf16.mxu0 0
  %6921 = vmatpush1.bf16.msra.mxu0 0
  %6922 = vmatprep.subr.bf16.mxu0 %v6853
  %6923 = vmatpush1.bf16.msra.mxu0 %v6852
  %6924 = vmatprep.subr.bf16.mxu0 %v6849
  %6925 = vmatpush1.bf16.msra.mxu0 %v6848
  %6926 = vmatprep.subr.bf16.mxu0 %v6845
  %6927 = vmatpush1.bf16.msra.mxu0 %v6844
  %6928 = vmatprep.subr.bf16.mxu0 %v6841
  %6929 = vmatpush1.bf16.msra.mxu0 %v6840
  %6930 = vmatprep.subr.bf16.mxu0 0
  %6931 = vmatpush2.bf16.msra.mxu0 0
  %6932 = vmatprep.subr.bf16.mxu0 0
  %6933 = vmatpush2.bf16.msra.mxu0 0
  %6934 = vmatprep.subr.bf16.mxu0 0
  %6935 = vmatpush2.bf16.msra.mxu0 0
  %6936 = vmatprep.subr.bf16.mxu0 0
  %6937 = vmatpush2.bf16.msra.mxu0 0
  %6938 = vmatprep.subr.bf16.mxu0 0
  %6939 = vmatpush2.bf16.msra.mxu0 0
  %6940 = vmatprep.subr.bf16.mxu0 0
  %6941 = vmatpush2.bf16.msra.mxu0 0
  %6942 = vmatprep.subr.bf16.mxu0 0
  %6943 = vmatpush2.bf16.msra.mxu0 0
  %6944 = vmatprep.subr.bf16.mxu0 0
  %6945 = vmatpush2.bf16.msra.mxu0 0
  %6946 = vmatprep.mubr.bf16.mxu0 0
  %6947 = vmatmul.mubr.bf16.gmra.mxu0 %v6871
  %v6948 = vpop.f32.mrf.mxu0
  %v6949 = vadd.f32 %v6784, %v6948
  %v6950 = vpop.f32.mrf.mxu0
  %v6951 = vadd.f32 %v6786, %v6950
  %v6952 = vpop.f32.mrf.mxu0
  %v6953 = vpop.f32.mrf.mxu0
  %6954 = vdwg.mxu0
  %s6955 = scalar_lea.vmem %s7, 256
  %v6956 = vld [vmem:[%s6955] sm:$0xff]
  %v6957 = vld [vmem:[%s6955 + $0x8] sm:$0xff]
  %v6958 = vld [vmem:[%s6955 + $0x10] sm:$0xff]
  %v6959 = vld [vmem:[%s6955 + $0x18] sm:$0xff]
  %v6960 = vld [vmem:[%s6955 + $0x20] sm:$0xff]
  %v6961 = vld [vmem:[%s6955 + $0x28] sm:$0xff]
  %v6962 = vld [vmem:[%s6955 + $0x30] sm:$0xff]
  %v6963 = vld [vmem:[%s6955 + $0x38] sm:$0xff]
  %v6964 = vld [vmem:[%s6955 + $0x40] sm:$0xff]
  %v6965 = vld [vmem:[%s6955 + $0x48] sm:$0xff]
  %v6966 = vld [vmem:[%s6955 + $0x50] sm:$0xff]
  %v6967 = vld [vmem:[%s6955 + $0x58] sm:$0xff]
  %v6968 = vld [vmem:[%s6955 + $0x60] sm:$0xff]
  %v6969 = vld [vmem:[%s6955 + $0x68] sm:$0xff]
  %v6970 = vld [vmem:[%s6955 + $0x70] sm:$0xff]
  %v6971 = vld [vmem:[%s6955 + $0x78] sm:$0xff]
  %v6988 = vunpack.c.l.b16 %v6956
  %v6989 = vunpack.c.h.b16 %v6956
  %v6990 = vunpack.c.l.b16 %v6957
  %v6991 = vunpack.c.h.b16 %v6957
  %v6992 = vunpack.c.l.b16 %v6958
  %v6993 = vunpack.c.h.b16 %v6958
  %v6994 = vunpack.c.l.b16 %v6959
  %v6995 = vunpack.c.h.b16 %v6959
  %v6996 = vunpack.c.l.b16 %v6960
  %v6997 = vunpack.c.h.b16 %v6960
  %v6998 = vunpack.c.l.b16 %v6961
  %v6999 = vunpack.c.h.b16 %v6961
  %v7000 = vunpack.c.l.b16 %v6962
  %v7001 = vunpack.c.h.b16 %v6962
  %v7002 = vunpack.c.l.b16 %v6963
  %v7003 = vunpack.c.h.b16 %v6963
  %v7004 = vunpack.c.l.b16 %v6964
  %v7005 = vunpack.c.h.b16 %v6964
  %v7006 = vunpack.c.l.b16 %v6965
  %v7007 = vunpack.c.h.b16 %v6965
  %v7008 = vunpack.c.l.b16 %v6966
  %v7009 = vunpack.c.h.b16 %v6966
  %v7010 = vunpack.c.l.b16 %v6967
  %v7011 = vunpack.c.h.b16 %v6967
  %v7012 = vunpack.c.l.b16 %v6968
  %v7013 = vunpack.c.h.b16 %v6968
  %v7014 = vunpack.c.l.b16 %v6969
  %v7015 = vunpack.c.h.b16 %v6969
  %v7016 = vunpack.c.l.b16 %v6970
  %v7017 = vunpack.c.h.b16 %v6970
  %v7018 = vunpack.c.l.b16 %v6971
  %v7019 = vunpack.c.h.b16 %v6971
  %v7020 = vpack.c.b16 %v6992, %v6988
  %v7021 = vpack.c.b16 %v6993, %v6989
  %v7022 = vpack.c.b16 %v6994, %v6990
  %v7023 = vpack.c.b16 %v6995, %v6991
  %v7024 = vpack.c.b16 %v7000, %v6996
  %v7025 = vpack.c.b16 %v7001, %v6997
  %v7026 = vpack.c.b16 %v7002, %v6998
  %v7027 = vpack.c.b16 %v7003, %v6999
  %v7028 = vpack.c.b16 %v7008, %v7004
  %v7029 = vpack.c.b16 %v7009, %v7005
  %v7030 = vpack.c.b16 %v7010, %v7006
  %v7031 = vpack.c.b16 %v7011, %v7007
  %v7032 = vpack.c.b16 %v7016, %v7012
  %v7033 = vpack.c.b16 %v7017, %v7013
  %v7034 = vpack.c.b16 %v7018, %v7014
  %v7035 = vpack.c.b16 %v7019, %v7015
  %v7053 = vsel %vm451, %v6590, 0
  %7055 = vmatprep.subr.bf16.mxu0 0
  %7056 = vmatpush1.bf16.msra.mxu0 0
  %7057 = vmatprep.subr.bf16.mxu0 0
  %7058 = vmatpush1.bf16.msra.mxu0 0
  %7059 = vmatprep.subr.bf16.mxu0 0
  %7060 = vmatpush1.bf16.msra.mxu0 0
  %7061 = vmatprep.subr.bf16.mxu0 0
  %7062 = vmatpush1.bf16.msra.mxu0 0
  %7063 = vmatprep.subr.bf16.mxu0 %v7033
  %7064 = vmatpush1.bf16.msra.mxu0 %v7032
  %7065 = vmatprep.subr.bf16.mxu0 %v7029
  %7066 = vmatpush1.bf16.msra.mxu0 %v7028
  %7067 = vmatprep.subr.bf16.mxu0 %v7025
  %7068 = vmatpush1.bf16.msra.mxu0 %v7024
  %7069 = vmatprep.subr.bf16.mxu0 %v7021
  %7070 = vmatpush1.bf16.msra.mxu0 %v7020
  %7071 = vmatprep.subr.bf16.mxu0 0
  %7072 = vmatpush2.bf16.msra.mxu0 0
  %7073 = vmatprep.subr.bf16.mxu0 0
  %7074 = vmatpush2.bf16.msra.mxu0 0
  %7075 = vmatprep.subr.bf16.mxu0 0
  %7076 = vmatpush2.bf16.msra.mxu0 0
  %7077 = vmatprep.subr.bf16.mxu0 0
  %7078 = vmatpush2.bf16.msra.mxu0 0
  %7079 = vmatprep.subr.bf16.mxu0 0
  %7080 = vmatpush2.bf16.msra.mxu0 0
  %7081 = vmatprep.subr.bf16.mxu0 0
  %7082 = vmatpush2.bf16.msra.mxu0 0
  %7083 = vmatprep.subr.bf16.mxu0 0
  %7084 = vmatpush2.bf16.msra.mxu0 0
  %7085 = vmatprep.subr.bf16.mxu0 0
  %7086 = vmatpush2.bf16.msra.mxu0 0
  %7087 = vmatprep.mubr.bf16.mxu0 0
  %7088 = vmatmul.mubr.bf16.gmra.mxu0 %v7053
  %v7089 = vpop.f32.mrf.mxu0
  %v7090 = vadd.f32 0.0, %v7089
  %v7091 = vpop.f32.mrf.mxu0
  %v7092 = vadd.f32 0.0, %v7091
  %v7093 = vpop.f32.mrf.mxu0
  %v7094 = vpop.f32.mrf.mxu0
  %7095 = vdwg.mxu0
  %7096 = vmatprep.subr.bf16.mxu0 0
  %7097 = vmatpush1.bf16.msra.mxu0 0
  %7098 = vmatprep.subr.bf16.mxu0 0
  %7099 = vmatpush1.bf16.msra.mxu0 0
  %7100 = vmatprep.subr.bf16.mxu0 0
  %7101 = vmatpush1.bf16.msra.mxu0 0
  %7102 = vmatprep.subr.bf16.mxu0 0
  %7103 = vmatpush1.bf16.msra.mxu0 0
  %7104 = vmatprep.subr.bf16.mxu0 %v7035
  %7105 = vmatpush1.bf16.msra.mxu0 %v7034
  %7106 = vmatprep.subr.bf16.mxu0 %v7031
  %7107 = vmatpush1.bf16.msra.mxu0 %v7030
  %7108 = vmatprep.subr.bf16.mxu0 %v7027
  %7109 = vmatpush1.bf16.msra.mxu0 %v7026
  %7110 = vmatprep.subr.bf16.mxu0 %v7023
  %7111 = vmatpush1.bf16.msra.mxu0 %v7022
  %7112 = vmatprep.subr.bf16.mxu0 0
  %7113 = vmatpush2.bf16.msra.mxu0 0
  %7114 = vmatprep.subr.bf16.mxu0 0
  %7115 = vmatpush2.bf16.msra.mxu0 0
  %7116 = vmatprep.subr.bf16.mxu0 0
  %7117 = vmatpush2.bf16.msra.mxu0 0
  %7118 = vmatprep.subr.bf16.mxu0 0
  %7119 = vmatpush2.bf16.msra.mxu0 0
  %7120 = vmatprep.subr.bf16.mxu0 0
  %7121 = vmatpush2.bf16.msra.mxu0 0
  %7122 = vmatprep.subr.bf16.mxu0 0
  %7123 = vmatpush2.bf16.msra.mxu0 0
  %7124 = vmatprep.subr.bf16.mxu0 0
  %7125 = vmatpush2.bf16.msra.mxu0 0
  %7126 = vmatprep.subr.bf16.mxu0 0
  %7127 = vmatpush2.bf16.msra.mxu0 0
  %7128 = vmatprep.mubr.bf16.mxu0 0
  %7129 = vmatmul.mubr.bf16.gmra.mxu0 %v7053
  %v7130 = vpop.f32.mrf.mxu0
  %v7131 = vadd.f32 0.0, %v7130
  %v7132 = vpop.f32.mrf.mxu0
  %v7133 = vadd.f32 0.0, %v7132
  %v7134 = vpop.f32.mrf.mxu0
  %v7135 = vpop.f32.mrf.mxu0
  %7136 = vdwg.mxu0
  %v7137 = vadd.f32 %v6908, %v7090
  %v7138 = vadd.f32 %v6910, %v7092
  %v7139 = vadd.f32 %v6949, %v7131
  %v7140 = vadd.f32 %v6951, %v7133
  %s7141 = scalar_lea.vmem %s7, 384
  %v7142 = vld [vmem:[%s7141] sm:$0xff]
  %v7143 = vld [vmem:[%s7141 + $0x8] sm:$0xff]
  %v7144 = vld [vmem:[%s7141 + $0x10] sm:$0xff]
  %v7145 = vld [vmem:[%s7141 + $0x18] sm:$0xff]
  %v7146 = vld [vmem:[%s7141 + $0x20] sm:$0xff]
  %v7147 = vld [vmem:[%s7141 + $0x28] sm:$0xff]
  %v7148 = vld [vmem:[%s7141 + $0x30] sm:$0xff]
  %v7149 = vld [vmem:[%s7141 + $0x38] sm:$0xff]
  %v7150 = vld [vmem:[%s7141 + $0x40] sm:$0xff]
  %v7151 = vld [vmem:[%s7141 + $0x48] sm:$0xff]
  %v7152 = vld [vmem:[%s7141 + $0x50] sm:$0xff]
  %v7153 = vld [vmem:[%s7141 + $0x58] sm:$0xff]
  %v7154 = vld [vmem:[%s7141 + $0x60] sm:$0xff]
  %v7155 = vld [vmem:[%s7141 + $0x68] sm:$0xff]
  %v7156 = vld [vmem:[%s7141 + $0x70] sm:$0xff]
  %v7157 = vld [vmem:[%s7141 + $0x78] sm:$0xff]
  %v7174 = vunpack.c.l.b16 %v7142
  %v7175 = vunpack.c.h.b16 %v7142
  %v7176 = vunpack.c.l.b16 %v7143
  %v7177 = vunpack.c.h.b16 %v7143
  %v7178 = vunpack.c.l.b16 %v7144
  %v7179 = vunpack.c.h.b16 %v7144
  %v7180 = vunpack.c.l.b16 %v7145
  %v7181 = vunpack.c.h.b16 %v7145
  %v7182 = vunpack.c.l.b16 %v7146
  %v7183 = vunpack.c.h.b16 %v7146
  %v7184 = vunpack.c.l.b16 %v7147
  %v7185 = vunpack.c.h.b16 %v7147
  %v7186 = vunpack.c.l.b16 %v7148
  %v7187 = vunpack.c.h.b16 %v7148
  %v7188 = vunpack.c.l.b16 %v7149
  %v7189 = vunpack.c.h.b16 %v7149
  %v7190 = vunpack.c.l.b16 %v7150
  %v7191 = vunpack.c.h.b16 %v7150
  %v7192 = vunpack.c.l.b16 %v7151
  %v7193 = vunpack.c.h.b16 %v7151
  %v7194 = vunpack.c.l.b16 %v7152
  %v7195 = vunpack.c.h.b16 %v7152
  %v7196 = vunpack.c.l.b16 %v7153
  %v7197 = vunpack.c.h.b16 %v7153
  %v7198 = vunpack.c.l.b16 %v7154
  %v7199 = vunpack.c.h.b16 %v7154
  %v7200 = vunpack.c.l.b16 %v7155
  %v7201 = vunpack.c.h.b16 %v7155
  %v7202 = vunpack.c.l.b16 %v7156
  %v7203 = vunpack.c.h.b16 %v7156
  %v7204 = vunpack.c.l.b16 %v7157
  %v7205 = vunpack.c.h.b16 %v7157
  %v7206 = vpack.c.b16 %v7178, %v7174
  %v7207 = vpack.c.b16 %v7179, %v7175
  %v7208 = vpack.c.b16 %v7180, %v7176
  %v7209 = vpack.c.b16 %v7181, %v7177
  %v7210 = vpack.c.b16 %v7186, %v7182
  %v7211 = vpack.c.b16 %v7187, %v7183
  %v7212 = vpack.c.b16 %v7188, %v7184
  %v7213 = vpack.c.b16 %v7189, %v7185
  %v7214 = vpack.c.b16 %v7194, %v7190
  %v7215 = vpack.c.b16 %v7195, %v7191
  %v7216 = vpack.c.b16 %v7196, %v7192
  %v7217 = vpack.c.b16 %v7197, %v7193
  %v7218 = vpack.c.b16 %v7202, %v7198
  %v7219 = vpack.c.b16 %v7203, %v7199
  %v7220 = vpack.c.b16 %v7204, %v7200
  %v7221 = vpack.c.b16 %v7205, %v7201
  %v7239 = vsel %vm451, %v6591, 0
  %7241 = vmatprep.subr.bf16.mxu0 0
  %7242 = vmatpush1.bf16.msra.mxu0 0
  %7243 = vmatprep.subr.bf16.mxu0 0
  %7244 = vmatpush1.bf16.msra.mxu0 0
  %7245 = vmatprep.subr.bf16.mxu0 0
  %7246 = vmatpush1.bf16.msra.mxu0 0
  %7247 = vmatprep.subr.bf16.mxu0 0
  %7248 = vmatpush1.bf16.msra.mxu0 0
  %7249 = vmatprep.subr.bf16.mxu0 %v7219
  %7250 = vmatpush1.bf16.msra.mxu0 %v7218
  %7251 = vmatprep.subr.bf16.mxu0 %v7215
  %7252 = vmatpush1.bf16.msra.mxu0 %v7214
  %7253 = vmatprep.subr.bf16.mxu0 %v7211
  %7254 = vmatpush1.bf16.msra.mxu0 %v7210
  %7255 = vmatprep.subr.bf16.mxu0 %v7207
  %7256 = vmatpush1.bf16.msra.mxu0 %v7206
  %7257 = vmatprep.subr.bf16.mxu0 0
  %7258 = vmatpush2.bf16.msra.mxu0 0
  %7259 = vmatprep.subr.bf16.mxu0 0
  %7260 = vmatpush2.bf16.msra.mxu0 0
  %7261 = vmatprep.subr.bf16.mxu0 0
  %7262 = vmatpush2.bf16.msra.mxu0 0
  %7263 = vmatprep.subr.bf16.mxu0 0
  %7264 = vmatpush2.bf16.msra.mxu0 0
  %7265 = vmatprep.subr.bf16.mxu0 0
  %7266 = vmatpush2.bf16.msra.mxu0 0
  %7267 = vmatprep.subr.bf16.mxu0 0
  %7268 = vmatpush2.bf16.msra.mxu0 0
  %7269 = vmatprep.subr.bf16.mxu0 0
  %7270 = vmatpush2.bf16.msra.mxu0 0
  %7271 = vmatprep.subr.bf16.mxu0 0
  %7272 = vmatpush2.bf16.msra.mxu0 0
  %7273 = vmatprep.mubr.bf16.mxu0 0
  %7274 = vmatmul.mubr.bf16.gmra.mxu0 %v7239
  %v7275 = vpop.f32.mrf.mxu0
  %v7276 = vadd.f32 0.0, %v7275
  %v7277 = vpop.f32.mrf.mxu0
  %v7278 = vadd.f32 0.0, %v7277
  %v7279 = vpop.f32.mrf.mxu0
  %v7280 = vpop.f32.mrf.mxu0
  %7281 = vdwg.mxu0
  %7282 = vmatprep.subr.bf16.mxu0 0
  %7283 = vmatpush1.bf16.msra.mxu0 0
  %7284 = vmatprep.subr.bf16.mxu0 0
  %7285 = vmatpush1.bf16.msra.mxu0 0
  %7286 = vmatprep.subr.bf16.mxu0 0
  %7287 = vmatpush1.bf16.msra.mxu0 0
  %7288 = vmatprep.subr.bf16.mxu0 0
  %7289 = vmatpush1.bf16.msra.mxu0 0
  %7290 = vmatprep.subr.bf16.mxu0 %v7221
  %7291 = vmatpush1.bf16.msra.mxu0 %v7220
  %7292 = vmatprep.subr.bf16.mxu0 %v7217
  %7293 = vmatpush1.bf16.msra.mxu0 %v7216
  %7294 = vmatprep.subr.bf16.mxu0 %v7213
  %7295 = vmatpush1.bf16.msra.mxu0 %v7212
  %7296 = vmatprep.subr.bf16.mxu0 %v7209
  %7297 = vmatpush1.bf16.msra.mxu0 %v7208
  %7298 = vmatprep.subr.bf16.mxu0 0
  %7299 = vmatpush2.bf16.msra.mxu0 0
  %7300 = vmatprep.subr.bf16.mxu0 0
  %7301 = vmatpush2.bf16.msra.mxu0 0
  %7302 = vmatprep.subr.bf16.mxu0 0
  %7303 = vmatpush2.bf16.msra.mxu0 0
  %7304 = vmatprep.subr.bf16.mxu0 0
  %7305 = vmatpush2.bf16.msra.mxu0 0
  %7306 = vmatprep.subr.bf16.mxu0 0
  %7307 = vmatpush2.bf16.msra.mxu0 0
  %7308 = vmatprep.subr.bf16.mxu0 0
  %7309 = vmatpush2.bf16.msra.mxu0 0
  %7310 = vmatprep.subr.bf16.mxu0 0
  %7311 = vmatpush2.bf16.msra.mxu0 0
  %7312 = vmatprep.subr.bf16.mxu0 0
  %7313 = vmatpush2.bf16.msra.mxu0 0
  %7314 = vmatprep.mubr.bf16.mxu0 0
  %7315 = vmatmul.mubr.bf16.gmra.mxu0 %v7239
  %v7316 = vpop.f32.mrf.mxu0
  %v7317 = vadd.f32 0.0, %v7316
  %v7318 = vpop.f32.mrf.mxu0
  %v7319 = vadd.f32 0.0, %v7318
  %v7320 = vpop.f32.mrf.mxu0
  %v7321 = vpop.f32.mrf.mxu0
  %7322 = vdwg.mxu0
  %v7323 = vadd.f32 %v7137, %v7276
  %v7324 = vadd.f32 %v7138, %v7278
  %v7325 = vadd.f32 %v7139, %v7317
  %v7326 = vadd.f32 %v7140, %v7319
  %v7327 = vld [vmem:[%s8] sm:$0xf]
  %v7329 = vlaneseq
  %v7330 = vshrl.u32 %v7329, 7
  %v7331 = vsub.s32 0, %v7330
  %v7332 = vrot.slane %v7327, %v7331
  %v7333 = vlaneseq
  %v7334 = vshrl.u32 %v7333, 7
  %v7335 = vsub.s32 1, %v7334
  %v7336 = vrot.slane %v7327, %v7335
  %v7337 = vlaneseq
  %v7338 = vshrl.u32 %v7337, 7
  %v7339 = vsub.s32 2, %v7338
  %v7340 = vrot.slane %v7327, %v7339
  %v7341 = vlaneseq
  %v7342 = vshrl.u32 %v7341, 7
  %v7343 = vsub.s32 3, %v7342
  %v7344 = vrot.slane %v7327, %v7343
  %v7349 = vadd.f32 %v7323, %v7332
  %v7350 = vadd.f32 %v7324, %v7336
  %v7351 = vadd.f32 %v7325, %v7340
  %v7352 = vadd.f32 %v7326, %v7344
  %v7353 = vmax.f32 %v7349, 0.0
  %v7354 = vmax.f32 %v7350, 0.0
  %v7355 = vmax.f32 %v7351, 0.0
  %v7356 = vmax.f32 %v7352, 0.0
  %v7357 = vpack.c.bf16 %v7353, %v7353
  %v7358 = vpack.c.bf16 %v7354, %v7354
  %v7359 = vpack.c.bf16 %v7355, %v7355
  %v7360 = vpack.c.bf16 %v7356, %v7356
  %v7361 = vld [vmem:[%s9] sm:$0xf]
  %v7362 = vld [vmem:[%s9 + $0x4] sm:$0xf]
  %v7363 = vld [vmem:[%s9 + $0x8] sm:$0xf]
  %v7364 = vld [vmem:[%s9 + $0xc] sm:$0xf]
  %v7365 = vld [vmem:[%s9 + $0x10] sm:$0xf]
  %v7366 = vld [vmem:[%s9 + $0x14] sm:$0xf]
  %v7367 = vld [vmem:[%s9 + $0x18] sm:$0xf]
  %v7368 = vld [vmem:[%s9 + $0x1c] sm:$0xf]
  %v7369 = vld [vmem:[%s9 + $0x20] sm:$0xf]
  %v7370 = vld [vmem:[%s9 + $0x24] sm:$0xf]
  %v7371 = vld [vmem:[%s9 + $0x28] sm:$0xf]
  %v7372 = vld [vmem:[%s9 + $0x2c] sm:$0xf]
  %v7373 = vld [vmem:[%s9 + $0x30] sm:$0xf]
  %v7374 = vld [vmem:[%s9 + $0x34] sm:$0xf]
  %v7375 = vld [vmem:[%s9 + $0x38] sm:$0xf]
  %v7376 = vld [vmem:[%s9 + $0x3c] sm:$0xf]
  %v7377 = vld [vmem:[%s9 + $0x40] sm:$0xf]
  %v7378 = vld [vmem:[%s9 + $0x44] sm:$0xf]
  %v7379 = vld [vmem:[%s9 + $0x48] sm:$0xf]
  %v7380 = vld [vmem:[%s9 + $0x4c] sm:$0xf]
  %v7381 = vld [vmem:[%s9 + $0x50] sm:$0xf]
  %v7382 = vld [vmem:[%s9 + $0x54] sm:$0xf]
  %v7383 = vld [vmem:[%s9 + $0x58] sm:$0xf]
  %v7384 = vld [vmem:[%s9 + $0x5c] sm:$0xf]
  %v7385 = vld [vmem:[%s9 + $0x60] sm:$0xf]
  %v7386 = vld [vmem:[%s9 + $0x64] sm:$0xf]
  %v7387 = vld [vmem:[%s9 + $0x68] sm:$0xf]
  %v7388 = vld [vmem:[%s9 + $0x6c] sm:$0xf]
  %v7389 = vld [vmem:[%s9 + $0x70] sm:$0xf]
  %v7390 = vld [vmem:[%s9 + $0x74] sm:$0xf]
  %v7391 = vld [vmem:[%s9 + $0x78] sm:$0xf]
  %v7392 = vld [vmem:[%s9 + $0x7c] sm:$0xf]
  %v7393 = vld [vmem:[%s9 + $0x80] sm:$0xf]
  %v7394 = vld [vmem:[%s9 + $0x84] sm:$0xf]
  %v7395 = vld [vmem:[%s9 + $0x88] sm:$0xf]
  %v7396 = vld [vmem:[%s9 + $0x8c] sm:$0xf]
  %v7397 = vld [vmem:[%s9 + $0x90] sm:$0xf]
  %v7398 = vld [vmem:[%s9 + $0x94] sm:$0xf]
  %v7399 = vld [vmem:[%s9 + $0x98] sm:$0xf]
  %v7400 = vld [vmem:[%s9 + $0x9c] sm:$0xf]
  %v7401 = vld [vmem:[%s9 + $0xa0] sm:$0xf]
  %v7402 = vld [vmem:[%s9 + $0xa4] sm:$0xf]
  %v7403 = vld [vmem:[%s9 + $0xa8] sm:$0xf]
  %v7404 = vld [vmem:[%s9 + $0xac] sm:$0xf]
  %v7405 = vld [vmem:[%s9 + $0xb0] sm:$0xf]
  %v7406 = vld [vmem:[%s9 + $0xb4] sm:$0xf]
  %v7407 = vld [vmem:[%s9 + $0xb8] sm:$0xf]
  %v7408 = vld [vmem:[%s9 + $0xbc] sm:$0xf]
  %v7409 = vld [vmem:[%s9 + $0xc0] sm:$0xf]
  %v7410 = vld [vmem:[%s9 + $0xc4] sm:$0xf]
  %v7411 = vld [vmem:[%s9 + $0xc8] sm:$0xf]
  %v7412 = vld [vmem:[%s9 + $0xcc] sm:$0xf]
  %v7413 = vld [vmem:[%s9 + $0xd0] sm:$0xf]
  %v7414 = vld [vmem:[%s9 + $0xd4] sm:$0xf]
  %v7415 = vld [vmem:[%s9 + $0xd8] sm:$0xf]
  %v7416 = vld [vmem:[%s9 + $0xdc] sm:$0xf]
  %v7417 = vld [vmem:[%s9 + $0xe0] sm:$0xf]
  %v7418 = vld [vmem:[%s9 + $0xe4] sm:$0xf]
  %v7419 = vld [vmem:[%s9 + $0xe8] sm:$0xf]
  %v7420 = vld [vmem:[%s9 + $0xec] sm:$0xf]
  %v7421 = vld [vmem:[%s9 + $0xf0] sm:$0xf]
  %v7422 = vld [vmem:[%s9 + $0xf4] sm:$0xf]
  %v7423 = vld [vmem:[%s9 + $0xf8] sm:$0xf]
  %v7424 = vld [vmem:[%s9 + $0xfc] sm:$0xf]
  %v7425 = vld [vmem:[%s10] sm:$0x1]
  %v7427 = vlaneseq
  %v7428 = vshrl.u32 %v7427, 7
  %v7429 = vsub.s32 0, %v7428
  %v7430 = vrot.slane %v7425, %v7429
  %v7496 = vunpack.c.l.b16 %v7361
  %v7497 = vunpack.c.l.b16 %v7362
  %v7498 = vunpack.c.l.b16 %v7363
  %v7499 = vunpack.c.l.b16 %v7364
  %v7500 = vunpack.c.l.b16 %v7365
  %v7501 = vunpack.c.l.b16 %v7366
  %v7502 = vunpack.c.l.b16 %v7367
  %v7503 = vunpack.c.l.b16 %v7368
  %v7504 = vunpack.c.l.b16 %v7369
  %v7505 = vunpack.c.l.b16 %v7370
  %v7506 = vunpack.c.l.b16 %v7371
  %v7507 = vunpack.c.l.b16 %v7372
  %v7508 = vunpack.c.l.b16 %v7373
  %v7509 = vunpack.c.l.b16 %v7374
  %v7510 = vunpack.c.l.b16 %v7375
  %v7511 = vunpack.c.l.b16 %v7376
  %v7512 = vunpack.c.l.b16 %v7377
  %v7513 = vunpack.c.l.b16 %v7378
  %v7514 = vunpack.c.l.b16 %v7379
  %v7515 = vunpack.c.l.b16 %v7380
  %v7516 = vunpack.c.l.b16 %v7381
  %v7517 = vunpack.c.l.b16 %v7382
  %v7518 = vunpack.c.l.b16 %v7383
  %v7519 = vunpack.c.l.b16 %v7384
  %v7520 = vunpack.c.l.b16 %v7385
  %v7521 = vunpack.c.l.b16 %v7386
  %v7522 = vunpack.c.l.b16 %v7387
  %v7523 = vunpack.c.l.b16 %v7388
  %v7524 = vunpack.c.l.b16 %v7389
  %v7525 = vunpack.c.l.b16 %v7390
  %v7526 = vunpack.c.l.b16 %v7391
  %v7527 = vunpack.c.l.b16 %v7392
  %v7528 = vunpack.c.l.b16 %v7393
  %v7529 = vunpack.c.l.b16 %v7394
  %v7530 = vunpack.c.l.b16 %v7395
  %v7531 = vunpack.c.l.b16 %v7396
  %v7532 = vunpack.c.l.b16 %v7397
  %v7533 = vunpack.c.l.b16 %v7398
  %v7534 = vunpack.c.l.b16 %v7399
  %v7535 = vunpack.c.l.b16 %v7400
  %v7536 = vunpack.c.l.b16 %v7401
  %v7537 = vunpack.c.l.b16 %v7402
  %v7538 = vunpack.c.l.b16 %v7403
  %v7539 = vunpack.c.l.b16 %v7404
  %v7540 = vunpack.c.l.b16 %v7405
  %v7541 = vunpack.c.l.b16 %v7406
  %v7542 = vunpack.c.l.b16 %v7407
  %v7543 = vunpack.c.l.b16 %v7408
  %v7544 = vunpack.c.l.b16 %v7409
  %v7545 = vunpack.c.l.b16 %v7410
  %v7546 = vunpack.c.l.b16 %v7411
  %v7547 = vunpack.c.l.b16 %v7412
  %v7548 = vunpack.c.l.b16 %v7413
  %v7549 = vunpack.c.l.b16 %v7414
  %v7550 = vunpack.c.l.b16 %v7415
  %v7551 = vunpack.c.l.b16 %v7416
  %v7552 = vunpack.c.l.b16 %v7417
  %v7553 = vunpack.c.l.b16 %v7418
  %v7554 = vunpack.c.l.b16 %v7419
  %v7555 = vunpack.c.l.b16 %v7420
  %v7556 = vunpack.c.l.b16 %v7421
  %v7557 = vunpack.c.l.b16 %v7422
  %v7558 = vunpack.c.l.b16 %v7423
  %v7559 = vunpack.c.l.b16 %v7424
  %v7560 = vpack.c.b16 %v7497, %v7496
  %v7561 = vpack.c.b16 %v7499, %v7498
  %v7562 = vpack.c.b16 %v7501, %v7500
  %v7563 = vpack.c.b16 %v7503, %v7502
  %v7564 = vpack.c.b16 %v7505, %v7504
  %v7565 = vpack.c.b16 %v7507, %v7506
  %v7566 = vpack.c.b16 %v7509, %v7508
  %v7567 = vpack.c.b16 %v7511, %v7510
  %v7568 = vpack.c.b16 %v7513, %v7512
  %v7569 = vpack.c.b16 %v7515, %v7514
  %v7570 = vpack.c.b16 %v7517, %v7516
  %v7571 = vpack.c.b16 %v7519, %v7518
  %v7572 = vpack.c.b16 %v7521, %v7520
  %v7573 = vpack.c.b16 %v7523, %v7522
  %v7574 = vpack.c.b16 %v7525, %v7524
  %v7575 = vpack.c.b16 %v7527, %v7526
  %v7576 = vpack.c.b16 %v7529, %v7528
  %v7577 = vpack.c.b16 %v7531, %v7530
  %v7578 = vpack.c.b16 %v7533, %v7532
  %v7579 = vpack.c.b16 %v7535, %v7534
  %v7580 = vpack.c.b16 %v7537, %v7536
  %v7581 = vpack.c.b16 %v7539, %v7538
  %v7582 = vpack.c.b16 %v7541, %v7540
  %v7583 = vpack.c.b16 %v7543, %v7542
  %v7584 = vpack.c.b16 %v7545, %v7544
  %v7585 = vpack.c.b16 %v7547, %v7546
  %v7586 = vpack.c.b16 %v7549, %v7548
  %v7587 = vpack.c.b16 %v7551, %v7550
  %v7588 = vpack.c.b16 %v7553, %v7552
  %v7589 = vpack.c.b16 %v7555, %v7554
  %v7590 = vpack.c.b16 %v7557, %v7556
  %v7591 = vpack.c.b16 %v7559, %v7558
  %7624 = vmatprep.subr.bf16.mxu0 0
  %7625 = vmatpush1.bf16.msra.mxu0 %v7567
  %7626 = vmatprep.subr.bf16.mxu0 0
  %7627 = vmatpush1.bf16.msra.mxu0 %v7566
  %7628 = vmatprep.subr.bf16.mxu0 0
  %7629 = vmatpush1.bf16.msra.mxu0 %v7565
  %7630 = vmatprep.subr.bf16.mxu0 0
  %7631 = vmatpush1.bf16.msra.mxu0 %v7564
  %7632 = vmatprep.subr.bf16.mxu0 0
  %7633 = vmatpush1.bf16.msra.mxu0 %v7563
  %7634 = vmatprep.subr.bf16.mxu0 0
  %7635 = vmatpush1.bf16.msra.mxu0 %v7562
  %7636 = vmatprep.subr.bf16.mxu0 0
  %7637 = vmatpush1.bf16.msra.mxu0 %v7561
  %7638 = vmatprep.subr.bf16.mxu0 0
  %7639 = vmatpush1.bf16.msra.mxu0 %v7560
  %7640 = vmatprep.subr.bf16.mxu0 0
  %7641 = vmatpush2.bf16.msra.mxu0 %v7575
  %7642 = vmatprep.subr.bf16.mxu0 0
  %7643 = vmatpush2.bf16.msra.mxu0 %v7574
  %7644 = vmatprep.subr.bf16.mxu0 0
  %7645 = vmatpush2.bf16.msra.mxu0 %v7573
  %7646 = vmatprep.subr.bf16.mxu0 0
  %7647 = vmatpush2.bf16.msra.mxu0 %v7572
  %7648 = vmatprep.subr.bf16.mxu0 0
  %7649 = vmatpush2.bf16.msra.mxu0 %v7571
  %7650 = vmatprep.subr.bf16.mxu0 0
  %7651 = vmatpush2.bf16.msra.mxu0 %v7570
  %7652 = vmatprep.subr.bf16.mxu0 0
  %7653 = vmatpush2.bf16.msra.mxu0 %v7569
  %7654 = vmatprep.subr.bf16.mxu0 0
  %7655 = vmatpush2.bf16.msra.mxu0 %v7568
  %7656 = vmatprep.mubr.bf16.mxu0 %v7358
  %7657 = vmatmul.mubr.bf16.gmra.mxu0 %v7357
  %v7658 = vpop.f32.mrf.mxu0
  %v7659 = vadd.f32 %v7430, %v7658
  %v7660 = vpop.f32.mrf.mxu0
  %v7661 = vpop.f32.mrf.mxu0
  %v7662 = vpop.f32.mrf.mxu0
  %7663 = vdwg.mxu0
  %7664 = vmatprep.subr.bf16.mxu0 0
  %7665 = vmatpush1.bf16.msra.mxu0 %v7583
  %7666 = vmatprep.subr.bf16.mxu0 0
  %7667 = vmatpush1.bf16.msra.mxu0 %v7582
  %7668 = vmatprep.subr.bf16.mxu0 0
  %7669 = vmatpush1.bf16.msra.mxu0 %v7581
  %7670 = vmatprep.subr.bf16.mxu0 0
  %7671 = vmatpush1.bf16.msra.mxu0 %v7580
  %7672 = vmatprep.subr.bf16.mxu0 0
  %7673 = vmatpush1.bf16.msra.mxu0 %v7579
  %7674 = vmatprep.subr.bf16.mxu0 0
  %7675 = vmatpush1.bf16.msra.mxu0 %v7578
  %7676 = vmatprep.subr.bf16.mxu0 0
  %7677 = vmatpush1.bf16.msra.mxu0 %v7577
  %7678 = vmatprep.subr.bf16.mxu0 0
  %7679 = vmatpush1.bf16.msra.mxu0 %v7576
  %7680 = vmatprep.subr.bf16.mxu0 0
  %7681 = vmatpush2.bf16.msra.mxu0 %v7591
  %7682 = vmatprep.subr.bf16.mxu0 0
  %7683 = vmatpush2.bf16.msra.mxu0 %v7590
  %7684 = vmatprep.subr.bf16.mxu0 0
  %7685 = vmatpush2.bf16.msra.mxu0 %v7589
  %7686 = vmatprep.subr.bf16.mxu0 0
  %7687 = vmatpush2.bf16.msra.mxu0 %v7588
  %7688 = vmatprep.subr.bf16.mxu0 0
  %7689 = vmatpush2.bf16.msra.mxu0 %v7587
  %7690 = vmatprep.subr.bf16.mxu0 0
  %7691 = vmatpush2.bf16.msra.mxu0 %v7586
  %7692 = vmatprep.subr.bf16.mxu0 0
  %7693 = vmatpush2.bf16.msra.mxu0 %v7585
  %7694 = vmatprep.subr.bf16.mxu0 0
  %7695 = vmatpush2.bf16.msra.mxu0 %v7584
  %7696 = vmatprep.mubr.bf16.mxu0 %v7360
  %7697 = vmatmul.mubr.bf16.gmra.mxu0 %v7359
  %v7698 = vpop.f32.mrf.mxu0
  %v7699 = vadd.f32 %v7659, %v7698
  %v7700 = vpop.f32.mrf.mxu0
  %v7701 = vpop.f32.mrf.mxu0
  %v7702 = vpop.f32.mrf.mxu0
  %7703 = vdwg.mxu0
  %7704 = vst [vmem:[%s11] sm:$0xff] %v7699
  // Predicated region
  $region46: #{_lambda_.1} parent=0 // pred_check
    _
  $region47: #{_lambda_.1} parent=0 // pred_check_branch
    %7706 = sbr.rel (0) target = $region49
  $region48: #{_lambda_.1} parent=0 // pred_region
    _
  $region49: #{_lambda_.1} parent=0 // pred_fallthru
    _
  // Predicated region
  $region50: #{_lambda_.1} parent=0 // pred_check
    _
  $region51: #{_lambda_.1} parent=0 // pred_check_branch
    %7708 = sbr.rel (0) target = $region53
  $region52: #{_lambda_.1} parent=0 // pred_region
    _
  $region53: #{_lambda_.1} parent=0 // pred_fallthru
    _

</llo_original>
